<compile_context>
chip_gen: v6e
topology: v6e:2x2x1
jax: 0.10.0
libtpu: 0.0.40
codegen_flags: <defaults>
</compile_context>

<pallas_src>
import jax
import jax.numpy as jnp
from jax.experimental import pallas as pl
from jax.experimental.pallas import tpu as pltpu

LATENT = 100
LATENT_PAD = 128            # ragged K=100 padded to 128 (inside the kernel)
H1, H2, H3 = 256, 512, 1024
OUT = 28 * 28               # 784
OUT_PAD = 896               # 7 * 128 -> unmasked lane-dense stores


def _cdiv(a, b):
    return (a + b - 1) // b


def _round_up(x, m):
    return _cdiv(x, m) * m


def _generator_kernel(x_ref,
                      w1_ref, b1_ref,
                      w2_ref, b2_ref,
                      w3_ref, b3_ref,
                      w4_ref, b4_ref,
                      o_ref, xpad_ref):
    blk = x_ref.shape[0]
    # Zero-pad the ragged latent dim 100 -> 128 in VMEM (no wrapper-side HBM round
    # trip; w1 rows 100:128 are zero, and the scratch tail is zeroed explicitly).
    xpad_ref[:, LATENT:] = jnp.zeros((blk, LATENT_PAD - LATENT), jnp.bfloat16)
    xpad_ref[:, :LATENT] = x_ref[...]

    # fc1 + ReLU   (bf16 operands into MXU, f32 accumulation; elementwise in f32)
    h = jnp.dot(xpad_ref[...], w1_ref[...],
                preferred_element_type=jnp.float32) + b1_ref[...]
    h = jnp.maximum(h, 0.0)
    # fc2 + ReLU
    h = jnp.dot(h.astype(jnp.bfloat16), w2_ref[...],
                preferred_element_type=jnp.float32) + b2_ref[...]
    h = jnp.maximum(h, 0.0)
    # fc3 + ReLU
    h = jnp.dot(h.astype(jnp.bfloat16), w3_ref[...],
                preferred_element_type=jnp.float32) + b3_ref[...]
    h = jnp.maximum(h, 0.0)
    # fc4 + Tanh
    h = jnp.dot(h.astype(jnp.bfloat16), w4_ref[...],
                preferred_element_type=jnp.float32) + b4_ref[...]
    o_ref[...] = jnp.tanh(h).astype(o_ref.dtype)


def generator_forward(x, params, *, max_batch_block=512, out_dtype=jnp.float32):
    """x: (B, 100) float32.  params: prepared dict from prepare_params()."""
    B = x.shape[0]
    w1, b1 = params["fc1"]
    w2, b2 = params["fc2"]
    w3, b3 = params["fc3"]
    w4, b4 = params["fc4"]

    # As few grid steps as possible (amortize per-step overhead); block rounded to 16
    # rows (bf16 sublane packing) so batch-padding waste stays < 16 rows per tile.
    num_blocks = _cdiv(B, max_batch_block)
    block_b = _round_up(_cdiv(B, num_blocks), 16)
    b_pad = num_blocks * block_b

    x_in = x.astype(jnp.bfloat16)
    if b_pad != B:  # row-only pad (bf16, 100 cols) -- tiny, skipped for aligned B
        x_in = jnp.zeros((b_pad, LATENT), jnp.bfloat16).at[:B].set(x_in)

    const = lambda i: (0, 0)

    matmul_elems = LATENT_PAD * H1 + H1 * H2 + H2 * H3 + H3 * OUT_PAD
    cost = pl.CostEstimate(
        flops=2 * b_pad * matmul_elems,
        transcendentals=b_pad * OUT_PAD,
        bytes_accessed=(2 * matmul_elems                         # bf16 weights (resident, streamed once)
                        + 4 * (H1 + H2 + H3 + OUT_PAD)           # f32 biases
                        + 2 * b_pad * LATENT                     # bf16 x
                        + jnp.dtype(out_dtype).itemsize * b_pad * OUT_PAD),
    )

    def build(single_buffer_weights):
        if single_buffer_weights:
            # Weights/biases never change block index -> single buffer is enough.
            wspec = lambda s: pl.BlockSpec(s, const, pipeline_mode=pl.Buffered(1))
        else:
            wspec = lambda s: pl.BlockSpec(s, const)
        in_specs = [
            pl.BlockSpec((block_b, LATENT), lambda i: (i, 0)),
            wspec(w1.shape), wspec(b1.shape),
            wspec(w2.shape), wspec(b2.shape),
            wspec(w3.shape), wspec(b3.shape),
            wspec(w4.shape), wspec(b4.shape),
        ]
        out_spec = pl.BlockSpec((block_b, OUT_PAD), lambda i: (i, 0))
        return pl.pallas_call(
            _generator_kernel,
            out_shape=jax.ShapeDtypeStruct((b_pad, OUT_PAD), out_dtype),
            grid_spec=pltpu.PrefetchScalarGridSpec(
                num_scalar_prefetch=0,
                grid=(b_pad // block_b,),
                in_specs=in_specs,
                out_specs=out_spec,
                scratch_shapes=[pltpu.VMEM((block_b, LATENT_PAD), jnp.bfloat16)],
            ),
            compiler_params=pltpu.CompilerParams(
                dimension_semantics=("parallel",),
                vmem_limit_bytes=32 << 20,   # ~10-15 MiB actual; safe on v7x (64 MiB)
            ),
            cost_estimate=cost,
        )

    args = (x_in, w1, b1, w2, b2, w3, b3, w4, b4)
    try:
        out = build(single_buffer_weights=True)(*args)
    except Exception:
        # Fallback if pl.Buffered(1) is not supported by the installed JAX/Mosaic.
        out = build(single_buffer_weights=False)(*args)

    return out[:B, :OUT]


def init_params(key):
    """Deterministic PyTorch-Linear-style init (uniform(-1/sqrt(fan_in), ...)), f32."""
    dims = [(LATENT, H1), (H1, H2), (H2, H3), (H3, OUT)]
    names = ["fc1", "fc2", "fc3", "fc4"]
    params = {}
    for name, (fan_in, fan_out) in zip(names, dims):
        key, kw, kb = jax.random.split(key, 3)
        bound = 1.0 / jnp.sqrt(fan_in)
        # weight stored (in, out): transpose of PyTorch's (out, in)
        w = jax.random.uniform(kw, (fan_in, fan_out), jnp.float32, -bound, bound)
        b = jax.random.uniform(kb, (1, fan_out), jnp.float32, -bound, bound)
        params[name] = (w, b)
    return params


def prepare_params(params):
    """Cast weights to bf16; zero-pad fc1 in-dim 100->128, fc4 out-dim 784->896."""
    w1, b1 = params["fc1"]
    w2, b2 = params["fc2"]
    w3, b3 = params["fc3"]
    w4, b4 = params["fc4"]
    w1p = jnp.zeros((LATENT_PAD, H1), jnp.bfloat16).at[:LATENT, :].set(
        w1.astype(jnp.bfloat16))
    w4p = jnp.zeros((H3, OUT_PAD), jnp.bfloat16).at[:, :OUT].set(
        w4.astype(jnp.bfloat16))
    b4p = jnp.zeros((1, OUT_PAD), jnp.float32).at[:, :OUT].set(b4)
    return {
        "fc1": (w1p, b1),
        "fc2": (w2.astype(jnp.bfloat16), b2),
        "fc3": (w3.astype(jnp.bfloat16), b3),
        "fc4": (w4p, b4p),
    }


def reference_forward(x, prepared):
    """Pure-JAX reference with identical math (bf16 weights/activations, f32 acc)."""
    B = x.shape[0]
    h = jnp.zeros((B, LATENT_PAD), jnp.bfloat16).at[:, :LATENT].set(
        x.astype(jnp.bfloat16))
    for name in ("fc1", "fc2", "fc3"):
        w, b = prepared[name]
        h32 = jnp.dot(h, w, preferred_element_type=jnp.float32) + b
        h = jnp.maximum(h32, 0.0).astype(jnp.bfloat16)
    w, b = prepared["fc4"]
    out = jnp.tanh(jnp.dot(h, w, preferred_element_type=jnp.float32) + b)
    return out[:, :OUT]


if __name__ == "__main__":
    key = jax.random.PRNGKey(0)
    key, kx = jax.random.split(key)

    B = 8
    x = jax.random.normal(kx, (B, LATENT), dtype=jnp.float32)
    params = prepare_params(init_params(key))

    out = generator_forward(x, params)
    out = jax.block_until_ready(out)

    ref = reference_forward(x, params)
    assert out.shape == (B, OUT)
    assert jnp.allclose(out, ref, atol=2e-3, rtol=2e-3), \
        float(jnp.max(jnp.abs(out - ref)))

    print("KERNEL_OK")
</pallas_src>

<mosaic_0001>
module attributes {stable_mosaic.version = 11 : i64} {
  func.func @_generator_kernel(%arg0: i32, %arg1: memref<16x100xbf16, #tpu.memory_space<vmem>>, %arg2: memref<128x256xbf16, #tpu.memory_space<vmem>>, %arg3: memref<1x256xf32, #tpu.memory_space<vmem>>, %arg4: memref<256x512xbf16, #tpu.memory_space<vmem>>, %arg5: memref<1x512xf32, #tpu.memory_space<vmem>>, %arg6: memref<512x1024xbf16, #tpu.memory_space<vmem>>, %arg7: memref<1x1024xf32, #tpu.memory_space<vmem>>, %arg8: memref<1024x896xbf16, #tpu.memory_space<vmem>>, %arg9: memref<1x896xf32, #tpu.memory_space<vmem>>, %arg10: memref<16x896xf32, #tpu.memory_space<vmem>>, %arg11: memref<16x128xbf16, #tpu.memory_space<vmem>>) attributes {dimension_semantics = [#tpu.dimension_semantics<parallel>], iteration_bounds = array<i64: 1>, scalar_prefetch = 0 : i64, scratch_operands = 1 : i64, tpu.core_type = #tpu.core_type<tc>, window_params = [{transform_indices = @transform_0, window_bounds = array<i64: 16, 100>}, {pipeline_mode = #tpu.pipeline_mode<synchronous>, transform_indices = @transform_1, window_bounds = array<i64: 128, 256>}, {pipeline_mode = #tpu.pipeline_mode<synchronous>, transform_indices = @transform_2, window_bounds = array<i64: 1, 256>}, {pipeline_mode = #tpu.pipeline_mode<synchronous>, transform_indices = @transform_3, window_bounds = array<i64: 256, 512>}, {pipeline_mode = #tpu.pipeline_mode<synchronous>, transform_indices = @transform_4, window_bounds = array<i64: 1, 512>}, {pipeline_mode = #tpu.pipeline_mode<synchronous>, transform_indices = @transform_5, window_bounds = array<i64: 512, 1024>}, {pipeline_mode = #tpu.pipeline_mode<synchronous>, transform_indices = @transform_6, window_bounds = array<i64: 1, 1024>}, {pipeline_mode = #tpu.pipeline_mode<synchronous>, transform_indices = @transform_7, window_bounds = array<i64: 1024, 896>}, {pipeline_mode = #tpu.pipeline_mode<synchronous>, transform_indices = @transform_8, window_bounds = array<i64: 1, 896>}, {transform_indices = @transform_9, window_bounds = array<i64: 16, 896>}]} {
    %cst = arith.constant 0.000000e+00 : bf16
    %0 = vector.broadcast %cst : bf16 to vector<16x28xbf16>
    %c0 = arith.constant 0 : index
    %c100 = arith.constant 100 : index
    %1 = vector.load %arg11[%c0, %c100] : memref<16x128xbf16, #tpu.memory_space<vmem>>, vector<16x28xbf16>
    tpu.vector_store %arg11[%c0, %c100], %0 {strides = array<i32>} : memref<16x128xbf16, #tpu.memory_space<vmem>>, vector<16x28xbf16>,
    %c0_0 = arith.constant 0 : index
    %c0_1 = arith.constant 0 : index
    %2 = vector.load %arg1[%c0_0, %c0_1] : memref<16x100xbf16, #tpu.memory_space<vmem>>, vector<16x100xbf16>
    %c0_2 = arith.constant 0 : index
    %c0_3 = arith.constant 0 : index
    %3 = vector.load %arg11[%c0_2, %c0_3] : memref<16x128xbf16, #tpu.memory_space<vmem>>, vector<16x100xbf16>
    tpu.vector_store %arg11[%c0_2, %c0_3], %2 {strides = array<i32>} : memref<16x128xbf16, #tpu.memory_space<vmem>>, vector<16x100xbf16>,
    %c0_4 = arith.constant 0 : index
    %c0_5 = arith.constant 0 : index
    %4 = vector.load %arg11[%c0_4, %c0_5] : memref<16x128xbf16, #tpu.memory_space<vmem>>, vector<16x128xbf16>
    %c0_6 = arith.constant 0 : index
    %c0_7 = arith.constant 0 : index
    %5 = vector.load %arg2[%c0_6, %c0_7] : memref<128x256xbf16, #tpu.memory_space<vmem>>, vector<128x256xbf16>
    %cst_8 = arith.constant dense<0.000000e+00> : vector<16x256xf32>
    %6 = tpu.matmul %4, %5, %cst_8 {dimension_numbers = #tpu.dot_dimension_numbers<[1], [0], [0], [1], [0, 0, 1, 1], [], []>} : vector<16x128xbf16>, vector<128x256xbf16>, vector<16x256xf32> -> vector<16x256xf32>
    %c0_9 = arith.constant 0 : index
    %c0_10 = arith.constant 0 : index
    %7 = vector.load %arg3[%c0_9, %c0_10] : memref<1x256xf32, #tpu.memory_space<vmem>>, vector<1x256xf32>
    %8 = vector.broadcast %7 : vector<1x256xf32> to vector<16x256xf32>
    %9 = arith.addf %6, %8 : vector<16x256xf32>
    %cst_11 = arith.constant 0.000000e+00 : f32
    %10 = vector.broadcast %cst_11 : f32 to vector<16x256xf32>
    %11 = arith.maximumf %9, %10 : vector<16x256xf32>
    %12 = arith.truncf %11 : vector<16x256xf32> to vector<16x256xbf16>
    %c0_12 = arith.constant 0 : index
    %c0_13 = arith.constant 0 : index
    %13 = vector.load %arg4[%c0_12, %c0_13] : memref<256x512xbf16, #tpu.memory_space<vmem>>, vector<256x512xbf16>
    %cst_14 = arith.constant dense<0.000000e+00> : vector<16x512xf32>
    %14 = tpu.matmul %12, %13, %cst_14 {dimension_numbers = #tpu.dot_dimension_numbers<[1], [0], [0], [1], [0, 0, 1, 1], [], []>} : vector<16x256xbf16>, vector<256x512xbf16>, vector<16x512xf32> -> vector<16x512xf32>
    %c0_15 = arith.constant 0 : index
    %c0_16 = arith.constant 0 : index
    %15 = vector.load %arg5[%c0_15, %c0_16] : memref<1x512xf32, #tpu.memory_space<vmem>>, vector<1x512xf32>
    %16 = vector.broadcast %15 : vector<1x512xf32> to vector<16x512xf32>
    %17 = arith.addf %14, %16 : vector<16x512xf32>
    %cst_17 = arith.constant 0.000000e+00 : f32
    %18 = vector.broadcast %cst_17 : f32 to vector<16x512xf32>
    %19 = arith.maximumf %17, %18 : vector<16x512xf32>
    %20 = arith.truncf %19 : vector<16x512xf32> to vector<16x512xbf16>
    %c0_18 = arith.constant 0 : index
    %c0_19 = arith.constant 0 : index
    %21 = vector.load %arg6[%c0_18, %c0_19] : memref<512x1024xbf16, #tpu.memory_space<vmem>>, vector<512x1024xbf16>
    %cst_20 = arith.constant dense<0.000000e+00> : vector<16x1024xf32>
    %22 = tpu.matmul %20, %21, %cst_20 {dimension_numbers = #tpu.dot_dimension_numbers<[1], [0], [0], [1], [0, 0, 1, 1], [], []>} : vector<16x512xbf16>, vector<512x1024xbf16>, vector<16x1024xf32> -> vector<16x1024xf32>
    %c0_21 = arith.constant 0 : index
    %c0_22 = arith.constant 0 : index
    %23 = vector.load %arg7[%c0_21, %c0_22] : memref<1x1024xf32, #tpu.memory_space<vmem>>, vector<1x1024xf32>
    %24 = vector.broadcast %23 : vector<1x1024xf32> to vector<16x1024xf32>
    %25 = arith.addf %22, %24 : vector<16x1024xf32>
    %cst_23 = arith.constant 0.000000e+00 : f32
    %26 = vector.broadcast %cst_23 : f32 to vector<16x1024xf32>
    %27 = arith.maximumf %25, %26 : vector<16x1024xf32>
    %28 = arith.truncf %27 : vector<16x1024xf32> to vector<16x1024xbf16>
    %c0_24 = arith.constant 0 : index
    %c0_25 = arith.constant 0 : index
    %29 = vector.load %arg8[%c0_24, %c0_25] : memref<1024x896xbf16, #tpu.memory_space<vmem>>, vector<1024x896xbf16>
    %cst_26 = arith.constant dense<0.000000e+00> : vector<16x896xf32>
    %30 = tpu.matmul %28, %29, %cst_26 {dimension_numbers = #tpu.dot_dimension_numbers<[1], [0], [0], [1], [0, 0, 1, 1], [], []>} : vector<16x1024xbf16>, vector<1024x896xbf16>, vector<16x896xf32> -> vector<16x896xf32>
    %c0_27 = arith.constant 0 : index
    %c0_28 = arith.constant 0 : index
    %31 = vector.load %arg9[%c0_27, %c0_28] : memref<1x896xf32, #tpu.memory_space<vmem>>, vector<1x896xf32>
    %32 = vector.broadcast %31 : vector<1x896xf32> to vector<16x896xf32>
    %33 = arith.addf %30, %32 : vector<16x896xf32>
    %34 = math.tanh %33 : vector<16x896xf32>
    %c0_29 = arith.constant 0 : index
    %c0_30 = arith.constant 0 : index
    %35 = vector.load %arg10[%c0_29, %c0_30] : memref<16x896xf32, #tpu.memory_space<vmem>>, vector<16x896xf32>
    tpu.vector_store %arg10[%c0_29, %c0_30], %34 {strides = array<i32>} : memref<16x896xf32, #tpu.memory_space<vmem>>, vector<16x896xf32>,
    return
  }
  func.func @transform_0(%arg0: i32) -> (i32, i32) {
    %c0_i32 = arith.constant 0 : i32
    %c0_i32_0 = arith.constant 0 : i32
    return %arg0, %c0_i32 : i32, i32
  }
  func.func @transform_1(%arg0: i32) -> (i32, i32) {
    %c0_i32 = arith.constant 0 : i32
    %c0_i32_0 = arith.constant 0 : i32
    %c0_i32_1 = arith.constant 0 : i32
    return %c0_i32, %c0_i32_0 : i32, i32
  }
  func.func @transform_2(%arg0: i32) -> (i32, i32) {
    %c0_i32 = arith.constant 0 : i32
    %c0_i32_0 = arith.constant 0 : i32
    %c0_i32_1 = arith.constant 0 : i32
    return %c0_i32, %c0_i32_0 : i32, i32
  }
  func.func @transform_3(%arg0: i32) -> (i32, i32) {
    %c0_i32 = arith.constant 0 : i32
    %c0_i32_0 = arith.constant 0 : i32
    %c0_i32_1 = arith.constant 0 : i32
    return %c0_i32, %c0_i32_0 : i32, i32
  }
  func.func @transform_4(%arg0: i32) -> (i32, i32) {
    %c0_i32 = arith.constant 0 : i32
    %c0_i32_0 = arith.constant 0 : i32
    %c0_i32_1 = arith.constant 0 : i32
    return %c0_i32, %c0_i32_0 : i32, i32
  }
  func.func @transform_5(%arg0: i32) -> (i32, i32) {
    %c0_i32 = arith.constant 0 : i32
    %c0_i32_0 = arith.constant 0 : i32
    %c0_i32_1 = arith.constant 0 : i32
    return %c0_i32, %c0_i32_0 : i32, i32
  }
  func.func @transform_6(%arg0: i32) -> (i32, i32) {
    %c0_i32 = arith.constant 0 : i32
    %c0_i32_0 = arith.constant 0 : i32
    %c0_i32_1 = arith.constant 0 : i32
    return %c0_i32, %c0_i32_0 : i32, i32
  }
  func.func @transform_7(%arg0: i32) -> (i32, i32) {
    %c0_i32 = arith.constant 0 : i32
    %c0_i32_0 = arith.constant 0 : i32
    %c0_i32_1 = arith.constant 0 : i32
    return %c0_i32, %c0_i32_0 : i32, i32
  }
  func.func @transform_8(%arg0: i32) -> (i32, i32) {
    %c0_i32 = arith.constant 0 : i32
    %c0_i32_0 = arith.constant 0 : i32
    %c0_i32_1 = arith.constant 0 : i32
    return %c0_i32, %c0_i32_0 : i32, i32
  }
  func.func @transform_9(%arg0: i32) -> (i32, i32) {
    %c0_i32 = arith.constant 0 : i32
    %c0_i32_0 = arith.constant 0 : i32
    return %arg0, %c0_i32 : i32, i32
  }
}

module attributes {stable_mosaic.version = 11 : i64} {
  func.func @_generator_kernel(%arg0: i32, %arg1: memref<16x100xbf16, #tpu.memory_space<vmem>>, %arg2: memref<128x256xbf16, #tpu.memory_space<vmem>>, %arg3: memref<1x256xf32, #tpu.memory_space<vmem>>, %arg4: memref<256x512xbf16, #tpu.memory_space<vmem>>, %arg5: memref<1x512xf32, #tpu.memory_space<vmem>>, %arg6: memref<512x1024xbf16, #tpu.memory_space<vmem>>, %arg7: memref<1x1024xf32, #tpu.memory_space<vmem>>, %arg8: memref<1024x896xbf16, #tpu.memory_space<vmem>>, %arg9: memref<1x896xf32, #tpu.memory_space<vmem>>, %arg10: memref<16x896xf32, #tpu.memory_space<vmem>>, %arg11: memref<16x128xbf16, #tpu.memory_space<vmem>>) attributes {dimension_semantics = [#tpu.dimension_semantics<parallel>], iteration_bounds = array<i64: 1>, scalar_prefetch = 0 : i64, scratch_operands = 1 : i64, tpu.core_type = #tpu.core_type<tc>, window_params = [{transform_indices = @transform_0, window_bounds = array<i64: 16, 100>}, {pipeline_mode = #tpu.pipeline_mode<synchronous>, transform_indices = @transform_1, window_bounds = array<i64: 128, 256>}, {pipeline_mode = #tpu.pipeline_mode<synchronous>, transform_indices = @transform_2, window_bounds = array<i64: 1, 256>}, {pipeline_mode = #tpu.pipeline_mode<synchronous>, transform_indices = @transform_3, window_bounds = array<i64: 256, 512>}, {pipeline_mode = #tpu.pipeline_mode<synchronous>, transform_indices = @transform_4, window_bounds = array<i64: 1, 512>}, {pipeline_mode = #tpu.pipeline_mode<synchronous>, transform_indices = @transform_5, window_bounds = array<i64: 512, 1024>}, {pipeline_mode = #tpu.pipeline_mode<synchronous>, transform_indices = @transform_6, window_bounds = array<i64: 1, 1024>}, {pipeline_mode = #tpu.pipeline_mode<synchronous>, transform_indices = @transform_7, window_bounds = array<i64: 1024, 896>}, {pipeline_mode = #tpu.pipeline_mode<synchronous>, transform_indices = @transform_8, window_bounds = array<i64: 1, 896>}, {transform_indices = @transform_9, window_bounds = array<i64: 16, 896>}]} {
    %cst = arith.constant 0.000000e+00 : bf16
    %0 = vector.broadcast %cst : bf16 to vector<16x28xbf16>
    %c0 = arith.constant 0 : index
    %c100 = arith.constant 100 : index
    %1 = vector.load %arg11[%c0, %c100] : memref<16x128xbf16, #tpu.memory_space<vmem>>, vector<16x28xbf16>
    tpu.vector_store %arg11[%c0, %c100], %0 {strides = array<i32>} : memref<16x128xbf16, #tpu.memory_space<vmem>>, vector<16x28xbf16>,
    %c0_0 = arith.constant 0 : index
    %c0_1 = arith.constant 0 : index
    %2 = vector.load %arg1[%c0_0, %c0_1] : memref<16x100xbf16, #tpu.memory_space<vmem>>, vector<16x100xbf16>
    %c0_2 = arith.constant 0 : index
    %c0_3 = arith.constant 0 : index
    %3 = vector.load %arg11[%c0_2, %c0_3] : memref<16x128xbf16, #tpu.memory_space<vmem>>, vector<16x100xbf16>
    tpu.vector_store %arg11[%c0_2, %c0_3], %2 {strides = array<i32>} : memref<16x128xbf16, #tpu.memory_space<vmem>>, vector<16x100xbf16>,
    %c0_4 = arith.constant 0 : index
    %c0_5 = arith.constant 0 : index
    %4 = vector.load %arg11[%c0_4, %c0_5] : memref<16x128xbf16, #tpu.memory_space<vmem>>, vector<16x128xbf16>
    %c0_6 = arith.constant 0 : index
    %c0_7 = arith.constant 0 : index
    %5 = vector.load %arg2[%c0_6, %c0_7] : memref<128x256xbf16, #tpu.memory_space<vmem>>, vector<128x256xbf16>
    %cst_8 = arith.constant dense<0.000000e+00> : vector<16x256xf32>
    %6 = tpu.matmul %4, %5, %cst_8 {dimension_numbers = #tpu.dot_dimension_numbers<[1], [0], [0], [1], [0, 0, 1, 1], [], []>} : vector<16x128xbf16>, vector<128x256xbf16>, vector<16x256xf32> -> vector<16x256xf32>
    %c0_9 = arith.constant 0 : index
    %c0_10 = arith.constant 0 : index
    %7 = vector.load %arg3[%c0_9, %c0_10] : memref<1x256xf32, #tpu.memory_space<vmem>>, vector<1x256xf32>
    %8 = vector.broadcast %7 : vector<1x256xf32> to vector<16x256xf32>
    %9 = arith.addf %6, %8 : vector<16x256xf32>
    %cst_11 = arith.constant 0.000000e+00 : f32
    %10 = vector.broadcast %cst_11 : f32 to vector<16x256xf32>
    %11 = arith.maximumf %9, %10 : vector<16x256xf32>
    %12 = arith.truncf %11 : vector<16x256xf32> to vector<16x256xbf16>
    %c0_12 = arith.constant 0 : index
    %c0_13 = arith.constant 0 : index
    %13 = vector.load %arg4[%c0_12, %c0_13] : memref<256x512xbf16, #tpu.memory_space<vmem>>, vector<256x512xbf16>
    %cst_14 = arith.constant dense<0.000000e+00> : vector<16x512xf32>
    %14 = tpu.matmul %12, %13, %cst_14 {dimension_numbers = #tpu.dot_dimension_numbers<[1], [0], [0], [1], [0, 0, 1, 1], [], []>} : vector<16x256xbf16>, vector<256x512xbf16>, vector<16x512xf32> -> vector<16x512xf32>
    %c0_15 = arith.constant 0 : index
    %c0_16 = arith.constant 0 : index
    %15 = vector.load %arg5[%c0_15, %c0_16] : memref<1x512xf32, #tpu.memory_space<vmem>>, vector<1x512xf32>
    %16 = vector.broadcast %15 : vector<1x512xf32> to vector<16x512xf32>
    %17 = arith.addf %14, %16 : vector<16x512xf32>
    %cst_17 = arith.constant 0.000000e+00 : f32
    %18 = vector.broadcast %cst_17 : f32 to vector<16x512xf32>
    %19 = arith.maximumf %17, %18 : vector<16x512xf32>
    %20 = arith.truncf %19 : vector<16x512xf32> to vector<16x512xbf16>
    %c0_18 = arith.constant 0 : index
    %c0_19 = arith.constant 0 : index
    %21 = vector.load %arg6[%c0_18, %c0_19] : memref<512x1024xbf16, #tpu.memory_space<vmem>>, vector<512x1024xbf16>
    %cst_20 = arith.constant dense<0.000000e+00> : vector<16x1024xf32>
    %22 = tpu.matmul %20, %21, %cst_20 {dimension_numbers = #tpu.dot_dimension_numbers<[1], [0], [0], [1], [0, 0, 1, 1], [], []>} : vector<16x512xbf16>, vector<512x1024xbf16>, vector<16x1024xf32> -> vector<16x1024xf32>
    %c0_21 = arith.constant 0 : index
    %c0_22 = arith.constant 0 : index
    %23 = vector.load %arg7[%c0_21, %c0_22] : memref<1x1024xf32, #tpu.memory_space<vmem>>, vector<1x1024xf32>
    %24 = vector.broadcast %23 : vector<1x1024xf32> to vector<16x1024xf32>
    %25 = arith.addf %22, %24 : vector<16x1024xf32>
    %cst_23 = arith.constant 0.000000e+00 : f32
    %26 = vector.broadcast %cst_23 : f32 to vector<16x1024xf32>
    %27 = arith.maximumf %25, %26 : vector<16x1024xf32>
    %28 = arith.truncf %27 : vector<16x1024xf32> to vector<16x1024xbf16>
    %c0_24 = arith.constant 0 : index
    %c0_25 = arith.constant 0 : index
    %29 = vector.load %arg8[%c0_24, %c0_25] : memref<1024x896xbf16, #tpu.memory_space<vmem>>, vector<1024x896xbf16>
    %cst_26 = arith.constant dense<0.000000e+00> : vector<16x896xf32>
    %30 = tpu.matmul %28, %29, %cst_26 {dimension_numbers = #tpu.dot_dimension_numbers<[1], [0], [0], [1], [0, 0, 1, 1], [], []>} : vector<16x1024xbf16>, vector<1024x896xbf16>, vector<16x896xf32> -> vector<16x896xf32>
    %c0_27 = arith.constant 0 : index
    %c0_28 = arith.constant 0 : index
    %31 = vector.load %arg9[%c0_27, %c0_28] : memref<1x896xf32, #tpu.memory_space<vmem>>, vector<1x896xf32>
    %32 = vector.broadcast %31 : vector<1x896xf32> to vector<16x896xf32>
    %33 = arith.addf %30, %32 : vector<16x896xf32>
    %34 = math.tanh %33 : vector<16x896xf32>
    %c0_29 = arith.constant 0 : index
    %c0_30 = arith.constant 0 : index
    %35 = vector.load %arg10[%c0_29, %c0_30] : memref<16x896xf32, #tpu.memory_space<vmem>>, vector<16x896xf32>
    tpu.vector_store %arg10[%c0_29, %c0_30], %34 {strides = array<i32>} : memref<16x896xf32, #tpu.memory_space<vmem>>, vector<16x896xf32>,
    return
  }
  func.func @transform_0(%arg0: i32) -> (i32, i32) {
    %c0_i32 = arith.constant 0 : i32
    %c0_i32_0 = arith.constant 0 : i32
    return %arg0, %c0_i32 : i32, i32
  }
  func.func @transform_1(%arg0: i32) -> (i32, i32) {
    %c0_i32 = arith.constant 0 : i32
    %c0_i32_0 = arith.constant 0 : i32
    %c0_i32_1 = arith.constant 0 : i32
    return %c0_i32, %c0_i32_0 : i32, i32
  }
  func.func @transform_2(%arg0: i32) -> (i32, i32) {
    %c0_i32 = arith.constant 0 : i32
    %c0_i32_0 = arith.constant 0 : i32
    %c0_i32_1 = arith.constant 0 : i32
    return %c0_i32, %c0_i32_0 : i32, i32
  }
  func.func @transform_3(%arg0: i32) -> (i32, i32) {
    %c0_i32 = arith.constant 0 : i32
    %c0_i32_0 = arith.constant 0 : i32
    %c0_i32_1 = arith.constant 0 : i32
    return %c0_i32, %c0_i32_0 : i32, i32
  }
  func.func @transform_4(%arg0: i32) -> (i32, i32) {
    %c0_i32 = arith.constant 0 : i32
    %c0_i32_0 = arith.constant 0 : i32
    %c0_i32_1 = arith.constant 0 : i32
    return %c0_i32, %c0_i32_0 : i32, i32
  }
  func.func @transform_5(%arg0: i32) -> (i32, i32) {
    %c0_i32 = arith.constant 0 : i32
    %c0_i32_0 = arith.constant 0 : i32
    %c0_i32_1 = arith.constant 0 : i32
    return %c0_i32, %c0_i32_0 : i32, i32
  }
  func.func @transform_6(%arg0: i32) -> (i32, i32) {
    %c0_i32 = arith.constant 0 : i32
    %c0_i32_0 = arith.constant 0 : i32
    %c0_i32_1 = arith.constant 0 : i32
    return %c0_i32, %c0_i32_0 : i32, i32
  }
  func.func @transform_7(%arg0: i32) -> (i32, i32) {
    %c0_i32 = arith.constant 0 : i32
    %c0_i32_0 = arith.constant 0 : i32
    %c0_i32_1 = arith.constant 0 : i32
    return %c0_i32, %c0_i32_0 : i32, i32
  }
  func.func @transform_8(%arg0: i32) -> (i32, i32) {
    %c0_i32 = arith.constant 0 : i32
    %c0_i32_0 = arith.constant 0 : i32
    %c0_i32_1 = arith.constant 0 : i32
    return %c0_i32, %c0_i32_0 : i32, i32
  }
  func.func @transform_9(%arg0: i32) -> (i32, i32) {
    %c0_i32 = arith.constant 0 : i32
    %c0_i32_0 = arith.constant 0 : i32
    return %arg0, %c0_i32 : i32, i32
  }
}

</mosaic_0001>

<llo_original>
// kernel: tpu_custom_call.1
$region0: #{tpu_custom_call.1}
  #allocation0 [shape = 'u32[]', space=smem, size = 0x4, offset = 0x4, fixed_abs, tag = 'smem constant byte address 0x4 - core index']
  #allocation1 [shape = 'u32[144,128]{1,0:T(1,128)}', space=vmem, size = 0x12000, scoped, tag = 'internal scratch']
  #allocation2 [shape = 'bf16[16,128]{1,0:T(8,128)(2,1)}', space=vmem, size = 0x1000, scoped, tag = 'scratch operand']
  %s0 = inlined_call_operand.hbm [shape: bf16[16,100], index: 0, kind: input, shape index: {}]
  %s1 = inlined_call_operand.hbm [shape: bf16[128,256], index: 1, kind: input, shape index: {}]
  %s2 = inlined_call_operand.hbm [shape: f32[1,256], index: 2, kind: input, shape index: {}]
  %s3 = inlined_call_operand.hbm [shape: bf16[256,512], index: 3, kind: input, shape index: {}]
  %s4 = inlined_call_operand.hbm [shape: f32[1,512], index: 4, kind: input, shape index: {}]
  %s5 = inlined_call_operand.hbm [shape: bf16[512,1024], index: 5, kind: input, shape index: {}]
  %s6 = inlined_call_operand.hbm [shape: f32[1,1024], index: 6, kind: input, shape index: {}]
  %s7 = inlined_call_operand.hbm [shape: bf16[1024,896], index: 7, kind: input, shape index: {}]
  %s8 = inlined_call_operand.hbm [shape: f32[1,896], index: 8, kind: input, shape index: {}]
  %s9 = inlined_call_operand.hbm [shape: f32[16,896], index: 9, kind: output, shape index: {}]
  %s10 = sld [smem:[#allocation0]]
  $region82: #{tpu_custom_call.1} parent=0
    _
  %s12 = ssub.s32 1, %s10
  %s13 = scalar_select 0, %s12, %s10
  $region1: #{tpu_custom_call.1} parent=0
    #allocation3 [shape = 'u8[4096]{0}', space=vmem, size = 0x1000, scoped, tag = 'input window, operand 0, single buffered']
    #allocation4 [shape = 's32[1]{0}', space=sflag, size = 0x4, scoped, tag = 'scoped memory for tpu_custom_call.1']
    #allocation5 [shape = 's32[1]{0}', space=sflag, size = 0x4, scoped, tag = 'scoped memory for tpu_custom_call.1']
    #allocation6 [shape = 'u8[65536]{0}', space=vmem, size = 0x10000, scoped, tag = 'input window, operand 1, single buffered']
    #allocation7 [shape = 's32[1]{0}', space=sflag, size = 0x4, scoped, tag = 'scoped memory for tpu_custom_call.1']
    #allocation8 [shape = 'u8[1024]{0}', space=vmem, size = 0x400, scoped, tag = 'input window, operand 2, single buffered']
    #allocation9 [shape = 'u8[262144]{0}', space=vmem, size = 0x40000, scoped, tag = 'input window, operand 3, single buffered']
    #allocation10 [shape = 's32[1]{0}', space=sflag, size = 0x4, scoped, tag = 'scoped memory for tpu_custom_call.1']
    #allocation11 [shape = 'u8[2048]{0}', space=vmem, size = 0x800, scoped, tag = 'input window, operand 4, single buffered']
    #allocation12 [shape = 'u8[1048576]{0}', space=vmem, size = 0x100000, scoped, tag = 'input window, operand 5, single buffered']
    #allocation13 [shape = 's32[1]{0}', space=sflag, size = 0x4, scoped, tag = 'scoped memory for tpu_custom_call.1']
    #allocation14 [shape = 'u8[4096]{0}', space=vmem, size = 0x1000, scoped, tag = 'input window, operand 6, single buffered']
    #allocation15 [shape = 'u8[1835008]{0}', space=vmem, size = 0x1c0000, scoped, tag = 'input window, operand 7, single buffered']
    #allocation16 [shape = 's32[1]{0}', space=sflag, size = 0x4, scoped, tag = 'scoped memory for tpu_custom_call.1']
    #allocation17 [shape = 'u8[3584]{0}', space=vmem, size = 0x1000, scoped, tag = 'input window, operand 8, single buffered']
    #allocation18 [shape = 'u8[57344]{0}', space=vmem, size = 0xe000, scoped, tag = 'output window, operand 0, single buffered']
    %14 = vsyncpa [#allocation4], 0
    %15 = vsyncpa [#allocation7], 0
    %16 = vsyncpa [#allocation10], 0
    %17 = vsyncpa [#allocation13], 0
    %18 = vsyncpa [#allocation16], 0
    %19 = vsyncpa [#allocation5], 0
    // Predicated region
    $region2: #{tpu_custom_call.1} parent=1 // pred_check
      _
    $region3: #{tpu_custom_call.1} parent=1 // pred_check_branch
      %21 = sbr.rel (0) target = $region5
    $region4: #{tpu_custom_call.1} parent=1 // pred_region
      %s23 = ssub.s32 128, 128
      %24 = vsyncadd [#allocation4], %s23
      %s25 = sshll.u32 [#allocation3], 4
      %s26 = int_to_ptr.vmem [resolvable:$true] %s25
      %31 = dma.hbm_to_vmem [thread:$0]  %s0, 128, %s26, [#allocation4], 64, 64, 4
    $region5: #{tpu_custom_call.1} parent=1 // pred_fallthru
      _
    // Predicated region
    $region6: #{tpu_custom_call.1} parent=1 // pred_check
      _
    $region7: #{tpu_custom_call.1} parent=1 // pred_check_branch
      %33 = sbr.rel (0) target = $region9
    $region8: #{tpu_custom_call.1} parent=1 // pred_region
      %s35 = ssub.s32 2048, 2048
      %36 = vsyncadd [#allocation7], %s35
      %s37 = sshll.u32 [#allocation6], 4
      %s38 = int_to_ptr.vmem [resolvable:$true] %s37
      %43 = dma.hbm_to_vmem [thread:$0]  %s1, 2048, %s38, [#allocation7], 128, 128, 8
    $region9: #{tpu_custom_call.1} parent=1 // pred_fallthru
      _
    // Predicated region
    $region10: #{tpu_custom_call.1} parent=1 // pred_check
      _
    $region11: #{tpu_custom_call.1} parent=1 // pred_check_branch
      %45 = sbr.rel (0) target = $region13
    $region12: #{tpu_custom_call.1} parent=1 // pred_region
      %s47 = ssub.s32 32, 32
      %48 = vsyncadd [#allocation7], %s47
      %s50 = sshll.u32 [#allocation8], 4
      %s51 = int_to_ptr.vmem [resolvable:$true] %s50
      %53 = dma.hbm_to_vmem [thread:$0]  %s2, 32, %s51, [#allocation7]
    $region13: #{tpu_custom_call.1} parent=1 // pred_fallthru
      _
    // Predicated region
    $region14: #{tpu_custom_call.1} parent=1 // pred_check
      _
    $region15: #{tpu_custom_call.1} parent=1 // pred_check_branch
      %55 = sbr.rel (0) target = $region17
    $region16: #{tpu_custom_call.1} parent=1 // pred_region
      %s57 = ssub.s32 8192, 8192
      %58 = vsyncadd [#allocation10], %s57
      %s59 = sshll.u32 [#allocation9], 4
      %s60 = int_to_ptr.vmem [resolvable:$true] %s59
      %65 = dma.hbm_to_vmem [thread:$0]  %s3, 8192, %s60, [#allocation10], 256, 256, 16
    $region17: #{tpu_custom_call.1} parent=1 // pred_fallthru
      _
    // Predicated region
    $region18: #{tpu_custom_call.1} parent=1 // pred_check
      _
    $region19: #{tpu_custom_call.1} parent=1 // pred_check_branch
      %67 = sbr.rel (0) target = $region21
    $region20: #{tpu_custom_call.1} parent=1 // pred_region
      %s69 = ssub.s32 64, 64
      %70 = vsyncadd [#allocation10], %s69
      %s72 = sshll.u32 [#allocation11], 4
      %s73 = int_to_ptr.vmem [resolvable:$true] %s72
      %75 = dma.hbm_to_vmem [thread:$0]  %s4, 64, %s73, [#allocation10]
    $region21: #{tpu_custom_call.1} parent=1 // pred_fallthru
      _
    // Predicated region
    $region22: #{tpu_custom_call.1} parent=1 // pred_check
      _
    $region23: #{tpu_custom_call.1} parent=1 // pred_check_branch
      %77 = sbr.rel (0) target = $region25
    $region24: #{tpu_custom_call.1} parent=1 // pred_region
      %s79 = ssub.s32 32768, 32768
      %80 = vsyncadd [#allocation13], %s79
      %s81 = sshll.u32 [#allocation12], 4
      %s82 = int_to_ptr.vmem [resolvable:$true] %s81
      %87 = dma.hbm_to_vmem [thread:$0]  %s5, 32768, %s82, [#allocation13], 512, 512, 32
    $region25: #{tpu_custom_call.1} parent=1 // pred_fallthru
      _
    // Predicated region
    $region26: #{tpu_custom_call.1} parent=1 // pred_check
      _
    $region27: #{tpu_custom_call.1} parent=1 // pred_check_branch
      %89 = sbr.rel (0) target = $region29
    $region28: #{tpu_custom_call.1} parent=1 // pred_region
      %s91 = ssub.s32 128, 128
      %92 = vsyncadd [#allocation13], %s91
      %s94 = sshll.u32 [#allocation14], 4
      %s95 = int_to_ptr.vmem [resolvable:$true] %s94
      %97 = dma.hbm_to_vmem [thread:$0]  %s6, 128, %s95, [#allocation13]
    $region29: #{tpu_custom_call.1} parent=1 // pred_fallthru
      _
    // Predicated region
    $region30: #{tpu_custom_call.1} parent=1 // pred_check
      _
    $region31: #{tpu_custom_call.1} parent=1 // pred_check_branch
      %99 = sbr.rel (0) target = $region33
    $region32: #{tpu_custom_call.1} parent=1 // pred_region
      %s101 = ssub.s32 57344, 57344
      %102 = vsyncadd [#allocation16], %s101
      %s103 = sshll.u32 [#allocation15], 4
      %s104 = int_to_ptr.vmem [resolvable:$true] %s103
      %109 = dma.hbm_to_vmem [thread:$0]  %s7, 57344, %s104, [#allocation16], 448, 448, 28
    $region33: #{tpu_custom_call.1} parent=1 // pred_fallthru
      _
    // Predicated region
    $region34: #{tpu_custom_call.1} parent=1 // pred_check
      _
    $region35: #{tpu_custom_call.1} parent=1 // pred_check_branch
      %111 = sbr.rel (0) target = $region37
    $region36: #{tpu_custom_call.1} parent=1 // pred_region
      %s113 = ssub.s32 112, 112
      %114 = vsyncadd [#allocation16], %s113
      %s116 = sshll.u32 [#allocation17], 4
      %s117 = int_to_ptr.vmem [resolvable:$true] %s116
      %119 = dma.hbm_to_vmem [thread:$0]  %s8, 112, %s117, [#allocation16]
    $region37: #{tpu_custom_call.1} parent=1 // pred_fallthru
      _
    // Predicated region
    $region38: #{tpu_custom_call.1} parent=1 // pred_check
      _
    $region39: #{tpu_custom_call.1} parent=1 // pred_check_branch
      %121 = sbr.rel (0) target = $region41
    $region40: #{tpu_custom_call.1} parent=1 // pred_region
      %122 = dma.done [#allocation4], 128
    $region41: #{tpu_custom_call.1} parent=1 // pred_fallthru
      _
    // Predicated region
    $region42: #{tpu_custom_call.1} parent=1 // pred_check
      _
    $region43: #{tpu_custom_call.1} parent=1 // pred_check_branch
      %124 = sbr.rel (0) target = $region45
    $region44: #{tpu_custom_call.1} parent=1 // pred_region
      %125 = dma.done [#allocation7], 2048
    $region45: #{tpu_custom_call.1} parent=1 // pred_fallthru
      _
    // Predicated region
    $region46: #{tpu_custom_call.1} parent=1 // pred_check
      _
    $region47: #{tpu_custom_call.1} parent=1 // pred_check_branch
      %127 = sbr.rel (0) target = $region49
    $region48: #{tpu_custom_call.1} parent=1 // pred_region
      %128 = dma.done [#allocation7], 32
    $region49: #{tpu_custom_call.1} parent=1 // pred_fallthru
      _
    // Predicated region
    $region50: #{tpu_custom_call.1} parent=1 // pred_check
      _
    $region51: #{tpu_custom_call.1} parent=1 // pred_check_branch
      %130 = sbr.rel (0) target = $region53
    $region52: #{tpu_custom_call.1} parent=1 // pred_region
      %131 = dma.done [#allocation10], 8192
    $region53: #{tpu_custom_call.1} parent=1 // pred_fallthru
      _
    // Predicated region
    $region54: #{tpu_custom_call.1} parent=1 // pred_check
      _
    $region55: #{tpu_custom_call.1} parent=1 // pred_check_branch
      %133 = sbr.rel (0) target = $region57
    $region56: #{tpu_custom_call.1} parent=1 // pred_region
      %134 = dma.done [#allocation10], 64
    $region57: #{tpu_custom_call.1} parent=1 // pred_fallthru
      _
    // Predicated region
    $region58: #{tpu_custom_call.1} parent=1 // pred_check
      _
    $region59: #{tpu_custom_call.1} parent=1 // pred_check_branch
      %136 = sbr.rel (0) target = $region61
    $region60: #{tpu_custom_call.1} parent=1 // pred_region
      %137 = dma.done [#allocation13], 32768
    $region61: #{tpu_custom_call.1} parent=1 // pred_fallthru
      _
    // Predicated region
    $region62: #{tpu_custom_call.1} parent=1 // pred_check
      _
    $region63: #{tpu_custom_call.1} parent=1 // pred_check_branch
      %139 = sbr.rel (0) target = $region65
    $region64: #{tpu_custom_call.1} parent=1 // pred_region
      %140 = dma.done [#allocation13], 128
    $region65: #{tpu_custom_call.1} parent=1 // pred_fallthru
      _
    // Predicated region
    $region66: #{tpu_custom_call.1} parent=1 // pred_check
      _
    $region67: #{tpu_custom_call.1} parent=1 // pred_check_branch
      %142 = sbr.rel (0) target = $region69
    $region68: #{tpu_custom_call.1} parent=1 // pred_region
      %143 = dma.done [#allocation16], 57344
    $region69: #{tpu_custom_call.1} parent=1 // pred_fallthru
      _
    // Predicated region
    $region70: #{tpu_custom_call.1} parent=1 // pred_check
      _
    $region71: #{tpu_custom_call.1} parent=1 // pred_check_branch
      %145 = sbr.rel (0) target = $region73
    $region72: #{tpu_custom_call.1} parent=1 // pred_region
      %146 = dma.done [#allocation16], 112
    $region73: #{tpu_custom_call.1} parent=1 // pred_fallthru
      _
    %vm148 = vcmask 1044256
    %149 = vst.msk [vmem:[#allocation2] sm:$0xf] %vm148, 0
    %150 = vst.msk [vmem:[#allocation2 + $0x4] sm:$0xf] %vm148, 0
    %v151 = vld [vmem:[#allocation3] sm:$0xf]
    %v152 = vld [vmem:[#allocation3 + $0x4] sm:$0xf]
    %vm153 = vcmask 814080
    %154 = vst.msk [vmem:[#allocation2] sm:$0xf] %vm153, %v151
    %155 = vst.msk [vmem:[#allocation2 + $0x4] sm:$0xf] %vm153, %v152
    %v156 = vld [vmem:[#allocation2] sm:$0xf]
    %v157 = vld [vmem:[#allocation2 + $0x4] sm:$0xf]
    %v158 = vld [vmem:[#allocation6] sm:$0xff]
    %v159 = vld [vmem:[#allocation6 + $0x8] sm:$0xff]
    %v160 = vld [vmem:[#allocation6 + $0x10] sm:$0xff]
    %v161 = vld [vmem:[#allocation6 + $0x18] sm:$0xff]
    %v162 = vld [vmem:[#allocation6 + $0x20] sm:$0xff]
    %v163 = vld [vmem:[#allocation6 + $0x28] sm:$0xff]
    %v164 = vld [vmem:[#allocation6 + $0x30] sm:$0xff]
    %v165 = vld [vmem:[#allocation6 + $0x38] sm:$0xff]
    %v166 = vld [vmem:[#allocation6 + $0x40] sm:$0xff]
    %v167 = vld [vmem:[#allocation6 + $0x48] sm:$0xff]
    %v168 = vld [vmem:[#allocation6 + $0x50] sm:$0xff]
    %v169 = vld [vmem:[#allocation6 + $0x58] sm:$0xff]
    %v170 = vld [vmem:[#allocation6 + $0x60] sm:$0xff]
    %v171 = vld [vmem:[#allocation6 + $0x68] sm:$0xff]
    %v172 = vld [vmem:[#allocation6 + $0x70] sm:$0xff]
    %v173 = vld [vmem:[#allocation6 + $0x78] sm:$0xff]
    %v174 = vld [vmem:[#allocation8] sm:$0x3]
    %v176 = vlaneseq
    %v177 = vshrl.u32 %v176, 7
    %v178 = vsub.s32 0, %v177
    %v179 = vrot.slane %v174, %v178
    %v180 = vlaneseq
    %v181 = vshrl.u32 %v180, 7
    %v182 = vsub.s32 1, %v181
    %v183 = vrot.slane %v174, %v182
    %v188 = vunpack.c.l.b16 %v156
    %v189 = vunpack.c.l.b16 %v157
    %v190 = vpack.c.b16 %v189, %v188
    %v208 = vunpack.c.l.b16 %v158
    %v209 = vunpack.c.h.b16 %v158
    %v210 = vunpack.c.l.b16 %v159
    %v211 = vunpack.c.h.b16 %v159
    %v212 = vunpack.c.l.b16 %v160
    %v213 = vunpack.c.h.b16 %v160
    %v214 = vunpack.c.l.b16 %v161
    %v215 = vunpack.c.h.b16 %v161
    %v216 = vunpack.c.l.b16 %v162
    %v217 = vunpack.c.h.b16 %v162
    %v218 = vunpack.c.l.b16 %v163
    %v219 = vunpack.c.h.b16 %v163
    %v220 = vunpack.c.l.b16 %v164
    %v221 = vunpack.c.h.b16 %v164
    %v222 = vunpack.c.l.b16 %v165
    %v223 = vunpack.c.h.b16 %v165
    %v224 = vunpack.c.l.b16 %v166
    %v225 = vunpack.c.h.b16 %v166
    %v226 = vunpack.c.l.b16 %v167
    %v227 = vunpack.c.h.b16 %v167
    %v228 = vunpack.c.l.b16 %v168
    %v229 = vunpack.c.h.b16 %v168
    %v230 = vunpack.c.l.b16 %v169
    %v231 = vunpack.c.h.b16 %v169
    %v232 = vunpack.c.l.b16 %v170
    %v233 = vunpack.c.h.b16 %v170
    %v234 = vunpack.c.l.b16 %v171
    %v235 = vunpack.c.h.b16 %v171
    %v236 = vunpack.c.l.b16 %v172
    %v237 = vunpack.c.h.b16 %v172
    %v238 = vunpack.c.l.b16 %v173
    %v239 = vunpack.c.h.b16 %v173
    %v240 = vpack.c.b16 %v210, %v208
    %v241 = vpack.c.b16 %v211, %v209
    %v242 = vpack.c.b16 %v214, %v212
    %v243 = vpack.c.b16 %v215, %v213
    %v244 = vpack.c.b16 %v218, %v216
    %v245 = vpack.c.b16 %v219, %v217
    %v246 = vpack.c.b16 %v222, %v220
    %v247 = vpack.c.b16 %v223, %v221
    %v248 = vpack.c.b16 %v226, %v224
    %v249 = vpack.c.b16 %v227, %v225
    %v250 = vpack.c.b16 %v230, %v228
    %v251 = vpack.c.b16 %v231, %v229
    %v252 = vpack.c.b16 %v234, %v232
    %v253 = vpack.c.b16 %v235, %v233
    %v254 = vpack.c.b16 %v238, %v236
    %v255 = vpack.c.b16 %v239, %v237
    %272 = vmatprep.subr.bf16.mxu0 %v255
    %273 = vmatpush1.bf16.msra.mxu0 %v254
    %274 = vmatprep.subr.bf16.mxu0 %v253
    %275 = vmatpush1.bf16.msra.mxu0 %v252
    %276 = vmatprep.subr.bf16.mxu0 %v251
    %277 = vmatpush1.bf16.msra.mxu0 %v250
    %278 = vmatprep.subr.bf16.mxu0 %v249
    %279 = vmatpush1.bf16.msra.mxu0 %v248
    %280 = vmatprep.subr.bf16.mxu0 %v247
    %281 = vmatpush1.bf16.msra.mxu0 %v246
    %282 = vmatprep.subr.bf16.mxu0 %v245
    %283 = vmatpush1.bf16.msra.mxu0 %v244
    %284 = vmatprep.subr.bf16.mxu0 %v243
    %285 = vmatpush1.bf16.msra.mxu0 %v242
    %286 = vmatprep.subr.bf16.mxu0 %v241
    %287 = vmatpush1.bf16.msra.mxu0 %v240
    %288 = vmatprep.subr.bf16.mxu0 0
    %289 = vmatpush2.bf16.msra.mxu0 0
    %290 = vmatprep.subr.bf16.mxu0 0
    %291 = vmatpush2.bf16.msra.mxu0 0
    %292 = vmatprep.subr.bf16.mxu0 0
    %293 = vmatpush2.bf16.msra.mxu0 0
    %294 = vmatprep.subr.bf16.mxu0 0
    %295 = vmatpush2.bf16.msra.mxu0 0
    %296 = vmatprep.subr.bf16.mxu0 0
    %297 = vmatpush2.bf16.msra.mxu0 0
    %298 = vmatprep.subr.bf16.mxu0 0
    %299 = vmatpush2.bf16.msra.mxu0 0
    %300 = vmatprep.subr.bf16.mxu0 0
    %301 = vmatpush2.bf16.msra.mxu0 0
    %302 = vmatprep.subr.bf16.mxu0 0
    %303 = vmatpush2.bf16.msra.mxu0 0
    %304 = vmatprep.mubr.bf16.mxu0 0
    %305 = vmatmul.mubr.bf16.gmra.mxu0 %v190
    %v306 = vpop.f32.mrf.mxu0
    %v307 = vadd.f32 %v179, %v306
    %v308 = vpop.f32.mrf.mxu0
    %v309 = vadd.f32 %v183, %v308
    %v310 = vpop.f32.mrf.mxu0
    %v311 = vadd.f32 %v179, %v310
    %v312 = vpop.f32.mrf.mxu0
    %v313 = vadd.f32 %v183, %v312
    %314 = vdwg.mxu0
    %v315 = vmax.f32 %v307, 0.0
    %v316 = vmax.f32 %v309, 0.0
    %v317 = vmax.f32 %v311, 0.0
    %v318 = vmax.f32 %v313, 0.0
    %v319 = vpack.c.bf16 %v317, %v315
    %v320 = vpack.c.bf16 %v318, %v316
    %v321 = vld [vmem:[#allocation9] sm:$0xff]
    %v322 = vld [vmem:[#allocation9 + $0x8] sm:$0xff]
    %v323 = vld [vmem:[#allocation9 + $0x10] sm:$0xff]
    %v324 = vld [vmem:[#allocation9 + $0x18] sm:$0xff]
    %v325 = vld [vmem:[#allocation9 + $0x20] sm:$0xff]
    %v326 = vld [vmem:[#allocation9 + $0x28] sm:$0xff]
    %v327 = vld [vmem:[#allocation9 + $0x30] sm:$0xff]
    %v328 = vld [vmem:[#allocation9 + $0x38] sm:$0xff]
    %v329 = vld [vmem:[#allocation9 + $0x40] sm:$0xff]
    %v330 = vld [vmem:[#allocation9 + $0x48] sm:$0xff]
    %v331 = vld [vmem:[#allocation9 + $0x50] sm:$0xff]
    %v332 = vld [vmem:[#allocation9 + $0x58] sm:$0xff]
    %v333 = vld [vmem:[#allocation9 + $0x60] sm:$0xff]
    %v334 = vld [vmem:[#allocation9 + $0x68] sm:$0xff]
    %v335 = vld [vmem:[#allocation9 + $0x70] sm:$0xff]
    %v336 = vld [vmem:[#allocation9 + $0x78] sm:$0xff]
    %v337 = vld [vmem:[#allocation9 + $0x80] sm:$0xff]
    %v338 = vld [vmem:[#allocation9 + $0x88] sm:$0xff]
    %v339 = vld [vmem:[#allocation9 + $0x90] sm:$0xff]
    %v340 = vld [vmem:[#allocation9 + $0x98] sm:$0xff]
    %v341 = vld [vmem:[#allocation9 + $0xa0] sm:$0xff]
    %v342 = vld [vmem:[#allocation9 + $0xa8] sm:$0xff]
    %v343 = vld [vmem:[#allocation9 + $0xb0] sm:$0xff]
    %v344 = vld [vmem:[#allocation9 + $0xb8] sm:$0xff]
    %v345 = vld [vmem:[#allocation9 + $0xc0] sm:$0xff]
    %v346 = vld [vmem:[#allocation9 + $0xc8] sm:$0xff]
    %v347 = vld [vmem:[#allocation9 + $0xd0] sm:$0xff]
    %v348 = vld [vmem:[#allocation9 + $0xd8] sm:$0xff]
    %v349 = vld [vmem:[#allocation9 + $0xe0] sm:$0xff]
    %v350 = vld [vmem:[#allocation9 + $0xe8] sm:$0xff]
    %v351 = vld [vmem:[#allocation9 + $0xf0] sm:$0xff]
    %v352 = vld [vmem:[#allocation9 + $0xf8] sm:$0xff]
    %v353 = vld [vmem:[#allocation9 + $0x100] sm:$0xff]
    %v354 = vld [vmem:[#allocation9 + $0x108] sm:$0xff]
    %v355 = vld [vmem:[#allocation9 + $0x110] sm:$0xff]
    %v356 = vld [vmem:[#allocation9 + $0x118] sm:$0xff]
    %v357 = vld [vmem:[#allocation9 + $0x120] sm:$0xff]
    %v358 = vld [vmem:[#allocation9 + $0x128] sm:$0xff]
    %v359 = vld [vmem:[#allocation9 + $0x130] sm:$0xff]
    %v360 = vld [vmem:[#allocation9 + $0x138] sm:$0xff]
    %v361 = vld [vmem:[#allocation9 + $0x140] sm:$0xff]
    %v362 = vld [vmem:[#allocation9 + $0x148] sm:$0xff]
    %v363 = vld [vmem:[#allocation9 + $0x150] sm:$0xff]
    %v364 = vld [vmem:[#allocation9 + $0x158] sm:$0xff]
    %v365 = vld [vmem:[#allocation9 + $0x160] sm:$0xff]
    %v366 = vld [vmem:[#allocation9 + $0x168] sm:$0xff]
    %v367 = vld [vmem:[#allocation9 + $0x170] sm:$0xff]
    %v368 = vld [vmem:[#allocation9 + $0x178] sm:$0xff]
    %v369 = vld [vmem:[#allocation9 + $0x180] sm:$0xff]
    %v370 = vld [vmem:[#allocation9 + $0x188] sm:$0xff]
    %v371 = vld [vmem:[#allocation9 + $0x190] sm:$0xff]
    %v372 = vld [vmem:[#allocation9 + $0x198] sm:$0xff]
    %v373 = vld [vmem:[#allocation9 + $0x1a0] sm:$0xff]
    %v374 = vld [vmem:[#allocation9 + $0x1a8] sm:$0xff]
    %v375 = vld [vmem:[#allocation9 + $0x1b0] sm:$0xff]
    %v376 = vld [vmem:[#allocation9 + $0x1b8] sm:$0xff]
    %v377 = vld [vmem:[#allocation9 + $0x1c0] sm:$0xff]
    %v378 = vld [vmem:[#allocation9 + $0x1c8] sm:$0xff]
    %v379 = vld [vmem:[#allocation9 + $0x1d0] sm:$0xff]
    %v380 = vld [vmem:[#allocation9 + $0x1d8] sm:$0xff]
    %v381 = vld [vmem:[#allocation9 + $0x1e0] sm:$0xff]
    %v382 = vld [vmem:[#allocation9 + $0x1e8] sm:$0xff]
    %v383 = vld [vmem:[#allocation9 + $0x1f0] sm:$0xff]
    %v384 = vld [vmem:[#allocation9 + $0x1f8] sm:$0xff]
    %v385 = vld [vmem:[#allocation11] sm:$0xf]
    %v387 = vlaneseq
    %v388 = vshrl.u32 %v387, 7
    %v389 = vsub.s32 0, %v388
    %v390 = vrot.slane %v385, %v389
    %v391 = vlaneseq
    %v392 = vshrl.u32 %v391, 7
    %v393 = vsub.s32 1, %v392
    %v394 = vrot.slane %v385, %v393
    %v395 = vlaneseq
    %v396 = vshrl.u32 %v395, 7
    %v397 = vsub.s32 2, %v396
    %v398 = vrot.slane %v385, %v397
    %v399 = vlaneseq
    %v400 = vshrl.u32 %v399, 7
    %v401 = vsub.s32 3, %v400
    %v402 = vrot.slane %v385, %v401
    %v471 = vunpack.c.l.b16 %v321
    %v472 = vunpack.c.h.b16 %v321
    %v473 = vunpack.c.l.b16 %v322
    %v474 = vunpack.c.h.b16 %v322
    %v475 = vunpack.c.l.b16 %v323
    %v476 = vunpack.c.h.b16 %v323
    %v477 = vunpack.c.l.b16 %v324
    %v478 = vunpack.c.h.b16 %v324
    %v479 = vunpack.c.l.b16 %v325
    %v480 = vunpack.c.h.b16 %v325
    %v481 = vunpack.c.l.b16 %v326
    %v482 = vunpack.c.h.b16 %v326
    %v483 = vunpack.c.l.b16 %v327
    %v484 = vunpack.c.h.b16 %v327
    %v485 = vunpack.c.l.b16 %v328
    %v486 = vunpack.c.h.b16 %v328
    %v487 = vunpack.c.l.b16 %v329
    %v488 = vunpack.c.h.b16 %v329
    %v489 = vunpack.c.l.b16 %v330
    %v490 = vunpack.c.h.b16 %v330
    %v491 = vunpack.c.l.b16 %v331
    %v492 = vunpack.c.h.b16 %v331
    %v493 = vunpack.c.l.b16 %v332
    %v494 = vunpack.c.h.b16 %v332
    %v495 = vunpack.c.l.b16 %v333
    %v496 = vunpack.c.h.b16 %v333
    %v497 = vunpack.c.l.b16 %v334
    %v498 = vunpack.c.h.b16 %v334
    %v499 = vunpack.c.l.b16 %v335
    %v500 = vunpack.c.h.b16 %v335
    %v501 = vunpack.c.l.b16 %v336
    %v502 = vunpack.c.h.b16 %v336
    %v503 = vunpack.c.l.b16 %v337
    %v504 = vunpack.c.h.b16 %v337
    %v505 = vunpack.c.l.b16 %v338
    %v506 = vunpack.c.h.b16 %v338
    %v507 = vunpack.c.l.b16 %v339
    %v508 = vunpack.c.h.b16 %v339
    %v509 = vunpack.c.l.b16 %v340
    %v510 = vunpack.c.h.b16 %v340
    %v511 = vunpack.c.l.b16 %v341
    %v512 = vunpack.c.h.b16 %v341
    %v513 = vunpack.c.l.b16 %v342
    %v514 = vunpack.c.h.b16 %v342
    %v515 = vunpack.c.l.b16 %v343
    %v516 = vunpack.c.h.b16 %v343
    %v517 = vunpack.c.l.b16 %v344
    %v518 = vunpack.c.h.b16 %v344
    %v519 = vunpack.c.l.b16 %v345
    %v520 = vunpack.c.h.b16 %v345
    %v521 = vunpack.c.l.b16 %v346
    %v522 = vunpack.c.h.b16 %v346
    %v523 = vunpack.c.l.b16 %v347
    %v524 = vunpack.c.h.b16 %v347
    %v525 = vunpack.c.l.b16 %v348
    %v526 = vunpack.c.h.b16 %v348
    %v527 = vunpack.c.l.b16 %v349
    %v528 = vunpack.c.h.b16 %v349
    %v529 = vunpack.c.l.b16 %v350
    %v530 = vunpack.c.h.b16 %v350
    %v531 = vunpack.c.l.b16 %v351
    %v532 = vunpack.c.h.b16 %v351
    %v533 = vunpack.c.l.b16 %v352
    %v534 = vunpack.c.h.b16 %v352
    %v535 = vunpack.c.l.b16 %v353
    %v536 = vunpack.c.h.b16 %v353
    %v537 = vunpack.c.l.b16 %v354
    %v538 = vunpack.c.h.b16 %v354
    %v539 = vunpack.c.l.b16 %v355
    %v540 = vunpack.c.h.b16 %v355
    %v541 = vunpack.c.l.b16 %v356
    %v542 = vunpack.c.h.b16 %v356
    %v543 = vunpack.c.l.b16 %v357
    %v544 = vunpack.c.h.b16 %v357
    %v545 = vunpack.c.l.b16 %v358
    %v546 = vunpack.c.h.b16 %v358
    %v547 = vunpack.c.l.b16 %v359
    %v548 = vunpack.c.h.b16 %v359
    %v549 = vunpack.c.l.b16 %v360
    %v550 = vunpack.c.h.b16 %v360
    %v551 = vunpack.c.l.b16 %v361
    %v552 = vunpack.c.h.b16 %v361
    %v553 = vunpack.c.l.b16 %v362
    %v554 = vunpack.c.h.b16 %v362
    %v555 = vunpack.c.l.b16 %v363
    %v556 = vunpack.c.h.b16 %v363
    %v557 = vunpack.c.l.b16 %v364
    %v558 = vunpack.c.h.b16 %v364
    %v559 = vunpack.c.l.b16 %v365
    %v560 = vunpack.c.h.b16 %v365
    %v561 = vunpack.c.l.b16 %v366
    %v562 = vunpack.c.h.b16 %v366
    %v563 = vunpack.c.l.b16 %v367
    %v564 = vunpack.c.h.b16 %v367
    %v565 = vunpack.c.l.b16 %v368
    %v566 = vunpack.c.h.b16 %v368
    %v567 = vunpack.c.l.b16 %v369
    %v568 = vunpack.c.h.b16 %v369
    %v569 = vunpack.c.l.b16 %v370
    %v570 = vunpack.c.h.b16 %v370
    %v571 = vunpack.c.l.b16 %v371
    %v572 = vunpack.c.h.b16 %v371
    %v573 = vunpack.c.l.b16 %v372
    %v574 = vunpack.c.h.b16 %v372
    %v575 = vunpack.c.l.b16 %v373
    %v576 = vunpack.c.h.b16 %v373
    %v577 = vunpack.c.l.b16 %v374
    %v578 = vunpack.c.h.b16 %v374
    %v579 = vunpack.c.l.b16 %v375
    %v580 = vunpack.c.h.b16 %v375
    %v581 = vunpack.c.l.b16 %v376
    %v582 = vunpack.c.h.b16 %v376
    %v583 = vunpack.c.l.b16 %v377
    %v584 = vunpack.c.h.b16 %v377
    %v585 = vunpack.c.l.b16 %v378
    %v586 = vunpack.c.h.b16 %v378
    %v587 = vunpack.c.l.b16 %v379
    %v588 = vunpack.c.h.b16 %v379
    %v589 = vunpack.c.l.b16 %v380
    %v590 = vunpack.c.h.b16 %v380
    %v591 = vunpack.c.l.b16 %v381
    %v592 = vunpack.c.h.b16 %v381
    %v593 = vunpack.c.l.b16 %v382
    %v594 = vunpack.c.h.b16 %v382
    %v595 = vunpack.c.l.b16 %v383
    %v596 = vunpack.c.h.b16 %v383
    %v597 = vunpack.c.l.b16 %v384
    %v598 = vunpack.c.h.b16 %v384
    %v599 = vpack.c.b16 %v475, %v471
    %v600 = vpack.c.b16 %v476, %v472
    %v601 = vpack.c.b16 %v477, %v473
    %v602 = vpack.c.b16 %v478, %v474
    %v603 = vpack.c.b16 %v483, %v479
    %v604 = vpack.c.b16 %v484, %v480
    %v605 = vpack.c.b16 %v485, %v481
    %v606 = vpack.c.b16 %v486, %v482
    %v607 = vpack.c.b16 %v491, %v487
    %v608 = vpack.c.b16 %v492, %v488
    %v609 = vpack.c.b16 %v493, %v489
    %v610 = vpack.c.b16 %v494, %v490
    %v611 = vpack.c.b16 %v499, %v495
    %v612 = vpack.c.b16 %v500, %v496
    %v613 = vpack.c.b16 %v501, %v497
    %v614 = vpack.c.b16 %v502, %v498
    %v615 = vpack.c.b16 %v507, %v503
    %v616 = vpack.c.b16 %v508, %v504
    %v617 = vpack.c.b16 %v509, %v505
    %v618 = vpack.c.b16 %v510, %v506
    %v619 = vpack.c.b16 %v515, %v511
    %v620 = vpack.c.b16 %v516, %v512
    %v621 = vpack.c.b16 %v517, %v513
    %v622 = vpack.c.b16 %v518, %v514
    %v623 = vpack.c.b16 %v523, %v519
    %v624 = vpack.c.b16 %v524, %v520
    %v625 = vpack.c.b16 %v525, %v521
    %v626 = vpack.c.b16 %v526, %v522
    %v627 = vpack.c.b16 %v531, %v527
    %v628 = vpack.c.b16 %v532, %v528
    %v629 = vpack.c.b16 %v533, %v529
    %v630 = vpack.c.b16 %v534, %v530
    %v631 = vpack.c.b16 %v539, %v535
    %v632 = vpack.c.b16 %v540, %v536
    %v633 = vpack.c.b16 %v541, %v537
    %v634 = vpack.c.b16 %v542, %v538
    %v635 = vpack.c.b16 %v547, %v543
    %v636 = vpack.c.b16 %v548, %v544
    %v637 = vpack.c.b16 %v549, %v545
    %v638 = vpack.c.b16 %v550, %v546
    %v639 = vpack.c.b16 %v555, %v551
    %v640 = vpack.c.b16 %v556, %v552
    %v641 = vpack.c.b16 %v557, %v553
    %v642 = vpack.c.b16 %v558, %v554
    %v643 = vpack.c.b16 %v563, %v559
    %v644 = vpack.c.b16 %v564, %v560
    %v645 = vpack.c.b16 %v565, %v561
    %v646 = vpack.c.b16 %v566, %v562
    %v647 = vpack.c.b16 %v571, %v567
    %v648 = vpack.c.b16 %v572, %v568
    %v649 = vpack.c.b16 %v573, %v569
    %v650 = vpack.c.b16 %v574, %v570
    %v651 = vpack.c.b16 %v579, %v575
    %v652 = vpack.c.b16 %v580, %v576
    %v653 = vpack.c.b16 %v581, %v577
    %v654 = vpack.c.b16 %v582, %v578
    %v655 = vpack.c.b16 %v587, %v583
    %v656 = vpack.c.b16 %v588, %v584
    %v657 = vpack.c.b16 %v589, %v585
    %v658 = vpack.c.b16 %v590, %v586
    %v659 = vpack.c.b16 %v595, %v591
    %v660 = vpack.c.b16 %v596, %v592
    %v661 = vpack.c.b16 %v597, %v593
    %v662 = vpack.c.b16 %v598, %v594
    %727 = vmatprep.subr.bf16.mxu0 %v628
    %728 = vmatpush1.bf16.msra.mxu0 %v627
    %729 = vmatprep.subr.bf16.mxu0 %v624
    %730 = vmatpush1.bf16.msra.mxu0 %v623
    %731 = vmatprep.subr.bf16.mxu0 %v620
    %732 = vmatpush1.bf16.msra.mxu0 %v619
    %733 = vmatprep.subr.bf16.mxu0 %v616
    %734 = vmatpush1.bf16.msra.mxu0 %v615
    %735 = vmatprep.subr.bf16.mxu0 %v612
    %736 = vmatpush1.bf16.msra.mxu0 %v611
    %737 = vmatprep.subr.bf16.mxu0 %v608
    %738 = vmatpush1.bf16.msra.mxu0 %v607
    %739 = vmatprep.subr.bf16.mxu0 %v604
    %740 = vmatpush1.bf16.msra.mxu0 %v603
    %741 = vmatprep.subr.bf16.mxu0 %v600
    %742 = vmatpush1.bf16.msra.mxu0 %v599
    %743 = vmatprep.subr.bf16.mxu0 %v660
    %744 = vmatpush2.bf16.msra.mxu0 %v659
    %745 = vmatprep.subr.bf16.mxu0 %v656
    %746 = vmatpush2.bf16.msra.mxu0 %v655
    %747 = vmatprep.subr.bf16.mxu0 %v652
    %748 = vmatpush2.bf16.msra.mxu0 %v651
    %749 = vmatprep.subr.bf16.mxu0 %v648
    %750 = vmatpush2.bf16.msra.mxu0 %v647
    %751 = vmatprep.subr.bf16.mxu0 %v644
    %752 = vmatpush2.bf16.msra.mxu0 %v643
    %753 = vmatprep.subr.bf16.mxu0 %v640
    %754 = vmatpush2.bf16.msra.mxu0 %v639
    %755 = vmatprep.subr.bf16.mxu0 %v636
    %756 = vmatpush2.bf16.msra.mxu0 %v635
    %757 = vmatprep.subr.bf16.mxu0 %v632
    %758 = vmatpush2.bf16.msra.mxu0 %v631
    %759 = vmatprep.mubr.bf16.mxu0 %v320
    %760 = vmatmul.mubr.bf16.gmra.mxu0 %v319
    %v761 = vpop.f32.mrf.mxu0
    %v762 = vadd.f32 %v390, %v761
    %v763 = vpop.f32.mrf.mxu0
    %v764 = vadd.f32 %v394, %v763
    %v765 = vpop.f32.mrf.mxu0
    %v766 = vadd.f32 %v390, %v765
    %v767 = vpop.f32.mrf.mxu0
    %v768 = vadd.f32 %v394, %v767
    %769 = vdwg.mxu0
    %770 = vmatprep.subr.bf16.mxu0 %v630
    %771 = vmatpush1.bf16.msra.mxu0 %v629
    %772 = vmatprep.subr.bf16.mxu0 %v626
    %773 = vmatpush1.bf16.msra.mxu0 %v625
    %774 = vmatprep.subr.bf16.mxu0 %v622
    %775 = vmatpush1.bf16.msra.mxu0 %v621
    %776 = vmatprep.subr.bf16.mxu0 %v618
    %777 = vmatpush1.bf16.msra.mxu0 %v617
    %778 = vmatprep.subr.bf16.mxu0 %v614
    %779 = vmatpush1.bf16.msra.mxu0 %v613
    %780 = vmatprep.subr.bf16.mxu0 %v610
    %781 = vmatpush1.bf16.msra.mxu0 %v609
    %782 = vmatprep.subr.bf16.mxu0 %v606
    %783 = vmatpush1.bf16.msra.mxu0 %v605
    %784 = vmatprep.subr.bf16.mxu0 %v602
    %785 = vmatpush1.bf16.msra.mxu0 %v601
    %786 = vmatprep.subr.bf16.mxu0 %v662
    %787 = vmatpush2.bf16.msra.mxu0 %v661
    %788 = vmatprep.subr.bf16.mxu0 %v658
    %789 = vmatpush2.bf16.msra.mxu0 %v657
    %790 = vmatprep.subr.bf16.mxu0 %v654
    %791 = vmatpush2.bf16.msra.mxu0 %v653
    %792 = vmatprep.subr.bf16.mxu0 %v650
    %793 = vmatpush2.bf16.msra.mxu0 %v649
    %794 = vmatprep.subr.bf16.mxu0 %v646
    %795 = vmatpush2.bf16.msra.mxu0 %v645
    %796 = vmatprep.subr.bf16.mxu0 %v642
    %797 = vmatpush2.bf16.msra.mxu0 %v641
    %798 = vmatprep.subr.bf16.mxu0 %v638
    %799 = vmatpush2.bf16.msra.mxu0 %v637
    %800 = vmatprep.subr.bf16.mxu0 %v634
    %801 = vmatpush2.bf16.msra.mxu0 %v633
    %802 = vmatprep.mubr.bf16.mxu0 %v320
    %803 = vmatmul.mubr.bf16.gmra.mxu0 %v319
    %v804 = vpop.f32.mrf.mxu0
    %v805 = vadd.f32 %v398, %v804
    %v806 = vpop.f32.mrf.mxu0
    %v807 = vadd.f32 %v402, %v806
    %v808 = vpop.f32.mrf.mxu0
    %v809 = vadd.f32 %v398, %v808
    %v810 = vpop.f32.mrf.mxu0
    %v811 = vadd.f32 %v402, %v810
    %812 = vdwg.mxu0
    %v813 = vmax.f32 %v762, 0.0
    %v814 = vmax.f32 %v764, 0.0
    %v815 = vmax.f32 %v805, 0.0
    %v816 = vmax.f32 %v807, 0.0
    %v817 = vmax.f32 %v766, 0.0
    %v818 = vmax.f32 %v768, 0.0
    %v819 = vmax.f32 %v809, 0.0
    %v820 = vmax.f32 %v811, 0.0
    %v821 = vpack.c.bf16 %v817, %v813
    %v822 = vpack.c.bf16 %v818, %v814
    %v823 = vpack.c.bf16 %v819, %v815
    %v824 = vpack.c.bf16 %v820, %v816
    %v825 = vld [vmem:[#allocation12] sm:$0xff]
    %v826 = vld [vmem:[#allocation12 + $0x8] sm:$0xff]
    %v827 = vld [vmem:[#allocation12 + $0x10] sm:$0xff]
    %v828 = vld [vmem:[#allocation12 + $0x18] sm:$0xff]
    %v829 = vld [vmem:[#allocation12 + $0x20] sm:$0xff]
    %v830 = vld [vmem:[#allocation12 + $0x28] sm:$0xff]
    %v831 = vld [vmem:[#allocation12 + $0x30] sm:$0xff]
    %v832 = vld [vmem:[#allocation12 + $0x38] sm:$0xff]
    %v833 = vld [vmem:[#allocation12 + $0x40] sm:$0xff]
    %v834 = vld [vmem:[#allocation12 + $0x48] sm:$0xff]
    %v835 = vld [vmem:[#allocation12 + $0x50] sm:$0xff]
    %v836 = vld [vmem:[#allocation12 + $0x58] sm:$0xff]
    %v837 = vld [vmem:[#allocation12 + $0x60] sm:$0xff]
    %v838 = vld [vmem:[#allocation12 + $0x68] sm:$0xff]
    %v839 = vld [vmem:[#allocation12 + $0x70] sm:$0xff]
    %v840 = vld [vmem:[#allocation12 + $0x78] sm:$0xff]
    %v841 = vld [vmem:[#allocation12 + $0x80] sm:$0xff]
    %v842 = vld [vmem:[#allocation12 + $0x88] sm:$0xff]
    %v843 = vld [vmem:[#allocation12 + $0x90] sm:$0xff]
    %v844 = vld [vmem:[#allocation12 + $0x98] sm:$0xff]
    %v845 = vld [vmem:[#allocation12 + $0xa0] sm:$0xff]
    %v846 = vld [vmem:[#allocation12 + $0xa8] sm:$0xff]
    %v847 = vld [vmem:[#allocation12 + $0xb0] sm:$0xff]
    %v848 = vld [vmem:[#allocation12 + $0xb8] sm:$0xff]
    %v849 = vld [vmem:[#allocation12 + $0xc0] sm:$0xff]
    %v850 = vld [vmem:[#allocation12 + $0xc8] sm:$0xff]
    %v851 = vld [vmem:[#allocation12 + $0xd0] sm:$0xff]
    %v852 = vld [vmem:[#allocation12 + $0xd8] sm:$0xff]
    %v853 = vld [vmem:[#allocation12 + $0xe0] sm:$0xff]
    %v854 = vld [vmem:[#allocation12 + $0xe8] sm:$0xff]
    %v855 = vld [vmem:[#allocation12 + $0xf0] sm:$0xff]
    %v856 = vld [vmem:[#allocation12 + $0xf8] sm:$0xff]
    %v857 = vld [vmem:[#allocation12 + $0x100] sm:$0xff]
    %v858 = vld [vmem:[#allocation12 + $0x108] sm:$0xff]
    %v859 = vld [vmem:[#allocation12 + $0x110] sm:$0xff]
    %v860 = vld [vmem:[#allocation12 + $0x118] sm:$0xff]
    %v861 = vld [vmem:[#allocation12 + $0x120] sm:$0xff]
    %v862 = vld [vmem:[#allocation12 + $0x128] sm:$0xff]
    %v863 = vld [vmem:[#allocation12 + $0x130] sm:$0xff]
    %v864 = vld [vmem:[#allocation12 + $0x138] sm:$0xff]
    %v865 = vld [vmem:[#allocation12 + $0x140] sm:$0xff]
    %v866 = vld [vmem:[#allocation12 + $0x148] sm:$0xff]
    %v867 = vld [vmem:[#allocation12 + $0x150] sm:$0xff]
    %v868 = vld [vmem:[#allocation12 + $0x158] sm:$0xff]
    %v869 = vld [vmem:[#allocation12 + $0x160] sm:$0xff]
    %v870 = vld [vmem:[#allocation12 + $0x168] sm:$0xff]
    %v871 = vld [vmem:[#allocation12 + $0x170] sm:$0xff]
    %v872 = vld [vmem:[#allocation12 + $0x178] sm:$0xff]
    %v873 = vld [vmem:[#allocation12 + $0x180] sm:$0xff]
    %v874 = vld [vmem:[#allocation12 + $0x188] sm:$0xff]
    %v875 = vld [vmem:[#allocation12 + $0x190] sm:$0xff]
    %v876 = vld [vmem:[#allocation12 + $0x198] sm:$0xff]
    %v877 = vld [vmem:[#allocation12 + $0x1a0] sm:$0xff]
    %v878 = vld [vmem:[#allocation12 + $0x1a8] sm:$0xff]
    %v879 = vld [vmem:[#allocation12 + $0x1b0] sm:$0xff]
    %v880 = vld [vmem:[#allocation12 + $0x1b8] sm:$0xff]
    %v881 = vld [vmem:[#allocation12 + $0x1c0] sm:$0xff]
    %v882 = vld [vmem:[#allocation12 + $0x1c8] sm:$0xff]
    %v883 = vld [vmem:[#allocation12 + $0x1d0] sm:$0xff]
    %v884 = vld [vmem:[#allocation12 + $0x1d8] sm:$0xff]
    %v885 = vld [vmem:[#allocation12 + $0x1e0] sm:$0xff]
    %v886 = vld [vmem:[#allocation12 + $0x1e8] sm:$0xff]
    %v887 = vld [vmem:[#allocation12 + $0x1f0] sm:$0xff]
    %v888 = vld [vmem:[#allocation12 + $0x1f8] sm:$0xff]
    %v889 = vld [vmem:[#allocation12 + $0x200] sm:$0xff]
    %v890 = vld [vmem:[#allocation12 + $0x208] sm:$0xff]
    %v891 = vld [vmem:[#allocation12 + $0x210] sm:$0xff]
    %v892 = vld [vmem:[#allocation12 + $0x218] sm:$0xff]
    %v893 = vld [vmem:[#allocation12 + $0x220] sm:$0xff]
    %v894 = vld [vmem:[#allocation12 + $0x228] sm:$0xff]
    %v895 = vld [vmem:[#allocation12 + $0x230] sm:$0xff]
    %v896 = vld [vmem:[#allocation12 + $0x238] sm:$0xff]
    %v897 = vld [vmem:[#allocation12 + $0x240] sm:$0xff]
    %v898 = vld [vmem:[#allocation12 + $0x248] sm:$0xff]
    %v899 = vld [vmem:[#allocation12 + $0x250] sm:$0xff]
    %v900 = vld [vmem:[#allocation12 + $0x258] sm:$0xff]
    %v901 = vld [vmem:[#allocation12 + $0x260] sm:$0xff]
    %v902 = vld [vmem:[#allocation12 + $0x268] sm:$0xff]
    %v903 = vld [vmem:[#allocation12 + $0x270] sm:$0xff]
    %v904 = vld [vmem:[#allocation12 + $0x278] sm:$0xff]
    %v905 = vld [vmem:[#allocation12 + $0x280] sm:$0xff]
    %v906 = vld [vmem:[#allocation12 + $0x288] sm:$0xff]
    %v907 = vld [vmem:[#allocation12 + $0x290] sm:$0xff]
    %v908 = vld [vmem:[#allocation12 + $0x298] sm:$0xff]
    %v909 = vld [vmem:[#allocation12 + $0x2a0] sm:$0xff]
    %v910 = vld [vmem:[#allocation12 + $0x2a8] sm:$0xff]
    %v911 = vld [vmem:[#allocation12 + $0x2b0] sm:$0xff]
    %v912 = vld [vmem:[#allocation12 + $0x2b8] sm:$0xff]
    %v913 = vld [vmem:[#allocation12 + $0x2c0] sm:$0xff]
    %v914 = vld [vmem:[#allocation12 + $0x2c8] sm:$0xff]
    %v915 = vld [vmem:[#allocation12 + $0x2d0] sm:$0xff]
    %v916 = vld [vmem:[#allocation12 + $0x2d8] sm:$0xff]
    %v917 = vld [vmem:[#allocation12 + $0x2e0] sm:$0xff]
    %v918 = vld [vmem:[#allocation12 + $0x2e8] sm:$0xff]
    %v919 = vld [vmem:[#allocation12 + $0x2f0] sm:$0xff]
    %v920 = vld [vmem:[#allocation12 + $0x2f8] sm:$0xff]
    %v921 = vld [vmem:[#allocation12 + $0x300] sm:$0xff]
    %v922 = vld [vmem:[#allocation12 + $0x308] sm:$0xff]
    %v923 = vld [vmem:[#allocation12 + $0x310] sm:$0xff]
    %v924 = vld [vmem:[#allocation12 + $0x318] sm:$0xff]
    %v925 = vld [vmem:[#allocation12 + $0x320] sm:$0xff]
    %v926 = vld [vmem:[#allocation12 + $0x328] sm:$0xff]
    %v927 = vld [vmem:[#allocation12 + $0x330] sm:$0xff]
    %v928 = vld [vmem:[#allocation12 + $0x338] sm:$0xff]
    %v929 = vld [vmem:[#allocation12 + $0x340] sm:$0xff]
    %v930 = vld [vmem:[#allocation12 + $0x348] sm:$0xff]
    %v931 = vld [vmem:[#allocation12 + $0x350] sm:$0xff]
    %v932 = vld [vmem:[#allocation12 + $0x358] sm:$0xff]
    %v933 = vld [vmem:[#allocation12 + $0x360] sm:$0xff]
    %v934 = vld [vmem:[#allocation12 + $0x368] sm:$0xff]
    %v935 = vld [vmem:[#allocation12 + $0x370] sm:$0xff]
    %v936 = vld [vmem:[#allocation12 + $0x378] sm:$0xff]
    %v937 = vld [vmem:[#allocation12 + $0x380] sm:$0xff]
    %v938 = vld [vmem:[#allocation12 + $0x388] sm:$0xff]
    %v939 = vld [vmem:[#allocation12 + $0x390] sm:$0xff]
    %v940 = vld [vmem:[#allocation12 + $0x398] sm:$0xff]
    %v941 = vld [vmem:[#allocation12 + $0x3a0] sm:$0xff]
    %v942 = vld [vmem:[#allocation12 + $0x3a8] sm:$0xff]
    %v943 = vld [vmem:[#allocation12 + $0x3b0] sm:$0xff]
    %v944 = vld [vmem:[#allocation12 + $0x3b8] sm:$0xff]
    %v945 = vld [vmem:[#allocation12 + $0x3c0] sm:$0xff]
    %v946 = vld [vmem:[#allocation12 + $0x3c8] sm:$0xff]
    %v947 = vld [vmem:[#allocation12 + $0x3d0] sm:$0xff]
    %v948 = vld [vmem:[#allocation12 + $0x3d8] sm:$0xff]
    %v949 = vld [vmem:[#allocation12 + $0x3e0] sm:$0xff]
    %v950 = vld [vmem:[#allocation12 + $0x3e8] sm:$0xff]
    %v951 = vld [vmem:[#allocation12 + $0x3f0] sm:$0xff]
    %v952 = vld [vmem:[#allocation12 + $0x3f8] sm:$0xff]
    %v953 = vld [vmem:[#allocation12 + $0x400] sm:$0xff]
    %v954 = vld [vmem:[#allocation12 + $0x408] sm:$0xff]
    %v955 = vld [vmem:[#allocation12 + $0x410] sm:$0xff]
    %v956 = vld [vmem:[#allocation12 + $0x418] sm:$0xff]
    %v957 = vld [vmem:[#allocation12 + $0x420] sm:$0xff]
    %v958 = vld [vmem:[#allocation12 + $0x428] sm:$0xff]
    %v959 = vld [vmem:[#allocation12 + $0x430] sm:$0xff]
    %v960 = vld [vmem:[#allocation12 + $0x438] sm:$0xff]
    %v961 = vld [vmem:[#allocation12 + $0x440] sm:$0xff]
    %v962 = vld [vmem:[#allocation12 + $0x448] sm:$0xff]
    %v963 = vld [vmem:[#allocation12 + $0x450] sm:$0xff]
    %v964 = vld [vmem:[#allocation12 + $0x458] sm:$0xff]
    %v965 = vld [vmem:[#allocation12 + $0x460] sm:$0xff]
    %v966 = vld [vmem:[#allocation12 + $0x468] sm:$0xff]
    %v967 = vld [vmem:[#allocation12 + $0x470] sm:$0xff]
    %v968 = vld [vmem:[#allocation12 + $0x478] sm:$0xff]
    %v969 = vld [vmem:[#allocation12 + $0x480] sm:$0xff]
    %v970 = vld [vmem:[#allocation12 + $0x488] sm:$0xff]
    %v971 = vld [vmem:[#allocation12 + $0x490] sm:$0xff]
    %v972 = vld [vmem:[#allocation12 + $0x498] sm:$0xff]
    %v973 = vld [vmem:[#allocation12 + $0x4a0] sm:$0xff]
    %v974 = vld [vmem:[#allocation12 + $0x4a8] sm:$0xff]
    %v975 = vld [vmem:[#allocation12 + $0x4b0] sm:$0xff]
    %v976 = vld [vmem:[#allocation12 + $0x4b8] sm:$0xff]
    %v977 = vld [vmem:[#allocation12 + $0x4c0] sm:$0xff]
    %v978 = vld [vmem:[#allocation12 + $0x4c8] sm:$0xff]
    %v979 = vld [vmem:[#allocation12 + $0x4d0] sm:$0xff]
    %v980 = vld [vmem:[#allocation12 + $0x4d8] sm:$0xff]
    %v981 = vld [vmem:[#allocation12 + $0x4e0] sm:$0xff]
    %v982 = vld [vmem:[#allocation12 + $0x4e8] sm:$0xff]
    %v983 = vld [vmem:[#allocation12 + $0x4f0] sm:$0xff]
    %v984 = vld [vmem:[#allocation12 + $0x4f8] sm:$0xff]
    %v985 = vld [vmem:[#allocation12 + $0x500] sm:$0xff]
    %v986 = vld [vmem:[#allocation12 + $0x508] sm:$0xff]
    %v987 = vld [vmem:[#allocation12 + $0x510] sm:$0xff]
    %v988 = vld [vmem:[#allocation12 + $0x518] sm:$0xff]
    %v989 = vld [vmem:[#allocation12 + $0x520] sm:$0xff]
    %v990 = vld [vmem:[#allocation12 + $0x528] sm:$0xff]
    %v991 = vld [vmem:[#allocation12 + $0x530] sm:$0xff]
    %v992 = vld [vmem:[#allocation12 + $0x538] sm:$0xff]
    %v993 = vld [vmem:[#allocation12 + $0x540] sm:$0xff]
    %v994 = vld [vmem:[#allocation12 + $0x548] sm:$0xff]
    %v995 = vld [vmem:[#allocation12 + $0x550] sm:$0xff]
    %v996 = vld [vmem:[#allocation12 + $0x558] sm:$0xff]
    %v997 = vld [vmem:[#allocation12 + $0x560] sm:$0xff]
    %v998 = vld [vmem:[#allocation12 + $0x568] sm:$0xff]
    %v999 = vld [vmem:[#allocation12 + $0x570] sm:$0xff]
    %v1000 = vld [vmem:[#allocation12 + $0x578] sm:$0xff]
    %v1001 = vld [vmem:[#allocation12 + $0x580] sm:$0xff]
    %v1002 = vld [vmem:[#allocation12 + $0x588] sm:$0xff]
    %v1003 = vld [vmem:[#allocation12 + $0x590] sm:$0xff]
    %v1004 = vld [vmem:[#allocation12 + $0x598] sm:$0xff]
    %v1005 = vld [vmem:[#allocation12 + $0x5a0] sm:$0xff]
    %v1006 = vld [vmem:[#allocation12 + $0x5a8] sm:$0xff]
    %v1007 = vld [vmem:[#allocation12 + $0x5b0] sm:$0xff]
    %v1008 = vld [vmem:[#allocation12 + $0x5b8] sm:$0xff]
    %v1009 = vld [vmem:[#allocation12 + $0x5c0] sm:$0xff]
    %v1010 = vld [vmem:[#allocation12 + $0x5c8] sm:$0xff]
    %v1011 = vld [vmem:[#allocation12 + $0x5d0] sm:$0xff]
    %v1012 = vld [vmem:[#allocation12 + $0x5d8] sm:$0xff]
    %v1013 = vld [vmem:[#allocation12 + $0x5e0] sm:$0xff]
    %v1014 = vld [vmem:[#allocation12 + $0x5e8] sm:$0xff]
    %v1015 = vld [vmem:[#allocation12 + $0x5f0] sm:$0xff]
    %v1016 = vld [vmem:[#allocation12 + $0x5f8] sm:$0xff]
    %v1017 = vld [vmem:[#allocation12 + $0x600] sm:$0xff]
    %v1018 = vld [vmem:[#allocation12 + $0x608] sm:$0xff]
    %v1019 = vld [vmem:[#allocation12 + $0x610] sm:$0xff]
    %v1020 = vld [vmem:[#allocation12 + $0x618] sm:$0xff]
    %v1021 = vld [vmem:[#allocation12 + $0x620] sm:$0xff]
    %v1022 = vld [vmem:[#allocation12 + $0x628] sm:$0xff]
    %v1023 = vld [vmem:[#allocation12 + $0x630] sm:$0xff]
    %v1024 = vld [vmem:[#allocation12 + $0x638] sm:$0xff]
    %v1025 = vld [vmem:[#allocation12 + $0x640] sm:$0xff]
    %v1026 = vld [vmem:[#allocation12 + $0x648] sm:$0xff]
    %v1027 = vld [vmem:[#allocation12 + $0x650] sm:$0xff]
    %v1028 = vld [vmem:[#allocation12 + $0x658] sm:$0xff]
    %v1029 = vld [vmem:[#allocation12 + $0x660] sm:$0xff]
    %v1030 = vld [vmem:[#allocation12 + $0x668] sm:$0xff]
    %v1031 = vld [vmem:[#allocation12 + $0x670] sm:$0xff]
    %v1032 = vld [vmem:[#allocation12 + $0x678] sm:$0xff]
    %v1033 = vld [vmem:[#allocation12 + $0x680] sm:$0xff]
    %v1034 = vld [vmem:[#allocation12 + $0x688] sm:$0xff]
    %v1035 = vld [vmem:[#allocation12 + $0x690] sm:$0xff]
    %v1036 = vld [vmem:[#allocation12 + $0x698] sm:$0xff]
    %v1037 = vld [vmem:[#allocation12 + $0x6a0] sm:$0xff]
    %v1038 = vld [vmem:[#allocation12 + $0x6a8] sm:$0xff]
    %v1039 = vld [vmem:[#allocation12 + $0x6b0] sm:$0xff]
    %v1040 = vld [vmem:[#allocation12 + $0x6b8] sm:$0xff]
    %v1041 = vld [vmem:[#allocation12 + $0x6c0] sm:$0xff]
    %v1042 = vld [vmem:[#allocation12 + $0x6c8] sm:$0xff]
    %v1043 = vld [vmem:[#allocation12 + $0x6d0] sm:$0xff]
    %v1044 = vld [vmem:[#allocation12 + $0x6d8] sm:$0xff]
    %v1045 = vld [vmem:[#allocation12 + $0x6e0] sm:$0xff]
    %v1046 = vld [vmem:[#allocation12 + $0x6e8] sm:$0xff]
    %v1047 = vld [vmem:[#allocation12 + $0x6f0] sm:$0xff]
    %v1048 = vld [vmem:[#allocation12 + $0x6f8] sm:$0xff]
    %v1049 = vld [vmem:[#allocation12 + $0x700] sm:$0xff]
    %v1050 = vld [vmem:[#allocation12 + $0x708] sm:$0xff]
    %v1051 = vld [vmem:[#allocation12 + $0x710] sm:$0xff]
    %v1052 = vld [vmem:[#allocation12 + $0x718] sm:$0xff]
    %v1053 = vld [vmem:[#allocation12 + $0x720] sm:$0xff]
    %v1054 = vld [vmem:[#allocation12 + $0x728] sm:$0xff]
    %v1055 = vld [vmem:[#allocation12 + $0x730] sm:$0xff]
    %v1056 = vld [vmem:[#allocation12 + $0x738] sm:$0xff]
    %v1057 = vld [vmem:[#allocation12 + $0x740] sm:$0xff]
    %v1058 = vld [vmem:[#allocation12 + $0x748] sm:$0xff]
    %v1059 = vld [vmem:[#allocation12 + $0x750] sm:$0xff]
    %v1060 = vld [vmem:[#allocation12 + $0x758] sm:$0xff]
    %v1061 = vld [vmem:[#allocation12 + $0x760] sm:$0xff]
    %v1062 = vld [vmem:[#allocation12 + $0x768] sm:$0xff]
    %v1063 = vld [vmem:[#allocation12 + $0x770] sm:$0xff]
    %v1064 = vld [vmem:[#allocation12 + $0x778] sm:$0xff]
    %v1065 = vld [vmem:[#allocation12 + $0x780] sm:$0xff]
    %v1066 = vld [vmem:[#allocation12 + $0x788] sm:$0xff]
    %v1067 = vld [vmem:[#allocation12 + $0x790] sm:$0xff]
    %v1068 = vld [vmem:[#allocation12 + $0x798] sm:$0xff]
    %v1069 = vld [vmem:[#allocation12 + $0x7a0] sm:$0xff]
    %v1070 = vld [vmem:[#allocation12 + $0x7a8] sm:$0xff]
    %v1071 = vld [vmem:[#allocation12 + $0x7b0] sm:$0xff]
    %v1072 = vld [vmem:[#allocation12 + $0x7b8] sm:$0xff]
    %v1073 = vld [vmem:[#allocation12 + $0x7c0] sm:$0xff]
    %v1074 = vld [vmem:[#allocation12 + $0x7c8] sm:$0xff]
    %v1075 = vld [vmem:[#allocation12 + $0x7d0] sm:$0xff]
    %v1076 = vld [vmem:[#allocation12 + $0x7d8] sm:$0xff]
    %v1077 = vld [vmem:[#allocation12 + $0x7e0] sm:$0xff]
    %v1078 = vld [vmem:[#allocation12 + $0x7e8] sm:$0xff]
    %v1079 = vld [vmem:[#allocation12 + $0x7f0] sm:$0xff]
    %v1080 = vld [vmem:[#allocation12 + $0x7f8] sm:$0xff]
    %v1081 = vld [vmem:[#allocation14] sm:$0xff]
    %v1083 = vlaneseq
    %v1084 = vshrl.u32 %v1083, 7
    %v1085 = vsub.s32 0, %v1084
    %v1086 = vrot.slane %v1081, %v1085
    %v1087 = vlaneseq
    %v1088 = vshrl.u32 %v1087, 7
    %v1089 = vsub.s32 1, %v1088
    %v1090 = vrot.slane %v1081, %v1089
    %v1091 = vlaneseq
    %v1092 = vshrl.u32 %v1091, 7
    %v1093 = vsub.s32 2, %v1092
    %v1094 = vrot.slane %v1081, %v1093
    %v1095 = vlaneseq
    %v1096 = vshrl.u32 %v1095, 7
    %v1097 = vsub.s32 3, %v1096
    %v1098 = vrot.slane %v1081, %v1097
    %v1099 = vlaneseq
    %v1100 = vshrl.u32 %v1099, 7
    %v1101 = vsub.s32 4, %v1100
    %v1102 = vrot.slane %v1081, %v1101
    %v1103 = vlaneseq
    %v1104 = vshrl.u32 %v1103, 7
    %v1105 = vsub.s32 5, %v1104
    %v1106 = vrot.slane %v1081, %v1105
    %v1107 = vlaneseq
    %v1108 = vshrl.u32 %v1107, 7
    %v1109 = vsub.s32 6, %v1108
    %v1110 = vrot.slane %v1081, %v1109
    %v1111 = vlaneseq
    %v1112 = vshrl.u32 %v1111, 7
    %v1113 = vsub.s32 7, %v1112
    %v1114 = vrot.slane %v1081, %v1113
    %v1379 = vunpack.c.l.b16 %v825
    %v1380 = vunpack.c.h.b16 %v825
    %v1381 = vunpack.c.l.b16 %v826
    %v1382 = vunpack.c.h.b16 %v826
    %v1383 = vunpack.c.l.b16 %v827
    %v1384 = vunpack.c.h.b16 %v827
    %v1385 = vunpack.c.l.b16 %v828
    %v1386 = vunpack.c.h.b16 %v828
    %v1387 = vunpack.c.l.b16 %v829
    %v1388 = vunpack.c.h.b16 %v829
    %v1389 = vunpack.c.l.b16 %v830
    %v1390 = vunpack.c.h.b16 %v830
    %v1391 = vunpack.c.l.b16 %v831
    %v1392 = vunpack.c.h.b16 %v831
    %v1393 = vunpack.c.l.b16 %v832
    %v1394 = vunpack.c.h.b16 %v832
    %v1395 = vunpack.c.l.b16 %v833
    %v1396 = vunpack.c.h.b16 %v833
    %v1397 = vunpack.c.l.b16 %v834
    %v1398 = vunpack.c.h.b16 %v834
    %v1399 = vunpack.c.l.b16 %v835
    %v1400 = vunpack.c.h.b16 %v835
    %v1401 = vunpack.c.l.b16 %v836
    %v1402 = vunpack.c.h.b16 %v836
    %v1403 = vunpack.c.l.b16 %v837
    %v1404 = vunpack.c.h.b16 %v837
    %v1405 = vunpack.c.l.b16 %v838
    %v1406 = vunpack.c.h.b16 %v838
    %v1407 = vunpack.c.l.b16 %v839
    %v1408 = vunpack.c.h.b16 %v839
    %v1409 = vunpack.c.l.b16 %v840
    %v1410 = vunpack.c.h.b16 %v840
    %v1411 = vunpack.c.l.b16 %v841
    %v1412 = vunpack.c.h.b16 %v841
    %v1413 = vunpack.c.l.b16 %v842
    %v1414 = vunpack.c.h.b16 %v842
    %v1415 = vunpack.c.l.b16 %v843
    %v1416 = vunpack.c.h.b16 %v843
    %v1417 = vunpack.c.l.b16 %v844
    %v1418 = vunpack.c.h.b16 %v844
    %v1419 = vunpack.c.l.b16 %v845
    %v1420 = vunpack.c.h.b16 %v845
    %v1421 = vunpack.c.l.b16 %v846
    %v1422 = vunpack.c.h.b16 %v846
    %v1423 = vunpack.c.l.b16 %v847
    %v1424 = vunpack.c.h.b16 %v847
    %v1425 = vunpack.c.l.b16 %v848
    %v1426 = vunpack.c.h.b16 %v848
    %v1427 = vunpack.c.l.b16 %v849
    %v1428 = vunpack.c.h.b16 %v849
    %v1429 = vunpack.c.l.b16 %v850
    %v1430 = vunpack.c.h.b16 %v850
    %v1431 = vunpack.c.l.b16 %v851
    %v1432 = vunpack.c.h.b16 %v851
    %v1433 = vunpack.c.l.b16 %v852
    %v1434 = vunpack.c.h.b16 %v852
    %v1435 = vunpack.c.l.b16 %v853
    %v1436 = vunpack.c.h.b16 %v853
    %v1437 = vunpack.c.l.b16 %v854
    %v1438 = vunpack.c.h.b16 %v854
    %v1439 = vunpack.c.l.b16 %v855
    %v1440 = vunpack.c.h.b16 %v855
    %v1441 = vunpack.c.l.b16 %v856
    %v1442 = vunpack.c.h.b16 %v856
    %v1443 = vunpack.c.l.b16 %v857
    %v1444 = vunpack.c.h.b16 %v857
    %v1445 = vunpack.c.l.b16 %v858
    %v1446 = vunpack.c.h.b16 %v858
    %v1447 = vunpack.c.l.b16 %v859
    %v1448 = vunpack.c.h.b16 %v859
    %v1449 = vunpack.c.l.b16 %v860
    %v1450 = vunpack.c.h.b16 %v860
    %v1451 = vunpack.c.l.b16 %v861
    %v1452 = vunpack.c.h.b16 %v861
    %v1453 = vunpack.c.l.b16 %v862
    %v1454 = vunpack.c.h.b16 %v862
    %v1455 = vunpack.c.l.b16 %v863
    %v1456 = vunpack.c.h.b16 %v863
    %v1457 = vunpack.c.l.b16 %v864
    %v1458 = vunpack.c.h.b16 %v864
    %v1459 = vunpack.c.l.b16 %v865
    %v1460 = vunpack.c.h.b16 %v865
    %v1461 = vunpack.c.l.b16 %v866
    %v1462 = vunpack.c.h.b16 %v866
    %v1463 = vunpack.c.l.b16 %v867
    %v1464 = vunpack.c.h.b16 %v867
    %v1465 = vunpack.c.l.b16 %v868
    %v1466 = vunpack.c.h.b16 %v868
    %v1467 = vunpack.c.l.b16 %v869
    %v1468 = vunpack.c.h.b16 %v869
    %v1469 = vunpack.c.l.b16 %v870
    %v1470 = vunpack.c.h.b16 %v870
    %v1471 = vunpack.c.l.b16 %v871
    %v1472 = vunpack.c.h.b16 %v871
    %v1473 = vunpack.c.l.b16 %v872
    %v1474 = vunpack.c.h.b16 %v872
    %v1475 = vunpack.c.l.b16 %v873
    %v1476 = vunpack.c.h.b16 %v873
    %v1477 = vunpack.c.l.b16 %v874
    %v1478 = vunpack.c.h.b16 %v874
    %v1479 = vunpack.c.l.b16 %v875
    %v1480 = vunpack.c.h.b16 %v875
    %v1481 = vunpack.c.l.b16 %v876
    %v1482 = vunpack.c.h.b16 %v876
    %v1483 = vunpack.c.l.b16 %v877
    %v1484 = vunpack.c.h.b16 %v877
    %v1485 = vunpack.c.l.b16 %v878
    %v1486 = vunpack.c.h.b16 %v878
    %v1487 = vunpack.c.l.b16 %v879
    %v1488 = vunpack.c.h.b16 %v879
    %v1489 = vunpack.c.l.b16 %v880
    %v1490 = vunpack.c.h.b16 %v880
    %v1491 = vunpack.c.l.b16 %v881
    %v1492 = vunpack.c.h.b16 %v881
    %v1493 = vunpack.c.l.b16 %v882
    %v1494 = vunpack.c.h.b16 %v882
    %v1495 = vunpack.c.l.b16 %v883
    %v1496 = vunpack.c.h.b16 %v883
    %v1497 = vunpack.c.l.b16 %v884
    %v1498 = vunpack.c.h.b16 %v884
    %v1499 = vunpack.c.l.b16 %v885
    %v1500 = vunpack.c.h.b16 %v885
    %v1501 = vunpack.c.l.b16 %v886
    %v1502 = vunpack.c.h.b16 %v886
    %v1503 = vunpack.c.l.b16 %v887
    %v1504 = vunpack.c.h.b16 %v887
    %v1505 = vunpack.c.l.b16 %v888
    %v1506 = vunpack.c.h.b16 %v888
    %v1507 = vunpack.c.l.b16 %v889
    %v1508 = vunpack.c.h.b16 %v889
    %v1509 = vunpack.c.l.b16 %v890
    %v1510 = vunpack.c.h.b16 %v890
    %v1511 = vunpack.c.l.b16 %v891
    %v1512 = vunpack.c.h.b16 %v891
    %v1513 = vunpack.c.l.b16 %v892
    %v1514 = vunpack.c.h.b16 %v892
    %v1515 = vunpack.c.l.b16 %v893
    %v1516 = vunpack.c.h.b16 %v893
    %v1517 = vunpack.c.l.b16 %v894
    %v1518 = vunpack.c.h.b16 %v894
    %v1519 = vunpack.c.l.b16 %v895
    %v1520 = vunpack.c.h.b16 %v895
    %v1521 = vunpack.c.l.b16 %v896
    %v1522 = vunpack.c.h.b16 %v896
    %v1523 = vunpack.c.l.b16 %v897
    %v1524 = vunpack.c.h.b16 %v897
    %v1525 = vunpack.c.l.b16 %v898
    %v1526 = vunpack.c.h.b16 %v898
    %v1527 = vunpack.c.l.b16 %v899
    %v1528 = vunpack.c.h.b16 %v899
    %v1529 = vunpack.c.l.b16 %v900
    %v1530 = vunpack.c.h.b16 %v900
    %v1531 = vunpack.c.l.b16 %v901
    %v1532 = vunpack.c.h.b16 %v901
    %v1533 = vunpack.c.l.b16 %v902
    %v1534 = vunpack.c.h.b16 %v902
    %v1535 = vunpack.c.l.b16 %v903
    %v1536 = vunpack.c.h.b16 %v903
    %v1537 = vunpack.c.l.b16 %v904
    %v1538 = vunpack.c.h.b16 %v904
    %v1539 = vunpack.c.l.b16 %v905
    %v1540 = vunpack.c.h.b16 %v905
    %v1541 = vunpack.c.l.b16 %v906
    %v1542 = vunpack.c.h.b16 %v906
    %v1543 = vunpack.c.l.b16 %v907
    %v1544 = vunpack.c.h.b16 %v907
    %v1545 = vunpack.c.l.b16 %v908
    %v1546 = vunpack.c.h.b16 %v908
    %v1547 = vunpack.c.l.b16 %v909
    %v1548 = vunpack.c.h.b16 %v909
    %v1549 = vunpack.c.l.b16 %v910
    %v1550 = vunpack.c.h.b16 %v910
    %v1551 = vunpack.c.l.b16 %v911
    %v1552 = vunpack.c.h.b16 %v911
    %v1553 = vunpack.c.l.b16 %v912
    %v1554 = vunpack.c.h.b16 %v912
    %v1555 = vunpack.c.l.b16 %v913
    %v1556 = vunpack.c.h.b16 %v913
    %v1557 = vunpack.c.l.b16 %v914
    %v1558 = vunpack.c.h.b16 %v914
    %v1559 = vunpack.c.l.b16 %v915
    %v1560 = vunpack.c.h.b16 %v915
    %v1561 = vunpack.c.l.b16 %v916
    %v1562 = vunpack.c.h.b16 %v916
    %v1563 = vunpack.c.l.b16 %v917
    %v1564 = vunpack.c.h.b16 %v917
    %v1565 = vunpack.c.l.b16 %v918
    %v1566 = vunpack.c.h.b16 %v918
    %v1567 = vunpack.c.l.b16 %v919
    %v1568 = vunpack.c.h.b16 %v919
    %v1569 = vunpack.c.l.b16 %v920
    %v1570 = vunpack.c.h.b16 %v920
    %v1571 = vunpack.c.l.b16 %v921
    %v1572 = vunpack.c.h.b16 %v921
    %v1573 = vunpack.c.l.b16 %v922
    %v1574 = vunpack.c.h.b16 %v922
    %v1575 = vunpack.c.l.b16 %v923
    %v1576 = vunpack.c.h.b16 %v923
    %v1577 = vunpack.c.l.b16 %v924
    %v1578 = vunpack.c.h.b16 %v924
    %v1579 = vunpack.c.l.b16 %v925
    %v1580 = vunpack.c.h.b16 %v925
    %v1581 = vunpack.c.l.b16 %v926
    %v1582 = vunpack.c.h.b16 %v926
    %v1583 = vunpack.c.l.b16 %v927
    %v1584 = vunpack.c.h.b16 %v927
    %v1585 = vunpack.c.l.b16 %v928
    %v1586 = vunpack.c.h.b16 %v928
    %v1587 = vunpack.c.l.b16 %v929
    %v1588 = vunpack.c.h.b16 %v929
    %v1589 = vunpack.c.l.b16 %v930
    %v1590 = vunpack.c.h.b16 %v930
    %v1591 = vunpack.c.l.b16 %v931
    %v1592 = vunpack.c.h.b16 %v931
    %v1593 = vunpack.c.l.b16 %v932
    %v1594 = vunpack.c.h.b16 %v932
    %v1595 = vunpack.c.l.b16 %v933
    %v1596 = vunpack.c.h.b16 %v933
    %v1597 = vunpack.c.l.b16 %v934
    %v1598 = vunpack.c.h.b16 %v934
    %v1599 = vunpack.c.l.b16 %v935
    %v1600 = vunpack.c.h.b16 %v935
    %v1601 = vunpack.c.l.b16 %v936
    %v1602 = vunpack.c.h.b16 %v936
    %v1603 = vunpack.c.l.b16 %v937
    %v1604 = vunpack.c.h.b16 %v937
    %v1605 = vunpack.c.l.b16 %v938
    %v1606 = vunpack.c.h.b16 %v938
    %v1607 = vunpack.c.l.b16 %v939
    %v1608 = vunpack.c.h.b16 %v939
    %v1609 = vunpack.c.l.b16 %v940
    %v1610 = vunpack.c.h.b16 %v940
    %v1611 = vunpack.c.l.b16 %v941
    %v1612 = vunpack.c.h.b16 %v941
    %v1613 = vunpack.c.l.b16 %v942
    %v1614 = vunpack.c.h.b16 %v942
    %v1615 = vunpack.c.l.b16 %v943
    %v1616 = vunpack.c.h.b16 %v943
    %v1617 = vunpack.c.l.b16 %v944
    %v1618 = vunpack.c.h.b16 %v944
    %v1619 = vunpack.c.l.b16 %v945
    %v1620 = vunpack.c.h.b16 %v945
    %v1621 = vunpack.c.l.b16 %v946
    %v1622 = vunpack.c.h.b16 %v946
    %v1623 = vunpack.c.l.b16 %v947
    %v1624 = vunpack.c.h.b16 %v947
    %v1625 = vunpack.c.l.b16 %v948
    %v1626 = vunpack.c.h.b16 %v948
    %v1627 = vunpack.c.l.b16 %v949
    %v1628 = vunpack.c.h.b16 %v949
    %v1629 = vunpack.c.l.b16 %v950
    %v1630 = vunpack.c.h.b16 %v950
    %v1631 = vunpack.c.l.b16 %v951
    %v1632 = vunpack.c.h.b16 %v951
    %v1633 = vunpack.c.l.b16 %v952
    %v1634 = vunpack.c.h.b16 %v952
    %v1635 = vunpack.c.l.b16 %v953
    %v1636 = vunpack.c.h.b16 %v953
    %v1637 = vunpack.c.l.b16 %v954
    %v1638 = vunpack.c.h.b16 %v954
    %v1639 = vunpack.c.l.b16 %v955
    %v1640 = vunpack.c.h.b16 %v955
    %v1641 = vunpack.c.l.b16 %v956
    %v1642 = vunpack.c.h.b16 %v956
    %v1643 = vunpack.c.l.b16 %v957
    %v1644 = vunpack.c.h.b16 %v957
    %v1645 = vunpack.c.l.b16 %v958
    %v1646 = vunpack.c.h.b16 %v958
    %v1647 = vunpack.c.l.b16 %v959
    %v1648 = vunpack.c.h.b16 %v959
    %v1649 = vunpack.c.l.b16 %v960
    %v1650 = vunpack.c.h.b16 %v960
    %v1651 = vunpack.c.l.b16 %v961
    %v1652 = vunpack.c.h.b16 %v961
    %v1653 = vunpack.c.l.b16 %v962
    %v1654 = vunpack.c.h.b16 %v962
    %v1655 = vunpack.c.l.b16 %v963
    %v1656 = vunpack.c.h.b16 %v963
    %v1657 = vunpack.c.l.b16 %v964
    %v1658 = vunpack.c.h.b16 %v964
    %v1659 = vunpack.c.l.b16 %v965
    %v1660 = vunpack.c.h.b16 %v965
    %v1661 = vunpack.c.l.b16 %v966
    %v1662 = vunpack.c.h.b16 %v966
    %v1663 = vunpack.c.l.b16 %v967
    %v1664 = vunpack.c.h.b16 %v967
    %v1665 = vunpack.c.l.b16 %v968
    %v1666 = vunpack.c.h.b16 %v968
    %v1667 = vunpack.c.l.b16 %v969
    %v1668 = vunpack.c.h.b16 %v969
    %v1669 = vunpack.c.l.b16 %v970
    %v1670 = vunpack.c.h.b16 %v970
    %v1671 = vunpack.c.l.b16 %v971
    %v1672 = vunpack.c.h.b16 %v971
    %v1673 = vunpack.c.l.b16 %v972
    %v1674 = vunpack.c.h.b16 %v972
    %v1675 = vunpack.c.l.b16 %v973
    %v1676 = vunpack.c.h.b16 %v973
    %v1677 = vunpack.c.l.b16 %v974
    %v1678 = vunpack.c.h.b16 %v974
    %v1679 = vunpack.c.l.b16 %v975
    %v1680 = vunpack.c.h.b16 %v975
    %v1681 = vunpack.c.l.b16 %v976
    %v1682 = vunpack.c.h.b16 %v976
    %v1683 = vunpack.c.l.b16 %v977
    %v1684 = vunpack.c.h.b16 %v977
    %v1685 = vunpack.c.l.b16 %v978
    %v1686 = vunpack.c.h.b16 %v978
    %v1687 = vunpack.c.l.b16 %v979
    %v1688 = vunpack.c.h.b16 %v979
    %v1689 = vunpack.c.l.b16 %v980
    %v1690 = vunpack.c.h.b16 %v980
    %v1691 = vunpack.c.l.b16 %v981
    %v1692 = vunpack.c.h.b16 %v981
    %v1693 = vunpack.c.l.b16 %v982
    %v1694 = vunpack.c.h.b16 %v982
    %v1695 = vunpack.c.l.b16 %v983
    %v1696 = vunpack.c.h.b16 %v983
    %v1697 = vunpack.c.l.b16 %v984
    %v1698 = vunpack.c.h.b16 %v984
    %v1699 = vunpack.c.l.b16 %v985
    %v1700 = vunpack.c.h.b16 %v985
    %v1701 = vunpack.c.l.b16 %v986
    %v1702 = vunpack.c.h.b16 %v986
    %v1703 = vunpack.c.l.b16 %v987
    %v1704 = vunpack.c.h.b16 %v987
    %v1705 = vunpack.c.l.b16 %v988
    %v1706 = vunpack.c.h.b16 %v988
    %v1707 = vunpack.c.l.b16 %v989
    %v1708 = vunpack.c.h.b16 %v989
    %v1709 = vunpack.c.l.b16 %v990
    %v1710 = vunpack.c.h.b16 %v990
    %v1711 = vunpack.c.l.b16 %v991
    %v1712 = vunpack.c.h.b16 %v991
    %v1713 = vunpack.c.l.b16 %v992
    %v1714 = vunpack.c.h.b16 %v992
    %v1715 = vunpack.c.l.b16 %v993
    %v1716 = vunpack.c.h.b16 %v993
    %v1717 = vunpack.c.l.b16 %v994
    %v1718 = vunpack.c.h.b16 %v994
    %v1719 = vunpack.c.l.b16 %v995
    %v1720 = vunpack.c.h.b16 %v995
    %v1721 = vunpack.c.l.b16 %v996
    %v1722 = vunpack.c.h.b16 %v996
    %v1723 = vunpack.c.l.b16 %v997
    %v1724 = vunpack.c.h.b16 %v997
    %v1725 = vunpack.c.l.b16 %v998
    %v1726 = vunpack.c.h.b16 %v998
    %v1727 = vunpack.c.l.b16 %v999
    %v1728 = vunpack.c.h.b16 %v999
    %v1729 = vunpack.c.l.b16 %v1000
    %v1730 = vunpack.c.h.b16 %v1000
    %v1731 = vunpack.c.l.b16 %v1001
    %v1732 = vunpack.c.h.b16 %v1001
    %v1733 = vunpack.c.l.b16 %v1002
    %v1734 = vunpack.c.h.b16 %v1002
    %v1735 = vunpack.c.l.b16 %v1003
    %v1736 = vunpack.c.h.b16 %v1003
    %v1737 = vunpack.c.l.b16 %v1004
    %v1738 = vunpack.c.h.b16 %v1004
    %v1739 = vunpack.c.l.b16 %v1005
    %v1740 = vunpack.c.h.b16 %v1005
    %v1741 = vunpack.c.l.b16 %v1006
    %v1742 = vunpack.c.h.b16 %v1006
    %v1743 = vunpack.c.l.b16 %v1007
    %v1744 = vunpack.c.h.b16 %v1007
    %v1745 = vunpack.c.l.b16 %v1008
    %v1746 = vunpack.c.h.b16 %v1008
    %v1747 = vunpack.c.l.b16 %v1009
    %v1748 = vunpack.c.h.b16 %v1009
    %v1749 = vunpack.c.l.b16 %v1010
    %v1750 = vunpack.c.h.b16 %v1010
    %v1751 = vunpack.c.l.b16 %v1011
    %v1752 = vunpack.c.h.b16 %v1011
    %v1753 = vunpack.c.l.b16 %v1012
    %v1754 = vunpack.c.h.b16 %v1012
    %v1755 = vunpack.c.l.b16 %v1013
    %v1756 = vunpack.c.h.b16 %v1013
    %v1757 = vunpack.c.l.b16 %v1014
    %v1758 = vunpack.c.h.b16 %v1014
    %v1759 = vunpack.c.l.b16 %v1015
    %v1760 = vunpack.c.h.b16 %v1015
    %v1761 = vunpack.c.l.b16 %v1016
    %v1762 = vunpack.c.h.b16 %v1016
    %v1763 = vunpack.c.l.b16 %v1017
    %v1764 = vunpack.c.h.b16 %v1017
    %v1765 = vunpack.c.l.b16 %v1018
    %v1766 = vunpack.c.h.b16 %v1018
    %v1767 = vunpack.c.l.b16 %v1019
    %v1768 = vunpack.c.h.b16 %v1019
    %v1769 = vunpack.c.l.b16 %v1020
    %v1770 = vunpack.c.h.b16 %v1020
    %v1771 = vunpack.c.l.b16 %v1021
    %v1772 = vunpack.c.h.b16 %v1021
    %v1773 = vunpack.c.l.b16 %v1022
    %v1774 = vunpack.c.h.b16 %v1022
    %v1775 = vunpack.c.l.b16 %v1023
    %v1776 = vunpack.c.h.b16 %v1023
    %v1777 = vunpack.c.l.b16 %v1024
    %v1778 = vunpack.c.h.b16 %v1024
    %v1779 = vunpack.c.l.b16 %v1025
    %v1780 = vunpack.c.h.b16 %v1025
    %v1781 = vunpack.c.l.b16 %v1026
    %v1782 = vunpack.c.h.b16 %v1026
    %v1783 = vunpack.c.l.b16 %v1027
    %v1784 = vunpack.c.h.b16 %v1027
    %v1785 = vunpack.c.l.b16 %v1028
    %v1786 = vunpack.c.h.b16 %v1028
    %v1787 = vunpack.c.l.b16 %v1029
    %v1788 = vunpack.c.h.b16 %v1029
    %v1789 = vunpack.c.l.b16 %v1030
    %v1790 = vunpack.c.h.b16 %v1030
    %v1791 = vunpack.c.l.b16 %v1031
    %v1792 = vunpack.c.h.b16 %v1031
    %v1793 = vunpack.c.l.b16 %v1032
    %v1794 = vunpack.c.h.b16 %v1032
    %v1795 = vunpack.c.l.b16 %v1033
    %v1796 = vunpack.c.h.b16 %v1033
    %v1797 = vunpack.c.l.b16 %v1034
    %v1798 = vunpack.c.h.b16 %v1034
    %v1799 = vunpack.c.l.b16 %v1035
    %v1800 = vunpack.c.h.b16 %v1035
    %v1801 = vunpack.c.l.b16 %v1036
    %v1802 = vunpack.c.h.b16 %v1036
    %v1803 = vunpack.c.l.b16 %v1037
    %v1804 = vunpack.c.h.b16 %v1037
    %v1805 = vunpack.c.l.b16 %v1038
    %v1806 = vunpack.c.h.b16 %v1038
    %v1807 = vunpack.c.l.b16 %v1039
    %v1808 = vunpack.c.h.b16 %v1039
    %v1809 = vunpack.c.l.b16 %v1040
    %v1810 = vunpack.c.h.b16 %v1040
    %v1811 = vunpack.c.l.b16 %v1041
    %v1812 = vunpack.c.h.b16 %v1041
    %v1813 = vunpack.c.l.b16 %v1042
    %v1814 = vunpack.c.h.b16 %v1042
    %v1815 = vunpack.c.l.b16 %v1043
    %v1816 = vunpack.c.h.b16 %v1043
    %v1817 = vunpack.c.l.b16 %v1044
    %v1818 = vunpack.c.h.b16 %v1044
    %v1819 = vunpack.c.l.b16 %v1045
    %v1820 = vunpack.c.h.b16 %v1045
    %v1821 = vunpack.c.l.b16 %v1046
    %v1822 = vunpack.c.h.b16 %v1046
    %v1823 = vunpack.c.l.b16 %v1047
    %v1824 = vunpack.c.h.b16 %v1047
    %v1825 = vunpack.c.l.b16 %v1048
    %v1826 = vunpack.c.h.b16 %v1048
    %v1827 = vunpack.c.l.b16 %v1049
    %v1828 = vunpack.c.h.b16 %v1049
    %v1829 = vunpack.c.l.b16 %v1050
    %v1830 = vunpack.c.h.b16 %v1050
    %v1831 = vunpack.c.l.b16 %v1051
    %v1832 = vunpack.c.h.b16 %v1051
    %v1833 = vunpack.c.l.b16 %v1052
    %v1834 = vunpack.c.h.b16 %v1052
    %v1835 = vunpack.c.l.b16 %v1053
    %v1836 = vunpack.c.h.b16 %v1053
    %v1837 = vunpack.c.l.b16 %v1054
    %v1838 = vunpack.c.h.b16 %v1054
    %v1839 = vunpack.c.l.b16 %v1055
    %v1840 = vunpack.c.h.b16 %v1055
    %v1841 = vunpack.c.l.b16 %v1056
    %v1842 = vunpack.c.h.b16 %v1056
    %v1843 = vunpack.c.l.b16 %v1057
    %v1844 = vunpack.c.h.b16 %v1057
    %v1845 = vunpack.c.l.b16 %v1058
    %v1846 = vunpack.c.h.b16 %v1058
    %v1847 = vunpack.c.l.b16 %v1059
    %v1848 = vunpack.c.h.b16 %v1059
    %v1849 = vunpack.c.l.b16 %v1060
    %v1850 = vunpack.c.h.b16 %v1060
    %v1851 = vunpack.c.l.b16 %v1061
    %v1852 = vunpack.c.h.b16 %v1061
    %v1853 = vunpack.c.l.b16 %v1062
    %v1854 = vunpack.c.h.b16 %v1062
    %v1855 = vunpack.c.l.b16 %v1063
    %v1856 = vunpack.c.h.b16 %v1063
    %v1857 = vunpack.c.l.b16 %v1064
    %v1858 = vunpack.c.h.b16 %v1064
    %v1859 = vunpack.c.l.b16 %v1065
    %v1860 = vunpack.c.h.b16 %v1065
    %v1861 = vunpack.c.l.b16 %v1066
    %v1862 = vunpack.c.h.b16 %v1066
    %v1863 = vunpack.c.l.b16 %v1067
    %v1864 = vunpack.c.h.b16 %v1067
    %v1865 = vunpack.c.l.b16 %v1068
    %v1866 = vunpack.c.h.b16 %v1068
    %v1867 = vunpack.c.l.b16 %v1069
    %v1868 = vunpack.c.h.b16 %v1069
    %v1869 = vunpack.c.l.b16 %v1070
    %v1870 = vunpack.c.h.b16 %v1070
    %v1871 = vunpack.c.l.b16 %v1071
    %v1872 = vunpack.c.h.b16 %v1071
    %v1873 = vunpack.c.l.b16 %v1072
    %v1874 = vunpack.c.h.b16 %v1072
    %v1875 = vunpack.c.l.b16 %v1073
    %v1876 = vunpack.c.h.b16 %v1073
    %v1877 = vunpack.c.l.b16 %v1074
    %v1878 = vunpack.c.h.b16 %v1074
    %v1879 = vunpack.c.l.b16 %v1075
    %v1880 = vunpack.c.h.b16 %v1075
    %v1881 = vunpack.c.l.b16 %v1076
    %v1882 = vunpack.c.h.b16 %v1076
    %v1883 = vunpack.c.l.b16 %v1077
    %v1884 = vunpack.c.h.b16 %v1077
    %v1885 = vunpack.c.l.b16 %v1078
    %v1886 = vunpack.c.h.b16 %v1078
    %v1887 = vunpack.c.l.b16 %v1079
    %v1888 = vunpack.c.h.b16 %v1079
    %v1889 = vunpack.c.l.b16 %v1080
    %v1890 = vunpack.c.h.b16 %v1080
    %v1891 = vpack.c.b16 %v1387, %v1379
    %v1892 = vpack.c.b16 %v1388, %v1380
    %v1893 = vpack.c.b16 %v1389, %v1381
    %v1894 = vpack.c.b16 %v1390, %v1382
    %v1895 = vpack.c.b16 %v1391, %v1383
    %v1896 = vpack.c.b16 %v1392, %v1384
    %v1897 = vpack.c.b16 %v1393, %v1385
    %v1898 = vpack.c.b16 %v1394, %v1386
    %v1899 = vpack.c.b16 %v1403, %v1395
    %v1900 = vpack.c.b16 %v1404, %v1396
    %v1901 = vpack.c.b16 %v1405, %v1397
    %v1902 = vpack.c.b16 %v1406, %v1398
    %v1903 = vpack.c.b16 %v1407, %v1399
    %v1904 = vpack.c.b16 %v1408, %v1400
    %v1905 = vpack.c.b16 %v1409, %v1401
    %v1906 = vpack.c.b16 %v1410, %v1402
    %v1907 = vpack.c.b16 %v1419, %v1411
    %v1908 = vpack.c.b16 %v1420, %v1412
    %v1909 = vpack.c.b16 %v1421, %v1413
    %v1910 = vpack.c.b16 %v1422, %v1414
    %v1911 = vpack.c.b16 %v1423, %v1415
    %v1912 = vpack.c.b16 %v1424, %v1416
    %v1913 = vpack.c.b16 %v1425, %v1417
    %v1914 = vpack.c.b16 %v1426, %v1418
    %v1915 = vpack.c.b16 %v1435, %v1427
    %v1916 = vpack.c.b16 %v1436, %v1428
    %v1917 = vpack.c.b16 %v1437, %v1429
    %v1918 = vpack.c.b16 %v1438, %v1430
    %v1919 = vpack.c.b16 %v1439, %v1431
    %v1920 = vpack.c.b16 %v1440, %v1432
    %v1921 = vpack.c.b16 %v1441, %v1433
    %v1922 = vpack.c.b16 %v1442, %v1434
    %v1923 = vpack.c.b16 %v1451, %v1443
    %v1924 = vpack.c.b16 %v1452, %v1444
    %v1925 = vpack.c.b16 %v1453, %v1445
    %v1926 = vpack.c.b16 %v1454, %v1446
    %v1927 = vpack.c.b16 %v1455, %v1447
    %v1928 = vpack.c.b16 %v1456, %v1448
    %v1929 = vpack.c.b16 %v1457, %v1449
    %v1930 = vpack.c.b16 %v1458, %v1450
    %v1931 = vpack.c.b16 %v1467, %v1459
    %v1932 = vpack.c.b16 %v1468, %v1460
    %v1933 = vpack.c.b16 %v1469, %v1461
    %v1934 = vpack.c.b16 %v1470, %v1462
    %v1935 = vpack.c.b16 %v1471, %v1463
    %v1936 = vpack.c.b16 %v1472, %v1464
    %v1937 = vpack.c.b16 %v1473, %v1465
    %v1938 = vpack.c.b16 %v1474, %v1466
    %v1939 = vpack.c.b16 %v1483, %v1475
    %v1940 = vpack.c.b16 %v1484, %v1476
    %v1941 = vpack.c.b16 %v1485, %v1477
    %v1942 = vpack.c.b16 %v1486, %v1478
    %v1943 = vpack.c.b16 %v1487, %v1479
    %v1944 = vpack.c.b16 %v1488, %v1480
    %v1945 = vpack.c.b16 %v1489, %v1481
    %v1946 = vpack.c.b16 %v1490, %v1482
    %v1947 = vpack.c.b16 %v1499, %v1491
    %v1948 = vpack.c.b16 %v1500, %v1492
    %v1949 = vpack.c.b16 %v1501, %v1493
    %v1950 = vpack.c.b16 %v1502, %v1494
    %v1951 = vpack.c.b16 %v1503, %v1495
    %v1952 = vpack.c.b16 %v1504, %v1496
    %v1953 = vpack.c.b16 %v1505, %v1497
    %v1954 = vpack.c.b16 %v1506, %v1498
    %v1955 = vpack.c.b16 %v1515, %v1507
    %v1956 = vpack.c.b16 %v1516, %v1508
    %v1957 = vpack.c.b16 %v1517, %v1509
    %v1958 = vpack.c.b16 %v1518, %v1510
    %v1959 = vpack.c.b16 %v1519, %v1511
    %v1960 = vpack.c.b16 %v1520, %v1512
    %v1961 = vpack.c.b16 %v1521, %v1513
    %v1962 = vpack.c.b16 %v1522, %v1514
    %v1963 = vpack.c.b16 %v1531, %v1523
    %v1964 = vpack.c.b16 %v1532, %v1524
    %v1965 = vpack.c.b16 %v1533, %v1525
    %v1966 = vpack.c.b16 %v1534, %v1526
    %v1967 = vpack.c.b16 %v1535, %v1527
    %v1968 = vpack.c.b16 %v1536, %v1528
    %v1969 = vpack.c.b16 %v1537, %v1529
    %v1970 = vpack.c.b16 %v1538, %v1530
    %v1971 = vpack.c.b16 %v1547, %v1539
    %v1972 = vpack.c.b16 %v1548, %v1540
    %v1973 = vpack.c.b16 %v1549, %v1541
    %v1974 = vpack.c.b16 %v1550, %v1542
    %v1975 = vpack.c.b16 %v1551, %v1543
    %v1976 = vpack.c.b16 %v1552, %v1544
    %v1977 = vpack.c.b16 %v1553, %v1545
    %v1978 = vpack.c.b16 %v1554, %v1546
    %v1979 = vpack.c.b16 %v1563, %v1555
    %v1980 = vpack.c.b16 %v1564, %v1556
    %v1981 = vpack.c.b16 %v1565, %v1557
    %v1982 = vpack.c.b16 %v1566, %v1558
    %v1983 = vpack.c.b16 %v1567, %v1559
    %v1984 = vpack.c.b16 %v1568, %v1560
    %v1985 = vpack.c.b16 %v1569, %v1561
    %v1986 = vpack.c.b16 %v1570, %v1562
    %v1987 = vpack.c.b16 %v1579, %v1571
    %v1988 = vpack.c.b16 %v1580, %v1572
    %v1989 = vpack.c.b16 %v1581, %v1573
    %v1990 = vpack.c.b16 %v1582, %v1574
    %v1991 = vpack.c.b16 %v1583, %v1575
    %v1992 = vpack.c.b16 %v1584, %v1576
    %v1993 = vpack.c.b16 %v1585, %v1577
    %v1994 = vpack.c.b16 %v1586, %v1578
    %v1995 = vpack.c.b16 %v1595, %v1587
    %v1996 = vpack.c.b16 %v1596, %v1588
    %v1997 = vpack.c.b16 %v1597, %v1589
    %v1998 = vpack.c.b16 %v1598, %v1590
    %v1999 = vpack.c.b16 %v1599, %v1591
    %v2000 = vpack.c.b16 %v1600, %v1592
    %v2001 = vpack.c.b16 %v1601, %v1593
    %v2002 = vpack.c.b16 %v1602, %v1594
    %v2003 = vpack.c.b16 %v1611, %v1603
    %v2004 = vpack.c.b16 %v1612, %v1604
    %v2005 = vpack.c.b16 %v1613, %v1605
    %v2006 = vpack.c.b16 %v1614, %v1606
    %v2007 = vpack.c.b16 %v1615, %v1607
    %v2008 = vpack.c.b16 %v1616, %v1608
    %v2009 = vpack.c.b16 %v1617, %v1609
    %v2010 = vpack.c.b16 %v1618, %v1610
    %v2011 = vpack.c.b16 %v1627, %v1619
    %v2012 = vpack.c.b16 %v1628, %v1620
    %v2013 = vpack.c.b16 %v1629, %v1621
    %v2014 = vpack.c.b16 %v1630, %v1622
    %v2015 = vpack.c.b16 %v1631, %v1623
    %v2016 = vpack.c.b16 %v1632, %v1624
    %v2017 = vpack.c.b16 %v1633, %v1625
    %v2018 = vpack.c.b16 %v1634, %v1626
    %v2019 = vpack.c.b16 %v1643, %v1635
    %v2020 = vpack.c.b16 %v1644, %v1636
    %v2021 = vpack.c.b16 %v1645, %v1637
    %v2022 = vpack.c.b16 %v1646, %v1638
    %v2023 = vpack.c.b16 %v1647, %v1639
    %v2024 = vpack.c.b16 %v1648, %v1640
    %v2025 = vpack.c.b16 %v1649, %v1641
    %v2026 = vpack.c.b16 %v1650, %v1642
    %v2027 = vpack.c.b16 %v1659, %v1651
    %v2028 = vpack.c.b16 %v1660, %v1652
    %v2029 = vpack.c.b16 %v1661, %v1653
    %v2030 = vpack.c.b16 %v1662, %v1654
    %v2031 = vpack.c.b16 %v1663, %v1655
    %v2032 = vpack.c.b16 %v1664, %v1656
    %v2033 = vpack.c.b16 %v1665, %v1657
    %v2034 = vpack.c.b16 %v1666, %v1658
    %v2035 = vpack.c.b16 %v1675, %v1667
    %v2036 = vpack.c.b16 %v1676, %v1668
    %v2037 = vpack.c.b16 %v1677, %v1669
    %v2038 = vpack.c.b16 %v1678, %v1670
    %v2039 = vpack.c.b16 %v1679, %v1671
    %v2040 = vpack.c.b16 %v1680, %v1672
    %v2041 = vpack.c.b16 %v1681, %v1673
    %v2042 = vpack.c.b16 %v1682, %v1674
    %v2043 = vpack.c.b16 %v1691, %v1683
    %v2044 = vpack.c.b16 %v1692, %v1684
    %v2045 = vpack.c.b16 %v1693, %v1685
    %v2046 = vpack.c.b16 %v1694, %v1686
    %v2047 = vpack.c.b16 %v1695, %v1687
    %v2048 = vpack.c.b16 %v1696, %v1688
    %v2049 = vpack.c.b16 %v1697, %v1689
    %v2050 = vpack.c.b16 %v1698, %v1690
    %v2051 = vpack.c.b16 %v1707, %v1699
    %v2052 = vpack.c.b16 %v1708, %v1700
    %v2053 = vpack.c.b16 %v1709, %v1701
    %v2054 = vpack.c.b16 %v1710, %v1702
    %v2055 = vpack.c.b16 %v1711, %v1703
    %v2056 = vpack.c.b16 %v1712, %v1704
    %v2057 = vpack.c.b16 %v1713, %v1705
    %v2058 = vpack.c.b16 %v1714, %v1706
    %v2059 = vpack.c.b16 %v1723, %v1715
    %v2060 = vpack.c.b16 %v1724, %v1716
    %v2061 = vpack.c.b16 %v1725, %v1717
    %v2062 = vpack.c.b16 %v1726, %v1718
    %v2063 = vpack.c.b16 %v1727, %v1719
    %v2064 = vpack.c.b16 %v1728, %v1720
    %v2065 = vpack.c.b16 %v1729, %v1721
    %v2066 = vpack.c.b16 %v1730, %v1722
    %v2067 = vpack.c.b16 %v1739, %v1731
    %v2068 = vpack.c.b16 %v1740, %v1732
    %v2069 = vpack.c.b16 %v1741, %v1733
    %v2070 = vpack.c.b16 %v1742, %v1734
    %v2071 = vpack.c.b16 %v1743, %v1735
    %v2072 = vpack.c.b16 %v1744, %v1736
    %v2073 = vpack.c.b16 %v1745, %v1737
    %v2074 = vpack.c.b16 %v1746, %v1738
    %v2075 = vpack.c.b16 %v1755, %v1747
    %v2076 = vpack.c.b16 %v1756, %v1748
    %v2077 = vpack.c.b16 %v1757, %v1749
    %v2078 = vpack.c.b16 %v1758, %v1750
    %v2079 = vpack.c.b16 %v1759, %v1751
    %v2080 = vpack.c.b16 %v1760, %v1752
    %v2081 = vpack.c.b16 %v1761, %v1753
    %v2082 = vpack.c.b16 %v1762, %v1754
    %v2083 = vpack.c.b16 %v1771, %v1763
    %v2084 = vpack.c.b16 %v1772, %v1764
    %v2085 = vpack.c.b16 %v1773, %v1765
    %v2086 = vpack.c.b16 %v1774, %v1766
    %v2087 = vpack.c.b16 %v1775, %v1767
    %v2088 = vpack.c.b16 %v1776, %v1768
    %v2089 = vpack.c.b16 %v1777, %v1769
    %v2090 = vpack.c.b16 %v1778, %v1770
    %v2091 = vpack.c.b16 %v1787, %v1779
    %v2092 = vpack.c.b16 %v1788, %v1780
    %v2093 = vpack.c.b16 %v1789, %v1781
    %v2094 = vpack.c.b16 %v1790, %v1782
    %v2095 = vpack.c.b16 %v1791, %v1783
    %v2096 = vpack.c.b16 %v1792, %v1784
    %v2097 = vpack.c.b16 %v1793, %v1785
    %v2098 = vpack.c.b16 %v1794, %v1786
    %v2099 = vpack.c.b16 %v1803, %v1795
    %v2100 = vpack.c.b16 %v1804, %v1796
    %v2101 = vpack.c.b16 %v1805, %v1797
    %v2102 = vpack.c.b16 %v1806, %v1798
    %v2103 = vpack.c.b16 %v1807, %v1799
    %v2104 = vpack.c.b16 %v1808, %v1800
    %v2105 = vpack.c.b16 %v1809, %v1801
    %v2106 = vpack.c.b16 %v1810, %v1802
    %v2107 = vpack.c.b16 %v1819, %v1811
    %v2108 = vpack.c.b16 %v1820, %v1812
    %v2109 = vpack.c.b16 %v1821, %v1813
    %v2110 = vpack.c.b16 %v1822, %v1814
    %v2111 = vpack.c.b16 %v1823, %v1815
    %v2112 = vpack.c.b16 %v1824, %v1816
    %v2113 = vpack.c.b16 %v1825, %v1817
    %v2114 = vpack.c.b16 %v1826, %v1818
    %v2115 = vpack.c.b16 %v1835, %v1827
    %v2116 = vpack.c.b16 %v1836, %v1828
    %v2117 = vpack.c.b16 %v1837, %v1829
    %v2118 = vpack.c.b16 %v1838, %v1830
    %v2119 = vpack.c.b16 %v1839, %v1831
    %v2120 = vpack.c.b16 %v1840, %v1832
    %v2121 = vpack.c.b16 %v1841, %v1833
    %v2122 = vpack.c.b16 %v1842, %v1834
    %v2123 = vpack.c.b16 %v1851, %v1843
    %v2124 = vpack.c.b16 %v1852, %v1844
    %v2125 = vpack.c.b16 %v1853, %v1845
    %v2126 = vpack.c.b16 %v1854, %v1846
    %v2127 = vpack.c.b16 %v1855, %v1847
    %v2128 = vpack.c.b16 %v1856, %v1848
    %v2129 = vpack.c.b16 %v1857, %v1849
    %v2130 = vpack.c.b16 %v1858, %v1850
    %v2131 = vpack.c.b16 %v1867, %v1859
    %v2132 = vpack.c.b16 %v1868, %v1860
    %v2133 = vpack.c.b16 %v1869, %v1861
    %v2134 = vpack.c.b16 %v1870, %v1862
    %v2135 = vpack.c.b16 %v1871, %v1863
    %v2136 = vpack.c.b16 %v1872, %v1864
    %v2137 = vpack.c.b16 %v1873, %v1865
    %v2138 = vpack.c.b16 %v1874, %v1866
    %v2139 = vpack.c.b16 %v1883, %v1875
    %v2140 = vpack.c.b16 %v1884, %v1876
    %v2141 = vpack.c.b16 %v1885, %v1877
    %v2142 = vpack.c.b16 %v1886, %v1878
    %v2143 = vpack.c.b16 %v1887, %v1879
    %v2144 = vpack.c.b16 %v1888, %v1880
    %v2145 = vpack.c.b16 %v1889, %v1881
    %v2146 = vpack.c.b16 %v1890, %v1882
    %2403 = vmatprep.subr.bf16.mxu0 %v1948
    %2404 = vmatpush1.bf16.msra.mxu0 %v1947
    %2405 = vmatprep.subr.bf16.mxu0 %v1940
    %2406 = vmatpush1.bf16.msra.mxu0 %v1939
    %2407 = vmatprep.subr.bf16.mxu0 %v1932
    %2408 = vmatpush1.bf16.msra.mxu0 %v1931
    %2409 = vmatprep.subr.bf16.mxu0 %v1924
    %2410 = vmatpush1.bf16.msra.mxu0 %v1923
    %2411 = vmatprep.subr.bf16.mxu0 %v1916
    %2412 = vmatpush1.bf16.msra.mxu0 %v1915
    %2413 = vmatprep.subr.bf16.mxu0 %v1908
    %2414 = vmatpush1.bf16.msra.mxu0 %v1907
    %2415 = vmatprep.subr.bf16.mxu0 %v1900
    %2416 = vmatpush1.bf16.msra.mxu0 %v1899
    %2417 = vmatprep.subr.bf16.mxu0 %v1892
    %2418 = vmatpush1.bf16.msra.mxu0 %v1891
    %2419 = vmatprep.subr.bf16.mxu0 %v2012
    %2420 = vmatpush2.bf16.msra.mxu0 %v2011
    %2421 = vmatprep.subr.bf16.mxu0 %v2004
    %2422 = vmatpush2.bf16.msra.mxu0 %v2003
    %2423 = vmatprep.subr.bf16.mxu0 %v1996
    %2424 = vmatpush2.bf16.msra.mxu0 %v1995
    %2425 = vmatprep.subr.bf16.mxu0 %v1988
    %2426 = vmatpush2.bf16.msra.mxu0 %v1987
    %2427 = vmatprep.subr.bf16.mxu0 %v1980
    %2428 = vmatpush2.bf16.msra.mxu0 %v1979
    %2429 = vmatprep.subr.bf16.mxu0 %v1972
    %2430 = vmatpush2.bf16.msra.mxu0 %v1971
    %2431 = vmatprep.subr.bf16.mxu0 %v1964
    %2432 = vmatpush2.bf16.msra.mxu0 %v1963
    %2433 = vmatprep.subr.bf16.mxu0 %v1956
    %2434 = vmatpush2.bf16.msra.mxu0 %v1955
    %2435 = vmatprep.mubr.bf16.mxu0 %v822
    %2436 = vmatmul.mubr.bf16.gmra.mxu0 %v821
    %v2437 = vpop.f32.mrf.mxu0
    %v2438 = vadd.f32 %v1086, %v2437
    %v2439 = vpop.f32.mrf.mxu0
    %v2440 = vadd.f32 %v1090, %v2439
    %v2441 = vpop.f32.mrf.mxu0
    %v2442 = vadd.f32 %v1086, %v2441
    %v2443 = vpop.f32.mrf.mxu0
    %v2444 = vadd.f32 %v1090, %v2443
    %2445 = vdwg.mxu0
    %2446 = vmatprep.subr.bf16.mxu0 %v2076
    %2447 = vmatpush1.bf16.msra.mxu0 %v2075
    %2448 = vmatprep.subr.bf16.mxu0 %v2068
    %2449 = vmatpush1.bf16.msra.mxu0 %v2067
    %2450 = vmatprep.subr.bf16.mxu0 %v2060
    %2451 = vmatpush1.bf16.msra.mxu0 %v2059
    %2452 = vmatprep.subr.bf16.mxu0 %v2052
    %2453 = vmatpush1.bf16.msra.mxu0 %v2051
    %2454 = vmatprep.subr.bf16.mxu0 %v2044
    %2455 = vmatpush1.bf16.msra.mxu0 %v2043
    %2456 = vmatprep.subr.bf16.mxu0 %v2036
    %2457 = vmatpush1.bf16.msra.mxu0 %v2035
    %2458 = vmatprep.subr.bf16.mxu0 %v2028
    %2459 = vmatpush1.bf16.msra.mxu0 %v2027
    %2460 = vmatprep.subr.bf16.mxu0 %v2020
    %2461 = vmatpush1.bf16.msra.mxu0 %v2019
    %2462 = vmatprep.subr.bf16.mxu0 %v2140
    %2463 = vmatpush2.bf16.msra.mxu0 %v2139
    %2464 = vmatprep.subr.bf16.mxu0 %v2132
    %2465 = vmatpush2.bf16.msra.mxu0 %v2131
    %2466 = vmatprep.subr.bf16.mxu0 %v2124
    %2467 = vmatpush2.bf16.msra.mxu0 %v2123
    %2468 = vmatprep.subr.bf16.mxu0 %v2116
    %2469 = vmatpush2.bf16.msra.mxu0 %v2115
    %2470 = vmatprep.subr.bf16.mxu0 %v2108
    %2471 = vmatpush2.bf16.msra.mxu0 %v2107
    %2472 = vmatprep.subr.bf16.mxu0 %v2100
    %2473 = vmatpush2.bf16.msra.mxu0 %v2099
    %2474 = vmatprep.subr.bf16.mxu0 %v2092
    %2475 = vmatpush2.bf16.msra.mxu0 %v2091
    %2476 = vmatprep.subr.bf16.mxu0 %v2084
    %2477 = vmatpush2.bf16.msra.mxu0 %v2083
    %2478 = vmatprep.mubr.bf16.mxu0 %v824
    %2479 = vmatmul.mubr.bf16.gmra.mxu0 %v823
    %v2480 = vpop.f32.mrf.mxu0
    %v2481 = vadd.f32 %v2438, %v2480
    %v2482 = vpop.f32.mrf.mxu0
    %v2483 = vadd.f32 %v2440, %v2482
    %v2484 = vpop.f32.mrf.mxu0
    %v2485 = vadd.f32 %v2442, %v2484
    %v2486 = vpop.f32.mrf.mxu0
    %v2487 = vadd.f32 %v2444, %v2486
    %2488 = vdwg.mxu0
    %2489 = vmatprep.subr.bf16.mxu0 %v1950
    %2490 = vmatpush1.bf16.msra.mxu0 %v1949
    %2491 = vmatprep.subr.bf16.mxu0 %v1942
    %2492 = vmatpush1.bf16.msra.mxu0 %v1941
    %2493 = vmatprep.subr.bf16.mxu0 %v1934
    %2494 = vmatpush1.bf16.msra.mxu0 %v1933
    %2495 = vmatprep.subr.bf16.mxu0 %v1926
    %2496 = vmatpush1.bf16.msra.mxu0 %v1925
    %2497 = vmatprep.subr.bf16.mxu0 %v1918
    %2498 = vmatpush1.bf16.msra.mxu0 %v1917
    %2499 = vmatprep.subr.bf16.mxu0 %v1910
    %2500 = vmatpush1.bf16.msra.mxu0 %v1909
    %2501 = vmatprep.subr.bf16.mxu0 %v1902
    %2502 = vmatpush1.bf16.msra.mxu0 %v1901
    %2503 = vmatprep.subr.bf16.mxu0 %v1894
    %2504 = vmatpush1.bf16.msra.mxu0 %v1893
    %2505 = vmatprep.subr.bf16.mxu0 %v2014
    %2506 = vmatpush2.bf16.msra.mxu0 %v2013
    %2507 = vmatprep.subr.bf16.mxu0 %v2006
    %2508 = vmatpush2.bf16.msra.mxu0 %v2005
    %2509 = vmatprep.subr.bf16.mxu0 %v1998
    %2510 = vmatpush2.bf16.msra.mxu0 %v1997
    %2511 = vmatprep.subr.bf16.mxu0 %v1990
    %2512 = vmatpush2.bf16.msra.mxu0 %v1989
    %2513 = vmatprep.subr.bf16.mxu0 %v1982
    %2514 = vmatpush2.bf16.msra.mxu0 %v1981
    %2515 = vmatprep.subr.bf16.mxu0 %v1974
    %2516 = vmatpush2.bf16.msra.mxu0 %v1973
    %2517 = vmatprep.subr.bf16.mxu0 %v1966
    %2518 = vmatpush2.bf16.msra.mxu0 %v1965
    %2519 = vmatprep.subr.bf16.mxu0 %v1958
    %2520 = vmatpush2.bf16.msra.mxu0 %v1957
    %2521 = vmatprep.mubr.bf16.mxu0 %v822
    %2522 = vmatmul.mubr.bf16.gmra.mxu0 %v821
    %v2523 = vpop.f32.mrf.mxu0
    %v2524 = vadd.f32 %v1094, %v2523
    %v2525 = vpop.f32.mrf.mxu0
    %v2526 = vadd.f32 %v1098, %v2525
    %v2527 = vpop.f32.mrf.mxu0
    %v2528 = vadd.f32 %v1094, %v2527
    %v2529 = vpop.f32.mrf.mxu0
    %v2530 = vadd.f32 %v1098, %v2529
    %2531 = vdwg.mxu0
    %2532 = vmatprep.subr.bf16.mxu0 %v2078
    %2533 = vmatpush1.bf16.msra.mxu0 %v2077
    %2534 = vmatprep.subr.bf16.mxu0 %v2070
    %2535 = vmatpush1.bf16.msra.mxu0 %v2069
    %2536 = vmatprep.subr.bf16.mxu0 %v2062
    %2537 = vmatpush1.bf16.msra.mxu0 %v2061
    %2538 = vmatprep.subr.bf16.mxu0 %v2054
    %2539 = vmatpush1.bf16.msra.mxu0 %v2053
    %2540 = vmatprep.subr.bf16.mxu0 %v2046
    %2541 = vmatpush1.bf16.msra.mxu0 %v2045
    %2542 = vmatprep.subr.bf16.mxu0 %v2038
    %2543 = vmatpush1.bf16.msra.mxu0 %v2037
    %2544 = vmatprep.subr.bf16.mxu0 %v2030
    %2545 = vmatpush1.bf16.msra.mxu0 %v2029
    %2546 = vmatprep.subr.bf16.mxu0 %v2022
    %2547 = vmatpush1.bf16.msra.mxu0 %v2021
    %2548 = vmatprep.subr.bf16.mxu0 %v2142
    %2549 = vmatpush2.bf16.msra.mxu0 %v2141
    %2550 = vmatprep.subr.bf16.mxu0 %v2134
    %2551 = vmatpush2.bf16.msra.mxu0 %v2133
    %2552 = vmatprep.subr.bf16.mxu0 %v2126
    %2553 = vmatpush2.bf16.msra.mxu0 %v2125
    %2554 = vmatprep.subr.bf16.mxu0 %v2118
    %2555 = vmatpush2.bf16.msra.mxu0 %v2117
    %2556 = vmatprep.subr.bf16.mxu0 %v2110
    %2557 = vmatpush2.bf16.msra.mxu0 %v2109
    %2558 = vmatprep.subr.bf16.mxu0 %v2102
    %2559 = vmatpush2.bf16.msra.mxu0 %v2101
    %2560 = vmatprep.subr.bf16.mxu0 %v2094
    %2561 = vmatpush2.bf16.msra.mxu0 %v2093
    %2562 = vmatprep.subr.bf16.mxu0 %v2086
    %2563 = vmatpush2.bf16.msra.mxu0 %v2085
    %2564 = vmatprep.mubr.bf16.mxu0 %v824
    %2565 = vmatmul.mubr.bf16.gmra.mxu0 %v823
    %v2566 = vpop.f32.mrf.mxu0
    %v2567 = vadd.f32 %v2524, %v2566
    %v2568 = vpop.f32.mrf.mxu0
    %v2569 = vadd.f32 %v2526, %v2568
    %v2570 = vpop.f32.mrf.mxu0
    %v2571 = vadd.f32 %v2528, %v2570
    %v2572 = vpop.f32.mrf.mxu0
    %v2573 = vadd.f32 %v2530, %v2572
    %2574 = vdwg.mxu0
    %2575 = vmatprep.subr.bf16.mxu0 %v1952
    %2576 = vmatpush1.bf16.msra.mxu0 %v1951
    %2577 = vmatprep.subr.bf16.mxu0 %v1944
    %2578 = vmatpush1.bf16.msra.mxu0 %v1943
    %2579 = vmatprep.subr.bf16.mxu0 %v1936
    %2580 = vmatpush1.bf16.msra.mxu0 %v1935
    %2581 = vmatprep.subr.bf16.mxu0 %v1928
    %2582 = vmatpush1.bf16.msra.mxu0 %v1927
    %2583 = vmatprep.subr.bf16.mxu0 %v1920
    %2584 = vmatpush1.bf16.msra.mxu0 %v1919
    %2585 = vmatprep.subr.bf16.mxu0 %v1912
    %2586 = vmatpush1.bf16.msra.mxu0 %v1911
    %2587 = vmatprep.subr.bf16.mxu0 %v1904
    %2588 = vmatpush1.bf16.msra.mxu0 %v1903
    %2589 = vmatprep.subr.bf16.mxu0 %v1896
    %2590 = vmatpush1.bf16.msra.mxu0 %v1895
    %2591 = vmatprep.subr.bf16.mxu0 %v2016
    %2592 = vmatpush2.bf16.msra.mxu0 %v2015
    %2593 = vmatprep.subr.bf16.mxu0 %v2008
    %2594 = vmatpush2.bf16.msra.mxu0 %v2007
    %2595 = vmatprep.subr.bf16.mxu0 %v2000
    %2596 = vmatpush2.bf16.msra.mxu0 %v1999
    %2597 = vmatprep.subr.bf16.mxu0 %v1992
    %2598 = vmatpush2.bf16.msra.mxu0 %v1991
    %2599 = vmatprep.subr.bf16.mxu0 %v1984
    %2600 = vmatpush2.bf16.msra.mxu0 %v1983
    %2601 = vmatprep.subr.bf16.mxu0 %v1976
    %2602 = vmatpush2.bf16.msra.mxu0 %v1975
    %2603 = vmatprep.subr.bf16.mxu0 %v1968
    %2604 = vmatpush2.bf16.msra.mxu0 %v1967
    %2605 = vmatprep.subr.bf16.mxu0 %v1960
    %2606 = vmatpush2.bf16.msra.mxu0 %v1959
    %2607 = vmatprep.mubr.bf16.mxu0 %v822
    %2608 = vmatmul.mubr.bf16.gmra.mxu0 %v821
    %v2609 = vpop.f32.mrf.mxu0
    %v2610 = vadd.f32 %v1102, %v2609
    %v2611 = vpop.f32.mrf.mxu0
    %v2612 = vadd.f32 %v1106, %v2611
    %v2613 = vpop.f32.mrf.mxu0
    %v2614 = vadd.f32 %v1102, %v2613
    %v2615 = vpop.f32.mrf.mxu0
    %v2616 = vadd.f32 %v1106, %v2615
    %2617 = vdwg.mxu0
    %2618 = vmatprep.subr.bf16.mxu0 %v2080
    %2619 = vmatpush1.bf16.msra.mxu0 %v2079
    %2620 = vmatprep.subr.bf16.mxu0 %v2072
    %2621 = vmatpush1.bf16.msra.mxu0 %v2071
    %2622 = vmatprep.subr.bf16.mxu0 %v2064
    %2623 = vmatpush1.bf16.msra.mxu0 %v2063
    %2624 = vmatprep.subr.bf16.mxu0 %v2056
    %2625 = vmatpush1.bf16.msra.mxu0 %v2055
    %2626 = vmatprep.subr.bf16.mxu0 %v2048
    %2627 = vmatpush1.bf16.msra.mxu0 %v2047
    %2628 = vmatprep.subr.bf16.mxu0 %v2040
    %2629 = vmatpush1.bf16.msra.mxu0 %v2039
    %2630 = vmatprep.subr.bf16.mxu0 %v2032
    %2631 = vmatpush1.bf16.msra.mxu0 %v2031
    %2632 = vmatprep.subr.bf16.mxu0 %v2024
    %2633 = vmatpush1.bf16.msra.mxu0 %v2023
    %2634 = vmatprep.subr.bf16.mxu0 %v2144
    %2635 = vmatpush2.bf16.msra.mxu0 %v2143
    %2636 = vmatprep.subr.bf16.mxu0 %v2136
    %2637 = vmatpush2.bf16.msra.mxu0 %v2135
    %2638 = vmatprep.subr.bf16.mxu0 %v2128
    %2639 = vmatpush2.bf16.msra.mxu0 %v2127
    %2640 = vmatprep.subr.bf16.mxu0 %v2120
    %2641 = vmatpush2.bf16.msra.mxu0 %v2119
    %2642 = vmatprep.subr.bf16.mxu0 %v2112
    %2643 = vmatpush2.bf16.msra.mxu0 %v2111
    %2644 = vmatprep.subr.bf16.mxu0 %v2104
    %2645 = vmatpush2.bf16.msra.mxu0 %v2103
    %2646 = vmatprep.subr.bf16.mxu0 %v2096
    %2647 = vmatpush2.bf16.msra.mxu0 %v2095
    %2648 = vmatprep.subr.bf16.mxu0 %v2088
    %2649 = vmatpush2.bf16.msra.mxu0 %v2087
    %2650 = vmatprep.mubr.bf16.mxu0 %v824
    %2651 = vmatmul.mubr.bf16.gmra.mxu0 %v823
    %v2652 = vpop.f32.mrf.mxu0
    %v2653 = vadd.f32 %v2610, %v2652
    %v2654 = vpop.f32.mrf.mxu0
    %v2655 = vadd.f32 %v2612, %v2654
    %v2656 = vpop.f32.mrf.mxu0
    %v2657 = vadd.f32 %v2614, %v2656
    %v2658 = vpop.f32.mrf.mxu0
    %v2659 = vadd.f32 %v2616, %v2658
    %2660 = vdwg.mxu0
    %2661 = vmatprep.subr.bf16.mxu0 %v1954
    %2662 = vmatpush1.bf16.msra.mxu0 %v1953
    %2663 = vmatprep.subr.bf16.mxu0 %v1946
    %2664 = vmatpush1.bf16.msra.mxu0 %v1945
    %2665 = vmatprep.subr.bf16.mxu0 %v1938
    %2666 = vmatpush1.bf16.msra.mxu0 %v1937
    %2667 = vmatprep.subr.bf16.mxu0 %v1930
    %2668 = vmatpush1.bf16.msra.mxu0 %v1929
    %2669 = vmatprep.subr.bf16.mxu0 %v1922
    %2670 = vmatpush1.bf16.msra.mxu0 %v1921
    %2671 = vmatprep.subr.bf16.mxu0 %v1914
    %2672 = vmatpush1.bf16.msra.mxu0 %v1913
    %2673 = vmatprep.subr.bf16.mxu0 %v1906
    %2674 = vmatpush1.bf16.msra.mxu0 %v1905
    %2675 = vmatprep.subr.bf16.mxu0 %v1898
    %2676 = vmatpush1.bf16.msra.mxu0 %v1897
    %2677 = vmatprep.subr.bf16.mxu0 %v2018
    %2678 = vmatpush2.bf16.msra.mxu0 %v2017
    %2679 = vmatprep.subr.bf16.mxu0 %v2010
    %2680 = vmatpush2.bf16.msra.mxu0 %v2009
    %2681 = vmatprep.subr.bf16.mxu0 %v2002
    %2682 = vmatpush2.bf16.msra.mxu0 %v2001
    %2683 = vmatprep.subr.bf16.mxu0 %v1994
    %2684 = vmatpush2.bf16.msra.mxu0 %v1993
    %2685 = vmatprep.subr.bf16.mxu0 %v1986
    %2686 = vmatpush2.bf16.msra.mxu0 %v1985
    %2687 = vmatprep.subr.bf16.mxu0 %v1978
    %2688 = vmatpush2.bf16.msra.mxu0 %v1977
    %2689 = vmatprep.subr.bf16.mxu0 %v1970
    %2690 = vmatpush2.bf16.msra.mxu0 %v1969
    %2691 = vmatprep.subr.bf16.mxu0 %v1962
    %2692 = vmatpush2.bf16.msra.mxu0 %v1961
    %2693 = vmatprep.mubr.bf16.mxu0 %v822
    %2694 = vmatmul.mubr.bf16.gmra.mxu0 %v821
    %v2695 = vpop.f32.mrf.mxu0
    %v2696 = vadd.f32 %v1110, %v2695
    %v2697 = vpop.f32.mrf.mxu0
    %v2698 = vadd.f32 %v1114, %v2697
    %v2699 = vpop.f32.mrf.mxu0
    %v2700 = vadd.f32 %v1110, %v2699
    %v2701 = vpop.f32.mrf.mxu0
    %v2702 = vadd.f32 %v1114, %v2701
    %2703 = vdwg.mxu0
    %2704 = vmatprep.subr.bf16.mxu0 %v2082
    %2705 = vmatpush1.bf16.msra.mxu0 %v2081
    %2706 = vmatprep.subr.bf16.mxu0 %v2074
    %2707 = vmatpush1.bf16.msra.mxu0 %v2073
    %2708 = vmatprep.subr.bf16.mxu0 %v2066
    %2709 = vmatpush1.bf16.msra.mxu0 %v2065
    %2710 = vmatprep.subr.bf16.mxu0 %v2058
    %2711 = vmatpush1.bf16.msra.mxu0 %v2057
    %2712 = vmatprep.subr.bf16.mxu0 %v2050
    %2713 = vmatpush1.bf16.msra.mxu0 %v2049
    %2714 = vmatprep.subr.bf16.mxu0 %v2042
    %2715 = vmatpush1.bf16.msra.mxu0 %v2041
    %2716 = vmatprep.subr.bf16.mxu0 %v2034
    %2717 = vmatpush1.bf16.msra.mxu0 %v2033
    %2718 = vmatprep.subr.bf16.mxu0 %v2026
    %2719 = vmatpush1.bf16.msra.mxu0 %v2025
    %2720 = vmatprep.subr.bf16.mxu0 %v2146
    %2721 = vmatpush2.bf16.msra.mxu0 %v2145
    %2722 = vmatprep.subr.bf16.mxu0 %v2138
    %2723 = vmatpush2.bf16.msra.mxu0 %v2137
    %2724 = vmatprep.subr.bf16.mxu0 %v2130
    %2725 = vmatpush2.bf16.msra.mxu0 %v2129
    %2726 = vmatprep.subr.bf16.mxu0 %v2122
    %2727 = vmatpush2.bf16.msra.mxu0 %v2121
    %2728 = vmatprep.subr.bf16.mxu0 %v2114
    %2729 = vmatpush2.bf16.msra.mxu0 %v2113
    %2730 = vmatprep.subr.bf16.mxu0 %v2106
    %2731 = vmatpush2.bf16.msra.mxu0 %v2105
    %2732 = vmatprep.subr.bf16.mxu0 %v2098
    %2733 = vmatpush2.bf16.msra.mxu0 %v2097
    %2734 = vmatprep.subr.bf16.mxu0 %v2090
    %2735 = vmatpush2.bf16.msra.mxu0 %v2089
    %2736 = vmatprep.mubr.bf16.mxu0 %v824
    %2737 = vmatmul.mubr.bf16.gmra.mxu0 %v823
    %v2738 = vpop.f32.mrf.mxu0
    %v2739 = vadd.f32 %v2696, %v2738
    %v2740 = vpop.f32.mrf.mxu0
    %v2741 = vadd.f32 %v2698, %v2740
    %v2742 = vpop.f32.mrf.mxu0
    %v2743 = vadd.f32 %v2700, %v2742
    %v2744 = vpop.f32.mrf.mxu0
    %v2745 = vadd.f32 %v2702, %v2744
    %2746 = vdwg.mxu0
    %v2747 = vmax.f32 %v2481, 0.0
    %v2748 = vmax.f32 %v2483, 0.0
    %v2749 = vmax.f32 %v2567, 0.0
    %v2750 = vmax.f32 %v2569, 0.0
    %v2751 = vmax.f32 %v2653, 0.0
    %v2752 = vmax.f32 %v2655, 0.0
    %v2753 = vmax.f32 %v2739, 0.0
    %v2754 = vmax.f32 %v2741, 0.0
    %v2755 = vmax.f32 %v2485, 0.0
    %v2756 = vmax.f32 %v2487, 0.0
    %v2757 = vmax.f32 %v2571, 0.0
    %v2758 = vmax.f32 %v2573, 0.0
    %v2759 = vmax.f32 %v2657, 0.0
    %v2760 = vmax.f32 %v2659, 0.0
    %v2761 = vmax.f32 %v2743, 0.0
    %v2762 = vmax.f32 %v2745, 0.0
    %v2763 = vpack.c.bf16 %v2755, %v2747
    %v2764 = vpack.c.bf16 %v2756, %v2748
    %v2765 = vpack.c.bf16 %v2757, %v2749
    %v2766 = vpack.c.bf16 %v2758, %v2750
    %v2767 = vpack.c.bf16 %v2759, %v2751
    %v2768 = vpack.c.bf16 %v2760, %v2752
    %v2769 = vpack.c.bf16 %v2761, %v2753
    %v2770 = vpack.c.bf16 %v2762, %v2754
    %v2771 = vld [vmem:[#allocation15] sm:$0xff]
    %v2772 = vld [vmem:[#allocation15 + $0x8] sm:$0xff]
    %v2773 = vld [vmem:[#allocation15 + $0x10] sm:$0xff]
    %v2774 = vld [vmem:[#allocation15 + $0x18] sm:$0xf]
    %v2775 = vld [vmem:[#allocation15 + $0x1c] sm:$0xff]
    %v2776 = vld [vmem:[#allocation15 + $0x24] sm:$0xff]
    %v2777 = vld [vmem:[#allocation15 + $0x2c] sm:$0xff]
    %v2778 = vld [vmem:[#allocation15 + $0x34] sm:$0xf]
    %v2779 = vld [vmem:[#allocation15 + $0x38] sm:$0xff]
    %v2780 = vld [vmem:[#allocation15 + $0x40] sm:$0xff]
    %v2781 = vld [vmem:[#allocation15 + $0x48] sm:$0xff]
    %v2782 = vld [vmem:[#allocation15 + $0x50] sm:$0xf]
    %v2783 = vld [vmem:[#allocation15 + $0x54] sm:$0xff]
    %v2784 = vld [vmem:[#allocation15 + $0x5c] sm:$0xff]
    %v2785 = vld [vmem:[#allocation15 + $0x64] sm:$0xff]
    %v2786 = vld [vmem:[#allocation15 + $0x6c] sm:$0xf]
    %v2787 = vld [vmem:[#allocation15 + $0x70] sm:$0xff]
    %v2788 = vld [vmem:[#allocation15 + $0x78] sm:$0xff]
    %v2789 = vld [vmem:[#allocation15 + $0x80] sm:$0xff]
    %v2790 = vld [vmem:[#allocation15 + $0x88] sm:$0xf]
    %v2791 = vld [vmem:[#allocation15 + $0x8c] sm:$0xff]
    %v2792 = vld [vmem:[#allocation15 + $0x94] sm:$0xff]
    %v2793 = vld [vmem:[#allocation15 + $0x9c] sm:$0xff]
    %v2794 = vld [vmem:[#allocation15 + $0xa4] sm:$0xf]
    %v2795 = vld [vmem:[#allocation15 + $0xa8] sm:$0xff]
    %v2796 = vld [vmem:[#allocation15 + $0xb0] sm:$0xff]
    %v2797 = vld [vmem:[#allocation15 + $0xb8] sm:$0xff]
    %v2798 = vld [vmem:[#allocation15 + $0xc0] sm:$0xf]
    %v2799 = vld [vmem:[#allocation15 + $0xc4] sm:$0xff]
    %v2800 = vld [vmem:[#allocation15 + $0xcc] sm:$0xff]
    %v2801 = vld [vmem:[#allocation15 + $0xd4] sm:$0xff]
    %v2802 = vld [vmem:[#allocation15 + $0xdc] sm:$0xf]
    %v2803 = vld [vmem:[#allocation15 + $0xe0] sm:$0xff]
    %v2804 = vld [vmem:[#allocation15 + $0xe8] sm:$0xff]
    %v2805 = vld [vmem:[#allocation15 + $0xf0] sm:$0xff]
    %v2806 = vld [vmem:[#allocation15 + $0xf8] sm:$0xf]
    %v2807 = vld [vmem:[#allocation15 + $0xfc] sm:$0xff]
    %v2808 = vld [vmem:[#allocation15 + $0x104] sm:$0xff]
    %v2809 = vld [vmem:[#allocation15 + $0x10c] sm:$0xff]
    %v2810 = vld [vmem:[#allocation15 + $0x114] sm:$0xf]
    %v2811 = vld [vmem:[#allocation15 + $0x118] sm:$0xff]
    %v2812 = vld [vmem:[#allocation15 + $0x120] sm:$0xff]
    %v2813 = vld [vmem:[#allocation15 + $0x128] sm:$0xff]
    %v2814 = vld [vmem:[#allocation15 + $0x130] sm:$0xf]
    %v2815 = vld [vmem:[#allocation15 + $0x134] sm:$0xff]
    %v2816 = vld [vmem:[#allocation15 + $0x13c] sm:$0xff]
    %v2817 = vld [vmem:[#allocation15 + $0x144] sm:$0xff]
    %v2818 = vld [vmem:[#allocation15 + $0x14c] sm:$0xf]
    %v2819 = vld [vmem:[#allocation15 + $0x150] sm:$0xff]
    %v2820 = vld [vmem:[#allocation15 + $0x158] sm:$0xff]
    %v2821 = vld [vmem:[#allocation15 + $0x160] sm:$0xff]
    %v2822 = vld [vmem:[#allocation15 + $0x168] sm:$0xf]
    %v2823 = vld [vmem:[#allocation15 + $0x16c] sm:$0xff]
    %v2824 = vld [vmem:[#allocation15 + $0x174] sm:$0xff]
    %v2825 = vld [vmem:[#allocation15 + $0x17c] sm:$0xff]
    %v2826 = vld [vmem:[#allocation15 + $0x184] sm:$0xf]
    %v2827 = vld [vmem:[#allocation15 + $0x188] sm:$0xff]
    %v2828 = vld [vmem:[#allocation15 + $0x190] sm:$0xff]
    %v2829 = vld [vmem:[#allocation15 + $0x198] sm:$0xff]
    %v2830 = vld [vmem:[#allocation15 + $0x1a0] sm:$0xf]
    %v2831 = vld [vmem:[#allocation15 + $0x1a4] sm:$0xff]
    %v2832 = vld [vmem:[#allocation15 + $0x1ac] sm:$0xff]
    %v2833 = vld [vmem:[#allocation15 + $0x1b4] sm:$0xff]
    %v2834 = vld [vmem:[#allocation15 + $0x1bc] sm:$0xf]
    %v2835 = vld [vmem:[#allocation15 + $0x1c0] sm:$0xff]
    %v2836 = vld [vmem:[#allocation15 + $0x1c8] sm:$0xff]
    %v2837 = vld [vmem:[#allocation15 + $0x1d0] sm:$0xff]
    %v2838 = vld [vmem:[#allocation15 + $0x1d8] sm:$0xf]
    %v2839 = vld [vmem:[#allocation15 + $0x1dc] sm:$0xff]
    %v2840 = vld [vmem:[#allocation15 + $0x1e4] sm:$0xff]
    %v2841 = vld [vmem:[#allocation15 + $0x1ec] sm:$0xff]
    %v2842 = vld [vmem:[#allocation15 + $0x1f4] sm:$0xf]
    %v2843 = vld [vmem:[#allocation15 + $0x1f8] sm:$0xff]
    %v2844 = vld [vmem:[#allocation15 + $0x200] sm:$0xff]
    %v2845 = vld [vmem:[#allocation15 + $0x208] sm:$0xff]
    %v2846 = vld [vmem:[#allocation15 + $0x210] sm:$0xf]
    %v2847 = vld [vmem:[#allocation15 + $0x214] sm:$0xff]
    %v2848 = vld [vmem:[#allocation15 + $0x21c] sm:$0xff]
    %v2849 = vld [vmem:[#allocation15 + $0x224] sm:$0xff]
    %v2850 = vld [vmem:[#allocation15 + $0x22c] sm:$0xf]
    %v2851 = vld [vmem:[#allocation15 + $0x230] sm:$0xff]
    %v2852 = vld [vmem:[#allocation15 + $0x238] sm:$0xff]
    %v2853 = vld [vmem:[#allocation15 + $0x240] sm:$0xff]
    %v2854 = vld [vmem:[#allocation15 + $0x248] sm:$0xf]
    %v2855 = vld [vmem:[#allocation15 + $0x24c] sm:$0xff]
    %v2856 = vld [vmem:[#allocation15 + $0x254] sm:$0xff]
    %v2857 = vld [vmem:[#allocation15 + $0x25c] sm:$0xff]
    %v2858 = vld [vmem:[#allocation15 + $0x264] sm:$0xf]
    %v2859 = vld [vmem:[#allocation15 + $0x268] sm:$0xff]
    %v2860 = vld [vmem:[#allocation15 + $0x270] sm:$0xff]
    %v2861 = vld [vmem:[#allocation15 + $0x278] sm:$0xff]
    %v2862 = vld [vmem:[#allocation15 + $0x280] sm:$0xf]
    %v2863 = vld [vmem:[#allocation15 + $0x284] sm:$0xff]
    %v2864 = vld [vmem:[#allocation15 + $0x28c] sm:$0xff]
    %v2865 = vld [vmem:[#allocation15 + $0x294] sm:$0xff]
    %v2866 = vld [vmem:[#allocation15 + $0x29c] sm:$0xf]
    %v2867 = vld [vmem:[#allocation15 + $0x2a0] sm:$0xff]
    %v2868 = vld [vmem:[#allocation15 + $0x2a8] sm:$0xff]
    %v2869 = vld [vmem:[#allocation15 + $0x2b0] sm:$0xff]
    %v2870 = vld [vmem:[#allocation15 + $0x2b8] sm:$0xf]
    %v2871 = vld [vmem:[#allocation15 + $0x2bc] sm:$0xff]
    %v2872 = vld [vmem:[#allocation15 + $0x2c4] sm:$0xff]
    %v2873 = vld [vmem:[#allocation15 + $0x2cc] sm:$0xff]
    %v2874 = vld [vmem:[#allocation15 + $0x2d4] sm:$0xf]
    %v2875 = vld [vmem:[#allocation15 + $0x2d8] sm:$0xff]
    %v2876 = vld [vmem:[#allocation15 + $0x2e0] sm:$0xff]
    %v2877 = vld [vmem:[#allocation15 + $0x2e8] sm:$0xff]
    %v2878 = vld [vmem:[#allocation15 + $0x2f0] sm:$0xf]
    %v2879 = vld [vmem:[#allocation15 + $0x2f4] sm:$0xff]
    %v2880 = vld [vmem:[#allocation15 + $0x2fc] sm:$0xff]
    %v2881 = vld [vmem:[#allocation15 + $0x304] sm:$0xff]
    %v2882 = vld [vmem:[#allocation15 + $0x30c] sm:$0xf]
    %v2883 = vld [vmem:[#allocation15 + $0x310] sm:$0xff]
    %v2884 = vld [vmem:[#allocation15 + $0x318] sm:$0xff]
    %v2885 = vld [vmem:[#allocation15 + $0x320] sm:$0xff]
    %v2886 = vld [vmem:[#allocation15 + $0x328] sm:$0xf]
    %v2887 = vld [vmem:[#allocation15 + $0x32c] sm:$0xff]
    %v2888 = vld [vmem:[#allocation15 + $0x334] sm:$0xff]
    %v2889 = vld [vmem:[#allocation15 + $0x33c] sm:$0xff]
    %v2890 = vld [vmem:[#allocation15 + $0x344] sm:$0xf]
    %v2891 = vld [vmem:[#allocation15 + $0x348] sm:$0xff]
    %v2892 = vld [vmem:[#allocation15 + $0x350] sm:$0xff]
    %v2893 = vld [vmem:[#allocation15 + $0x358] sm:$0xff]
    %v2894 = vld [vmem:[#allocation15 + $0x360] sm:$0xf]
    %v2895 = vld [vmem:[#allocation15 + $0x364] sm:$0xff]
    %v2896 = vld [vmem:[#allocation15 + $0x36c] sm:$0xff]
    %v2897 = vld [vmem:[#allocation15 + $0x374] sm:$0xff]
    %v2898 = vld [vmem:[#allocation15 + $0x37c] sm:$0xf]
    %v2899 = vld [vmem:[#allocation15 + $0x380] sm:$0xff]
    %v2900 = vld [vmem:[#allocation15 + $0x388] sm:$0xff]
    %v2901 = vld [vmem:[#allocation15 + $0x390] sm:$0xff]
    %v2902 = vld [vmem:[#allocation15 + $0x398] sm:$0xf]
    %v2903 = vld [vmem:[#allocation15 + $0x39c] sm:$0xff]
    %v2904 = vld [vmem:[#allocation15 + $0x3a4] sm:$0xff]
    %v2905 = vld [vmem:[#allocation15 + $0x3ac] sm:$0xff]
    %v2906 = vld [vmem:[#allocation15 + $0x3b4] sm:$0xf]
    %v2907 = vld [vmem:[#allocation15 + $0x3b8] sm:$0xff]
    %v2908 = vld [vmem:[#allocation15 + $0x3c0] sm:$0xff]
    %v2909 = vld [vmem:[#allocation15 + $0x3c8] sm:$0xff]
    %v2910 = vld [vmem:[#allocation15 + $0x3d0] sm:$0xf]
    %v2911 = vld [vmem:[#allocation15 + $0x3d4] sm:$0xff]
    %v2912 = vld [vmem:[#allocation15 + $0x3dc] sm:$0xff]
    %v2913 = vld [vmem:[#allocation15 + $0x3e4] sm:$0xff]
    %v2914 = vld [vmem:[#allocation15 + $0x3ec] sm:$0xf]
    %v2915 = vld [vmem:[#allocation15 + $0x3f0] sm:$0xff]
    %v2916 = vld [vmem:[#allocation15 + $0x3f8] sm:$0xff]
    %v2917 = vld [vmem:[#allocation15 + $0x400] sm:$0xff]
    %v2918 = vld [vmem:[#allocation15 + $0x408] sm:$0xf]
    %v2919 = vld [vmem:[#allocation15 + $0x40c] sm:$0xff]
    %v2920 = vld [vmem:[#allocation15 + $0x414] sm:$0xff]
    %v2921 = vld [vmem:[#allocation15 + $0x41c] sm:$0xff]
    %v2922 = vld [vmem:[#allocation15 + $0x424] sm:$0xf]
    %v2923 = vld [vmem:[#allocation15 + $0x428] sm:$0xff]
    %v2924 = vld [vmem:[#allocation15 + $0x430] sm:$0xff]
    %v2925 = vld [vmem:[#allocation15 + $0x438] sm:$0xff]
    %v2926 = vld [vmem:[#allocation15 + $0x440] sm:$0xf]
    %v2927 = vld [vmem:[#allocation15 + $0x444] sm:$0xff]
    %v2928 = vld [vmem:[#allocation15 + $0x44c] sm:$0xff]
    %v2929 = vld [vmem:[#allocation15 + $0x454] sm:$0xff]
    %v2930 = vld [vmem:[#allocation15 + $0x45c] sm:$0xf]
    %v2931 = vld [vmem:[#allocation15 + $0x460] sm:$0xff]
    %v2932 = vld [vmem:[#allocation15 + $0x468] sm:$0xff]
    %v2933 = vld [vmem:[#allocation15 + $0x470] sm:$0xff]
    %v2934 = vld [vmem:[#allocation15 + $0x478] sm:$0xf]
    %v2935 = vld [vmem:[#allocation15 + $0x47c] sm:$0xff]
    %v2936 = vld [vmem:[#allocation15 + $0x484] sm:$0xff]
    %v2937 = vld [vmem:[#allocation15 + $0x48c] sm:$0xff]
    %v2938 = vld [vmem:[#allocation15 + $0x494] sm:$0xf]
    %v2939 = vld [vmem:[#allocation15 + $0x498] sm:$0xff]
    %v2940 = vld [vmem:[#allocation15 + $0x4a0] sm:$0xff]
    %v2941 = vld [vmem:[#allocation15 + $0x4a8] sm:$0xff]
    %v2942 = vld [vmem:[#allocation15 + $0x4b0] sm:$0xf]
    %v2943 = vld [vmem:[#allocation15 + $0x4b4] sm:$0xff]
    %v2944 = vld [vmem:[#allocation15 + $0x4bc] sm:$0xff]
    %v2945 = vld [vmem:[#allocation15 + $0x4c4] sm:$0xff]
    %v2946 = vld [vmem:[#allocation15 + $0x4cc] sm:$0xf]
    %v2947 = vld [vmem:[#allocation15 + $0x4d0] sm:$0xff]
    %v2948 = vld [vmem:[#allocation15 + $0x4d8] sm:$0xff]
    %v2949 = vld [vmem:[#allocation15 + $0x4e0] sm:$0xff]
    %v2950 = vld [vmem:[#allocation15 + $0x4e8] sm:$0xf]
    %v2951 = vld [vmem:[#allocation15 + $0x4ec] sm:$0xff]
    %v2952 = vld [vmem:[#allocation15 + $0x4f4] sm:$0xff]
    %v2953 = vld [vmem:[#allocation15 + $0x4fc] sm:$0xff]
    %v2954 = vld [vmem:[#allocation15 + $0x504] sm:$0xf]
    %v2955 = vld [vmem:[#allocation15 + $0x508] sm:$0xff]
    %v2956 = vld [vmem:[#allocation15 + $0x510] sm:$0xff]
    %v2957 = vld [vmem:[#allocation15 + $0x518] sm:$0xff]
    %v2958 = vld [vmem:[#allocation15 + $0x520] sm:$0xf]
    %v2959 = vld [vmem:[#allocation15 + $0x524] sm:$0xff]
    %v2960 = vld [vmem:[#allocation15 + $0x52c] sm:$0xff]
    %v2961 = vld [vmem:[#allocation15 + $0x534] sm:$0xff]
    %v2962 = vld [vmem:[#allocation15 + $0x53c] sm:$0xf]
    %v2963 = vld [vmem:[#allocation15 + $0x540] sm:$0xff]
    %v2964 = vld [vmem:[#allocation15 + $0x548] sm:$0xff]
    %v2965 = vld [vmem:[#allocation15 + $0x550] sm:$0xff]
    %v2966 = vld [vmem:[#allocation15 + $0x558] sm:$0xf]
    %v2967 = vld [vmem:[#allocation15 + $0x55c] sm:$0xff]
    %v2968 = vld [vmem:[#allocation15 + $0x564] sm:$0xff]
    %v2969 = vld [vmem:[#allocation15 + $0x56c] sm:$0xff]
    %v2970 = vld [vmem:[#allocation15 + $0x574] sm:$0xf]
    %v2971 = vld [vmem:[#allocation15 + $0x578] sm:$0xff]
    %v2972 = vld [vmem:[#allocation15 + $0x580] sm:$0xff]
    %v2973 = vld [vmem:[#allocation15 + $0x588] sm:$0xff]
    %v2974 = vld [vmem:[#allocation15 + $0x590] sm:$0xf]
    %v2975 = vld [vmem:[#allocation15 + $0x594] sm:$0xff]
    %v2976 = vld [vmem:[#allocation15 + $0x59c] sm:$0xff]
    %v2977 = vld [vmem:[#allocation15 + $0x5a4] sm:$0xff]
    %v2978 = vld [vmem:[#allocation15 + $0x5ac] sm:$0xf]
    %v2979 = vld [vmem:[#allocation15 + $0x5b0] sm:$0xff]
    %v2980 = vld [vmem:[#allocation15 + $0x5b8] sm:$0xff]
    %v2981 = vld [vmem:[#allocation15 + $0x5c0] sm:$0xff]
    %v2982 = vld [vmem:[#allocation15 + $0x5c8] sm:$0xf]
    %v2983 = vld [vmem:[#allocation15 + $0x5cc] sm:$0xff]
    %v2984 = vld [vmem:[#allocation15 + $0x5d4] sm:$0xff]
    %v2985 = vld [vmem:[#allocation15 + $0x5dc] sm:$0xff]
    %v2986 = vld [vmem:[#allocation15 + $0x5e4] sm:$0xf]
    %v2987 = vld [vmem:[#allocation15 + $0x5e8] sm:$0xff]
    %v2988 = vld [vmem:[#allocation15 + $0x5f0] sm:$0xff]
    %v2989 = vld [vmem:[#allocation15 + $0x5f8] sm:$0xff]
    %v2990 = vld [vmem:[#allocation15 + $0x600] sm:$0xf]
    %v2991 = vld [vmem:[#allocation15 + $0x604] sm:$0xff]
    %v2992 = vld [vmem:[#allocation15 + $0x60c] sm:$0xff]
    %v2993 = vld [vmem:[#allocation15 + $0x614] sm:$0xff]
    %v2994 = vld [vmem:[#allocation15 + $0x61c] sm:$0xf]
    %v2995 = vld [vmem:[#allocation15 + $0x620] sm:$0xff]
    %v2996 = vld [vmem:[#allocation15 + $0x628] sm:$0xff]
    %v2997 = vld [vmem:[#allocation15 + $0x630] sm:$0xff]
    %v2998 = vld [vmem:[#allocation15 + $0x638] sm:$0xf]
    %v2999 = vld [vmem:[#allocation15 + $0x63c] sm:$0xff]
    %v3000 = vld [vmem:[#allocation15 + $0x644] sm:$0xff]
    %v3001 = vld [vmem:[#allocation15 + $0x64c] sm:$0xff]
    %v3002 = vld [vmem:[#allocation15 + $0x654] sm:$0xf]
    %v3003 = vld [vmem:[#allocation15 + $0x658] sm:$0xff]
    %v3004 = vld [vmem:[#allocation15 + $0x660] sm:$0xff]
    %v3005 = vld [vmem:[#allocation15 + $0x668] sm:$0xff]
    %v3006 = vld [vmem:[#allocation15 + $0x670] sm:$0xf]
    %v3007 = vld [vmem:[#allocation15 + $0x674] sm:$0xff]
    %v3008 = vld [vmem:[#allocation15 + $0x67c] sm:$0xff]
    %v3009 = vld [vmem:[#allocation15 + $0x684] sm:$0xff]
    %v3010 = vld [vmem:[#allocation15 + $0x68c] sm:$0xf]
    %v3011 = vld [vmem:[#allocation15 + $0x690] sm:$0xff]
    %v3012 = vld [vmem:[#allocation15 + $0x698] sm:$0xff]
    %v3013 = vld [vmem:[#allocation15 + $0x6a0] sm:$0xff]
    %v3014 = vld [vmem:[#allocation15 + $0x6a8] sm:$0xf]
    %v3015 = vld [vmem:[#allocation15 + $0x6ac] sm:$0xff]
    %v3016 = vld [vmem:[#allocation15 + $0x6b4] sm:$0xff]
    %v3017 = vld [vmem:[#allocation15 + $0x6bc] sm:$0xff]
    %v3018 = vld [vmem:[#allocation15 + $0x6c4] sm:$0xf]
    %v3019 = vld [vmem:[#allocation15 + $0x6c8] sm:$0xff]
    %v3020 = vld [vmem:[#allocation15 + $0x6d0] sm:$0xff]
    %v3021 = vld [vmem:[#allocation15 + $0x6d8] sm:$0xff]
    %v3022 = vld [vmem:[#allocation15 + $0x6e0] sm:$0xf]
    %v3023 = vld [vmem:[#allocation15 + $0x6e4] sm:$0xff]
    %v3024 = vld [vmem:[#allocation15 + $0x6ec] sm:$0xff]
    %v3025 = vld [vmem:[#allocation15 + $0x6f4] sm:$0xff]
    %v3026 = vld [vmem:[#allocation15 + $0x6fc] sm:$0xf]
    %v3027 = vld [vmem:[#allocation15 + $0x700] sm:$0xff]
    %v3028 = vld [vmem:[#allocation15 + $0x708] sm:$0xff]
    %v3029 = vld [vmem:[#allocation15 + $0x710] sm:$0xff]
    %v3030 = vld [vmem:[#allocation15 + $0x718] sm:$0xf]
    %v3031 = vld [vmem:[#allocation15 + $0x71c] sm:$0xff]
    %v3032 = vld [vmem:[#allocation15 + $0x724] sm:$0xff]
    %v3033 = vld [vmem:[#allocation15 + $0x72c] sm:$0xff]
    %v3034 = vld [vmem:[#allocation15 + $0x734] sm:$0xf]
    %v3035 = vld [vmem:[#allocation15 + $0x738] sm:$0xff]
    %v3036 = vld [vmem:[#allocation15 + $0x740] sm:$0xff]
    %v3037 = vld [vmem:[#allocation15 + $0x748] sm:$0xff]
    %v3038 = vld [vmem:[#allocation15 + $0x750] sm:$0xf]
    %v3039 = vld [vmem:[#allocation15 + $0x754] sm:$0xff]
    %v3040 = vld [vmem:[#allocation15 + $0x75c] sm:$0xff]
    %v3041 = vld [vmem:[#allocation15 + $0x764] sm:$0xff]
    %v3042 = vld [vmem:[#allocation15 + $0x76c] sm:$0xf]
    %v3043 = vld [vmem:[#allocation15 + $0x770] sm:$0xff]
    %v3044 = vld [vmem:[#allocation15 + $0x778] sm:$0xff]
    %v3045 = vld [vmem:[#allocation15 + $0x780] sm:$0xff]
    %v3046 = vld [vmem:[#allocation15 + $0x788] sm:$0xf]
    %v3047 = vld [vmem:[#allocation15 + $0x78c] sm:$0xff]
    %v3048 = vld [vmem:[#allocation15 + $0x794] sm:$0xff]
    %v3049 = vld [vmem:[#allocation15 + $0x79c] sm:$0xff]
    %v3050 = vld [vmem:[#allocation15 + $0x7a4] sm:$0xf]
    %v3051 = vld [vmem:[#allocation15 + $0x7a8] sm:$0xff]
    %v3052 = vld [vmem:[#allocation15 + $0x7b0] sm:$0xff]
    %v3053 = vld [vmem:[#allocation15 + $0x7b8] sm:$0xff]
    %v3054 = vld [vmem:[#allocation15 + $0x7c0] sm:$0xf]
    %v3055 = vld [vmem:[#allocation15 + $0x7c4] sm:$0xff]
    %v3056 = vld [vmem:[#allocation15 + $0x7cc] sm:$0xff]
    %v3057 = vld [vmem:[#allocation15 + $0x7d4] sm:$0xff]
    %v3058 = vld [vmem:[#allocation15 + $0x7dc] sm:$0xf]
    %v3059 = vld [vmem:[#allocation15 + $0x7e0] sm:$0xff]
    %v3060 = vld [vmem:[#allocation15 + $0x7e8] sm:$0xff]
    %v3061 = vld [vmem:[#allocation15 + $0x7f0] sm:$0xff]
    %v3062 = vld [vmem:[#allocation15 + $0x7f8] sm:$0xf]
    %v3063 = vld [vmem:[#allocation15 + $0x7fc] sm:$0xff]
    %v3064 = vld [vmem:[#allocation15 + $0x804] sm:$0xff]
    %v3065 = vld [vmem:[#allocation15 + $0x80c] sm:$0xff]
    %v3066 = vld [vmem:[#allocation15 + $0x814] sm:$0xf]
    %v3067 = vld [vmem:[#allocation15 + $0x818] sm:$0xff]
    %v3068 = vld [vmem:[#allocation15 + $0x820] sm:$0xff]
    %v3069 = vld [vmem:[#allocation15 + $0x828] sm:$0xff]
    %v3070 = vld [vmem:[#allocation15 + $0x830] sm:$0xf]
    %v3071 = vld [vmem:[#allocation15 + $0x834] sm:$0xff]
    %v3072 = vld [vmem:[#allocation15 + $0x83c] sm:$0xff]
    %v3073 = vld [vmem:[#allocation15 + $0x844] sm:$0xff]
    %v3074 = vld [vmem:[#allocation15 + $0x84c] sm:$0xf]
    %v3075 = vld [vmem:[#allocation15 + $0x850] sm:$0xff]
    %v3076 = vld [vmem:[#allocation15 + $0x858] sm:$0xff]
    %v3077 = vld [vmem:[#allocation15 + $0x860] sm:$0xff]
    %v3078 = vld [vmem:[#allocation15 + $0x868] sm:$0xf]
    %v3079 = vld [vmem:[#allocation15 + $0x86c] sm:$0xff]
    %v3080 = vld [vmem:[#allocation15 + $0x874] sm:$0xff]
    %v3081 = vld [vmem:[#allocation15 + $0x87c] sm:$0xff]
    %v3082 = vld [vmem:[#allocation15 + $0x884] sm:$0xf]
    %v3083 = vld [vmem:[#allocation15 + $0x888] sm:$0xff]
    %v3084 = vld [vmem:[#allocation15 + $0x890] sm:$0xff]
    %v3085 = vld [vmem:[#allocation15 + $0x898] sm:$0xff]
    %v3086 = vld [vmem:[#allocation15 + $0x8a0] sm:$0xf]
    %v3087 = vld [vmem:[#allocation15 + $0x8a4] sm:$0xff]
    %v3088 = vld [vmem:[#allocation15 + $0x8ac] sm:$0xff]
    %v3089 = vld [vmem:[#allocation15 + $0x8b4] sm:$0xff]
    %v3090 = vld [vmem:[#allocation15 + $0x8bc] sm:$0xf]
    %v3091 = vld [vmem:[#allocation15 + $0x8c0] sm:$0xff]
    %v3092 = vld [vmem:[#allocation15 + $0x8c8] sm:$0xff]
    %v3093 = vld [vmem:[#allocation15 + $0x8d0] sm:$0xff]
    %v3094 = vld [vmem:[#allocation15 + $0x8d8] sm:$0xf]
    %v3095 = vld [vmem:[#allocation15 + $0x8dc] sm:$0xff]
    %v3096 = vld [vmem:[#allocation15 + $0x8e4] sm:$0xff]
    %v3097 = vld [vmem:[#allocation15 + $0x8ec] sm:$0xff]
    %v3098 = vld [vmem:[#allocation15 + $0x8f4] sm:$0xf]
    %v3099 = vld [vmem:[#allocation15 + $0x8f8] sm:$0xff]
    %v3100 = vld [vmem:[#allocation15 + $0x900] sm:$0xff]
    %v3101 = vld [vmem:[#allocation15 + $0x908] sm:$0xff]
    %v3102 = vld [vmem:[#allocation15 + $0x910] sm:$0xf]
    %v3103 = vld [vmem:[#allocation15 + $0x914] sm:$0xff]
    %v3104 = vld [vmem:[#allocation15 + $0x91c] sm:$0xff]
    %v3105 = vld [vmem:[#allocation15 + $0x924] sm:$0xff]
    %v3106 = vld [vmem:[#allocation15 + $0x92c] sm:$0xf]
    %v3107 = vld [vmem:[#allocation15 + $0x930] sm:$0xff]
    %v3108 = vld [vmem:[#allocation15 + $0x938] sm:$0xff]
    %v3109 = vld [vmem:[#allocation15 + $0x940] sm:$0xff]
    %v3110 = vld [vmem:[#allocation15 + $0x948] sm:$0xf]
    %v3111 = vld [vmem:[#allocation15 + $0x94c] sm:$0xff]
    %v3112 = vld [vmem:[#allocation15 + $0x954] sm:$0xff]
    %v3113 = vld [vmem:[#allocation15 + $0x95c] sm:$0xff]
    %v3114 = vld [vmem:[#allocation15 + $0x964] sm:$0xf]
    %v3115 = vld [vmem:[#allocation15 + $0x968] sm:$0xff]
    %v3116 = vld [vmem:[#allocation15 + $0x970] sm:$0xff]
    %v3117 = vld [vmem:[#allocation15 + $0x978] sm:$0xff]
    %v3118 = vld [vmem:[#allocation15 + $0x980] sm:$0xf]
    %v3119 = vld [vmem:[#allocation15 + $0x984] sm:$0xff]
    %v3120 = vld [vmem:[#allocation15 + $0x98c] sm:$0xff]
    %v3121 = vld [vmem:[#allocation15 + $0x994] sm:$0xff]
    %v3122 = vld [vmem:[#allocation15 + $0x99c] sm:$0xf]
    %v3123 = vld [vmem:[#allocation15 + $0x9a0] sm:$0xff]
    %v3124 = vld [vmem:[#allocation15 + $0x9a8] sm:$0xff]
    %v3125 = vld [vmem:[#allocation15 + $0x9b0] sm:$0xff]
    %v3126 = vld [vmem:[#allocation15 + $0x9b8] sm:$0xf]
    %v3127 = vld [vmem:[#allocation15 + $0x9bc] sm:$0xff]
    %v3128 = vld [vmem:[#allocation15 + $0x9c4] sm:$0xff]
    %v3129 = vld [vmem:[#allocation15 + $0x9cc] sm:$0xff]
    %v3130 = vld [vmem:[#allocation15 + $0x9d4] sm:$0xf]
    %v3131 = vld [vmem:[#allocation15 + $0x9d8] sm:$0xff]
    %v3132 = vld [vmem:[#allocation15 + $0x9e0] sm:$0xff]
    %v3133 = vld [vmem:[#allocation15 + $0x9e8] sm:$0xff]
    %v3134 = vld [vmem:[#allocation15 + $0x9f0] sm:$0xf]
    %v3135 = vld [vmem:[#allocation15 + $0x9f4] sm:$0xff]
    %v3136 = vld [vmem:[#allocation15 + $0x9fc] sm:$0xff]
    %v3137 = vld [vmem:[#allocation15 + $0xa04] sm:$0xff]
    %v3138 = vld [vmem:[#allocation15 + $0xa0c] sm:$0xf]
    %v3139 = vld [vmem:[#allocation15 + $0xa10] sm:$0xff]
    %v3140 = vld [vmem:[#allocation15 + $0xa18] sm:$0xff]
    %v3141 = vld [vmem:[#allocation15 + $0xa20] sm:$0xff]
    %v3142 = vld [vmem:[#allocation15 + $0xa28] sm:$0xf]
    %v3143 = vld [vmem:[#allocation15 + $0xa2c] sm:$0xff]
    %v3144 = vld [vmem:[#allocation15 + $0xa34] sm:$0xff]
    %v3145 = vld [vmem:[#allocation15 + $0xa3c] sm:$0xff]
    %v3146 = vld [vmem:[#allocation15 + $0xa44] sm:$0xf]
    %v3147 = vld [vmem:[#allocation15 + $0xa48] sm:$0xff]
    %v3148 = vld [vmem:[#allocation15 + $0xa50] sm:$0xff]
    %v3149 = vld [vmem:[#allocation15 + $0xa58] sm:$0xff]
    %v3150 = vld [vmem:[#allocation15 + $0xa60] sm:$0xf]
    %v3151 = vld [vmem:[#allocation15 + $0xa64] sm:$0xff]
    %v3152 = vld [vmem:[#allocation15 + $0xa6c] sm:$0xff]
    %v3153 = vld [vmem:[#allocation15 + $0xa74] sm:$0xff]
    %v3154 = vld [vmem:[#allocation15 + $0xa7c] sm:$0xf]
    %v3155 = vld [vmem:[#allocation15 + $0xa80] sm:$0xff]
    %v3156 = vld [vmem:[#allocation15 + $0xa88] sm:$0xff]
    %v3157 = vld [vmem:[#allocation15 + $0xa90] sm:$0xff]
    %v3158 = vld [vmem:[#allocation15 + $0xa98] sm:$0xf]
    %v3159 = vld [vmem:[#allocation15 + $0xa9c] sm:$0xff]
    %v3160 = vld [vmem:[#allocation15 + $0xaa4] sm:$0xff]
    %v3161 = vld [vmem:[#allocation15 + $0xaac] sm:$0xff]
    %v3162 = vld [vmem:[#allocation15 + $0xab4] sm:$0xf]
    %v3163 = vld [vmem:[#allocation15 + $0xab8] sm:$0xff]
    %v3164 = vld [vmem:[#allocation15 + $0xac0] sm:$0xff]
    %v3165 = vld [vmem:[#allocation15 + $0xac8] sm:$0xff]
    %v3166 = vld [vmem:[#allocation15 + $0xad0] sm:$0xf]
    %v3167 = vld [vmem:[#allocation15 + $0xad4] sm:$0xff]
    %v3168 = vld [vmem:[#allocation15 + $0xadc] sm:$0xff]
    %v3169 = vld [vmem:[#allocation15 + $0xae4] sm:$0xff]
    %v3170 = vld [vmem:[#allocation15 + $0xaec] sm:$0xf]
    %v3171 = vld [vmem:[#allocation15 + $0xaf0] sm:$0xff]
    %v3172 = vld [vmem:[#allocation15 + $0xaf8] sm:$0xff]
    %v3173 = vld [vmem:[#allocation15 + $0xb00] sm:$0xff]
    %v3174 = vld [vmem:[#allocation15 + $0xb08] sm:$0xf]
    %v3175 = vld [vmem:[#allocation15 + $0xb0c] sm:$0xff]
    %v3176 = vld [vmem:[#allocation15 + $0xb14] sm:$0xff]
    %v3177 = vld [vmem:[#allocation15 + $0xb1c] sm:$0xff]
    %v3178 = vld [vmem:[#allocation15 + $0xb24] sm:$0xf]
    %v3179 = vld [vmem:[#allocation15 + $0xb28] sm:$0xff]
    %v3180 = vld [vmem:[#allocation15 + $0xb30] sm:$0xff]
    %v3181 = vld [vmem:[#allocation15 + $0xb38] sm:$0xff]
    %v3182 = vld [vmem:[#allocation15 + $0xb40] sm:$0xf]
    %v3183 = vld [vmem:[#allocation15 + $0xb44] sm:$0xff]
    %v3184 = vld [vmem:[#allocation15 + $0xb4c] sm:$0xff]
    %v3185 = vld [vmem:[#allocation15 + $0xb54] sm:$0xff]
    %v3186 = vld [vmem:[#allocation15 + $0xb5c] sm:$0xf]
    %v3187 = vld [vmem:[#allocation15 + $0xb60] sm:$0xff]
    %v3188 = vld [vmem:[#allocation15 + $0xb68] sm:$0xff]
    %v3189 = vld [vmem:[#allocation15 + $0xb70] sm:$0xff]
    %v3190 = vld [vmem:[#allocation15 + $0xb78] sm:$0xf]
    %v3191 = vld [vmem:[#allocation15 + $0xb7c] sm:$0xff]
    %v3192 = vld [vmem:[#allocation15 + $0xb84] sm:$0xff]
    %v3193 = vld [vmem:[#allocation15 + $0xb8c] sm:$0xff]
    %v3194 = vld [vmem:[#allocation15 + $0xb94] sm:$0xf]
    %v3195 = vld [vmem:[#allocation15 + $0xb98] sm:$0xff]
    %v3196 = vld [vmem:[#allocation15 + $0xba0] sm:$0xff]
    %v3197 = vld [vmem:[#allocation15 + $0xba8] sm:$0xff]
    %v3198 = vld [vmem:[#allocation15 + $0xbb0] sm:$0xf]
    %v3199 = vld [vmem:[#allocation15 + $0xbb4] sm:$0xff]
    %v3200 = vld [vmem:[#allocation15 + $0xbbc] sm:$0xff]
    %v3201 = vld [vmem:[#allocation15 + $0xbc4] sm:$0xff]
    %v3202 = vld [vmem:[#allocation15 + $0xbcc] sm:$0xf]
    %v3203 = vld [vmem:[#allocation15 + $0xbd0] sm:$0xff]
    %v3204 = vld [vmem:[#allocation15 + $0xbd8] sm:$0xff]
    %v3205 = vld [vmem:[#allocation15 + $0xbe0] sm:$0xff]
    %v3206 = vld [vmem:[#allocation15 + $0xbe8] sm:$0xf]
    %v3207 = vld [vmem:[#allocation15 + $0xbec] sm:$0xff]
    %v3208 = vld [vmem:[#allocation15 + $0xbf4] sm:$0xff]
    %v3209 = vld [vmem:[#allocation15 + $0xbfc] sm:$0xff]
    %v3210 = vld [vmem:[#allocation15 + $0xc04] sm:$0xf]
    %v3211 = vld [vmem:[#allocation15 + $0xc08] sm:$0xff]
    %v3212 = vld [vmem:[#allocation15 + $0xc10] sm:$0xff]
    %v3213 = vld [vmem:[#allocation15 + $0xc18] sm:$0xff]
    %v3214 = vld [vmem:[#allocation15 + $0xc20] sm:$0xf]
    %v3215 = vld [vmem:[#allocation15 + $0xc24] sm:$0xff]
    %v3216 = vld [vmem:[#allocation15 + $0xc2c] sm:$0xff]
    %v3217 = vld [vmem:[#allocation15 + $0xc34] sm:$0xff]
    %v3218 = vld [vmem:[#allocation15 + $0xc3c] sm:$0xf]
    %v3219 = vld [vmem:[#allocation15 + $0xc40] sm:$0xff]
    %v3220 = vld [vmem:[#allocation15 + $0xc48] sm:$0xff]
    %v3221 = vld [vmem:[#allocation15 + $0xc50] sm:$0xff]
    %v3222 = vld [vmem:[#allocation15 + $0xc58] sm:$0xf]
    %v3223 = vld [vmem:[#allocation15 + $0xc5c] sm:$0xff]
    %v3224 = vld [vmem:[#allocation15 + $0xc64] sm:$0xff]
    %v3225 = vld [vmem:[#allocation15 + $0xc6c] sm:$0xff]
    %v3226 = vld [vmem:[#allocation15 + $0xc74] sm:$0xf]
    %v3227 = vld [vmem:[#allocation15 + $0xc78] sm:$0xff]
    %v3228 = vld [vmem:[#allocation15 + $0xc80] sm:$0xff]
    %v3229 = vld [vmem:[#allocation15 + $0xc88] sm:$0xff]
    %v3230 = vld [vmem:[#allocation15 + $0xc90] sm:$0xf]
    %v3231 = vld [vmem:[#allocation15 + $0xc94] sm:$0xff]
    %v3232 = vld [vmem:[#allocation15 + $0xc9c] sm:$0xff]
    %v3233 = vld [vmem:[#allocation15 + $0xca4] sm:$0xff]
    %v3234 = vld [vmem:[#allocation15 + $0xcac] sm:$0xf]
    %v3235 = vld [vmem:[#allocation15 + $0xcb0] sm:$0xff]
    %v3236 = vld [vmem:[#allocation15 + $0xcb8] sm:$0xff]
    %v3237 = vld [vmem:[#allocation15 + $0xcc0] sm:$0xff]
    %v3238 = vld [vmem:[#allocation15 + $0xcc8] sm:$0xf]
    %v3239 = vld [vmem:[#allocation15 + $0xccc] sm:$0xff]
    %v3240 = vld [vmem:[#allocation15 + $0xcd4] sm:$0xff]
    %v3241 = vld [vmem:[#allocation15 + $0xcdc] sm:$0xff]
    %v3242 = vld [vmem:[#allocation15 + $0xce4] sm:$0xf]
    %v3243 = vld [vmem:[#allocation15 + $0xce8] sm:$0xff]
    %v3244 = vld [vmem:[#allocation15 + $0xcf0] sm:$0xff]
    %v3245 = vld [vmem:[#allocation15 + $0xcf8] sm:$0xff]
    %v3246 = vld [vmem:[#allocation15 + $0xd00] sm:$0xf]
    %v3247 = vld [vmem:[#allocation15 + $0xd04] sm:$0xff]
    %v3248 = vld [vmem:[#allocation15 + $0xd0c] sm:$0xff]
    %v3249 = vld [vmem:[#allocation15 + $0xd14] sm:$0xff]
    %v3250 = vld [vmem:[#allocation15 + $0xd1c] sm:$0xf]
    %v3251 = vld [vmem:[#allocation15 + $0xd20] sm:$0xff]
    %v3252 = vld [vmem:[#allocation15 + $0xd28] sm:$0xff]
    %v3253 = vld [vmem:[#allocation15 + $0xd30] sm:$0xff]
    %v3254 = vld [vmem:[#allocation15 + $0xd38] sm:$0xf]
    %v3255 = vld [vmem:[#allocation15 + $0xd3c] sm:$0xff]
    %v3256 = vld [vmem:[#allocation15 + $0xd44] sm:$0xff]
    %v3257 = vld [vmem:[#allocation15 + $0xd4c] sm:$0xff]
    %v3258 = vld [vmem:[#allocation15 + $0xd54] sm:$0xf]
    %v3259 = vld [vmem:[#allocation15 + $0xd58] sm:$0xff]
    %v3260 = vld [vmem:[#allocation15 + $0xd60] sm:$0xff]
    %v3261 = vld [vmem:[#allocation15 + $0xd68] sm:$0xff]
    %v3262 = vld [vmem:[#allocation15 + $0xd70] sm:$0xf]
    %v3263 = vld [vmem:[#allocation15 + $0xd74] sm:$0xff]
    %v3264 = vld [vmem:[#allocation15 + $0xd7c] sm:$0xff]
    %v3265 = vld [vmem:[#allocation15 + $0xd84] sm:$0xff]
    %v3266 = vld [vmem:[#allocation15 + $0xd8c] sm:$0xf]
    %v3267 = vld [vmem:[#allocation15 + $0xd90] sm:$0xff]
    %v3268 = vld [vmem:[#allocation15 + $0xd98] sm:$0xff]
    %v3269 = vld [vmem:[#allocation15 + $0xda0] sm:$0xff]
    %v3270 = vld [vmem:[#allocation15 + $0xda8] sm:$0xf]
    %v3271 = vld [vmem:[#allocation15 + $0xdac] sm:$0xff]
    %v3272 = vld [vmem:[#allocation15 + $0xdb4] sm:$0xff]
    %v3273 = vld [vmem:[#allocation15 + $0xdbc] sm:$0xff]
    %v3274 = vld [vmem:[#allocation15 + $0xdc4] sm:$0xf]
    %v3275 = vld [vmem:[#allocation15 + $0xdc8] sm:$0xff]
    %v3276 = vld [vmem:[#allocation15 + $0xdd0] sm:$0xff]
    %v3277 = vld [vmem:[#allocation15 + $0xdd8] sm:$0xff]
    %v3278 = vld [vmem:[#allocation15 + $0xde0] sm:$0xf]
    %v3279 = vld [vmem:[#allocation15 + $0xde4] sm:$0xff]
    %v3280 = vld [vmem:[#allocation15 + $0xdec] sm:$0xff]
    %v3281 = vld [vmem:[#allocation15 + $0xdf4] sm:$0xff]
    %v3282 = vld [vmem:[#allocation15 + $0xdfc] sm:$0xf]
    %v3283 = vld [vmem:[#allocation17] sm:$0xff]
    %v3285 = vlaneseq
    %v3286 = vshrl.u32 %v3285, 7
    %v3287 = vsub.s32 0, %v3286
    %v3288 = vrot.slane %v3283, %v3287
    %v3289 = vlaneseq
    %v3290 = vshrl.u32 %v3289, 7
    %v3291 = vsub.s32 1, %v3290
    %v3292 = vrot.slane %v3283, %v3291
    %v3293 = vlaneseq
    %v3294 = vshrl.u32 %v3293, 7
    %v3295 = vsub.s32 2, %v3294
    %v3296 = vrot.slane %v3283, %v3295
    %v3297 = vlaneseq
    %v3298 = vshrl.u32 %v3297, 7
    %v3299 = vsub.s32 3, %v3298
    %v3300 = vrot.slane %v3283, %v3299
    %v3301 = vlaneseq
    %v3302 = vshrl.u32 %v3301, 7
    %v3303 = vsub.s32 4, %v3302
    %v3304 = vrot.slane %v3283, %v3303
    %v3305 = vlaneseq
    %v3306 = vshrl.u32 %v3305, 7
    %v3307 = vsub.s32 5, %v3306
    %v3308 = vrot.slane %v3283, %v3307
    %v3309 = vlaneseq
    %v3310 = vshrl.u32 %v3309, 7
    %v3311 = vsub.s32 6, %v3310
    %v3312 = vrot.slane %v3283, %v3311
    %v3832 = vunpack.c.l.b16 %v2771
    %v3833 = vunpack.c.h.b16 %v2771
    %v3834 = vunpack.c.l.b16 %v2772
    %v3835 = vunpack.c.h.b16 %v2772
    %v3836 = vunpack.c.l.b16 %v2773
    %v3837 = vunpack.c.h.b16 %v2773
    %v3838 = vunpack.c.l.b16 %v2774
    %v3839 = vunpack.c.l.b16 %v2775
    %v3840 = vunpack.c.h.b16 %v2775
    %v3841 = vunpack.c.l.b16 %v2776
    %v3842 = vunpack.c.h.b16 %v2776
    %v3843 = vunpack.c.l.b16 %v2777
    %v3844 = vunpack.c.h.b16 %v2777
    %v3845 = vunpack.c.l.b16 %v2778
    %v3846 = vunpack.c.l.b16 %v2779
    %v3847 = vunpack.c.h.b16 %v2779
    %v3848 = vunpack.c.l.b16 %v2780
    %v3849 = vunpack.c.h.b16 %v2780
    %v3850 = vunpack.c.l.b16 %v2781
    %v3851 = vunpack.c.h.b16 %v2781
    %v3852 = vunpack.c.l.b16 %v2782
    %v3853 = vunpack.c.l.b16 %v2783
    %v3854 = vunpack.c.h.b16 %v2783
    %v3855 = vunpack.c.l.b16 %v2784
    %v3856 = vunpack.c.h.b16 %v2784
    %v3857 = vunpack.c.l.b16 %v2785
    %v3858 = vunpack.c.h.b16 %v2785
    %v3859 = vunpack.c.l.b16 %v2786
    %v3860 = vunpack.c.l.b16 %v2787
    %v3861 = vunpack.c.h.b16 %v2787
    %v3862 = vunpack.c.l.b16 %v2788
    %v3863 = vunpack.c.h.b16 %v2788
    %v3864 = vunpack.c.l.b16 %v2789
    %v3865 = vunpack.c.h.b16 %v2789
    %v3866 = vunpack.c.l.b16 %v2790
    %v3867 = vunpack.c.l.b16 %v2791
    %v3868 = vunpack.c.h.b16 %v2791
    %v3869 = vunpack.c.l.b16 %v2792
    %v3870 = vunpack.c.h.b16 %v2792
    %v3871 = vunpack.c.l.b16 %v2793
    %v3872 = vunpack.c.h.b16 %v2793
    %v3873 = vunpack.c.l.b16 %v2794
    %v3874 = vunpack.c.l.b16 %v2795
    %v3875 = vunpack.c.h.b16 %v2795
    %v3876 = vunpack.c.l.b16 %v2796
    %v3877 = vunpack.c.h.b16 %v2796
    %v3878 = vunpack.c.l.b16 %v2797
    %v3879 = vunpack.c.h.b16 %v2797
    %v3880 = vunpack.c.l.b16 %v2798
    %v3881 = vunpack.c.l.b16 %v2799
    %v3882 = vunpack.c.h.b16 %v2799
    %v3883 = vunpack.c.l.b16 %v2800
    %v3884 = vunpack.c.h.b16 %v2800
    %v3885 = vunpack.c.l.b16 %v2801
    %v3886 = vunpack.c.h.b16 %v2801
    %v3887 = vunpack.c.l.b16 %v2802
    %v3888 = vunpack.c.l.b16 %v2803
    %v3889 = vunpack.c.h.b16 %v2803
    %v3890 = vunpack.c.l.b16 %v2804
    %v3891 = vunpack.c.h.b16 %v2804
    %v3892 = vunpack.c.l.b16 %v2805
    %v3893 = vunpack.c.h.b16 %v2805
    %v3894 = vunpack.c.l.b16 %v2806
    %v3895 = vunpack.c.l.b16 %v2807
    %v3896 = vunpack.c.h.b16 %v2807
    %v3897 = vunpack.c.l.b16 %v2808
    %v3898 = vunpack.c.h.b16 %v2808
    %v3899 = vunpack.c.l.b16 %v2809
    %v3900 = vunpack.c.h.b16 %v2809
    %v3901 = vunpack.c.l.b16 %v2810
    %v3902 = vunpack.c.l.b16 %v2811
    %v3903 = vunpack.c.h.b16 %v2811
    %v3904 = vunpack.c.l.b16 %v2812
    %v3905 = vunpack.c.h.b16 %v2812
    %v3906 = vunpack.c.l.b16 %v2813
    %v3907 = vunpack.c.h.b16 %v2813
    %v3908 = vunpack.c.l.b16 %v2814
    %v3909 = vunpack.c.l.b16 %v2815
    %v3910 = vunpack.c.h.b16 %v2815
    %v3911 = vunpack.c.l.b16 %v2816
    %v3912 = vunpack.c.h.b16 %v2816
    %v3913 = vunpack.c.l.b16 %v2817
    %v3914 = vunpack.c.h.b16 %v2817
    %v3915 = vunpack.c.l.b16 %v2818
    %v3916 = vunpack.c.l.b16 %v2819
    %v3917 = vunpack.c.h.b16 %v2819
    %v3918 = vunpack.c.l.b16 %v2820
    %v3919 = vunpack.c.h.b16 %v2820
    %v3920 = vunpack.c.l.b16 %v2821
    %v3921 = vunpack.c.h.b16 %v2821
    %v3922 = vunpack.c.l.b16 %v2822
    %v3923 = vunpack.c.l.b16 %v2823
    %v3924 = vunpack.c.h.b16 %v2823
    %v3925 = vunpack.c.l.b16 %v2824
    %v3926 = vunpack.c.h.b16 %v2824
    %v3927 = vunpack.c.l.b16 %v2825
    %v3928 = vunpack.c.h.b16 %v2825
    %v3929 = vunpack.c.l.b16 %v2826
    %v3930 = vunpack.c.l.b16 %v2827
    %v3931 = vunpack.c.h.b16 %v2827
    %v3932 = vunpack.c.l.b16 %v2828
    %v3933 = vunpack.c.h.b16 %v2828
    %v3934 = vunpack.c.l.b16 %v2829
    %v3935 = vunpack.c.h.b16 %v2829
    %v3936 = vunpack.c.l.b16 %v2830
    %v3937 = vunpack.c.l.b16 %v2831
    %v3938 = vunpack.c.h.b16 %v2831
    %v3939 = vunpack.c.l.b16 %v2832
    %v3940 = vunpack.c.h.b16 %v2832
    %v3941 = vunpack.c.l.b16 %v2833
    %v3942 = vunpack.c.h.b16 %v2833
    %v3943 = vunpack.c.l.b16 %v2834
    %v3944 = vunpack.c.l.b16 %v2835
    %v3945 = vunpack.c.h.b16 %v2835
    %v3946 = vunpack.c.l.b16 %v2836
    %v3947 = vunpack.c.h.b16 %v2836
    %v3948 = vunpack.c.l.b16 %v2837
    %v3949 = vunpack.c.h.b16 %v2837
    %v3950 = vunpack.c.l.b16 %v2838
    %v3951 = vunpack.c.l.b16 %v2839
    %v3952 = vunpack.c.h.b16 %v2839
    %v3953 = vunpack.c.l.b16 %v2840
    %v3954 = vunpack.c.h.b16 %v2840
    %v3955 = vunpack.c.l.b16 %v2841
    %v3956 = vunpack.c.h.b16 %v2841
    %v3957 = vunpack.c.l.b16 %v2842
    %v3958 = vunpack.c.l.b16 %v2843
    %v3959 = vunpack.c.h.b16 %v2843
    %v3960 = vunpack.c.l.b16 %v2844
    %v3961 = vunpack.c.h.b16 %v2844
    %v3962 = vunpack.c.l.b16 %v2845
    %v3963 = vunpack.c.h.b16 %v2845
    %v3964 = vunpack.c.l.b16 %v2846
    %v3965 = vunpack.c.l.b16 %v2847
    %v3966 = vunpack.c.h.b16 %v2847
    %v3967 = vunpack.c.l.b16 %v2848
    %v3968 = vunpack.c.h.b16 %v2848
    %v3969 = vunpack.c.l.b16 %v2849
    %v3970 = vunpack.c.h.b16 %v2849
    %v3971 = vunpack.c.l.b16 %v2850
    %v3972 = vunpack.c.l.b16 %v2851
    %v3973 = vunpack.c.h.b16 %v2851
    %v3974 = vunpack.c.l.b16 %v2852
    %v3975 = vunpack.c.h.b16 %v2852
    %v3976 = vunpack.c.l.b16 %v2853
    %v3977 = vunpack.c.h.b16 %v2853
    %v3978 = vunpack.c.l.b16 %v2854
    %v3979 = vunpack.c.l.b16 %v2855
    %v3980 = vunpack.c.h.b16 %v2855
    %v3981 = vunpack.c.l.b16 %v2856
    %v3982 = vunpack.c.h.b16 %v2856
    %v3983 = vunpack.c.l.b16 %v2857
    %v3984 = vunpack.c.h.b16 %v2857
    %v3985 = vunpack.c.l.b16 %v2858
    %v3986 = vunpack.c.l.b16 %v2859
    %v3987 = vunpack.c.h.b16 %v2859
    %v3988 = vunpack.c.l.b16 %v2860
    %v3989 = vunpack.c.h.b16 %v2860
    %v3990 = vunpack.c.l.b16 %v2861
    %v3991 = vunpack.c.h.b16 %v2861
    %v3992 = vunpack.c.l.b16 %v2862
    %v3993 = vunpack.c.l.b16 %v2863
    %v3994 = vunpack.c.h.b16 %v2863
    %v3995 = vunpack.c.l.b16 %v2864
    %v3996 = vunpack.c.h.b16 %v2864
    %v3997 = vunpack.c.l.b16 %v2865
    %v3998 = vunpack.c.h.b16 %v2865
    %v3999 = vunpack.c.l.b16 %v2866
    %v4000 = vunpack.c.l.b16 %v2867
    %v4001 = vunpack.c.h.b16 %v2867
    %v4002 = vunpack.c.l.b16 %v2868
    %v4003 = vunpack.c.h.b16 %v2868
    %v4004 = vunpack.c.l.b16 %v2869
    %v4005 = vunpack.c.h.b16 %v2869
    %v4006 = vunpack.c.l.b16 %v2870
    %v4007 = vunpack.c.l.b16 %v2871
    %v4008 = vunpack.c.h.b16 %v2871
    %v4009 = vunpack.c.l.b16 %v2872
    %v4010 = vunpack.c.h.b16 %v2872
    %v4011 = vunpack.c.l.b16 %v2873
    %v4012 = vunpack.c.h.b16 %v2873
    %v4013 = vunpack.c.l.b16 %v2874
    %v4014 = vunpack.c.l.b16 %v2875
    %v4015 = vunpack.c.h.b16 %v2875
    %v4016 = vunpack.c.l.b16 %v2876
    %v4017 = vunpack.c.h.b16 %v2876
    %v4018 = vunpack.c.l.b16 %v2877
    %v4019 = vunpack.c.h.b16 %v2877
    %v4020 = vunpack.c.l.b16 %v2878
    %v4021 = vunpack.c.l.b16 %v2879
    %v4022 = vunpack.c.h.b16 %v2879
    %v4023 = vunpack.c.l.b16 %v2880
    %v4024 = vunpack.c.h.b16 %v2880
    %v4025 = vunpack.c.l.b16 %v2881
    %v4026 = vunpack.c.h.b16 %v2881
    %v4027 = vunpack.c.l.b16 %v2882
    %v4028 = vunpack.c.l.b16 %v2883
    %v4029 = vunpack.c.h.b16 %v2883
    %v4030 = vunpack.c.l.b16 %v2884
    %v4031 = vunpack.c.h.b16 %v2884
    %v4032 = vunpack.c.l.b16 %v2885
    %v4033 = vunpack.c.h.b16 %v2885
    %v4034 = vunpack.c.l.b16 %v2886
    %v4035 = vunpack.c.l.b16 %v2887
    %v4036 = vunpack.c.h.b16 %v2887
    %v4037 = vunpack.c.l.b16 %v2888
    %v4038 = vunpack.c.h.b16 %v2888
    %v4039 = vunpack.c.l.b16 %v2889
    %v4040 = vunpack.c.h.b16 %v2889
    %v4041 = vunpack.c.l.b16 %v2890
    %v4042 = vunpack.c.l.b16 %v2891
    %v4043 = vunpack.c.h.b16 %v2891
    %v4044 = vunpack.c.l.b16 %v2892
    %v4045 = vunpack.c.h.b16 %v2892
    %v4046 = vunpack.c.l.b16 %v2893
    %v4047 = vunpack.c.h.b16 %v2893
    %v4048 = vunpack.c.l.b16 %v2894
    %v4049 = vunpack.c.l.b16 %v2895
    %v4050 = vunpack.c.h.b16 %v2895
    %v4051 = vunpack.c.l.b16 %v2896
    %v4052 = vunpack.c.h.b16 %v2896
    %v4053 = vunpack.c.l.b16 %v2897
    %v4054 = vunpack.c.h.b16 %v2897
    %v4055 = vunpack.c.l.b16 %v2898
    %v4056 = vunpack.c.l.b16 %v2899
    %v4057 = vunpack.c.h.b16 %v2899
    %v4058 = vunpack.c.l.b16 %v2900
    %v4059 = vunpack.c.h.b16 %v2900
    %v4060 = vunpack.c.l.b16 %v2901
    %v4061 = vunpack.c.h.b16 %v2901
    %v4062 = vunpack.c.l.b16 %v2902
    %v4063 = vunpack.c.l.b16 %v2903
    %v4064 = vunpack.c.h.b16 %v2903
    %v4065 = vunpack.c.l.b16 %v2904
    %v4066 = vunpack.c.h.b16 %v2904
    %v4067 = vunpack.c.l.b16 %v2905
    %v4068 = vunpack.c.h.b16 %v2905
    %v4069 = vunpack.c.l.b16 %v2906
    %v4070 = vunpack.c.l.b16 %v2907
    %v4071 = vunpack.c.h.b16 %v2907
    %v4072 = vunpack.c.l.b16 %v2908
    %v4073 = vunpack.c.h.b16 %v2908
    %v4074 = vunpack.c.l.b16 %v2909
    %v4075 = vunpack.c.h.b16 %v2909
    %v4076 = vunpack.c.l.b16 %v2910
    %v4077 = vunpack.c.l.b16 %v2911
    %v4078 = vunpack.c.h.b16 %v2911
    %v4079 = vunpack.c.l.b16 %v2912
    %v4080 = vunpack.c.h.b16 %v2912
    %v4081 = vunpack.c.l.b16 %v2913
    %v4082 = vunpack.c.h.b16 %v2913
    %v4083 = vunpack.c.l.b16 %v2914
    %v4084 = vunpack.c.l.b16 %v2915
    %v4085 = vunpack.c.h.b16 %v2915
    %v4086 = vunpack.c.l.b16 %v2916
    %v4087 = vunpack.c.h.b16 %v2916
    %v4088 = vunpack.c.l.b16 %v2917
    %v4089 = vunpack.c.h.b16 %v2917
    %v4090 = vunpack.c.l.b16 %v2918
    %v4091 = vunpack.c.l.b16 %v2919
    %v4092 = vunpack.c.h.b16 %v2919
    %v4093 = vunpack.c.l.b16 %v2920
    %v4094 = vunpack.c.h.b16 %v2920
    %v4095 = vunpack.c.l.b16 %v2921
    %v4096 = vunpack.c.h.b16 %v2921
    %v4097 = vunpack.c.l.b16 %v2922
    %v4098 = vunpack.c.l.b16 %v2923
    %v4099 = vunpack.c.h.b16 %v2923
    %v4100 = vunpack.c.l.b16 %v2924
    %v4101 = vunpack.c.h.b16 %v2924
    %v4102 = vunpack.c.l.b16 %v2925
    %v4103 = vunpack.c.h.b16 %v2925
    %v4104 = vunpack.c.l.b16 %v2926
    %v4105 = vunpack.c.l.b16 %v2927
    %v4106 = vunpack.c.h.b16 %v2927
    %v4107 = vunpack.c.l.b16 %v2928
    %v4108 = vunpack.c.h.b16 %v2928
    %v4109 = vunpack.c.l.b16 %v2929
    %v4110 = vunpack.c.h.b16 %v2929
    %v4111 = vunpack.c.l.b16 %v2930
    %v4112 = vunpack.c.l.b16 %v2931
    %v4113 = vunpack.c.h.b16 %v2931
    %v4114 = vunpack.c.l.b16 %v2932
    %v4115 = vunpack.c.h.b16 %v2932
    %v4116 = vunpack.c.l.b16 %v2933
    %v4117 = vunpack.c.h.b16 %v2933
    %v4118 = vunpack.c.l.b16 %v2934
    %v4119 = vunpack.c.l.b16 %v2935
    %v4120 = vunpack.c.h.b16 %v2935
    %v4121 = vunpack.c.l.b16 %v2936
    %v4122 = vunpack.c.h.b16 %v2936
    %v4123 = vunpack.c.l.b16 %v2937
    %v4124 = vunpack.c.h.b16 %v2937
    %v4125 = vunpack.c.l.b16 %v2938
    %v4126 = vunpack.c.l.b16 %v2939
    %v4127 = vunpack.c.h.b16 %v2939
    %v4128 = vunpack.c.l.b16 %v2940
    %v4129 = vunpack.c.h.b16 %v2940
    %v4130 = vunpack.c.l.b16 %v2941
    %v4131 = vunpack.c.h.b16 %v2941
    %v4132 = vunpack.c.l.b16 %v2942
    %v4133 = vunpack.c.l.b16 %v2943
    %v4134 = vunpack.c.h.b16 %v2943
    %v4135 = vunpack.c.l.b16 %v2944
    %v4136 = vunpack.c.h.b16 %v2944
    %v4137 = vunpack.c.l.b16 %v2945
    %v4138 = vunpack.c.h.b16 %v2945
    %v4139 = vunpack.c.l.b16 %v2946
    %v4140 = vunpack.c.l.b16 %v2947
    %v4141 = vunpack.c.h.b16 %v2947
    %v4142 = vunpack.c.l.b16 %v2948
    %v4143 = vunpack.c.h.b16 %v2948
    %v4144 = vunpack.c.l.b16 %v2949
    %v4145 = vunpack.c.h.b16 %v2949
    %v4146 = vunpack.c.l.b16 %v2950
    %v4147 = vunpack.c.l.b16 %v2951
    %v4148 = vunpack.c.h.b16 %v2951
    %v4149 = vunpack.c.l.b16 %v2952
    %v4150 = vunpack.c.h.b16 %v2952
    %v4151 = vunpack.c.l.b16 %v2953
    %v4152 = vunpack.c.h.b16 %v2953
    %v4153 = vunpack.c.l.b16 %v2954
    %v4154 = vunpack.c.l.b16 %v2955
    %v4155 = vunpack.c.h.b16 %v2955
    %v4156 = vunpack.c.l.b16 %v2956
    %v4157 = vunpack.c.h.b16 %v2956
    %v4158 = vunpack.c.l.b16 %v2957
    %v4159 = vunpack.c.h.b16 %v2957
    %v4160 = vunpack.c.l.b16 %v2958
    %v4161 = vunpack.c.l.b16 %v2959
    %v4162 = vunpack.c.h.b16 %v2959
    %v4163 = vunpack.c.l.b16 %v2960
    %v4164 = vunpack.c.h.b16 %v2960
    %v4165 = vunpack.c.l.b16 %v2961
    %v4166 = vunpack.c.h.b16 %v2961
    %v4167 = vunpack.c.l.b16 %v2962
    %v4168 = vunpack.c.l.b16 %v2963
    %v4169 = vunpack.c.h.b16 %v2963
    %v4170 = vunpack.c.l.b16 %v2964
    %v4171 = vunpack.c.h.b16 %v2964
    %v4172 = vunpack.c.l.b16 %v2965
    %v4173 = vunpack.c.h.b16 %v2965
    %v4174 = vunpack.c.l.b16 %v2966
    %v4175 = vunpack.c.l.b16 %v2967
    %v4176 = vunpack.c.h.b16 %v2967
    %v4177 = vunpack.c.l.b16 %v2968
    %v4178 = vunpack.c.h.b16 %v2968
    %v4179 = vunpack.c.l.b16 %v2969
    %v4180 = vunpack.c.h.b16 %v2969
    %v4181 = vunpack.c.l.b16 %v2970
    %v4182 = vunpack.c.l.b16 %v2971
    %v4183 = vunpack.c.h.b16 %v2971
    %v4184 = vunpack.c.l.b16 %v2972
    %v4185 = vunpack.c.h.b16 %v2972
    %v4186 = vunpack.c.l.b16 %v2973
    %v4187 = vunpack.c.h.b16 %v2973
    %v4188 = vunpack.c.l.b16 %v2974
    %v4189 = vunpack.c.l.b16 %v2975
    %v4190 = vunpack.c.h.b16 %v2975
    %v4191 = vunpack.c.l.b16 %v2976
    %v4192 = vunpack.c.h.b16 %v2976
    %v4193 = vunpack.c.l.b16 %v2977
    %v4194 = vunpack.c.h.b16 %v2977
    %v4195 = vunpack.c.l.b16 %v2978
    %v4196 = vunpack.c.l.b16 %v2979
    %v4197 = vunpack.c.h.b16 %v2979
    %v4198 = vunpack.c.l.b16 %v2980
    %v4199 = vunpack.c.h.b16 %v2980
    %v4200 = vunpack.c.l.b16 %v2981
    %v4201 = vunpack.c.h.b16 %v2981
    %v4202 = vunpack.c.l.b16 %v2982
    %v4203 = vunpack.c.l.b16 %v2983
    %v4204 = vunpack.c.h.b16 %v2983
    %v4205 = vunpack.c.l.b16 %v2984
    %v4206 = vunpack.c.h.b16 %v2984
    %v4207 = vunpack.c.l.b16 %v2985
    %v4208 = vunpack.c.h.b16 %v2985
    %v4209 = vunpack.c.l.b16 %v2986
    %v4210 = vunpack.c.l.b16 %v2987
    %v4211 = vunpack.c.h.b16 %v2987
    %v4212 = vunpack.c.l.b16 %v2988
    %v4213 = vunpack.c.h.b16 %v2988
    %v4214 = vunpack.c.l.b16 %v2989
    %v4215 = vunpack.c.h.b16 %v2989
    %v4216 = vunpack.c.l.b16 %v2990
    %v4217 = vunpack.c.l.b16 %v2991
    %v4218 = vunpack.c.h.b16 %v2991
    %v4219 = vunpack.c.l.b16 %v2992
    %v4220 = vunpack.c.h.b16 %v2992
    %v4221 = vunpack.c.l.b16 %v2993
    %v4222 = vunpack.c.h.b16 %v2993
    %v4223 = vunpack.c.l.b16 %v2994
    %v4224 = vunpack.c.l.b16 %v2995
    %v4225 = vunpack.c.h.b16 %v2995
    %v4226 = vunpack.c.l.b16 %v2996
    %v4227 = vunpack.c.h.b16 %v2996
    %v4228 = vunpack.c.l.b16 %v2997
    %v4229 = vunpack.c.h.b16 %v2997
    %v4230 = vunpack.c.l.b16 %v2998
    %v4231 = vunpack.c.l.b16 %v2999
    %v4232 = vunpack.c.h.b16 %v2999
    %v4233 = vunpack.c.l.b16 %v3000
    %v4234 = vunpack.c.h.b16 %v3000
    %v4235 = vunpack.c.l.b16 %v3001
    %v4236 = vunpack.c.h.b16 %v3001
    %v4237 = vunpack.c.l.b16 %v3002
    %v4238 = vunpack.c.l.b16 %v3003
    %v4239 = vunpack.c.h.b16 %v3003
    %v4240 = vunpack.c.l.b16 %v3004
    %v4241 = vunpack.c.h.b16 %v3004
    %v4242 = vunpack.c.l.b16 %v3005
    %v4243 = vunpack.c.h.b16 %v3005
    %v4244 = vunpack.c.l.b16 %v3006
    %v4245 = vunpack.c.l.b16 %v3007
    %v4246 = vunpack.c.h.b16 %v3007
    %v4247 = vunpack.c.l.b16 %v3008
    %v4248 = vunpack.c.h.b16 %v3008
    %v4249 = vunpack.c.l.b16 %v3009
    %v4250 = vunpack.c.h.b16 %v3009
    %v4251 = vunpack.c.l.b16 %v3010
    %v4252 = vunpack.c.l.b16 %v3011
    %v4253 = vunpack.c.h.b16 %v3011
    %v4254 = vunpack.c.l.b16 %v3012
    %v4255 = vunpack.c.h.b16 %v3012
    %v4256 = vunpack.c.l.b16 %v3013
    %v4257 = vunpack.c.h.b16 %v3013
    %v4258 = vunpack.c.l.b16 %v3014
    %v4259 = vunpack.c.l.b16 %v3015
    %v4260 = vunpack.c.h.b16 %v3015
    %v4261 = vunpack.c.l.b16 %v3016
    %v4262 = vunpack.c.h.b16 %v3016
    %v4263 = vunpack.c.l.b16 %v3017
    %v4264 = vunpack.c.h.b16 %v3017
    %v4265 = vunpack.c.l.b16 %v3018
    %v4266 = vunpack.c.l.b16 %v3019
    %v4267 = vunpack.c.h.b16 %v3019
    %v4268 = vunpack.c.l.b16 %v3020
    %v4269 = vunpack.c.h.b16 %v3020
    %v4270 = vunpack.c.l.b16 %v3021
    %v4271 = vunpack.c.h.b16 %v3021
    %v4272 = vunpack.c.l.b16 %v3022
    %v4273 = vunpack.c.l.b16 %v3023
    %v4274 = vunpack.c.h.b16 %v3023
    %v4275 = vunpack.c.l.b16 %v3024
    %v4276 = vunpack.c.h.b16 %v3024
    %v4277 = vunpack.c.l.b16 %v3025
    %v4278 = vunpack.c.h.b16 %v3025
    %v4279 = vunpack.c.l.b16 %v3026
    %v4280 = vunpack.c.l.b16 %v3027
    %v4281 = vunpack.c.h.b16 %v3027
    %v4282 = vunpack.c.l.b16 %v3028
    %v4283 = vunpack.c.h.b16 %v3028
    %v4284 = vunpack.c.l.b16 %v3029
    %v4285 = vunpack.c.h.b16 %v3029
    %v4286 = vunpack.c.l.b16 %v3030
    %v4287 = vunpack.c.l.b16 %v3031
    %v4288 = vunpack.c.h.b16 %v3031
    %v4289 = vunpack.c.l.b16 %v3032
    %v4290 = vunpack.c.h.b16 %v3032
    %v4291 = vunpack.c.l.b16 %v3033
    %v4292 = vunpack.c.h.b16 %v3033
    %v4293 = vunpack.c.l.b16 %v3034
    %v4294 = vunpack.c.l.b16 %v3035
    %v4295 = vunpack.c.h.b16 %v3035
    %v4296 = vunpack.c.l.b16 %v3036
    %v4297 = vunpack.c.h.b16 %v3036
    %v4298 = vunpack.c.l.b16 %v3037
    %v4299 = vunpack.c.h.b16 %v3037
    %v4300 = vunpack.c.l.b16 %v3038
    %v4301 = vunpack.c.l.b16 %v3039
    %v4302 = vunpack.c.h.b16 %v3039
    %v4303 = vunpack.c.l.b16 %v3040
    %v4304 = vunpack.c.h.b16 %v3040
    %v4305 = vunpack.c.l.b16 %v3041
    %v4306 = vunpack.c.h.b16 %v3041
    %v4307 = vunpack.c.l.b16 %v3042
    %v4308 = vunpack.c.l.b16 %v3043
    %v4309 = vunpack.c.h.b16 %v3043
    %v4310 = vunpack.c.l.b16 %v3044
    %v4311 = vunpack.c.h.b16 %v3044
    %v4312 = vunpack.c.l.b16 %v3045
    %v4313 = vunpack.c.h.b16 %v3045
    %v4314 = vunpack.c.l.b16 %v3046
    %v4315 = vunpack.c.l.b16 %v3047
    %v4316 = vunpack.c.h.b16 %v3047
    %v4317 = vunpack.c.l.b16 %v3048
    %v4318 = vunpack.c.h.b16 %v3048
    %v4319 = vunpack.c.l.b16 %v3049
    %v4320 = vunpack.c.h.b16 %v3049
    %v4321 = vunpack.c.l.b16 %v3050
    %v4322 = vunpack.c.l.b16 %v3051
    %v4323 = vunpack.c.h.b16 %v3051
    %v4324 = vunpack.c.l.b16 %v3052
    %v4325 = vunpack.c.h.b16 %v3052
    %v4326 = vunpack.c.l.b16 %v3053
    %v4327 = vunpack.c.h.b16 %v3053
    %v4328 = vunpack.c.l.b16 %v3054
    %v4329 = vunpack.c.l.b16 %v3055
    %v4330 = vunpack.c.h.b16 %v3055
    %v4331 = vunpack.c.l.b16 %v3056
    %v4332 = vunpack.c.h.b16 %v3056
    %v4333 = vunpack.c.l.b16 %v3057
    %v4334 = vunpack.c.h.b16 %v3057
    %v4335 = vunpack.c.l.b16 %v3058
    %v4336 = vunpack.c.l.b16 %v3059
    %v4337 = vunpack.c.h.b16 %v3059
    %v4338 = vunpack.c.l.b16 %v3060
    %v4339 = vunpack.c.h.b16 %v3060
    %v4340 = vunpack.c.l.b16 %v3061
    %v4341 = vunpack.c.h.b16 %v3061
    %v4342 = vunpack.c.l.b16 %v3062
    %v4343 = vunpack.c.l.b16 %v3063
    %v4344 = vunpack.c.h.b16 %v3063
    %v4345 = vunpack.c.l.b16 %v3064
    %v4346 = vunpack.c.h.b16 %v3064
    %v4347 = vunpack.c.l.b16 %v3065
    %v4348 = vunpack.c.h.b16 %v3065
    %v4349 = vunpack.c.l.b16 %v3066
    %v4350 = vunpack.c.l.b16 %v3067
    %v4351 = vunpack.c.h.b16 %v3067
    %v4352 = vunpack.c.l.b16 %v3068
    %v4353 = vunpack.c.h.b16 %v3068
    %v4354 = vunpack.c.l.b16 %v3069
    %v4355 = vunpack.c.h.b16 %v3069
    %v4356 = vunpack.c.l.b16 %v3070
    %v4357 = vunpack.c.l.b16 %v3071
    %v4358 = vunpack.c.h.b16 %v3071
    %v4359 = vunpack.c.l.b16 %v3072
    %v4360 = vunpack.c.h.b16 %v3072
    %v4361 = vunpack.c.l.b16 %v3073
    %v4362 = vunpack.c.h.b16 %v3073
    %v4363 = vunpack.c.l.b16 %v3074
    %v4364 = vunpack.c.l.b16 %v3075
    %v4365 = vunpack.c.h.b16 %v3075
    %v4366 = vunpack.c.l.b16 %v3076
    %v4367 = vunpack.c.h.b16 %v3076
    %v4368 = vunpack.c.l.b16 %v3077
    %v4369 = vunpack.c.h.b16 %v3077
    %v4370 = vunpack.c.l.b16 %v3078
    %v4371 = vunpack.c.l.b16 %v3079
    %v4372 = vunpack.c.h.b16 %v3079
    %v4373 = vunpack.c.l.b16 %v3080
    %v4374 = vunpack.c.h.b16 %v3080
    %v4375 = vunpack.c.l.b16 %v3081
    %v4376 = vunpack.c.h.b16 %v3081
    %v4377 = vunpack.c.l.b16 %v3082
    %v4378 = vunpack.c.l.b16 %v3083
    %v4379 = vunpack.c.h.b16 %v3083
    %v4380 = vunpack.c.l.b16 %v3084
    %v4381 = vunpack.c.h.b16 %v3084
    %v4382 = vunpack.c.l.b16 %v3085
    %v4383 = vunpack.c.h.b16 %v3085
    %v4384 = vunpack.c.l.b16 %v3086
    %v4385 = vunpack.c.l.b16 %v3087
    %v4386 = vunpack.c.h.b16 %v3087
    %v4387 = vunpack.c.l.b16 %v3088
    %v4388 = vunpack.c.h.b16 %v3088
    %v4389 = vunpack.c.l.b16 %v3089
    %v4390 = vunpack.c.h.b16 %v3089
    %v4391 = vunpack.c.l.b16 %v3090
    %v4392 = vunpack.c.l.b16 %v3091
    %v4393 = vunpack.c.h.b16 %v3091
    %v4394 = vunpack.c.l.b16 %v3092
    %v4395 = vunpack.c.h.b16 %v3092
    %v4396 = vunpack.c.l.b16 %v3093
    %v4397 = vunpack.c.h.b16 %v3093
    %v4398 = vunpack.c.l.b16 %v3094
    %v4399 = vunpack.c.l.b16 %v3095
    %v4400 = vunpack.c.h.b16 %v3095
    %v4401 = vunpack.c.l.b16 %v3096
    %v4402 = vunpack.c.h.b16 %v3096
    %v4403 = vunpack.c.l.b16 %v3097
    %v4404 = vunpack.c.h.b16 %v3097
    %v4405 = vunpack.c.l.b16 %v3098
    %v4406 = vunpack.c.l.b16 %v3099
    %v4407 = vunpack.c.h.b16 %v3099
    %v4408 = vunpack.c.l.b16 %v3100
    %v4409 = vunpack.c.h.b16 %v3100
    %v4410 = vunpack.c.l.b16 %v3101
    %v4411 = vunpack.c.h.b16 %v3101
    %v4412 = vunpack.c.l.b16 %v3102
    %v4413 = vunpack.c.l.b16 %v3103
    %v4414 = vunpack.c.h.b16 %v3103
    %v4415 = vunpack.c.l.b16 %v3104
    %v4416 = vunpack.c.h.b16 %v3104
    %v4417 = vunpack.c.l.b16 %v3105
    %v4418 = vunpack.c.h.b16 %v3105
    %v4419 = vunpack.c.l.b16 %v3106
    %v4420 = vunpack.c.l.b16 %v3107
    %v4421 = vunpack.c.h.b16 %v3107
    %v4422 = vunpack.c.l.b16 %v3108
    %v4423 = vunpack.c.h.b16 %v3108
    %v4424 = vunpack.c.l.b16 %v3109
    %v4425 = vunpack.c.h.b16 %v3109
    %v4426 = vunpack.c.l.b16 %v3110
    %v4427 = vunpack.c.l.b16 %v3111
    %v4428 = vunpack.c.h.b16 %v3111
    %v4429 = vunpack.c.l.b16 %v3112
    %v4430 = vunpack.c.h.b16 %v3112
    %v4431 = vunpack.c.l.b16 %v3113
    %v4432 = vunpack.c.h.b16 %v3113
    %v4433 = vunpack.c.l.b16 %v3114
    %v4434 = vunpack.c.l.b16 %v3115
    %v4435 = vunpack.c.h.b16 %v3115
    %v4436 = vunpack.c.l.b16 %v3116
    %v4437 = vunpack.c.h.b16 %v3116
    %v4438 = vunpack.c.l.b16 %v3117
    %v4439 = vunpack.c.h.b16 %v3117
    %v4440 = vunpack.c.l.b16 %v3118
    %v4441 = vunpack.c.l.b16 %v3119
    %v4442 = vunpack.c.h.b16 %v3119
    %v4443 = vunpack.c.l.b16 %v3120
    %v4444 = vunpack.c.h.b16 %v3120
    %v4445 = vunpack.c.l.b16 %v3121
    %v4446 = vunpack.c.h.b16 %v3121
    %v4447 = vunpack.c.l.b16 %v3122
    %v4448 = vunpack.c.l.b16 %v3123
    %v4449 = vunpack.c.h.b16 %v3123
    %v4450 = vunpack.c.l.b16 %v3124
    %v4451 = vunpack.c.h.b16 %v3124
    %v4452 = vunpack.c.l.b16 %v3125
    %v4453 = vunpack.c.h.b16 %v3125
    %v4454 = vunpack.c.l.b16 %v3126
    %v4455 = vunpack.c.l.b16 %v3127
    %v4456 = vunpack.c.h.b16 %v3127
    %v4457 = vunpack.c.l.b16 %v3128
    %v4458 = vunpack.c.h.b16 %v3128
    %v4459 = vunpack.c.l.b16 %v3129
    %v4460 = vunpack.c.h.b16 %v3129
    %v4461 = vunpack.c.l.b16 %v3130
    %v4462 = vunpack.c.l.b16 %v3131
    %v4463 = vunpack.c.h.b16 %v3131
    %v4464 = vunpack.c.l.b16 %v3132
    %v4465 = vunpack.c.h.b16 %v3132
    %v4466 = vunpack.c.l.b16 %v3133
    %v4467 = vunpack.c.h.b16 %v3133
    %v4468 = vunpack.c.l.b16 %v3134
    %v4469 = vunpack.c.l.b16 %v3135
    %v4470 = vunpack.c.h.b16 %v3135
    %v4471 = vunpack.c.l.b16 %v3136
    %v4472 = vunpack.c.h.b16 %v3136
    %v4473 = vunpack.c.l.b16 %v3137
    %v4474 = vunpack.c.h.b16 %v3137
    %v4475 = vunpack.c.l.b16 %v3138
    %v4476 = vunpack.c.l.b16 %v3139
    %v4477 = vunpack.c.h.b16 %v3139
    %v4478 = vunpack.c.l.b16 %v3140
    %v4479 = vunpack.c.h.b16 %v3140
    %v4480 = vunpack.c.l.b16 %v3141
    %v4481 = vunpack.c.h.b16 %v3141
    %v4482 = vunpack.c.l.b16 %v3142
    %v4483 = vunpack.c.l.b16 %v3143
    %v4484 = vunpack.c.h.b16 %v3143
    %v4485 = vunpack.c.l.b16 %v3144
    %v4486 = vunpack.c.h.b16 %v3144
    %v4487 = vunpack.c.l.b16 %v3145
    %v4488 = vunpack.c.h.b16 %v3145
    %v4489 = vunpack.c.l.b16 %v3146
    %v4490 = vunpack.c.l.b16 %v3147
    %v4491 = vunpack.c.h.b16 %v3147
    %v4492 = vunpack.c.l.b16 %v3148
    %v4493 = vunpack.c.h.b16 %v3148
    %v4494 = vunpack.c.l.b16 %v3149
    %v4495 = vunpack.c.h.b16 %v3149
    %v4496 = vunpack.c.l.b16 %v3150
    %v4497 = vunpack.c.l.b16 %v3151
    %v4498 = vunpack.c.h.b16 %v3151
    %v4499 = vunpack.c.l.b16 %v3152
    %v4500 = vunpack.c.h.b16 %v3152
    %v4501 = vunpack.c.l.b16 %v3153
    %v4502 = vunpack.c.h.b16 %v3153
    %v4503 = vunpack.c.l.b16 %v3154
    %v4504 = vunpack.c.l.b16 %v3155
    %v4505 = vunpack.c.h.b16 %v3155
    %v4506 = vunpack.c.l.b16 %v3156
    %v4507 = vunpack.c.h.b16 %v3156
    %v4508 = vunpack.c.l.b16 %v3157
    %v4509 = vunpack.c.h.b16 %v3157
    %v4510 = vunpack.c.l.b16 %v3158
    %v4511 = vunpack.c.l.b16 %v3159
    %v4512 = vunpack.c.h.b16 %v3159
    %v4513 = vunpack.c.l.b16 %v3160
    %v4514 = vunpack.c.h.b16 %v3160
    %v4515 = vunpack.c.l.b16 %v3161
    %v4516 = vunpack.c.h.b16 %v3161
    %v4517 = vunpack.c.l.b16 %v3162
    %v4518 = vunpack.c.l.b16 %v3163
    %v4519 = vunpack.c.h.b16 %v3163
    %v4520 = vunpack.c.l.b16 %v3164
    %v4521 = vunpack.c.h.b16 %v3164
    %v4522 = vunpack.c.l.b16 %v3165
    %v4523 = vunpack.c.h.b16 %v3165
    %v4524 = vunpack.c.l.b16 %v3166
    %v4525 = vunpack.c.l.b16 %v3167
    %v4526 = vunpack.c.h.b16 %v3167
    %v4527 = vunpack.c.l.b16 %v3168
    %v4528 = vunpack.c.h.b16 %v3168
    %v4529 = vunpack.c.l.b16 %v3169
    %v4530 = vunpack.c.h.b16 %v3169
    %v4531 = vunpack.c.l.b16 %v3170
    %v4532 = vunpack.c.l.b16 %v3171
    %v4533 = vunpack.c.h.b16 %v3171
    %v4534 = vunpack.c.l.b16 %v3172
    %v4535 = vunpack.c.h.b16 %v3172
    %v4536 = vunpack.c.l.b16 %v3173
    %v4537 = vunpack.c.h.b16 %v3173
    %v4538 = vunpack.c.l.b16 %v3174
    %v4539 = vunpack.c.l.b16 %v3175
    %v4540 = vunpack.c.h.b16 %v3175
    %v4541 = vunpack.c.l.b16 %v3176
    %v4542 = vunpack.c.h.b16 %v3176
    %v4543 = vunpack.c.l.b16 %v3177
    %v4544 = vunpack.c.h.b16 %v3177
    %v4545 = vunpack.c.l.b16 %v3178
    %v4546 = vunpack.c.l.b16 %v3179
    %v4547 = vunpack.c.h.b16 %v3179
    %v4548 = vunpack.c.l.b16 %v3180
    %v4549 = vunpack.c.h.b16 %v3180
    %v4550 = vunpack.c.l.b16 %v3181
    %v4551 = vunpack.c.h.b16 %v3181
    %v4552 = vunpack.c.l.b16 %v3182
    %v4553 = vunpack.c.l.b16 %v3183
    %v4554 = vunpack.c.h.b16 %v3183
    %v4555 = vunpack.c.l.b16 %v3184
    %v4556 = vunpack.c.h.b16 %v3184
    %v4557 = vunpack.c.l.b16 %v3185
    %v4558 = vunpack.c.h.b16 %v3185
    %v4559 = vunpack.c.l.b16 %v3186
    %v4560 = vunpack.c.l.b16 %v3187
    %v4561 = vunpack.c.h.b16 %v3187
    %v4562 = vunpack.c.l.b16 %v3188
    %v4563 = vunpack.c.h.b16 %v3188
    %v4564 = vunpack.c.l.b16 %v3189
    %v4565 = vunpack.c.h.b16 %v3189
    %v4566 = vunpack.c.l.b16 %v3190
    %v4567 = vunpack.c.l.b16 %v3191
    %v4568 = vunpack.c.h.b16 %v3191
    %v4569 = vunpack.c.l.b16 %v3192
    %v4570 = vunpack.c.h.b16 %v3192
    %v4571 = vunpack.c.l.b16 %v3193
    %v4572 = vunpack.c.h.b16 %v3193
    %v4573 = vunpack.c.l.b16 %v3194
    %v4574 = vunpack.c.l.b16 %v3195
    %v4575 = vunpack.c.h.b16 %v3195
    %v4576 = vunpack.c.l.b16 %v3196
    %v4577 = vunpack.c.h.b16 %v3196
    %v4578 = vunpack.c.l.b16 %v3197
    %v4579 = vunpack.c.h.b16 %v3197
    %v4580 = vunpack.c.l.b16 %v3198
    %v4581 = vunpack.c.l.b16 %v3199
    %v4582 = vunpack.c.h.b16 %v3199
    %v4583 = vunpack.c.l.b16 %v3200
    %v4584 = vunpack.c.h.b16 %v3200
    %v4585 = vunpack.c.l.b16 %v3201
    %v4586 = vunpack.c.h.b16 %v3201
    %v4587 = vunpack.c.l.b16 %v3202
    %v4588 = vunpack.c.l.b16 %v3203
    %v4589 = vunpack.c.h.b16 %v3203
    %v4590 = vunpack.c.l.b16 %v3204
    %v4591 = vunpack.c.h.b16 %v3204
    %v4592 = vunpack.c.l.b16 %v3205
    %v4593 = vunpack.c.h.b16 %v3205
    %v4594 = vunpack.c.l.b16 %v3206
    %v4595 = vunpack.c.l.b16 %v3207
    %v4596 = vunpack.c.h.b16 %v3207
    %v4597 = vunpack.c.l.b16 %v3208
    %v4598 = vunpack.c.h.b16 %v3208
    %v4599 = vunpack.c.l.b16 %v3209
    %v4600 = vunpack.c.h.b16 %v3209
    %v4601 = vunpack.c.l.b16 %v3210
    %v4602 = vunpack.c.l.b16 %v3211
    %v4603 = vunpack.c.h.b16 %v3211
    %v4604 = vunpack.c.l.b16 %v3212
    %v4605 = vunpack.c.h.b16 %v3212
    %v4606 = vunpack.c.l.b16 %v3213
    %v4607 = vunpack.c.h.b16 %v3213
    %v4608 = vunpack.c.l.b16 %v3214
    %v4609 = vunpack.c.l.b16 %v3215
    %v4610 = vunpack.c.h.b16 %v3215
    %v4611 = vunpack.c.l.b16 %v3216
    %v4612 = vunpack.c.h.b16 %v3216
    %v4613 = vunpack.c.l.b16 %v3217
    %v4614 = vunpack.c.h.b16 %v3217
    %v4615 = vunpack.c.l.b16 %v3218
    %v4616 = vunpack.c.l.b16 %v3219
    %v4617 = vunpack.c.h.b16 %v3219
    %v4618 = vunpack.c.l.b16 %v3220
    %v4619 = vunpack.c.h.b16 %v3220
    %v4620 = vunpack.c.l.b16 %v3221
    %v4621 = vunpack.c.h.b16 %v3221
    %v4622 = vunpack.c.l.b16 %v3222
    %v4623 = vunpack.c.l.b16 %v3223
    %v4624 = vunpack.c.h.b16 %v3223
    %v4625 = vunpack.c.l.b16 %v3224
    %v4626 = vunpack.c.h.b16 %v3224
    %v4627 = vunpack.c.l.b16 %v3225
    %v4628 = vunpack.c.h.b16 %v3225
    %v4629 = vunpack.c.l.b16 %v3226
    %v4630 = vunpack.c.l.b16 %v3227
    %v4631 = vunpack.c.h.b16 %v3227
    %v4632 = vunpack.c.l.b16 %v3228
    %v4633 = vunpack.c.h.b16 %v3228
    %v4634 = vunpack.c.l.b16 %v3229
    %v4635 = vunpack.c.h.b16 %v3229
    %v4636 = vunpack.c.l.b16 %v3230
    %v4637 = vunpack.c.l.b16 %v3231
    %v4638 = vunpack.c.h.b16 %v3231
    %v4639 = vunpack.c.l.b16 %v3232
    %v4640 = vunpack.c.h.b16 %v3232
    %v4641 = vunpack.c.l.b16 %v3233
    %v4642 = vunpack.c.h.b16 %v3233
    %v4643 = vunpack.c.l.b16 %v3234
    %v4644 = vunpack.c.l.b16 %v3235
    %v4645 = vunpack.c.h.b16 %v3235
    %v4646 = vunpack.c.l.b16 %v3236
    %v4647 = vunpack.c.h.b16 %v3236
    %v4648 = vunpack.c.l.b16 %v3237
    %v4649 = vunpack.c.h.b16 %v3237
    %v4650 = vunpack.c.l.b16 %v3238
    %v4651 = vunpack.c.l.b16 %v3239
    %v4652 = vunpack.c.h.b16 %v3239
    %v4653 = vunpack.c.l.b16 %v3240
    %v4654 = vunpack.c.h.b16 %v3240
    %v4655 = vunpack.c.l.b16 %v3241
    %v4656 = vunpack.c.h.b16 %v3241
    %v4657 = vunpack.c.l.b16 %v3242
    %v4658 = vunpack.c.l.b16 %v3243
    %v4659 = vunpack.c.h.b16 %v3243
    %v4660 = vunpack.c.l.b16 %v3244
    %v4661 = vunpack.c.h.b16 %v3244
    %v4662 = vunpack.c.l.b16 %v3245
    %v4663 = vunpack.c.h.b16 %v3245
    %v4664 = vunpack.c.l.b16 %v3246
    %v4665 = vunpack.c.l.b16 %v3247
    %v4666 = vunpack.c.h.b16 %v3247
    %v4667 = vunpack.c.l.b16 %v3248
    %v4668 = vunpack.c.h.b16 %v3248
    %v4669 = vunpack.c.l.b16 %v3249
    %v4670 = vunpack.c.h.b16 %v3249
    %v4671 = vunpack.c.l.b16 %v3250
    %v4672 = vunpack.c.l.b16 %v3251
    %v4673 = vunpack.c.h.b16 %v3251
    %v4674 = vunpack.c.l.b16 %v3252
    %v4675 = vunpack.c.h.b16 %v3252
    %v4676 = vunpack.c.l.b16 %v3253
    %v4677 = vunpack.c.h.b16 %v3253
    %v4678 = vunpack.c.l.b16 %v3254
    %v4679 = vunpack.c.l.b16 %v3255
    %v4680 = vunpack.c.h.b16 %v3255
    %v4681 = vunpack.c.l.b16 %v3256
    %v4682 = vunpack.c.h.b16 %v3256
    %v4683 = vunpack.c.l.b16 %v3257
    %v4684 = vunpack.c.h.b16 %v3257
    %v4685 = vunpack.c.l.b16 %v3258
    %v4686 = vunpack.c.l.b16 %v3259
    %v4687 = vunpack.c.h.b16 %v3259
    %v4688 = vunpack.c.l.b16 %v3260
    %v4689 = vunpack.c.h.b16 %v3260
    %v4690 = vunpack.c.l.b16 %v3261
    %v4691 = vunpack.c.h.b16 %v3261
    %v4692 = vunpack.c.l.b16 %v3262
    %v4693 = vunpack.c.l.b16 %v3263
    %v4694 = vunpack.c.h.b16 %v3263
    %v4695 = vunpack.c.l.b16 %v3264
    %v4696 = vunpack.c.h.b16 %v3264
    %v4697 = vunpack.c.l.b16 %v3265
    %v4698 = vunpack.c.h.b16 %v3265
    %v4699 = vunpack.c.l.b16 %v3266
    %v4700 = vunpack.c.l.b16 %v3267
    %v4701 = vunpack.c.h.b16 %v3267
    %v4702 = vunpack.c.l.b16 %v3268
    %v4703 = vunpack.c.h.b16 %v3268
    %v4704 = vunpack.c.l.b16 %v3269
    %v4705 = vunpack.c.h.b16 %v3269
    %v4706 = vunpack.c.l.b16 %v3270
    %v4707 = vunpack.c.l.b16 %v3271
    %v4708 = vunpack.c.h.b16 %v3271
    %v4709 = vunpack.c.l.b16 %v3272
    %v4710 = vunpack.c.h.b16 %v3272
    %v4711 = vunpack.c.l.b16 %v3273
    %v4712 = vunpack.c.h.b16 %v3273
    %v4713 = vunpack.c.l.b16 %v3274
    %v4714 = vunpack.c.l.b16 %v3275
    %v4715 = vunpack.c.h.b16 %v3275
    %v4716 = vunpack.c.l.b16 %v3276
    %v4717 = vunpack.c.h.b16 %v3276
    %v4718 = vunpack.c.l.b16 %v3277
    %v4719 = vunpack.c.h.b16 %v3277
    %v4720 = vunpack.c.l.b16 %v3278
    %v4721 = vunpack.c.l.b16 %v3279
    %v4722 = vunpack.c.h.b16 %v3279
    %v4723 = vunpack.c.l.b16 %v3280
    %v4724 = vunpack.c.h.b16 %v3280
    %v4725 = vunpack.c.l.b16 %v3281
    %v4726 = vunpack.c.h.b16 %v3281
    %v4727 = vunpack.c.l.b16 %v3282
    %v4728 = vpack.c.b16 %v3839, %v3832
    %v4729 = vpack.c.b16 %v3840, %v3833
    %v4730 = vpack.c.b16 %v3841, %v3834
    %v4731 = vpack.c.b16 %v3842, %v3835
    %v4732 = vpack.c.b16 %v3843, %v3836
    %v4733 = vpack.c.b16 %v3844, %v3837
    %v4734 = vpack.c.b16 %v3845, %v3838
    %v4735 = vpack.c.b16 %v3853, %v3846
    %v4736 = vpack.c.b16 %v3854, %v3847
    %v4737 = vpack.c.b16 %v3855, %v3848
    %v4738 = vpack.c.b16 %v3856, %v3849
    %v4739 = vpack.c.b16 %v3857, %v3850
    %v4740 = vpack.c.b16 %v3858, %v3851
    %v4741 = vpack.c.b16 %v3859, %v3852
    %v4742 = vpack.c.b16 %v3867, %v3860
    %v4743 = vpack.c.b16 %v3868, %v3861
    %v4744 = vpack.c.b16 %v3869, %v3862
    %v4745 = vpack.c.b16 %v3870, %v3863
    %v4746 = vpack.c.b16 %v3871, %v3864
    %v4747 = vpack.c.b16 %v3872, %v3865
    %v4748 = vpack.c.b16 %v3873, %v3866
    %v4749 = vpack.c.b16 %v3881, %v3874
    %v4750 = vpack.c.b16 %v3882, %v3875
    %v4751 = vpack.c.b16 %v3883, %v3876
    %v4752 = vpack.c.b16 %v3884, %v3877
    %v4753 = vpack.c.b16 %v3885, %v3878
    %v4754 = vpack.c.b16 %v3886, %v3879
    %v4755 = vpack.c.b16 %v3887, %v3880
    %v4756 = vpack.c.b16 %v3895, %v3888
    %v4757 = vpack.c.b16 %v3896, %v3889
    %v4758 = vpack.c.b16 %v3897, %v3890
    %v4759 = vpack.c.b16 %v3898, %v3891
    %v4760 = vpack.c.b16 %v3899, %v3892
    %v4761 = vpack.c.b16 %v3900, %v3893
    %v4762 = vpack.c.b16 %v3901, %v3894
    %v4763 = vpack.c.b16 %v3909, %v3902
    %v4764 = vpack.c.b16 %v3910, %v3903
    %v4765 = vpack.c.b16 %v3911, %v3904
    %v4766 = vpack.c.b16 %v3912, %v3905
    %v4767 = vpack.c.b16 %v3913, %v3906
    %v4768 = vpack.c.b16 %v3914, %v3907
    %v4769 = vpack.c.b16 %v3915, %v3908
    %v4770 = vpack.c.b16 %v3923, %v3916
    %v4771 = vpack.c.b16 %v3924, %v3917
    %v4772 = vpack.c.b16 %v3925, %v3918
    %v4773 = vpack.c.b16 %v3926, %v3919
    %v4774 = vpack.c.b16 %v3927, %v3920
    %v4775 = vpack.c.b16 %v3928, %v3921
    %v4776 = vpack.c.b16 %v3929, %v3922
    %v4777 = vpack.c.b16 %v3937, %v3930
    %v4778 = vpack.c.b16 %v3938, %v3931
    %v4779 = vpack.c.b16 %v3939, %v3932
    %v4780 = vpack.c.b16 %v3940, %v3933
    %v4781 = vpack.c.b16 %v3941, %v3934
    %v4782 = vpack.c.b16 %v3942, %v3935
    %v4783 = vpack.c.b16 %v3943, %v3936
    %v4784 = vpack.c.b16 %v3951, %v3944
    %v4785 = vpack.c.b16 %v3952, %v3945
    %v4786 = vpack.c.b16 %v3953, %v3946
    %v4787 = vpack.c.b16 %v3954, %v3947
    %v4788 = vpack.c.b16 %v3955, %v3948
    %v4789 = vpack.c.b16 %v3956, %v3949
    %v4790 = vpack.c.b16 %v3957, %v3950
    %v4791 = vpack.c.b16 %v3965, %v3958
    %v4792 = vpack.c.b16 %v3966, %v3959
    %v4793 = vpack.c.b16 %v3967, %v3960
    %v4794 = vpack.c.b16 %v3968, %v3961
    %v4795 = vpack.c.b16 %v3969, %v3962
    %v4796 = vpack.c.b16 %v3970, %v3963
    %v4797 = vpack.c.b16 %v3971, %v3964
    %v4798 = vpack.c.b16 %v3979, %v3972
    %v4799 = vpack.c.b16 %v3980, %v3973
    %v4800 = vpack.c.b16 %v3981, %v3974
    %v4801 = vpack.c.b16 %v3982, %v3975
    %v4802 = vpack.c.b16 %v3983, %v3976
    %v4803 = vpack.c.b16 %v3984, %v3977
    %v4804 = vpack.c.b16 %v3985, %v3978
    %v4805 = vpack.c.b16 %v3993, %v3986
    %v4806 = vpack.c.b16 %v3994, %v3987
    %v4807 = vpack.c.b16 %v3995, %v3988
    %v4808 = vpack.c.b16 %v3996, %v3989
    %v4809 = vpack.c.b16 %v3997, %v3990
    %v4810 = vpack.c.b16 %v3998, %v3991
    %v4811 = vpack.c.b16 %v3999, %v3992
    %v4812 = vpack.c.b16 %v4007, %v4000
    %v4813 = vpack.c.b16 %v4008, %v4001
    %v4814 = vpack.c.b16 %v4009, %v4002
    %v4815 = vpack.c.b16 %v4010, %v4003
    %v4816 = vpack.c.b16 %v4011, %v4004
    %v4817 = vpack.c.b16 %v4012, %v4005
    %v4818 = vpack.c.b16 %v4013, %v4006
    %v4819 = vpack.c.b16 %v4021, %v4014
    %v4820 = vpack.c.b16 %v4022, %v4015
    %v4821 = vpack.c.b16 %v4023, %v4016
    %v4822 = vpack.c.b16 %v4024, %v4017
    %v4823 = vpack.c.b16 %v4025, %v4018
    %v4824 = vpack.c.b16 %v4026, %v4019
    %v4825 = vpack.c.b16 %v4027, %v4020
    %v4826 = vpack.c.b16 %v4035, %v4028
    %v4827 = vpack.c.b16 %v4036, %v4029
    %v4828 = vpack.c.b16 %v4037, %v4030
    %v4829 = vpack.c.b16 %v4038, %v4031
    %v4830 = vpack.c.b16 %v4039, %v4032
    %v4831 = vpack.c.b16 %v4040, %v4033
    %v4832 = vpack.c.b16 %v4041, %v4034
    %v4833 = vpack.c.b16 %v4049, %v4042
    %v4834 = vpack.c.b16 %v4050, %v4043
    %v4835 = vpack.c.b16 %v4051, %v4044
    %v4836 = vpack.c.b16 %v4052, %v4045
    %v4837 = vpack.c.b16 %v4053, %v4046
    %v4838 = vpack.c.b16 %v4054, %v4047
    %v4839 = vpack.c.b16 %v4055, %v4048
    %v4840 = vpack.c.b16 %v4063, %v4056
    %v4841 = vpack.c.b16 %v4064, %v4057
    %v4842 = vpack.c.b16 %v4065, %v4058
    %v4843 = vpack.c.b16 %v4066, %v4059
    %v4844 = vpack.c.b16 %v4067, %v4060
    %v4845 = vpack.c.b16 %v4068, %v4061
    %v4846 = vpack.c.b16 %v4069, %v4062
    %v4847 = vpack.c.b16 %v4077, %v4070
    %v4848 = vpack.c.b16 %v4078, %v4071
    %v4849 = vpack.c.b16 %v4079, %v4072
    %v4850 = vpack.c.b16 %v4080, %v4073
    %v4851 = vpack.c.b16 %v4081, %v4074
    %v4852 = vpack.c.b16 %v4082, %v4075
    %v4853 = vpack.c.b16 %v4083, %v4076
    %v4854 = vpack.c.b16 %v4091, %v4084
    %v4855 = vpack.c.b16 %v4092, %v4085
    %v4856 = vpack.c.b16 %v4093, %v4086
    %v4857 = vpack.c.b16 %v4094, %v4087
    %v4858 = vpack.c.b16 %v4095, %v4088
    %v4859 = vpack.c.b16 %v4096, %v4089
    %v4860 = vpack.c.b16 %v4097, %v4090
    %v4861 = vpack.c.b16 %v4105, %v4098
    %v4862 = vpack.c.b16 %v4106, %v4099
    %v4863 = vpack.c.b16 %v4107, %v4100
    %v4864 = vpack.c.b16 %v4108, %v4101
    %v4865 = vpack.c.b16 %v4109, %v4102
    %v4866 = vpack.c.b16 %v4110, %v4103
    %v4867 = vpack.c.b16 %v4111, %v4104
    %v4868 = vpack.c.b16 %v4119, %v4112
    %v4869 = vpack.c.b16 %v4120, %v4113
    %v4870 = vpack.c.b16 %v4121, %v4114
    %v4871 = vpack.c.b16 %v4122, %v4115
    %v4872 = vpack.c.b16 %v4123, %v4116
    %v4873 = vpack.c.b16 %v4124, %v4117
    %v4874 = vpack.c.b16 %v4125, %v4118
    %v4875 = vpack.c.b16 %v4133, %v4126
    %v4876 = vpack.c.b16 %v4134, %v4127
    %v4877 = vpack.c.b16 %v4135, %v4128
    %v4878 = vpack.c.b16 %v4136, %v4129
    %v4879 = vpack.c.b16 %v4137, %v4130
    %v4880 = vpack.c.b16 %v4138, %v4131
    %v4881 = vpack.c.b16 %v4139, %v4132
    %v4882 = vpack.c.b16 %v4147, %v4140
    %v4883 = vpack.c.b16 %v4148, %v4141
    %v4884 = vpack.c.b16 %v4149, %v4142
    %v4885 = vpack.c.b16 %v4150, %v4143
    %v4886 = vpack.c.b16 %v4151, %v4144
    %v4887 = vpack.c.b16 %v4152, %v4145
    %v4888 = vpack.c.b16 %v4153, %v4146
    %v4889 = vpack.c.b16 %v4161, %v4154
    %v4890 = vpack.c.b16 %v4162, %v4155
    %v4891 = vpack.c.b16 %v4163, %v4156
    %v4892 = vpack.c.b16 %v4164, %v4157
    %v4893 = vpack.c.b16 %v4165, %v4158
    %v4894 = vpack.c.b16 %v4166, %v4159
    %v4895 = vpack.c.b16 %v4167, %v4160
    %v4896 = vpack.c.b16 %v4175, %v4168
    %v4897 = vpack.c.b16 %v4176, %v4169
    %v4898 = vpack.c.b16 %v4177, %v4170
    %v4899 = vpack.c.b16 %v4178, %v4171
    %v4900 = vpack.c.b16 %v4179, %v4172
    %v4901 = vpack.c.b16 %v4180, %v4173
    %v4902 = vpack.c.b16 %v4181, %v4174
    %v4903 = vpack.c.b16 %v4189, %v4182
    %v4904 = vpack.c.b16 %v4190, %v4183
    %v4905 = vpack.c.b16 %v4191, %v4184
    %v4906 = vpack.c.b16 %v4192, %v4185
    %v4907 = vpack.c.b16 %v4193, %v4186
    %v4908 = vpack.c.b16 %v4194, %v4187
    %v4909 = vpack.c.b16 %v4195, %v4188
    %v4910 = vpack.c.b16 %v4203, %v4196
    %v4911 = vpack.c.b16 %v4204, %v4197
    %v4912 = vpack.c.b16 %v4205, %v4198
    %v4913 = vpack.c.b16 %v4206, %v4199
    %v4914 = vpack.c.b16 %v4207, %v4200
    %v4915 = vpack.c.b16 %v4208, %v4201
    %v4916 = vpack.c.b16 %v4209, %v4202
    %v4917 = vpack.c.b16 %v4217, %v4210
    %v4918 = vpack.c.b16 %v4218, %v4211
    %v4919 = vpack.c.b16 %v4219, %v4212
    %v4920 = vpack.c.b16 %v4220, %v4213
    %v4921 = vpack.c.b16 %v4221, %v4214
    %v4922 = vpack.c.b16 %v4222, %v4215
    %v4923 = vpack.c.b16 %v4223, %v4216
    %v4924 = vpack.c.b16 %v4231, %v4224
    %v4925 = vpack.c.b16 %v4232, %v4225
    %v4926 = vpack.c.b16 %v4233, %v4226
    %v4927 = vpack.c.b16 %v4234, %v4227
    %v4928 = vpack.c.b16 %v4235, %v4228
    %v4929 = vpack.c.b16 %v4236, %v4229
    %v4930 = vpack.c.b16 %v4237, %v4230
    %v4931 = vpack.c.b16 %v4245, %v4238
    %v4932 = vpack.c.b16 %v4246, %v4239
    %v4933 = vpack.c.b16 %v4247, %v4240
    %v4934 = vpack.c.b16 %v4248, %v4241
    %v4935 = vpack.c.b16 %v4249, %v4242
    %v4936 = vpack.c.b16 %v4250, %v4243
    %v4937 = vpack.c.b16 %v4251, %v4244
    %v4938 = vpack.c.b16 %v4259, %v4252
    %v4939 = vpack.c.b16 %v4260, %v4253
    %v4940 = vpack.c.b16 %v4261, %v4254
    %v4941 = vpack.c.b16 %v4262, %v4255
    %v4942 = vpack.c.b16 %v4263, %v4256
    %v4943 = vpack.c.b16 %v4264, %v4257
    %v4944 = vpack.c.b16 %v4265, %v4258
    %v4945 = vpack.c.b16 %v4273, %v4266
    %v4946 = vpack.c.b16 %v4274, %v4267
    %v4947 = vpack.c.b16 %v4275, %v4268
    %v4948 = vpack.c.b16 %v4276, %v4269
    %v4949 = vpack.c.b16 %v4277, %v4270
    %v4950 = vpack.c.b16 %v4278, %v4271
    %v4951 = vpack.c.b16 %v4279, %v4272
    %v4952 = vpack.c.b16 %v4287, %v4280
    %v4953 = vpack.c.b16 %v4288, %v4281
    %v4954 = vpack.c.b16 %v4289, %v4282
    %v4955 = vpack.c.b16 %v4290, %v4283
    %v4956 = vpack.c.b16 %v4291, %v4284
    %v4957 = vpack.c.b16 %v4292, %v4285
    %v4958 = vpack.c.b16 %v4293, %v4286
    %v4959 = vpack.c.b16 %v4301, %v4294
    %v4960 = vpack.c.b16 %v4302, %v4295
    %v4961 = vpack.c.b16 %v4303, %v4296
    %v4962 = vpack.c.b16 %v4304, %v4297
    %v4963 = vpack.c.b16 %v4305, %v4298
    %v4964 = vpack.c.b16 %v4306, %v4299
    %v4965 = vpack.c.b16 %v4307, %v4300
    %v4966 = vpack.c.b16 %v4315, %v4308
    %v4967 = vpack.c.b16 %v4316, %v4309
    %v4968 = vpack.c.b16 %v4317, %v4310
    %v4969 = vpack.c.b16 %v4318, %v4311
    %v4970 = vpack.c.b16 %v4319, %v4312
    %v4971 = vpack.c.b16 %v4320, %v4313
    %v4972 = vpack.c.b16 %v4321, %v4314
    %v4973 = vpack.c.b16 %v4329, %v4322
    %v4974 = vpack.c.b16 %v4330, %v4323
    %v4975 = vpack.c.b16 %v4331, %v4324
    %v4976 = vpack.c.b16 %v4332, %v4325
    %v4977 = vpack.c.b16 %v4333, %v4326
    %v4978 = vpack.c.b16 %v4334, %v4327
    %v4979 = vpack.c.b16 %v4335, %v4328
    %v4980 = vpack.c.b16 %v4343, %v4336
    %v4981 = vpack.c.b16 %v4344, %v4337
    %v4982 = vpack.c.b16 %v4345, %v4338
    %v4983 = vpack.c.b16 %v4346, %v4339
    %v4984 = vpack.c.b16 %v4347, %v4340
    %v4985 = vpack.c.b16 %v4348, %v4341
    %v4986 = vpack.c.b16 %v4349, %v4342
    %v4987 = vpack.c.b16 %v4357, %v4350
    %v4988 = vpack.c.b16 %v4358, %v4351
    %v4989 = vpack.c.b16 %v4359, %v4352
    %v4990 = vpack.c.b16 %v4360, %v4353
    %v4991 = vpack.c.b16 %v4361, %v4354
    %v4992 = vpack.c.b16 %v4362, %v4355
    %v4993 = vpack.c.b16 %v4363, %v4356
    %v4994 = vpack.c.b16 %v4371, %v4364
    %v4995 = vpack.c.b16 %v4372, %v4365
    %v4996 = vpack.c.b16 %v4373, %v4366
    %v4997 = vpack.c.b16 %v4374, %v4367
    %v4998 = vpack.c.b16 %v4375, %v4368
    %v4999 = vpack.c.b16 %v4376, %v4369
    %v5000 = vpack.c.b16 %v4377, %v4370
    %v5001 = vpack.c.b16 %v4385, %v4378
    %v5002 = vpack.c.b16 %v4386, %v4379
    %v5003 = vpack.c.b16 %v4387, %v4380
    %v5004 = vpack.c.b16 %v4388, %v4381
    %v5005 = vpack.c.b16 %v4389, %v4382
    %v5006 = vpack.c.b16 %v4390, %v4383
    %v5007 = vpack.c.b16 %v4391, %v4384
    %v5008 = vpack.c.b16 %v4399, %v4392
    %v5009 = vpack.c.b16 %v4400, %v4393
    %v5010 = vpack.c.b16 %v4401, %v4394
    %v5011 = vpack.c.b16 %v4402, %v4395
    %v5012 = vpack.c.b16 %v4403, %v4396
    %v5013 = vpack.c.b16 %v4404, %v4397
    %v5014 = vpack.c.b16 %v4405, %v4398
    %v5015 = vpack.c.b16 %v4413, %v4406
    %v5016 = vpack.c.b16 %v4414, %v4407
    %v5017 = vpack.c.b16 %v4415, %v4408
    %v5018 = vpack.c.b16 %v4416, %v4409
    %v5019 = vpack.c.b16 %v4417, %v4410
    %v5020 = vpack.c.b16 %v4418, %v4411
    %v5021 = vpack.c.b16 %v4419, %v4412
    %v5022 = vpack.c.b16 %v4427, %v4420
    %v5023 = vpack.c.b16 %v4428, %v4421
    %v5024 = vpack.c.b16 %v4429, %v4422
    %v5025 = vpack.c.b16 %v4430, %v4423
    %v5026 = vpack.c.b16 %v4431, %v4424
    %v5027 = vpack.c.b16 %v4432, %v4425
    %v5028 = vpack.c.b16 %v4433, %v4426
    %v5029 = vpack.c.b16 %v4441, %v4434
    %v5030 = vpack.c.b16 %v4442, %v4435
    %v5031 = vpack.c.b16 %v4443, %v4436
    %v5032 = vpack.c.b16 %v4444, %v4437
    %v5033 = vpack.c.b16 %v4445, %v4438
    %v5034 = vpack.c.b16 %v4446, %v4439
    %v5035 = vpack.c.b16 %v4447, %v4440
    %v5036 = vpack.c.b16 %v4455, %v4448
    %v5037 = vpack.c.b16 %v4456, %v4449
    %v5038 = vpack.c.b16 %v4457, %v4450
    %v5039 = vpack.c.b16 %v4458, %v4451
    %v5040 = vpack.c.b16 %v4459, %v4452
    %v5041 = vpack.c.b16 %v4460, %v4453
    %v5042 = vpack.c.b16 %v4461, %v4454
    %v5043 = vpack.c.b16 %v4469, %v4462
    %v5044 = vpack.c.b16 %v4470, %v4463
    %v5045 = vpack.c.b16 %v4471, %v4464
    %v5046 = vpack.c.b16 %v4472, %v4465
    %v5047 = vpack.c.b16 %v4473, %v4466
    %v5048 = vpack.c.b16 %v4474, %v4467
    %v5049 = vpack.c.b16 %v4475, %v4468
    %v5050 = vpack.c.b16 %v4483, %v4476
    %v5051 = vpack.c.b16 %v4484, %v4477
    %v5052 = vpack.c.b16 %v4485, %v4478
    %v5053 = vpack.c.b16 %v4486, %v4479
    %v5054 = vpack.c.b16 %v4487, %v4480
    %v5055 = vpack.c.b16 %v4488, %v4481
    %v5056 = vpack.c.b16 %v4489, %v4482
    %v5057 = vpack.c.b16 %v4497, %v4490
    %v5058 = vpack.c.b16 %v4498, %v4491
    %v5059 = vpack.c.b16 %v4499, %v4492
    %v5060 = vpack.c.b16 %v4500, %v4493
    %v5061 = vpack.c.b16 %v4501, %v4494
    %v5062 = vpack.c.b16 %v4502, %v4495
    %v5063 = vpack.c.b16 %v4503, %v4496
    %v5064 = vpack.c.b16 %v4511, %v4504
    %v5065 = vpack.c.b16 %v4512, %v4505
    %v5066 = vpack.c.b16 %v4513, %v4506
    %v5067 = vpack.c.b16 %v4514, %v4507
    %v5068 = vpack.c.b16 %v4515, %v4508
    %v5069 = vpack.c.b16 %v4516, %v4509
    %v5070 = vpack.c.b16 %v4517, %v4510
    %v5071 = vpack.c.b16 %v4525, %v4518
    %v5072 = vpack.c.b16 %v4526, %v4519
    %v5073 = vpack.c.b16 %v4527, %v4520
    %v5074 = vpack.c.b16 %v4528, %v4521
    %v5075 = vpack.c.b16 %v4529, %v4522
    %v5076 = vpack.c.b16 %v4530, %v4523
    %v5077 = vpack.c.b16 %v4531, %v4524
    %v5078 = vpack.c.b16 %v4539, %v4532
    %v5079 = vpack.c.b16 %v4540, %v4533
    %v5080 = vpack.c.b16 %v4541, %v4534
    %v5081 = vpack.c.b16 %v4542, %v4535
    %v5082 = vpack.c.b16 %v4543, %v4536
    %v5083 = vpack.c.b16 %v4544, %v4537
    %v5084 = vpack.c.b16 %v4545, %v4538
    %v5085 = vpack.c.b16 %v4553, %v4546
    %v5086 = vpack.c.b16 %v4554, %v4547
    %v5087 = vpack.c.b16 %v4555, %v4548
    %v5088 = vpack.c.b16 %v4556, %v4549
    %v5089 = vpack.c.b16 %v4557, %v4550
    %v5090 = vpack.c.b16 %v4558, %v4551
    %v5091 = vpack.c.b16 %v4559, %v4552
    %v5092 = vpack.c.b16 %v4567, %v4560
    %v5093 = vpack.c.b16 %v4568, %v4561
    %v5094 = vpack.c.b16 %v4569, %v4562
    %v5095 = vpack.c.b16 %v4570, %v4563
    %v5096 = vpack.c.b16 %v4571, %v4564
    %v5097 = vpack.c.b16 %v4572, %v4565
    %v5098 = vpack.c.b16 %v4573, %v4566
    %v5099 = vpack.c.b16 %v4581, %v4574
    %v5100 = vpack.c.b16 %v4582, %v4575
    %v5101 = vpack.c.b16 %v4583, %v4576
    %v5102 = vpack.c.b16 %v4584, %v4577
    %v5103 = vpack.c.b16 %v4585, %v4578
    %v5104 = vpack.c.b16 %v4586, %v4579
    %v5105 = vpack.c.b16 %v4587, %v4580
    %v5106 = vpack.c.b16 %v4595, %v4588
    %v5107 = vpack.c.b16 %v4596, %v4589
    %v5108 = vpack.c.b16 %v4597, %v4590
    %v5109 = vpack.c.b16 %v4598, %v4591
    %v5110 = vpack.c.b16 %v4599, %v4592
    %v5111 = vpack.c.b16 %v4600, %v4593
    %v5112 = vpack.c.b16 %v4601, %v4594
    %v5113 = vpack.c.b16 %v4609, %v4602
    %v5114 = vpack.c.b16 %v4610, %v4603
    %v5115 = vpack.c.b16 %v4611, %v4604
    %v5116 = vpack.c.b16 %v4612, %v4605
    %v5117 = vpack.c.b16 %v4613, %v4606
    %v5118 = vpack.c.b16 %v4614, %v4607
    %v5119 = vpack.c.b16 %v4615, %v4608
    %v5120 = vpack.c.b16 %v4623, %v4616
    %v5121 = vpack.c.b16 %v4624, %v4617
    %v5122 = vpack.c.b16 %v4625, %v4618
    %v5123 = vpack.c.b16 %v4626, %v4619
    %v5124 = vpack.c.b16 %v4627, %v4620
    %v5125 = vpack.c.b16 %v4628, %v4621
    %v5126 = vpack.c.b16 %v4629, %v4622
    %v5127 = vpack.c.b16 %v4637, %v4630
    %v5128 = vpack.c.b16 %v4638, %v4631
    %v5129 = vpack.c.b16 %v4639, %v4632
    %v5130 = vpack.c.b16 %v4640, %v4633
    %v5131 = vpack.c.b16 %v4641, %v4634
    %v5132 = vpack.c.b16 %v4642, %v4635
    %v5133 = vpack.c.b16 %v4643, %v4636
    %v5134 = vpack.c.b16 %v4651, %v4644
    %v5135 = vpack.c.b16 %v4652, %v4645
    %v5136 = vpack.c.b16 %v4653, %v4646
    %v5137 = vpack.c.b16 %v4654, %v4647
    %v5138 = vpack.c.b16 %v4655, %v4648
    %v5139 = vpack.c.b16 %v4656, %v4649
    %v5140 = vpack.c.b16 %v4657, %v4650
    %v5141 = vpack.c.b16 %v4665, %v4658
    %v5142 = vpack.c.b16 %v4666, %v4659
    %v5143 = vpack.c.b16 %v4667, %v4660
    %v5144 = vpack.c.b16 %v4668, %v4661
    %v5145 = vpack.c.b16 %v4669, %v4662
    %v5146 = vpack.c.b16 %v4670, %v4663
    %v5147 = vpack.c.b16 %v4671, %v4664
    %v5148 = vpack.c.b16 %v4679, %v4672
    %v5149 = vpack.c.b16 %v4680, %v4673
    %v5150 = vpack.c.b16 %v4681, %v4674
    %v5151 = vpack.c.b16 %v4682, %v4675
    %v5152 = vpack.c.b16 %v4683, %v4676
    %v5153 = vpack.c.b16 %v4684, %v4677
    %v5154 = vpack.c.b16 %v4685, %v4678
    %v5155 = vpack.c.b16 %v4693, %v4686
    %v5156 = vpack.c.b16 %v4694, %v4687
    %v5157 = vpack.c.b16 %v4695, %v4688
    %v5158 = vpack.c.b16 %v4696, %v4689
    %v5159 = vpack.c.b16 %v4697, %v4690
    %v5160 = vpack.c.b16 %v4698, %v4691
    %v5161 = vpack.c.b16 %v4699, %v4692
    %v5162 = vpack.c.b16 %v4707, %v4700
    %v5163 = vpack.c.b16 %v4708, %v4701
    %v5164 = vpack.c.b16 %v4709, %v4702
    %v5165 = vpack.c.b16 %v4710, %v4703
    %v5166 = vpack.c.b16 %v4711, %v4704
    %v5167 = vpack.c.b16 %v4712, %v4705
    %v5168 = vpack.c.b16 %v4713, %v4706
    %v5169 = vpack.c.b16 %v4721, %v4714
    %v5170 = vpack.c.b16 %v4722, %v4715
    %v5171 = vpack.c.b16 %v4723, %v4716
    %v5172 = vpack.c.b16 %v4724, %v4717
    %v5173 = vpack.c.b16 %v4725, %v4718
    %v5174 = vpack.c.b16 %v4726, %v4719
    %v5175 = vpack.c.b16 %v4727, %v4720
    %5624 = vmatprep.subr.bf16.mxu0 %v4778
    %5625 = vmatpush1.bf16.msra.mxu0 %v4777
    %5626 = vmatprep.subr.bf16.mxu0 %v4771
    %5627 = vmatpush1.bf16.msra.mxu0 %v4770
    %5628 = vmatprep.subr.bf16.mxu0 %v4764
    %5629 = vmatpush1.bf16.msra.mxu0 %v4763
    %5630 = vmatprep.subr.bf16.mxu0 %v4757
    %5631 = vmatpush1.bf16.msra.mxu0 %v4756
    %5632 = vmatprep.subr.bf16.mxu0 %v4750
    %5633 = vmatpush1.bf16.msra.mxu0 %v4749
    %5634 = vmatprep.subr.bf16.mxu0 %v4743
    %5635 = vmatpush1.bf16.msra.mxu0 %v4742
    %5636 = vmatprep.subr.bf16.mxu0 %v4736
    %5637 = vmatpush1.bf16.msra.mxu0 %v4735
    %5638 = vmatprep.subr.bf16.mxu0 %v4729
    %5639 = vmatpush1.bf16.msra.mxu0 %v4728
    %5640 = vmatprep.subr.bf16.mxu0 %v4834
    %5641 = vmatpush2.bf16.msra.mxu0 %v4833
    %5642 = vmatprep.subr.bf16.mxu0 %v4827
    %5643 = vmatpush2.bf16.msra.mxu0 %v4826
    %5644 = vmatprep.subr.bf16.mxu0 %v4820
    %5645 = vmatpush2.bf16.msra.mxu0 %v4819
    %5646 = vmatprep.subr.bf16.mxu0 %v4813
    %5647 = vmatpush2.bf16.msra.mxu0 %v4812
    %5648 = vmatprep.subr.bf16.mxu0 %v4806
    %5649 = vmatpush2.bf16.msra.mxu0 %v4805
    %5650 = vmatprep.subr.bf16.mxu0 %v4799
    %5651 = vmatpush2.bf16.msra.mxu0 %v4798
    %5652 = vmatprep.subr.bf16.mxu0 %v4792
    %5653 = vmatpush2.bf16.msra.mxu0 %v4791
    %5654 = vmatprep.subr.bf16.mxu0 %v4785
    %5655 = vmatpush2.bf16.msra.mxu0 %v4784
    %5656 = vmatprep.mubr.bf16.mxu0 %v2764
    %5657 = vmatmul.mubr.bf16.gmra.mxu0 %v2763
    %v5658 = vpop.f32.mrf.mxu0
    %v5659 = vadd.f32 %v3288, %v5658
    %v5660 = vpop.f32.mrf.mxu0
    %v5661 = vadd.f32 %v3292, %v5660
    %v5662 = vpop.f32.mrf.mxu0
    %v5663 = vadd.f32 %v3288, %v5662
    %v5664 = vpop.f32.mrf.mxu0
    %v5665 = vadd.f32 %v3292, %v5664
    %5666 = vdwg.mxu0
    %5667 = vmatprep.subr.bf16.mxu0 %v4890
    %5668 = vmatpush1.bf16.msra.mxu0 %v4889
    %5669 = vmatprep.subr.bf16.mxu0 %v4883
    %5670 = vmatpush1.bf16.msra.mxu0 %v4882
    %5671 = vmatprep.subr.bf16.mxu0 %v4876
    %5672 = vmatpush1.bf16.msra.mxu0 %v4875
    %5673 = vmatprep.subr.bf16.mxu0 %v4869
    %5674 = vmatpush1.bf16.msra.mxu0 %v4868
    %5675 = vmatprep.subr.bf16.mxu0 %v4862
    %5676 = vmatpush1.bf16.msra.mxu0 %v4861
    %5677 = vmatprep.subr.bf16.mxu0 %v4855
    %5678 = vmatpush1.bf16.msra.mxu0 %v4854
    %5679 = vmatprep.subr.bf16.mxu0 %v4848
    %5680 = vmatpush1.bf16.msra.mxu0 %v4847
    %5681 = vmatprep.subr.bf16.mxu0 %v4841
    %5682 = vmatpush1.bf16.msra.mxu0 %v4840
    %5683 = vmatprep.subr.bf16.mxu0 %v4946
    %5684 = vmatpush2.bf16.msra.mxu0 %v4945
    %5685 = vmatprep.subr.bf16.mxu0 %v4939
    %5686 = vmatpush2.bf16.msra.mxu0 %v4938
    %5687 = vmatprep.subr.bf16.mxu0 %v4932
    %5688 = vmatpush2.bf16.msra.mxu0 %v4931
    %5689 = vmatprep.subr.bf16.mxu0 %v4925
    %5690 = vmatpush2.bf16.msra.mxu0 %v4924
    %5691 = vmatprep.subr.bf16.mxu0 %v4918
    %5692 = vmatpush2.bf16.msra.mxu0 %v4917
    %5693 = vmatprep.subr.bf16.mxu0 %v4911
    %5694 = vmatpush2.bf16.msra.mxu0 %v4910
    %5695 = vmatprep.subr.bf16.mxu0 %v4904
    %5696 = vmatpush2.bf16.msra.mxu0 %v4903
    %5697 = vmatprep.subr.bf16.mxu0 %v4897
    %5698 = vmatpush2.bf16.msra.mxu0 %v4896
    %5699 = vmatprep.mubr.bf16.mxu0 %v2766
    %5700 = vmatmul.mubr.bf16.gmra.mxu0 %v2765
    %v5701 = vpop.f32.mrf.mxu0
    %v5702 = vadd.f32 %v5659, %v5701
    %v5703 = vpop.f32.mrf.mxu0
    %v5704 = vadd.f32 %v5661, %v5703
    %v5705 = vpop.f32.mrf.mxu0
    %v5706 = vadd.f32 %v5663, %v5705
    %v5707 = vpop.f32.mrf.mxu0
    %v5708 = vadd.f32 %v5665, %v5707
    %5709 = vdwg.mxu0
    %5710 = vmatprep.subr.bf16.mxu0 %v5002
    %5711 = vmatpush1.bf16.msra.mxu0 %v5001
    %5712 = vmatprep.subr.bf16.mxu0 %v4995
    %5713 = vmatpush1.bf16.msra.mxu0 %v4994
    %5714 = vmatprep.subr.bf16.mxu0 %v4988
    %5715 = vmatpush1.bf16.msra.mxu0 %v4987
    %5716 = vmatprep.subr.bf16.mxu0 %v4981
    %5717 = vmatpush1.bf16.msra.mxu0 %v4980
    %5718 = vmatprep.subr.bf16.mxu0 %v4974
    %5719 = vmatpush1.bf16.msra.mxu0 %v4973
    %5720 = vmatprep.subr.bf16.mxu0 %v4967
    %5721 = vmatpush1.bf16.msra.mxu0 %v4966
    %5722 = vmatprep.subr.bf16.mxu0 %v4960
    %5723 = vmatpush1.bf16.msra.mxu0 %v4959
    %5724 = vmatprep.subr.bf16.mxu0 %v4953
    %5725 = vmatpush1.bf16.msra.mxu0 %v4952
    %5726 = vmatprep.subr.bf16.mxu0 %v5058
    %5727 = vmatpush2.bf16.msra.mxu0 %v5057
    %5728 = vmatprep.subr.bf16.mxu0 %v5051
    %5729 = vmatpush2.bf16.msra.mxu0 %v5050
    %5730 = vmatprep.subr.bf16.mxu0 %v5044
    %5731 = vmatpush2.bf16.msra.mxu0 %v5043
    %5732 = vmatprep.subr.bf16.mxu0 %v5037
    %5733 = vmatpush2.bf16.msra.mxu0 %v5036
    %5734 = vmatprep.subr.bf16.mxu0 %v5030
    %5735 = vmatpush2.bf16.msra.mxu0 %v5029
    %5736 = vmatprep.subr.bf16.mxu0 %v5023
    %5737 = vmatpush2.bf16.msra.mxu0 %v5022
    %5738 = vmatprep.subr.bf16.mxu0 %v5016
    %5739 = vmatpush2.bf16.msra.mxu0 %v5015
    %5740 = vmatprep.subr.bf16.mxu0 %v5009
    %5741 = vmatpush2.bf16.msra.mxu0 %v5008
    %5742 = vmatprep.mubr.bf16.mxu0 %v2768
    %5743 = vmatmul.mubr.bf16.gmra.mxu0 %v2767
    %v5744 = vpop.f32.mrf.mxu0
    %v5745 = vadd.f32 %v5702, %v5744
    %v5746 = vpop.f32.mrf.mxu0
    %v5747 = vadd.f32 %v5704, %v5746
    %v5748 = vpop.f32.mrf.mxu0
    %v5749 = vadd.f32 %v5706, %v5748
    %v5750 = vpop.f32.mrf.mxu0
    %v5751 = vadd.f32 %v5708, %v5750
    %5752 = vdwg.mxu0
    %5753 = vmatprep.subr.bf16.mxu0 %v5114
    %5754 = vmatpush1.bf16.msra.mxu0 %v5113
    %5755 = vmatprep.subr.bf16.mxu0 %v5107
    %5756 = vmatpush1.bf16.msra.mxu0 %v5106
    %5757 = vmatprep.subr.bf16.mxu0 %v5100
    %5758 = vmatpush1.bf16.msra.mxu0 %v5099
    %5759 = vmatprep.subr.bf16.mxu0 %v5093
    %5760 = vmatpush1.bf16.msra.mxu0 %v5092
    %5761 = vmatprep.subr.bf16.mxu0 %v5086
    %5762 = vmatpush1.bf16.msra.mxu0 %v5085
    %5763 = vmatprep.subr.bf16.mxu0 %v5079
    %5764 = vmatpush1.bf16.msra.mxu0 %v5078
    %5765 = vmatprep.subr.bf16.mxu0 %v5072
    %5766 = vmatpush1.bf16.msra.mxu0 %v5071
    %5767 = vmatprep.subr.bf16.mxu0 %v5065
    %5768 = vmatpush1.bf16.msra.mxu0 %v5064
    %5769 = vmatprep.subr.bf16.mxu0 %v5170
    %5770 = vmatpush2.bf16.msra.mxu0 %v5169
    %5771 = vmatprep.subr.bf16.mxu0 %v5163
    %5772 = vmatpush2.bf16.msra.mxu0 %v5162
    %5773 = vmatprep.subr.bf16.mxu0 %v5156
    %5774 = vmatpush2.bf16.msra.mxu0 %v5155
    %5775 = vmatprep.subr.bf16.mxu0 %v5149
    %5776 = vmatpush2.bf16.msra.mxu0 %v5148
    %5777 = vmatprep.subr.bf16.mxu0 %v5142
    %5778 = vmatpush2.bf16.msra.mxu0 %v5141
    %5779 = vmatprep.subr.bf16.mxu0 %v5135
    %5780 = vmatpush2.bf16.msra.mxu0 %v5134
    %5781 = vmatprep.subr.bf16.mxu0 %v5128
    %5782 = vmatpush2.bf16.msra.mxu0 %v5127
    %5783 = vmatprep.subr.bf16.mxu0 %v5121
    %5784 = vmatpush2.bf16.msra.mxu0 %v5120
    %5785 = vmatprep.mubr.bf16.mxu0 %v2770
    %5786 = vmatmul.mubr.bf16.gmra.mxu0 %v2769
    %v5787 = vpop.f32.mrf.mxu0
    %v5788 = vadd.f32 %v5745, %v5787
    %v5789 = vpop.f32.mrf.mxu0
    %v5790 = vadd.f32 %v5747, %v5789
    %v5791 = vpop.f32.mrf.mxu0
    %v5792 = vadd.f32 %v5749, %v5791
    %v5793 = vpop.f32.mrf.mxu0
    %v5794 = vadd.f32 %v5751, %v5793
    %5795 = vdwg.mxu0
    %5796 = vmatprep.subr.bf16.mxu0 %v4780
    %5797 = vmatpush1.bf16.msra.mxu0 %v4779
    %5798 = vmatprep.subr.bf16.mxu0 %v4773
    %5799 = vmatpush1.bf16.msra.mxu0 %v4772
    %5800 = vmatprep.subr.bf16.mxu0 %v4766
    %5801 = vmatpush1.bf16.msra.mxu0 %v4765
    %5802 = vmatprep.subr.bf16.mxu0 %v4759
    %5803 = vmatpush1.bf16.msra.mxu0 %v4758
    %5804 = vmatprep.subr.bf16.mxu0 %v4752
    %5805 = vmatpush1.bf16.msra.mxu0 %v4751
    %5806 = vmatprep.subr.bf16.mxu0 %v4745
    %5807 = vmatpush1.bf16.msra.mxu0 %v4744
    %5808 = vmatprep.subr.bf16.mxu0 %v4738
    %5809 = vmatpush1.bf16.msra.mxu0 %v4737
    %5810 = vmatprep.subr.bf16.mxu0 %v4731
    %5811 = vmatpush1.bf16.msra.mxu0 %v4730
    %5812 = vmatprep.subr.bf16.mxu0 %v4836
    %5813 = vmatpush2.bf16.msra.mxu0 %v4835
    %5814 = vmatprep.subr.bf16.mxu0 %v4829
    %5815 = vmatpush2.bf16.msra.mxu0 %v4828
    %5816 = vmatprep.subr.bf16.mxu0 %v4822
    %5817 = vmatpush2.bf16.msra.mxu0 %v4821
    %5818 = vmatprep.subr.bf16.mxu0 %v4815
    %5819 = vmatpush2.bf16.msra.mxu0 %v4814
    %5820 = vmatprep.subr.bf16.mxu0 %v4808
    %5821 = vmatpush2.bf16.msra.mxu0 %v4807
    %5822 = vmatprep.subr.bf16.mxu0 %v4801
    %5823 = vmatpush2.bf16.msra.mxu0 %v4800
    %5824 = vmatprep.subr.bf16.mxu0 %v4794
    %5825 = vmatpush2.bf16.msra.mxu0 %v4793
    %5826 = vmatprep.subr.bf16.mxu0 %v4787
    %5827 = vmatpush2.bf16.msra.mxu0 %v4786
    %5828 = vmatprep.mubr.bf16.mxu0 %v2764
    %5829 = vmatmul.mubr.bf16.gmra.mxu0 %v2763
    %v5830 = vpop.f32.mrf.mxu0
    %v5831 = vadd.f32 %v3296, %v5830
    %v5832 = vpop.f32.mrf.mxu0
    %v5833 = vadd.f32 %v3300, %v5832
    %v5834 = vpop.f32.mrf.mxu0
    %v5835 = vadd.f32 %v3296, %v5834
    %v5836 = vpop.f32.mrf.mxu0
    %v5837 = vadd.f32 %v3300, %v5836
    %5838 = vdwg.mxu0
    %5839 = vmatprep.subr.bf16.mxu0 %v4892
    %5840 = vmatpush1.bf16.msra.mxu0 %v4891
    %5841 = vmatprep.subr.bf16.mxu0 %v4885
    %5842 = vmatpush1.bf16.msra.mxu0 %v4884
    %5843 = vmatprep.subr.bf16.mxu0 %v4878
    %5844 = vmatpush1.bf16.msra.mxu0 %v4877
    %5845 = vmatprep.subr.bf16.mxu0 %v4871
    %5846 = vmatpush1.bf16.msra.mxu0 %v4870
    %5847 = vmatprep.subr.bf16.mxu0 %v4864
    %5848 = vmatpush1.bf16.msra.mxu0 %v4863
    %5849 = vmatprep.subr.bf16.mxu0 %v4857
    %5850 = vmatpush1.bf16.msra.mxu0 %v4856
    %5851 = vmatprep.subr.bf16.mxu0 %v4850
    %5852 = vmatpush1.bf16.msra.mxu0 %v4849
    %5853 = vmatprep.subr.bf16.mxu0 %v4843
    %5854 = vmatpush1.bf16.msra.mxu0 %v4842
    %5855 = vmatprep.subr.bf16.mxu0 %v4948
    %5856 = vmatpush2.bf16.msra.mxu0 %v4947
    %5857 = vmatprep.subr.bf16.mxu0 %v4941
    %5858 = vmatpush2.bf16.msra.mxu0 %v4940
    %5859 = vmatprep.subr.bf16.mxu0 %v4934
    %5860 = vmatpush2.bf16.msra.mxu0 %v4933
    %5861 = vmatprep.subr.bf16.mxu0 %v4927
    %5862 = vmatpush2.bf16.msra.mxu0 %v4926
    %5863 = vmatprep.subr.bf16.mxu0 %v4920
    %5864 = vmatpush2.bf16.msra.mxu0 %v4919
    %5865 = vmatprep.subr.bf16.mxu0 %v4913
    %5866 = vmatpush2.bf16.msra.mxu0 %v4912
    %5867 = vmatprep.subr.bf16.mxu0 %v4906
    %5868 = vmatpush2.bf16.msra.mxu0 %v4905
    %5869 = vmatprep.subr.bf16.mxu0 %v4899
    %5870 = vmatpush2.bf16.msra.mxu0 %v4898
    %5871 = vmatprep.mubr.bf16.mxu0 %v2766
    %5872 = vmatmul.mubr.bf16.gmra.mxu0 %v2765
    %v5873 = vpop.f32.mrf.mxu0
    %v5874 = vadd.f32 %v5831, %v5873
    %v5875 = vpop.f32.mrf.mxu0
    %v5876 = vadd.f32 %v5833, %v5875
    %v5877 = vpop.f32.mrf.mxu0
    %v5878 = vadd.f32 %v5835, %v5877
    %v5879 = vpop.f32.mrf.mxu0
    %v5880 = vadd.f32 %v5837, %v5879
    %5881 = vdwg.mxu0
    %5882 = vmatprep.subr.bf16.mxu0 %v5004
    %5883 = vmatpush1.bf16.msra.mxu0 %v5003
    %5884 = vmatprep.subr.bf16.mxu0 %v4997
    %5885 = vmatpush1.bf16.msra.mxu0 %v4996
    %5886 = vmatprep.subr.bf16.mxu0 %v4990
    %5887 = vmatpush1.bf16.msra.mxu0 %v4989
    %5888 = vmatprep.subr.bf16.mxu0 %v4983
    %5889 = vmatpush1.bf16.msra.mxu0 %v4982
    %5890 = vmatprep.subr.bf16.mxu0 %v4976
    %5891 = vmatpush1.bf16.msra.mxu0 %v4975
    %5892 = vmatprep.subr.bf16.mxu0 %v4969
    %5893 = vmatpush1.bf16.msra.mxu0 %v4968
    %5894 = vmatprep.subr.bf16.mxu0 %v4962
    %5895 = vmatpush1.bf16.msra.mxu0 %v4961
    %5896 = vmatprep.subr.bf16.mxu0 %v4955
    %5897 = vmatpush1.bf16.msra.mxu0 %v4954
    %5898 = vmatprep.subr.bf16.mxu0 %v5060
    %5899 = vmatpush2.bf16.msra.mxu0 %v5059
    %5900 = vmatprep.subr.bf16.mxu0 %v5053
    %5901 = vmatpush2.bf16.msra.mxu0 %v5052
    %5902 = vmatprep.subr.bf16.mxu0 %v5046
    %5903 = vmatpush2.bf16.msra.mxu0 %v5045
    %5904 = vmatprep.subr.bf16.mxu0 %v5039
    %5905 = vmatpush2.bf16.msra.mxu0 %v5038
    %5906 = vmatprep.subr.bf16.mxu0 %v5032
    %5907 = vmatpush2.bf16.msra.mxu0 %v5031
    %5908 = vmatprep.subr.bf16.mxu0 %v5025
    %5909 = vmatpush2.bf16.msra.mxu0 %v5024
    %5910 = vmatprep.subr.bf16.mxu0 %v5018
    %5911 = vmatpush2.bf16.msra.mxu0 %v5017
    %5912 = vmatprep.subr.bf16.mxu0 %v5011
    %5913 = vmatpush2.bf16.msra.mxu0 %v5010
    %5914 = vmatprep.mubr.bf16.mxu0 %v2768
    %5915 = vmatmul.mubr.bf16.gmra.mxu0 %v2767
    %v5916 = vpop.f32.mrf.mxu0
    %v5917 = vadd.f32 %v5874, %v5916
    %v5918 = vpop.f32.mrf.mxu0
    %v5919 = vadd.f32 %v5876, %v5918
    %v5920 = vpop.f32.mrf.mxu0
    %v5921 = vadd.f32 %v5878, %v5920
    %v5922 = vpop.f32.mrf.mxu0
    %v5923 = vadd.f32 %v5880, %v5922
    %5924 = vdwg.mxu0
    %5925 = vmatprep.subr.bf16.mxu0 %v5116
    %5926 = vmatpush1.bf16.msra.mxu0 %v5115
    %5927 = vmatprep.subr.bf16.mxu0 %v5109
    %5928 = vmatpush1.bf16.msra.mxu0 %v5108
    %5929 = vmatprep.subr.bf16.mxu0 %v5102
    %5930 = vmatpush1.bf16.msra.mxu0 %v5101
    %5931 = vmatprep.subr.bf16.mxu0 %v5095
    %5932 = vmatpush1.bf16.msra.mxu0 %v5094
    %5933 = vmatprep.subr.bf16.mxu0 %v5088
    %5934 = vmatpush1.bf16.msra.mxu0 %v5087
    %5935 = vmatprep.subr.bf16.mxu0 %v5081
    %5936 = vmatpush1.bf16.msra.mxu0 %v5080
    %5937 = vmatprep.subr.bf16.mxu0 %v5074
    %5938 = vmatpush1.bf16.msra.mxu0 %v5073
    %5939 = vmatprep.subr.bf16.mxu0 %v5067
    %5940 = vmatpush1.bf16.msra.mxu0 %v5066
    %5941 = vmatprep.subr.bf16.mxu0 %v5172
    %5942 = vmatpush2.bf16.msra.mxu0 %v5171
    %5943 = vmatprep.subr.bf16.mxu0 %v5165
    %5944 = vmatpush2.bf16.msra.mxu0 %v5164
    %5945 = vmatprep.subr.bf16.mxu0 %v5158
    %5946 = vmatpush2.bf16.msra.mxu0 %v5157
    %5947 = vmatprep.subr.bf16.mxu0 %v5151
    %5948 = vmatpush2.bf16.msra.mxu0 %v5150
    %5949 = vmatprep.subr.bf16.mxu0 %v5144
    %5950 = vmatpush2.bf16.msra.mxu0 %v5143
    %5951 = vmatprep.subr.bf16.mxu0 %v5137
    %5952 = vmatpush2.bf16.msra.mxu0 %v5136
    %5953 = vmatprep.subr.bf16.mxu0 %v5130
    %5954 = vmatpush2.bf16.msra.mxu0 %v5129
    %5955 = vmatprep.subr.bf16.mxu0 %v5123
    %5956 = vmatpush2.bf16.msra.mxu0 %v5122
    %5957 = vmatprep.mubr.bf16.mxu0 %v2770
    %5958 = vmatmul.mubr.bf16.gmra.mxu0 %v2769
    %v5959 = vpop.f32.mrf.mxu0
    %v5960 = vadd.f32 %v5917, %v5959
    %v5961 = vpop.f32.mrf.mxu0
    %v5962 = vadd.f32 %v5919, %v5961
    %v5963 = vpop.f32.mrf.mxu0
    %v5964 = vadd.f32 %v5921, %v5963
    %v5965 = vpop.f32.mrf.mxu0
    %v5966 = vadd.f32 %v5923, %v5965
    %5967 = vdwg.mxu0
    %5968 = vmatprep.subr.bf16.mxu0 %v4782
    %5969 = vmatpush1.bf16.msra.mxu0 %v4781
    %5970 = vmatprep.subr.bf16.mxu0 %v4775
    %5971 = vmatpush1.bf16.msra.mxu0 %v4774
    %5972 = vmatprep.subr.bf16.mxu0 %v4768
    %5973 = vmatpush1.bf16.msra.mxu0 %v4767
    %5974 = vmatprep.subr.bf16.mxu0 %v4761
    %5975 = vmatpush1.bf16.msra.mxu0 %v4760
    %5976 = vmatprep.subr.bf16.mxu0 %v4754
    %5977 = vmatpush1.bf16.msra.mxu0 %v4753
    %5978 = vmatprep.subr.bf16.mxu0 %v4747
    %5979 = vmatpush1.bf16.msra.mxu0 %v4746
    %5980 = vmatprep.subr.bf16.mxu0 %v4740
    %5981 = vmatpush1.bf16.msra.mxu0 %v4739
    %5982 = vmatprep.subr.bf16.mxu0 %v4733
    %5983 = vmatpush1.bf16.msra.mxu0 %v4732
    %5984 = vmatprep.subr.bf16.mxu0 %v4838
    %5985 = vmatpush2.bf16.msra.mxu0 %v4837
    %5986 = vmatprep.subr.bf16.mxu0 %v4831
    %5987 = vmatpush2.bf16.msra.mxu0 %v4830
    %5988 = vmatprep.subr.bf16.mxu0 %v4824
    %5989 = vmatpush2.bf16.msra.mxu0 %v4823
    %5990 = vmatprep.subr.bf16.mxu0 %v4817
    %5991 = vmatpush2.bf16.msra.mxu0 %v4816
    %5992 = vmatprep.subr.bf16.mxu0 %v4810
    %5993 = vmatpush2.bf16.msra.mxu0 %v4809
    %5994 = vmatprep.subr.bf16.mxu0 %v4803
    %5995 = vmatpush2.bf16.msra.mxu0 %v4802
    %5996 = vmatprep.subr.bf16.mxu0 %v4796
    %5997 = vmatpush2.bf16.msra.mxu0 %v4795
    %5998 = vmatprep.subr.bf16.mxu0 %v4789
    %5999 = vmatpush2.bf16.msra.mxu0 %v4788
    %6000 = vmatprep.mubr.bf16.mxu0 %v2764
    %6001 = vmatmul.mubr.bf16.gmra.mxu0 %v2763
    %v6002 = vpop.f32.mrf.mxu0
    %v6003 = vadd.f32 %v3304, %v6002
    %v6004 = vpop.f32.mrf.mxu0
    %v6005 = vadd.f32 %v3308, %v6004
    %v6006 = vpop.f32.mrf.mxu0
    %v6007 = vadd.f32 %v3304, %v6006
    %v6008 = vpop.f32.mrf.mxu0
    %v6009 = vadd.f32 %v3308, %v6008
    %6010 = vdwg.mxu0
    %6011 = vmatprep.subr.bf16.mxu0 %v4894
    %6012 = vmatpush1.bf16.msra.mxu0 %v4893
    %6013 = vmatprep.subr.bf16.mxu0 %v4887
    %6014 = vmatpush1.bf16.msra.mxu0 %v4886
    %6015 = vmatprep.subr.bf16.mxu0 %v4880
    %6016 = vmatpush1.bf16.msra.mxu0 %v4879
    %6017 = vmatprep.subr.bf16.mxu0 %v4873
    %6018 = vmatpush1.bf16.msra.mxu0 %v4872
    %6019 = vmatprep.subr.bf16.mxu0 %v4866
    %6020 = vmatpush1.bf16.msra.mxu0 %v4865
    %6021 = vmatprep.subr.bf16.mxu0 %v4859
    %6022 = vmatpush1.bf16.msra.mxu0 %v4858
    %6023 = vmatprep.subr.bf16.mxu0 %v4852
    %6024 = vmatpush1.bf16.msra.mxu0 %v4851
    %6025 = vmatprep.subr.bf16.mxu0 %v4845
    %6026 = vmatpush1.bf16.msra.mxu0 %v4844
    %6027 = vmatprep.subr.bf16.mxu0 %v4950
    %6028 = vmatpush2.bf16.msra.mxu0 %v4949
    %6029 = vmatprep.subr.bf16.mxu0 %v4943
    %6030 = vmatpush2.bf16.msra.mxu0 %v4942
    %6031 = vmatprep.subr.bf16.mxu0 %v4936
    %6032 = vmatpush2.bf16.msra.mxu0 %v4935
    %6033 = vmatprep.subr.bf16.mxu0 %v4929
    %6034 = vmatpush2.bf16.msra.mxu0 %v4928
    %6035 = vmatprep.subr.bf16.mxu0 %v4922
    %6036 = vmatpush2.bf16.msra.mxu0 %v4921
    %6037 = vmatprep.subr.bf16.mxu0 %v4915
    %6038 = vmatpush2.bf16.msra.mxu0 %v4914
    %6039 = vmatprep.subr.bf16.mxu0 %v4908
    %6040 = vmatpush2.bf16.msra.mxu0 %v4907
    %6041 = vmatprep.subr.bf16.mxu0 %v4901
    %6042 = vmatpush2.bf16.msra.mxu0 %v4900
    %6043 = vmatprep.mubr.bf16.mxu0 %v2766
    %6044 = vmatmul.mubr.bf16.gmra.mxu0 %v2765
    %v6045 = vpop.f32.mrf.mxu0
    %v6046 = vadd.f32 %v6003, %v6045
    %v6047 = vpop.f32.mrf.mxu0
    %v6048 = vadd.f32 %v6005, %v6047
    %v6049 = vpop.f32.mrf.mxu0
    %v6050 = vadd.f32 %v6007, %v6049
    %v6051 = vpop.f32.mrf.mxu0
    %v6052 = vadd.f32 %v6009, %v6051
    %6053 = vdwg.mxu0
    %6054 = vmatprep.subr.bf16.mxu0 %v5006
    %6055 = vmatpush1.bf16.msra.mxu0 %v5005
    %6056 = vmatprep.subr.bf16.mxu0 %v4999
    %6057 = vmatpush1.bf16.msra.mxu0 %v4998
    %6058 = vmatprep.subr.bf16.mxu0 %v4992
    %6059 = vmatpush1.bf16.msra.mxu0 %v4991
    %6060 = vmatprep.subr.bf16.mxu0 %v4985
    %6061 = vmatpush1.bf16.msra.mxu0 %v4984
    %6062 = vmatprep.subr.bf16.mxu0 %v4978
    %6063 = vmatpush1.bf16.msra.mxu0 %v4977
    %6064 = vmatprep.subr.bf16.mxu0 %v4971
    %6065 = vmatpush1.bf16.msra.mxu0 %v4970
    %6066 = vmatprep.subr.bf16.mxu0 %v4964
    %6067 = vmatpush1.bf16.msra.mxu0 %v4963
    %6068 = vmatprep.subr.bf16.mxu0 %v4957
    %6069 = vmatpush1.bf16.msra.mxu0 %v4956
    %6070 = vmatprep.subr.bf16.mxu0 %v5062
    %6071 = vmatpush2.bf16.msra.mxu0 %v5061
    %6072 = vmatprep.subr.bf16.mxu0 %v5055
    %6073 = vmatpush2.bf16.msra.mxu0 %v5054
    %6074 = vmatprep.subr.bf16.mxu0 %v5048
    %6075 = vmatpush2.bf16.msra.mxu0 %v5047
    %6076 = vmatprep.subr.bf16.mxu0 %v5041
    %6077 = vmatpush2.bf16.msra.mxu0 %v5040
    %6078 = vmatprep.subr.bf16.mxu0 %v5034
    %6079 = vmatpush2.bf16.msra.mxu0 %v5033
    %6080 = vmatprep.subr.bf16.mxu0 %v5027
    %6081 = vmatpush2.bf16.msra.mxu0 %v5026
    %6082 = vmatprep.subr.bf16.mxu0 %v5020
    %6083 = vmatpush2.bf16.msra.mxu0 %v5019
    %6084 = vmatprep.subr.bf16.mxu0 %v5013
    %6085 = vmatpush2.bf16.msra.mxu0 %v5012
    %6086 = vmatprep.mubr.bf16.mxu0 %v2768
    %6087 = vmatmul.mubr.bf16.gmra.mxu0 %v2767
    %v6088 = vpop.f32.mrf.mxu0
    %v6089 = vadd.f32 %v6046, %v6088
    %v6090 = vpop.f32.mrf.mxu0
    %v6091 = vadd.f32 %v6048, %v6090
    %v6092 = vpop.f32.mrf.mxu0
    %v6093 = vadd.f32 %v6050, %v6092
    %v6094 = vpop.f32.mrf.mxu0
    %v6095 = vadd.f32 %v6052, %v6094
    %6096 = vdwg.mxu0
    %6097 = vmatprep.subr.bf16.mxu0 %v5118
    %6098 = vmatpush1.bf16.msra.mxu0 %v5117
    %6099 = vmatprep.subr.bf16.mxu0 %v5111
    %6100 = vmatpush1.bf16.msra.mxu0 %v5110
    %6101 = vmatprep.subr.bf16.mxu0 %v5104
    %6102 = vmatpush1.bf16.msra.mxu0 %v5103
    %6103 = vmatprep.subr.bf16.mxu0 %v5097
    %6104 = vmatpush1.bf16.msra.mxu0 %v5096
    %6105 = vmatprep.subr.bf16.mxu0 %v5090
    %6106 = vmatpush1.bf16.msra.mxu0 %v5089
    %6107 = vmatprep.subr.bf16.mxu0 %v5083
    %6108 = vmatpush1.bf16.msra.mxu0 %v5082
    %6109 = vmatprep.subr.bf16.mxu0 %v5076
    %6110 = vmatpush1.bf16.msra.mxu0 %v5075
    %6111 = vmatprep.subr.bf16.mxu0 %v5069
    %6112 = vmatpush1.bf16.msra.mxu0 %v5068
    %6113 = vmatprep.subr.bf16.mxu0 %v5174
    %6114 = vmatpush2.bf16.msra.mxu0 %v5173
    %6115 = vmatprep.subr.bf16.mxu0 %v5167
    %6116 = vmatpush2.bf16.msra.mxu0 %v5166
    %6117 = vmatprep.subr.bf16.mxu0 %v5160
    %6118 = vmatpush2.bf16.msra.mxu0 %v5159
    %6119 = vmatprep.subr.bf16.mxu0 %v5153
    %6120 = vmatpush2.bf16.msra.mxu0 %v5152
    %6121 = vmatprep.subr.bf16.mxu0 %v5146
    %6122 = vmatpush2.bf16.msra.mxu0 %v5145
    %6123 = vmatprep.subr.bf16.mxu0 %v5139
    %6124 = vmatpush2.bf16.msra.mxu0 %v5138
    %6125 = vmatprep.subr.bf16.mxu0 %v5132
    %6126 = vmatpush2.bf16.msra.mxu0 %v5131
    %6127 = vmatprep.subr.bf16.mxu0 %v5125
    %6128 = vmatpush2.bf16.msra.mxu0 %v5124
    %6129 = vmatprep.mubr.bf16.mxu0 %v2770
    %6130 = vmatmul.mubr.bf16.gmra.mxu0 %v2769
    %v6131 = vpop.f32.mrf.mxu0
    %v6132 = vadd.f32 %v6089, %v6131
    %v6133 = vpop.f32.mrf.mxu0
    %v6134 = vadd.f32 %v6091, %v6133
    %v6135 = vpop.f32.mrf.mxu0
    %v6136 = vadd.f32 %v6093, %v6135
    %v6137 = vpop.f32.mrf.mxu0
    %v6138 = vadd.f32 %v6095, %v6137
    %6139 = vdwg.mxu0
    %6140 = vmatprep.subr.bf16.mxu0 0
    %6141 = vmatpush1.bf16.msra.mxu0 %v4783
    %6142 = vmatprep.subr.bf16.mxu0 0
    %6143 = vmatpush1.bf16.msra.mxu0 %v4776
    %6144 = vmatprep.subr.bf16.mxu0 0
    %6145 = vmatpush1.bf16.msra.mxu0 %v4769
    %6146 = vmatprep.subr.bf16.mxu0 0
    %6147 = vmatpush1.bf16.msra.mxu0 %v4762
    %6148 = vmatprep.subr.bf16.mxu0 0
    %6149 = vmatpush1.bf16.msra.mxu0 %v4755
    %6150 = vmatprep.subr.bf16.mxu0 0
    %6151 = vmatpush1.bf16.msra.mxu0 %v4748
    %6152 = vmatprep.subr.bf16.mxu0 0
    %6153 = vmatpush1.bf16.msra.mxu0 %v4741
    %6154 = vmatprep.subr.bf16.mxu0 0
    %6155 = vmatpush1.bf16.msra.mxu0 %v4734
    %6156 = vmatprep.subr.bf16.mxu0 0
    %6157 = vmatpush2.bf16.msra.mxu0 %v4839
    %6158 = vmatprep.subr.bf16.mxu0 0
    %6159 = vmatpush2.bf16.msra.mxu0 %v4832
    %6160 = vmatprep.subr.bf16.mxu0 0
    %6161 = vmatpush2.bf16.msra.mxu0 %v4825
    %6162 = vmatprep.subr.bf16.mxu0 0
    %6163 = vmatpush2.bf16.msra.mxu0 %v4818
    %6164 = vmatprep.subr.bf16.mxu0 0
    %6165 = vmatpush2.bf16.msra.mxu0 %v4811
    %6166 = vmatprep.subr.bf16.mxu0 0
    %6167 = vmatpush2.bf16.msra.mxu0 %v4804
    %6168 = vmatprep.subr.bf16.mxu0 0
    %6169 = vmatpush2.bf16.msra.mxu0 %v4797
    %6170 = vmatprep.subr.bf16.mxu0 0
    %6171 = vmatpush2.bf16.msra.mxu0 %v4790
    %6172 = vmatprep.mubr.bf16.mxu0 %v2764
    %6173 = vmatmul.mubr.bf16.gmra.mxu0 %v2763
    %v6174 = vpop.f32.mrf.mxu0
    %v6175 = vadd.f32 %v3312, %v6174
    %v6176 = vpop.f32.mrf.mxu0
    %v6177 = vpop.f32.mrf.mxu0
    %v6178 = vadd.f32 %v3312, %v6177
    %v6179 = vpop.f32.mrf.mxu0
    %6180 = vdwg.mxu0
    %6181 = vmatprep.subr.bf16.mxu0 0
    %6182 = vmatpush1.bf16.msra.mxu0 %v4895
    %6183 = vmatprep.subr.bf16.mxu0 0
    %6184 = vmatpush1.bf16.msra.mxu0 %v4888
    %6185 = vmatprep.subr.bf16.mxu0 0
    %6186 = vmatpush1.bf16.msra.mxu0 %v4881
    %6187 = vmatprep.subr.bf16.mxu0 0
    %6188 = vmatpush1.bf16.msra.mxu0 %v4874
    %6189 = vmatprep.subr.bf16.mxu0 0
    %6190 = vmatpush1.bf16.msra.mxu0 %v4867
    %6191 = vmatprep.subr.bf16.mxu0 0
    %6192 = vmatpush1.bf16.msra.mxu0 %v4860
    %6193 = vmatprep.subr.bf16.mxu0 0
    %6194 = vmatpush1.bf16.msra.mxu0 %v4853
    %6195 = vmatprep.subr.bf16.mxu0 0
    %6196 = vmatpush1.bf16.msra.mxu0 %v4846
    %6197 = vmatprep.subr.bf16.mxu0 0
    %6198 = vmatpush2.bf16.msra.mxu0 %v4951
    %6199 = vmatprep.subr.bf16.mxu0 0
    %6200 = vmatpush2.bf16.msra.mxu0 %v4944
    %6201 = vmatprep.subr.bf16.mxu0 0
    %6202 = vmatpush2.bf16.msra.mxu0 %v4937
    %6203 = vmatprep.subr.bf16.mxu0 0
    %6204 = vmatpush2.bf16.msra.mxu0 %v4930
    %6205 = vmatprep.subr.bf16.mxu0 0
    %6206 = vmatpush2.bf16.msra.mxu0 %v4923
    %6207 = vmatprep.subr.bf16.mxu0 0
    %6208 = vmatpush2.bf16.msra.mxu0 %v4916
    %6209 = vmatprep.subr.bf16.mxu0 0
    %6210 = vmatpush2.bf16.msra.mxu0 %v4909
    %6211 = vmatprep.subr.bf16.mxu0 0
    %6212 = vmatpush2.bf16.msra.mxu0 %v4902
    %6213 = vmatprep.mubr.bf16.mxu0 %v2766
    %6214 = vmatmul.mubr.bf16.gmra.mxu0 %v2765
    %v6215 = vpop.f32.mrf.mxu0
    %v6216 = vadd.f32 %v6175, %v6215
    %v6217 = vpop.f32.mrf.mxu0
    %v6218 = vpop.f32.mrf.mxu0
    %v6219 = vadd.f32 %v6178, %v6218
    %v6220 = vpop.f32.mrf.mxu0
    %6221 = vdwg.mxu0
    %6222 = vmatprep.subr.bf16.mxu0 0
    %6223 = vmatpush1.bf16.msra.mxu0 %v5007
    %6224 = vmatprep.subr.bf16.mxu0 0
    %6225 = vmatpush1.bf16.msra.mxu0 %v5000
    %6226 = vmatprep.subr.bf16.mxu0 0
    %6227 = vmatpush1.bf16.msra.mxu0 %v4993
    %6228 = vmatprep.subr.bf16.mxu0 0
    %6229 = vmatpush1.bf16.msra.mxu0 %v4986
    %6230 = vmatprep.subr.bf16.mxu0 0
    %6231 = vmatpush1.bf16.msra.mxu0 %v4979
    %6232 = vmatprep.subr.bf16.mxu0 0
    %6233 = vmatpush1.bf16.msra.mxu0 %v4972
    %6234 = vmatprep.subr.bf16.mxu0 0
    %6235 = vmatpush1.bf16.msra.mxu0 %v4965
    %6236 = vmatprep.subr.bf16.mxu0 0
    %6237 = vmatpush1.bf16.msra.mxu0 %v4958
    %6238 = vmatprep.subr.bf16.mxu0 0
    %6239 = vmatpush2.bf16.msra.mxu0 %v5063
    %6240 = vmatprep.subr.bf16.mxu0 0
    %6241 = vmatpush2.bf16.msra.mxu0 %v5056
    %6242 = vmatprep.subr.bf16.mxu0 0
    %6243 = vmatpush2.bf16.msra.mxu0 %v5049
    %6244 = vmatprep.subr.bf16.mxu0 0
    %6245 = vmatpush2.bf16.msra.mxu0 %v5042
    %6246 = vmatprep.subr.bf16.mxu0 0
    %6247 = vmatpush2.bf16.msra.mxu0 %v5035
    %6248 = vmatprep.subr.bf16.mxu0 0
    %6249 = vmatpush2.bf16.msra.mxu0 %v5028
    %6250 = vmatprep.subr.bf16.mxu0 0
    %6251 = vmatpush2.bf16.msra.mxu0 %v5021
    %6252 = vmatprep.subr.bf16.mxu0 0
    %6253 = vmatpush2.bf16.msra.mxu0 %v5014
    %6254 = vmatprep.mubr.bf16.mxu0 %v2768
    %6255 = vmatmul.mubr.bf16.gmra.mxu0 %v2767
    %v6256 = vpop.f32.mrf.mxu0
    %v6257 = vadd.f32 %v6216, %v6256
    %v6258 = vpop.f32.mrf.mxu0
    %v6259 = vpop.f32.mrf.mxu0
    %v6260 = vadd.f32 %v6219, %v6259
    %v6261 = vpop.f32.mrf.mxu0
    %6262 = vdwg.mxu0
    %6263 = vmatprep.subr.bf16.mxu0 0
    %6264 = vmatpush1.bf16.msra.mxu0 %v5119
    %6265 = vmatprep.subr.bf16.mxu0 0
    %6266 = vmatpush1.bf16.msra.mxu0 %v5112
    %6267 = vmatprep.subr.bf16.mxu0 0
    %6268 = vmatpush1.bf16.msra.mxu0 %v5105
    %6269 = vmatprep.subr.bf16.mxu0 0
    %6270 = vmatpush1.bf16.msra.mxu0 %v5098
    %6271 = vmatprep.subr.bf16.mxu0 0
    %6272 = vmatpush1.bf16.msra.mxu0 %v5091
    %6273 = vmatprep.subr.bf16.mxu0 0
    %6274 = vmatpush1.bf16.msra.mxu0 %v5084
    %6275 = vmatprep.subr.bf16.mxu0 0
    %6276 = vmatpush1.bf16.msra.mxu0 %v5077
    %6277 = vmatprep.subr.bf16.mxu0 0
    %6278 = vmatpush1.bf16.msra.mxu0 %v5070
    %6279 = vmatprep.subr.bf16.mxu0 0
    %6280 = vmatpush2.bf16.msra.mxu0 %v5175
    %6281 = vmatprep.subr.bf16.mxu0 0
    %6282 = vmatpush2.bf16.msra.mxu0 %v5168
    %6283 = vmatprep.subr.bf16.mxu0 0
    %6284 = vmatpush2.bf16.msra.mxu0 %v5161
    %6285 = vmatprep.subr.bf16.mxu0 0
    %6286 = vmatpush2.bf16.msra.mxu0 %v5154
    %6287 = vmatprep.subr.bf16.mxu0 0
    %6288 = vmatpush2.bf16.msra.mxu0 %v5147
    %6289 = vmatprep.subr.bf16.mxu0 0
    %6290 = vmatpush2.bf16.msra.mxu0 %v5140
    %6291 = vmatprep.subr.bf16.mxu0 0
    %6292 = vmatpush2.bf16.msra.mxu0 %v5133
    %6293 = vmatprep.subr.bf16.mxu0 0
    %6294 = vmatpush2.bf16.msra.mxu0 %v5126
    %6295 = vmatprep.mubr.bf16.mxu0 %v2770
    %6296 = vmatmul.mubr.bf16.gmra.mxu0 %v2769
    %v6297 = vpop.f32.mrf.mxu0
    %v6298 = vadd.f32 %v6257, %v6297
    %v6299 = vpop.f32.mrf.mxu0
    %v6300 = vpop.f32.mrf.mxu0
    %v6301 = vadd.f32 %v6260, %v6300
    %v6302 = vpop.f32.mrf.mxu0
    %6303 = vdwg.mxu0
    %v6304 = vtanh.pop %v5788
    %v6305 = vtanh.pop %v5790
    %v6306 = vtanh.pop %v5960
    %v6307 = vtanh.pop %v5962
    %v6308 = vtanh.pop %v6132
    %v6309 = vtanh.pop %v6134
    %v6310 = vtanh.pop %v6298
    %v6311 = vtanh.pop %v5792
    %v6312 = vtanh.pop %v5794
    %v6313 = vtanh.pop %v5964
    %v6314 = vtanh.pop %v5966
    %v6315 = vtanh.pop %v6136
    %v6316 = vtanh.pop %v6138
    %v6317 = vtanh.pop %v6301
    %6318 = vst [vmem:[#allocation18] sm:$0xff] %v6304
    %6319 = vst [vmem:[#allocation18 + $0x8] sm:$0xff] %v6305
    %6320 = vst [vmem:[#allocation18 + $0x10] sm:$0xff] %v6306
    %6321 = vst [vmem:[#allocation18 + $0x18] sm:$0xff] %v6307
    %6322 = vst [vmem:[#allocation18 + $0x20] sm:$0xff] %v6308
    %6323 = vst [vmem:[#allocation18 + $0x28] sm:$0xff] %v6309
    %6324 = vst [vmem:[#allocation18 + $0x30] sm:$0xff] %v6310
    %6325 = vst [vmem:[#allocation18 + $0x38] sm:$0xff] %v6311
    %6326 = vst [vmem:[#allocation18 + $0x40] sm:$0xff] %v6312
    %6327 = vst [vmem:[#allocation18 + $0x48] sm:$0xff] %v6313
    %6328 = vst [vmem:[#allocation18 + $0x50] sm:$0xff] %v6314
    %6329 = vst [vmem:[#allocation18 + $0x58] sm:$0xff] %v6315
    %6330 = vst [vmem:[#allocation18 + $0x60] sm:$0xff] %v6316
    %6331 = vst [vmem:[#allocation18 + $0x68] sm:$0xff] %v6317
    // Predicated region
    $region74: #{tpu_custom_call.1} parent=1 // pred_check
      _
    $region75: #{tpu_custom_call.1} parent=1 // pred_check_branch
      %6333 = sbr.rel (0) target = $region77
    $region76: #{tpu_custom_call.1} parent=1 // pred_region
      %s6335 = ssub.s32 1792, 1792
      %6336 = vsyncadd [#allocation5], %s6335
      %s6337 = sshll.u32 [#allocation18], 4
      %s6338 = int_to_ptr.vmem [resolvable:$true] %s6337
      %6343 = dma.vmem_to_hbm [thread:$0]  %s6338, 1792, %s9, [#allocation5], 896, 896, 56
    $region77: #{tpu_custom_call.1} parent=1 // pred_fallthru
      _
    // Predicated region
    $region78: #{tpu_custom_call.1} parent=1 // pred_check
      _
    $region79: #{tpu_custom_call.1} parent=1 // pred_check_branch
      %6345 = sbr.rel (0) target = $region81
    $region80: #{tpu_custom_call.1} parent=1 // pred_region
      %6346 = dma.done [#allocation5], 1792
    $region81: #{tpu_custom_call.1} parent=1 // pred_fallthru
      _
    %6347 = vsyncpa [#allocation4], 1
    %6348 = vsyncpa [#allocation7], 1
    %6349 = vsyncpa [#allocation10], 1
    %6350 = vsyncpa [#allocation13], 1
    %6351 = vsyncpa [#allocation16], 1
    %6352 = vsyncpa [#allocation5], 1

// kernel: tpu_custom_call.1
$region0: #{tpu_custom_call.1}
  #allocation0 [shape = 'u32[]', space=smem, size = 0x4, offset = 0x4, fixed_abs, tag = 'smem constant byte address 0x4 - core index']
  #allocation1 [shape = 'u32[144,128]{1,0:T(1,128)}', space=vmem, size = 0x12000, scoped, tag = 'internal scratch']
  #allocation2 [shape = 'bf16[16,128]{1,0:T(8,128)(2,1)}', space=vmem, size = 0x1000, scoped, tag = 'scratch operand']
  %s0 = inlined_call_operand.hbm [shape: bf16[16,100], index: 0, kind: input, shape index: {}]
  %s1 = inlined_call_operand.hbm [shape: bf16[128,256], index: 1, kind: input, shape index: {}]
  %s2 = inlined_call_operand.hbm [shape: f32[1,256], index: 2, kind: input, shape index: {}]
  %s3 = inlined_call_operand.hbm [shape: bf16[256,512], index: 3, kind: input, shape index: {}]
  %s4 = inlined_call_operand.hbm [shape: f32[1,512], index: 4, kind: input, shape index: {}]
  %s5 = inlined_call_operand.hbm [shape: bf16[512,1024], index: 5, kind: input, shape index: {}]
  %s6 = inlined_call_operand.hbm [shape: f32[1,1024], index: 6, kind: input, shape index: {}]
  %s7 = inlined_call_operand.hbm [shape: bf16[1024,896], index: 7, kind: input, shape index: {}]
  %s8 = inlined_call_operand.hbm [shape: f32[1,896], index: 8, kind: input, shape index: {}]
  %s9 = inlined_call_operand.hbm [shape: f32[16,896], index: 9, kind: output, shape index: {}]
  %s10 = sld [smem:[#allocation0]]
  $region82: #{tpu_custom_call.1} parent=0
    _
  %s12 = ssub.s32 1, %s10
  %s13 = scalar_select 0, %s12, %s10
  $region1: #{tpu_custom_call.1} parent=0
    #allocation3 [shape = 'u8[4096]{0}', space=vmem, size = 0x1000, scoped, tag = 'input window, operand 0, single buffered']
    #allocation4 [shape = 's32[1]{0}', space=sflag, size = 0x4, scoped, tag = 'scoped memory for tpu_custom_call.1']
    #allocation5 [shape = 's32[1]{0}', space=sflag, size = 0x4, scoped, tag = 'scoped memory for tpu_custom_call.1']
    #allocation6 [shape = 'u8[65536]{0}', space=vmem, size = 0x10000, scoped, tag = 'input window, operand 1, single buffered']
    #allocation7 [shape = 's32[1]{0}', space=sflag, size = 0x4, scoped, tag = 'scoped memory for tpu_custom_call.1']
    #allocation8 [shape = 'u8[1024]{0}', space=vmem, size = 0x400, scoped, tag = 'input window, operand 2, single buffered']
    #allocation9 [shape = 'u8[262144]{0}', space=vmem, size = 0x40000, scoped, tag = 'input window, operand 3, single buffered']
    #allocation10 [shape = 's32[1]{0}', space=sflag, size = 0x4, scoped, tag = 'scoped memory for tpu_custom_call.1']
    #allocation11 [shape = 'u8[2048]{0}', space=vmem, size = 0x800, scoped, tag = 'input window, operand 4, single buffered']
    #allocation12 [shape = 'u8[1048576]{0}', space=vmem, size = 0x100000, scoped, tag = 'input window, operand 5, single buffered']
    #allocation13 [shape = 's32[1]{0}', space=sflag, size = 0x4, scoped, tag = 'scoped memory for tpu_custom_call.1']
    #allocation14 [shape = 'u8[4096]{0}', space=vmem, size = 0x1000, scoped, tag = 'input window, operand 6, single buffered']
    #allocation15 [shape = 'u8[1835008]{0}', space=vmem, size = 0x1c0000, scoped, tag = 'input window, operand 7, single buffered']
    #allocation16 [shape = 's32[1]{0}', space=sflag, size = 0x4, scoped, tag = 'scoped memory for tpu_custom_call.1']
    #allocation17 [shape = 'u8[3584]{0}', space=vmem, size = 0x1000, scoped, tag = 'input window, operand 8, single buffered']
    #allocation18 [shape = 'u8[57344]{0}', space=vmem, size = 0xe000, scoped, tag = 'output window, operand 0, single buffered']
    %14 = vsyncpa [#allocation4], 0
    %15 = vsyncpa [#allocation7], 0
    %16 = vsyncpa [#allocation10], 0
    %17 = vsyncpa [#allocation13], 0
    %18 = vsyncpa [#allocation16], 0
    %19 = vsyncpa [#allocation5], 0
    // Predicated region
    $region2: #{tpu_custom_call.1} parent=1 // pred_check
      _
    $region3: #{tpu_custom_call.1} parent=1 // pred_check_branch
      %21 = sbr.rel (0) target = $region5
    $region4: #{tpu_custom_call.1} parent=1 // pred_region
      %s23 = ssub.s32 128, 128
      %24 = vsyncadd [#allocation4], %s23
      %s25 = sshll.u32 [#allocation3], 4
      %s26 = int_to_ptr.vmem [resolvable:$true] %s25
      %31 = dma.hbm_to_vmem [thread:$0]  %s0, 128, %s26, [#allocation4], 64, 64, 4
    $region5: #{tpu_custom_call.1} parent=1 // pred_fallthru
      _
    // Predicated region
    $region6: #{tpu_custom_call.1} parent=1 // pred_check
      _
    $region7: #{tpu_custom_call.1} parent=1 // pred_check_branch
      %33 = sbr.rel (0) target = $region9
    $region8: #{tpu_custom_call.1} parent=1 // pred_region
      %s35 = ssub.s32 2048, 2048
      %36 = vsyncadd [#allocation7], %s35
      %s37 = sshll.u32 [#allocation6], 4
      %s38 = int_to_ptr.vmem [resolvable:$true] %s37
      %43 = dma.hbm_to_vmem [thread:$0]  %s1, 2048, %s38, [#allocation7], 128, 128, 8
    $region9: #{tpu_custom_call.1} parent=1 // pred_fallthru
      _
    // Predicated region
    $region10: #{tpu_custom_call.1} parent=1 // pred_check
      _
    $region11: #{tpu_custom_call.1} parent=1 // pred_check_branch
      %45 = sbr.rel (0) target = $region13
    $region12: #{tpu_custom_call.1} parent=1 // pred_region
      %s47 = ssub.s32 32, 32
      %48 = vsyncadd [#allocation7], %s47
      %s50 = sshll.u32 [#allocation8], 4
      %s51 = int_to_ptr.vmem [resolvable:$true] %s50
      %53 = dma.hbm_to_vmem [thread:$0]  %s2, 32, %s51, [#allocation7]
    $region13: #{tpu_custom_call.1} parent=1 // pred_fallthru
      _
    // Predicated region
    $region14: #{tpu_custom_call.1} parent=1 // pred_check
      _
    $region15: #{tpu_custom_call.1} parent=1 // pred_check_branch
      %55 = sbr.rel (0) target = $region17
    $region16: #{tpu_custom_call.1} parent=1 // pred_region
      %s57 = ssub.s32 8192, 8192
      %58 = vsyncadd [#allocation10], %s57
      %s59 = sshll.u32 [#allocation9], 4
      %s60 = int_to_ptr.vmem [resolvable:$true] %s59
      %65 = dma.hbm_to_vmem [thread:$0]  %s3, 8192, %s60, [#allocation10], 256, 256, 16
    $region17: #{tpu_custom_call.1} parent=1 // pred_fallthru
      _
    // Predicated region
    $region18: #{tpu_custom_call.1} parent=1 // pred_check
      _
    $region19: #{tpu_custom_call.1} parent=1 // pred_check_branch
      %67 = sbr.rel (0) target = $region21
    $region20: #{tpu_custom_call.1} parent=1 // pred_region
      %s69 = ssub.s32 64, 64
      %70 = vsyncadd [#allocation10], %s69
      %s72 = sshll.u32 [#allocation11], 4
      %s73 = int_to_ptr.vmem [resolvable:$true] %s72
      %75 = dma.hbm_to_vmem [thread:$0]  %s4, 64, %s73, [#allocation10]
    $region21: #{tpu_custom_call.1} parent=1 // pred_fallthru
      _
    // Predicated region
    $region22: #{tpu_custom_call.1} parent=1 // pred_check
      _
    $region23: #{tpu_custom_call.1} parent=1 // pred_check_branch
      %77 = sbr.rel (0) target = $region25
    $region24: #{tpu_custom_call.1} parent=1 // pred_region
      %s79 = ssub.s32 32768, 32768
      %80 = vsyncadd [#allocation13], %s79
      %s81 = sshll.u32 [#allocation12], 4
      %s82 = int_to_ptr.vmem [resolvable:$true] %s81
      %87 = dma.hbm_to_vmem [thread:$0]  %s5, 32768, %s82, [#allocation13], 512, 512, 32
    $region25: #{tpu_custom_call.1} parent=1 // pred_fallthru
      _
    // Predicated region
    $region26: #{tpu_custom_call.1} parent=1 // pred_check
      _
    $region27: #{tpu_custom_call.1} parent=1 // pred_check_branch
      %89 = sbr.rel (0) target = $region29
    $region28: #{tpu_custom_call.1} parent=1 // pred_region
      %s91 = ssub.s32 128, 128
      %92 = vsyncadd [#allocation13], %s91
      %s94 = sshll.u32 [#allocation14], 4
      %s95 = int_to_ptr.vmem [resolvable:$true] %s94
      %97 = dma.hbm_to_vmem [thread:$0]  %s6, 128, %s95, [#allocation13]
    $region29: #{tpu_custom_call.1} parent=1 // pred_fallthru
      _
    // Predicated region
    $region30: #{tpu_custom_call.1} parent=1 // pred_check
      _
    $region31: #{tpu_custom_call.1} parent=1 // pred_check_branch
      %99 = sbr.rel (0) target = $region33
    $region32: #{tpu_custom_call.1} parent=1 // pred_region
      %s101 = ssub.s32 57344, 57344
      %102 = vsyncadd [#allocation16], %s101
      %s103 = sshll.u32 [#allocation15], 4
      %s104 = int_to_ptr.vmem [resolvable:$true] %s103
      %109 = dma.hbm_to_vmem [thread:$0]  %s7, 57344, %s104, [#allocation16], 448, 448, 28
    $region33: #{tpu_custom_call.1} parent=1 // pred_fallthru
      _
    // Predicated region
    $region34: #{tpu_custom_call.1} parent=1 // pred_check
      _
    $region35: #{tpu_custom_call.1} parent=1 // pred_check_branch
      %111 = sbr.rel (0) target = $region37
    $region36: #{tpu_custom_call.1} parent=1 // pred_region
      %s113 = ssub.s32 112, 112
      %114 = vsyncadd [#allocation16], %s113
      %s116 = sshll.u32 [#allocation17], 4
      %s117 = int_to_ptr.vmem [resolvable:$true] %s116
      %119 = dma.hbm_to_vmem [thread:$0]  %s8, 112, %s117, [#allocation16]
    $region37: #{tpu_custom_call.1} parent=1 // pred_fallthru
      _
    // Predicated region
    $region38: #{tpu_custom_call.1} parent=1 // pred_check
      _
    $region39: #{tpu_custom_call.1} parent=1 // pred_check_branch
      %121 = sbr.rel (0) target = $region41
    $region40: #{tpu_custom_call.1} parent=1 // pred_region
      %122 = dma.done [#allocation4], 128
    $region41: #{tpu_custom_call.1} parent=1 // pred_fallthru
      _
    // Predicated region
    $region42: #{tpu_custom_call.1} parent=1 // pred_check
      _
    $region43: #{tpu_custom_call.1} parent=1 // pred_check_branch
      %124 = sbr.rel (0) target = $region45
    $region44: #{tpu_custom_call.1} parent=1 // pred_region
      %125 = dma.done [#allocation7], 2048
    $region45: #{tpu_custom_call.1} parent=1 // pred_fallthru
      _
    // Predicated region
    $region46: #{tpu_custom_call.1} parent=1 // pred_check
      _
    $region47: #{tpu_custom_call.1} parent=1 // pred_check_branch
      %127 = sbr.rel (0) target = $region49
    $region48: #{tpu_custom_call.1} parent=1 // pred_region
      %128 = dma.done [#allocation7], 32
    $region49: #{tpu_custom_call.1} parent=1 // pred_fallthru
      _
    // Predicated region
    $region50: #{tpu_custom_call.1} parent=1 // pred_check
      _
    $region51: #{tpu_custom_call.1} parent=1 // pred_check_branch
      %130 = sbr.rel (0) target = $region53
    $region52: #{tpu_custom_call.1} parent=1 // pred_region
      %131 = dma.done [#allocation10], 8192
    $region53: #{tpu_custom_call.1} parent=1 // pred_fallthru
      _
    // Predicated region
    $region54: #{tpu_custom_call.1} parent=1 // pred_check
      _
    $region55: #{tpu_custom_call.1} parent=1 // pred_check_branch
      %133 = sbr.rel (0) target = $region57
    $region56: #{tpu_custom_call.1} parent=1 // pred_region
      %134 = dma.done [#allocation10], 64
    $region57: #{tpu_custom_call.1} parent=1 // pred_fallthru
      _
    // Predicated region
    $region58: #{tpu_custom_call.1} parent=1 // pred_check
      _
    $region59: #{tpu_custom_call.1} parent=1 // pred_check_branch
      %136 = sbr.rel (0) target = $region61
    $region60: #{tpu_custom_call.1} parent=1 // pred_region
      %137 = dma.done [#allocation13], 32768
    $region61: #{tpu_custom_call.1} parent=1 // pred_fallthru
      _
    // Predicated region
    $region62: #{tpu_custom_call.1} parent=1 // pred_check
      _
    $region63: #{tpu_custom_call.1} parent=1 // pred_check_branch
      %139 = sbr.rel (0) target = $region65
    $region64: #{tpu_custom_call.1} parent=1 // pred_region
      %140 = dma.done [#allocation13], 128
    $region65: #{tpu_custom_call.1} parent=1 // pred_fallthru
      _
    // Predicated region
    $region66: #{tpu_custom_call.1} parent=1 // pred_check
      _
    $region67: #{tpu_custom_call.1} parent=1 // pred_check_branch
      %142 = sbr.rel (0) target = $region69
    $region68: #{tpu_custom_call.1} parent=1 // pred_region
      %143 = dma.done [#allocation16], 57344
    $region69: #{tpu_custom_call.1} parent=1 // pred_fallthru
      _
    // Predicated region
    $region70: #{tpu_custom_call.1} parent=1 // pred_check
      _
    $region71: #{tpu_custom_call.1} parent=1 // pred_check_branch
      %145 = sbr.rel (0) target = $region73
    $region72: #{tpu_custom_call.1} parent=1 // pred_region
      %146 = dma.done [#allocation16], 112
    $region73: #{tpu_custom_call.1} parent=1 // pred_fallthru
      _
    %vm148 = vcmask 1044256
    %149 = vst.msk [vmem:[#allocation2] sm:$0xf] %vm148, 0
    %150 = vst.msk [vmem:[#allocation2 + $0x4] sm:$0xf] %vm148, 0
    %v151 = vld [vmem:[#allocation3] sm:$0xf]
    %v152 = vld [vmem:[#allocation3 + $0x4] sm:$0xf]
    %vm153 = vcmask 814080
    %154 = vst.msk [vmem:[#allocation2] sm:$0xf] %vm153, %v151
    %155 = vst.msk [vmem:[#allocation2 + $0x4] sm:$0xf] %vm153, %v152
    %v156 = vld [vmem:[#allocation2] sm:$0xf]
    %v157 = vld [vmem:[#allocation2 + $0x4] sm:$0xf]
    %v158 = vld [vmem:[#allocation6] sm:$0xff]
    %v159 = vld [vmem:[#allocation6 + $0x8] sm:$0xff]
    %v160 = vld [vmem:[#allocation6 + $0x10] sm:$0xff]
    %v161 = vld [vmem:[#allocation6 + $0x18] sm:$0xff]
    %v162 = vld [vmem:[#allocation6 + $0x20] sm:$0xff]
    %v163 = vld [vmem:[#allocation6 + $0x28] sm:$0xff]
    %v164 = vld [vmem:[#allocation6 + $0x30] sm:$0xff]
    %v165 = vld [vmem:[#allocation6 + $0x38] sm:$0xff]
    %v166 = vld [vmem:[#allocation6 + $0x40] sm:$0xff]
    %v167 = vld [vmem:[#allocation6 + $0x48] sm:$0xff]
    %v168 = vld [vmem:[#allocation6 + $0x50] sm:$0xff]
    %v169 = vld [vmem:[#allocation6 + $0x58] sm:$0xff]
    %v170 = vld [vmem:[#allocation6 + $0x60] sm:$0xff]
    %v171 = vld [vmem:[#allocation6 + $0x68] sm:$0xff]
    %v172 = vld [vmem:[#allocation6 + $0x70] sm:$0xff]
    %v173 = vld [vmem:[#allocation6 + $0x78] sm:$0xff]
    %v174 = vld [vmem:[#allocation8] sm:$0x3]
    %v176 = vlaneseq
    %v177 = vshrl.u32 %v176, 7
    %v178 = vsub.s32 0, %v177
    %v179 = vrot.slane %v174, %v178
    %v180 = vlaneseq
    %v181 = vshrl.u32 %v180, 7
    %v182 = vsub.s32 1, %v181
    %v183 = vrot.slane %v174, %v182
    %v188 = vunpack.c.l.b16 %v156
    %v189 = vunpack.c.l.b16 %v157
    %v190 = vpack.c.b16 %v189, %v188
    %v208 = vunpack.c.l.b16 %v158
    %v209 = vunpack.c.h.b16 %v158
    %v210 = vunpack.c.l.b16 %v159
    %v211 = vunpack.c.h.b16 %v159
    %v212 = vunpack.c.l.b16 %v160
    %v213 = vunpack.c.h.b16 %v160
    %v214 = vunpack.c.l.b16 %v161
    %v215 = vunpack.c.h.b16 %v161
    %v216 = vunpack.c.l.b16 %v162
    %v217 = vunpack.c.h.b16 %v162
    %v218 = vunpack.c.l.b16 %v163
    %v219 = vunpack.c.h.b16 %v163
    %v220 = vunpack.c.l.b16 %v164
    %v221 = vunpack.c.h.b16 %v164
    %v222 = vunpack.c.l.b16 %v165
    %v223 = vunpack.c.h.b16 %v165
    %v224 = vunpack.c.l.b16 %v166
    %v225 = vunpack.c.h.b16 %v166
    %v226 = vunpack.c.l.b16 %v167
    %v227 = vunpack.c.h.b16 %v167
    %v228 = vunpack.c.l.b16 %v168
    %v229 = vunpack.c.h.b16 %v168
    %v230 = vunpack.c.l.b16 %v169
    %v231 = vunpack.c.h.b16 %v169
    %v232 = vunpack.c.l.b16 %v170
    %v233 = vunpack.c.h.b16 %v170
    %v234 = vunpack.c.l.b16 %v171
    %v235 = vunpack.c.h.b16 %v171
    %v236 = vunpack.c.l.b16 %v172
    %v237 = vunpack.c.h.b16 %v172
    %v238 = vunpack.c.l.b16 %v173
    %v239 = vunpack.c.h.b16 %v173
    %v240 = vpack.c.b16 %v210, %v208
    %v241 = vpack.c.b16 %v211, %v209
    %v242 = vpack.c.b16 %v214, %v212
    %v243 = vpack.c.b16 %v215, %v213
    %v244 = vpack.c.b16 %v218, %v216
    %v245 = vpack.c.b16 %v219, %v217
    %v246 = vpack.c.b16 %v222, %v220
    %v247 = vpack.c.b16 %v223, %v221
    %v248 = vpack.c.b16 %v226, %v224
    %v249 = vpack.c.b16 %v227, %v225
    %v250 = vpack.c.b16 %v230, %v228
    %v251 = vpack.c.b16 %v231, %v229
    %v252 = vpack.c.b16 %v234, %v232
    %v253 = vpack.c.b16 %v235, %v233
    %v254 = vpack.c.b16 %v238, %v236
    %v255 = vpack.c.b16 %v239, %v237
    %272 = vmatprep.subr.bf16.mxu0 %v255
    %273 = vmatpush1.bf16.msra.mxu0 %v254
    %274 = vmatprep.subr.bf16.mxu0 %v253
    %275 = vmatpush1.bf16.msra.mxu0 %v252
    %276 = vmatprep.subr.bf16.mxu0 %v251
    %277 = vmatpush1.bf16.msra.mxu0 %v250
    %278 = vmatprep.subr.bf16.mxu0 %v249
    %279 = vmatpush1.bf16.msra.mxu0 %v248
    %280 = vmatprep.subr.bf16.mxu0 %v247
    %281 = vmatpush1.bf16.msra.mxu0 %v246
    %282 = vmatprep.subr.bf16.mxu0 %v245
    %283 = vmatpush1.bf16.msra.mxu0 %v244
    %284 = vmatprep.subr.bf16.mxu0 %v243
    %285 = vmatpush1.bf16.msra.mxu0 %v242
    %286 = vmatprep.subr.bf16.mxu0 %v241
    %287 = vmatpush1.bf16.msra.mxu0 %v240
    %288 = vmatprep.subr.bf16.mxu0 0
    %289 = vmatpush2.bf16.msra.mxu0 0
    %290 = vmatprep.subr.bf16.mxu0 0
    %291 = vmatpush2.bf16.msra.mxu0 0
    %292 = vmatprep.subr.bf16.mxu0 0
    %293 = vmatpush2.bf16.msra.mxu0 0
    %294 = vmatprep.subr.bf16.mxu0 0
    %295 = vmatpush2.bf16.msra.mxu0 0
    %296 = vmatprep.subr.bf16.mxu0 0
    %297 = vmatpush2.bf16.msra.mxu0 0
    %298 = vmatprep.subr.bf16.mxu0 0
    %299 = vmatpush2.bf16.msra.mxu0 0
    %300 = vmatprep.subr.bf16.mxu0 0
    %301 = vmatpush2.bf16.msra.mxu0 0
    %302 = vmatprep.subr.bf16.mxu0 0
    %303 = vmatpush2.bf16.msra.mxu0 0
    %304 = vmatprep.mubr.bf16.mxu0 0
    %305 = vmatmul.mubr.bf16.gmra.mxu0 %v190
    %v306 = vpop.f32.mrf.mxu0
    %v307 = vadd.f32 %v179, %v306
    %v308 = vpop.f32.mrf.mxu0
    %v309 = vadd.f32 %v183, %v308
    %v310 = vpop.f32.mrf.mxu0
    %v311 = vadd.f32 %v179, %v310
    %v312 = vpop.f32.mrf.mxu0
    %v313 = vadd.f32 %v183, %v312
    %314 = vdwg.mxu0
    %v315 = vmax.f32 %v307, 0.0
    %v316 = vmax.f32 %v309, 0.0
    %v317 = vmax.f32 %v311, 0.0
    %v318 = vmax.f32 %v313, 0.0
    %v319 = vpack.c.bf16 %v317, %v315
    %v320 = vpack.c.bf16 %v318, %v316
    %v321 = vld [vmem:[#allocation9] sm:$0xff]
    %v322 = vld [vmem:[#allocation9 + $0x8] sm:$0xff]
    %v323 = vld [vmem:[#allocation9 + $0x10] sm:$0xff]
    %v324 = vld [vmem:[#allocation9 + $0x18] sm:$0xff]
    %v325 = vld [vmem:[#allocation9 + $0x20] sm:$0xff]
    %v326 = vld [vmem:[#allocation9 + $0x28] sm:$0xff]
    %v327 = vld [vmem:[#allocation9 + $0x30] sm:$0xff]
    %v328 = vld [vmem:[#allocation9 + $0x38] sm:$0xff]
    %v329 = vld [vmem:[#allocation9 + $0x40] sm:$0xff]
    %v330 = vld [vmem:[#allocation9 + $0x48] sm:$0xff]
    %v331 = vld [vmem:[#allocation9 + $0x50] sm:$0xff]
    %v332 = vld [vmem:[#allocation9 + $0x58] sm:$0xff]
    %v333 = vld [vmem:[#allocation9 + $0x60] sm:$0xff]
    %v334 = vld [vmem:[#allocation9 + $0x68] sm:$0xff]
    %v335 = vld [vmem:[#allocation9 + $0x70] sm:$0xff]
    %v336 = vld [vmem:[#allocation9 + $0x78] sm:$0xff]
    %v337 = vld [vmem:[#allocation9 + $0x80] sm:$0xff]
    %v338 = vld [vmem:[#allocation9 + $0x88] sm:$0xff]
    %v339 = vld [vmem:[#allocation9 + $0x90] sm:$0xff]
    %v340 = vld [vmem:[#allocation9 + $0x98] sm:$0xff]
    %v341 = vld [vmem:[#allocation9 + $0xa0] sm:$0xff]
    %v342 = vld [vmem:[#allocation9 + $0xa8] sm:$0xff]
    %v343 = vld [vmem:[#allocation9 + $0xb0] sm:$0xff]
    %v344 = vld [vmem:[#allocation9 + $0xb8] sm:$0xff]
    %v345 = vld [vmem:[#allocation9 + $0xc0] sm:$0xff]
    %v346 = vld [vmem:[#allocation9 + $0xc8] sm:$0xff]
    %v347 = vld [vmem:[#allocation9 + $0xd0] sm:$0xff]
    %v348 = vld [vmem:[#allocation9 + $0xd8] sm:$0xff]
    %v349 = vld [vmem:[#allocation9 + $0xe0] sm:$0xff]
    %v350 = vld [vmem:[#allocation9 + $0xe8] sm:$0xff]
    %v351 = vld [vmem:[#allocation9 + $0xf0] sm:$0xff]
    %v352 = vld [vmem:[#allocation9 + $0xf8] sm:$0xff]
    %v353 = vld [vmem:[#allocation9 + $0x100] sm:$0xff]
    %v354 = vld [vmem:[#allocation9 + $0x108] sm:$0xff]
    %v355 = vld [vmem:[#allocation9 + $0x110] sm:$0xff]
    %v356 = vld [vmem:[#allocation9 + $0x118] sm:$0xff]
    %v357 = vld [vmem:[#allocation9 + $0x120] sm:$0xff]
    %v358 = vld [vmem:[#allocation9 + $0x128] sm:$0xff]
    %v359 = vld [vmem:[#allocation9 + $0x130] sm:$0xff]
    %v360 = vld [vmem:[#allocation9 + $0x138] sm:$0xff]
    %v361 = vld [vmem:[#allocation9 + $0x140] sm:$0xff]
    %v362 = vld [vmem:[#allocation9 + $0x148] sm:$0xff]
    %v363 = vld [vmem:[#allocation9 + $0x150] sm:$0xff]
    %v364 = vld [vmem:[#allocation9 + $0x158] sm:$0xff]
    %v365 = vld [vmem:[#allocation9 + $0x160] sm:$0xff]
    %v366 = vld [vmem:[#allocation9 + $0x168] sm:$0xff]
    %v367 = vld [vmem:[#allocation9 + $0x170] sm:$0xff]
    %v368 = vld [vmem:[#allocation9 + $0x178] sm:$0xff]
    %v369 = vld [vmem:[#allocation9 + $0x180] sm:$0xff]
    %v370 = vld [vmem:[#allocation9 + $0x188] sm:$0xff]
    %v371 = vld [vmem:[#allocation9 + $0x190] sm:$0xff]
    %v372 = vld [vmem:[#allocation9 + $0x198] sm:$0xff]
    %v373 = vld [vmem:[#allocation9 + $0x1a0] sm:$0xff]
    %v374 = vld [vmem:[#allocation9 + $0x1a8] sm:$0xff]
    %v375 = vld [vmem:[#allocation9 + $0x1b0] sm:$0xff]
    %v376 = vld [vmem:[#allocation9 + $0x1b8] sm:$0xff]
    %v377 = vld [vmem:[#allocation9 + $0x1c0] sm:$0xff]
    %v378 = vld [vmem:[#allocation9 + $0x1c8] sm:$0xff]
    %v379 = vld [vmem:[#allocation9 + $0x1d0] sm:$0xff]
    %v380 = vld [vmem:[#allocation9 + $0x1d8] sm:$0xff]
    %v381 = vld [vmem:[#allocation9 + $0x1e0] sm:$0xff]
    %v382 = vld [vmem:[#allocation9 + $0x1e8] sm:$0xff]
    %v383 = vld [vmem:[#allocation9 + $0x1f0] sm:$0xff]
    %v384 = vld [vmem:[#allocation9 + $0x1f8] sm:$0xff]
    %v385 = vld [vmem:[#allocation11] sm:$0xf]
    %v387 = vlaneseq
    %v388 = vshrl.u32 %v387, 7
    %v389 = vsub.s32 0, %v388
    %v390 = vrot.slane %v385, %v389
    %v391 = vlaneseq
    %v392 = vshrl.u32 %v391, 7
    %v393 = vsub.s32 1, %v392
    %v394 = vrot.slane %v385, %v393
    %v395 = vlaneseq
    %v396 = vshrl.u32 %v395, 7
    %v397 = vsub.s32 2, %v396
    %v398 = vrot.slane %v385, %v397
    %v399 = vlaneseq
    %v400 = vshrl.u32 %v399, 7
    %v401 = vsub.s32 3, %v400
    %v402 = vrot.slane %v385, %v401
    %v471 = vunpack.c.l.b16 %v321
    %v472 = vunpack.c.h.b16 %v321
    %v473 = vunpack.c.l.b16 %v322
    %v474 = vunpack.c.h.b16 %v322
    %v475 = vunpack.c.l.b16 %v323
    %v476 = vunpack.c.h.b16 %v323
    %v477 = vunpack.c.l.b16 %v324
    %v478 = vunpack.c.h.b16 %v324
    %v479 = vunpack.c.l.b16 %v325
    %v480 = vunpack.c.h.b16 %v325
    %v481 = vunpack.c.l.b16 %v326
    %v482 = vunpack.c.h.b16 %v326
    %v483 = vunpack.c.l.b16 %v327
    %v484 = vunpack.c.h.b16 %v327
    %v485 = vunpack.c.l.b16 %v328
    %v486 = vunpack.c.h.b16 %v328
    %v487 = vunpack.c.l.b16 %v329
    %v488 = vunpack.c.h.b16 %v329
    %v489 = vunpack.c.l.b16 %v330
    %v490 = vunpack.c.h.b16 %v330
    %v491 = vunpack.c.l.b16 %v331
    %v492 = vunpack.c.h.b16 %v331
    %v493 = vunpack.c.l.b16 %v332
    %v494 = vunpack.c.h.b16 %v332
    %v495 = vunpack.c.l.b16 %v333
    %v496 = vunpack.c.h.b16 %v333
    %v497 = vunpack.c.l.b16 %v334
    %v498 = vunpack.c.h.b16 %v334
    %v499 = vunpack.c.l.b16 %v335
    %v500 = vunpack.c.h.b16 %v335
    %v501 = vunpack.c.l.b16 %v336
    %v502 = vunpack.c.h.b16 %v336
    %v503 = vunpack.c.l.b16 %v337
    %v504 = vunpack.c.h.b16 %v337
    %v505 = vunpack.c.l.b16 %v338
    %v506 = vunpack.c.h.b16 %v338
    %v507 = vunpack.c.l.b16 %v339
    %v508 = vunpack.c.h.b16 %v339
    %v509 = vunpack.c.l.b16 %v340
    %v510 = vunpack.c.h.b16 %v340
    %v511 = vunpack.c.l.b16 %v341
    %v512 = vunpack.c.h.b16 %v341
    %v513 = vunpack.c.l.b16 %v342
    %v514 = vunpack.c.h.b16 %v342
    %v515 = vunpack.c.l.b16 %v343
    %v516 = vunpack.c.h.b16 %v343
    %v517 = vunpack.c.l.b16 %v344
    %v518 = vunpack.c.h.b16 %v344
    %v519 = vunpack.c.l.b16 %v345
    %v520 = vunpack.c.h.b16 %v345
    %v521 = vunpack.c.l.b16 %v346
    %v522 = vunpack.c.h.b16 %v346
    %v523 = vunpack.c.l.b16 %v347
    %v524 = vunpack.c.h.b16 %v347
    %v525 = vunpack.c.l.b16 %v348
    %v526 = vunpack.c.h.b16 %v348
    %v527 = vunpack.c.l.b16 %v349
    %v528 = vunpack.c.h.b16 %v349
    %v529 = vunpack.c.l.b16 %v350
    %v530 = vunpack.c.h.b16 %v350
    %v531 = vunpack.c.l.b16 %v351
    %v532 = vunpack.c.h.b16 %v351
    %v533 = vunpack.c.l.b16 %v352
    %v534 = vunpack.c.h.b16 %v352
    %v535 = vunpack.c.l.b16 %v353
    %v536 = vunpack.c.h.b16 %v353
    %v537 = vunpack.c.l.b16 %v354
    %v538 = vunpack.c.h.b16 %v354
    %v539 = vunpack.c.l.b16 %v355
    %v540 = vunpack.c.h.b16 %v355
    %v541 = vunpack.c.l.b16 %v356
    %v542 = vunpack.c.h.b16 %v356
    %v543 = vunpack.c.l.b16 %v357
    %v544 = vunpack.c.h.b16 %v357
    %v545 = vunpack.c.l.b16 %v358
    %v546 = vunpack.c.h.b16 %v358
    %v547 = vunpack.c.l.b16 %v359
    %v548 = vunpack.c.h.b16 %v359
    %v549 = vunpack.c.l.b16 %v360
    %v550 = vunpack.c.h.b16 %v360
    %v551 = vunpack.c.l.b16 %v361
    %v552 = vunpack.c.h.b16 %v361
    %v553 = vunpack.c.l.b16 %v362
    %v554 = vunpack.c.h.b16 %v362
    %v555 = vunpack.c.l.b16 %v363
    %v556 = vunpack.c.h.b16 %v363
    %v557 = vunpack.c.l.b16 %v364
    %v558 = vunpack.c.h.b16 %v364
    %v559 = vunpack.c.l.b16 %v365
    %v560 = vunpack.c.h.b16 %v365
    %v561 = vunpack.c.l.b16 %v366
    %v562 = vunpack.c.h.b16 %v366
    %v563 = vunpack.c.l.b16 %v367
    %v564 = vunpack.c.h.b16 %v367
    %v565 = vunpack.c.l.b16 %v368
    %v566 = vunpack.c.h.b16 %v368
    %v567 = vunpack.c.l.b16 %v369
    %v568 = vunpack.c.h.b16 %v369
    %v569 = vunpack.c.l.b16 %v370
    %v570 = vunpack.c.h.b16 %v370
    %v571 = vunpack.c.l.b16 %v371
    %v572 = vunpack.c.h.b16 %v371
    %v573 = vunpack.c.l.b16 %v372
    %v574 = vunpack.c.h.b16 %v372
    %v575 = vunpack.c.l.b16 %v373
    %v576 = vunpack.c.h.b16 %v373
    %v577 = vunpack.c.l.b16 %v374
    %v578 = vunpack.c.h.b16 %v374
    %v579 = vunpack.c.l.b16 %v375
    %v580 = vunpack.c.h.b16 %v375
    %v581 = vunpack.c.l.b16 %v376
    %v582 = vunpack.c.h.b16 %v376
    %v583 = vunpack.c.l.b16 %v377
    %v584 = vunpack.c.h.b16 %v377
    %v585 = vunpack.c.l.b16 %v378
    %v586 = vunpack.c.h.b16 %v378
    %v587 = vunpack.c.l.b16 %v379
    %v588 = vunpack.c.h.b16 %v379
    %v589 = vunpack.c.l.b16 %v380
    %v590 = vunpack.c.h.b16 %v380
    %v591 = vunpack.c.l.b16 %v381
    %v592 = vunpack.c.h.b16 %v381
    %v593 = vunpack.c.l.b16 %v382
    %v594 = vunpack.c.h.b16 %v382
    %v595 = vunpack.c.l.b16 %v383
    %v596 = vunpack.c.h.b16 %v383
    %v597 = vunpack.c.l.b16 %v384
    %v598 = vunpack.c.h.b16 %v384
    %v599 = vpack.c.b16 %v475, %v471
    %v600 = vpack.c.b16 %v476, %v472
    %v601 = vpack.c.b16 %v477, %v473
    %v602 = vpack.c.b16 %v478, %v474
    %v603 = vpack.c.b16 %v483, %v479
    %v604 = vpack.c.b16 %v484, %v480
    %v605 = vpack.c.b16 %v485, %v481
    %v606 = vpack.c.b16 %v486, %v482
    %v607 = vpack.c.b16 %v491, %v487
    %v608 = vpack.c.b16 %v492, %v488
    %v609 = vpack.c.b16 %v493, %v489
    %v610 = vpack.c.b16 %v494, %v490
    %v611 = vpack.c.b16 %v499, %v495
    %v612 = vpack.c.b16 %v500, %v496
    %v613 = vpack.c.b16 %v501, %v497
    %v614 = vpack.c.b16 %v502, %v498
    %v615 = vpack.c.b16 %v507, %v503
    %v616 = vpack.c.b16 %v508, %v504
    %v617 = vpack.c.b16 %v509, %v505
    %v618 = vpack.c.b16 %v510, %v506
    %v619 = vpack.c.b16 %v515, %v511
    %v620 = vpack.c.b16 %v516, %v512
    %v621 = vpack.c.b16 %v517, %v513
    %v622 = vpack.c.b16 %v518, %v514
    %v623 = vpack.c.b16 %v523, %v519
    %v624 = vpack.c.b16 %v524, %v520
    %v625 = vpack.c.b16 %v525, %v521
    %v626 = vpack.c.b16 %v526, %v522
    %v627 = vpack.c.b16 %v531, %v527
    %v628 = vpack.c.b16 %v532, %v528
    %v629 = vpack.c.b16 %v533, %v529
    %v630 = vpack.c.b16 %v534, %v530
    %v631 = vpack.c.b16 %v539, %v535
    %v632 = vpack.c.b16 %v540, %v536
    %v633 = vpack.c.b16 %v541, %v537
    %v634 = vpack.c.b16 %v542, %v538
    %v635 = vpack.c.b16 %v547, %v543
    %v636 = vpack.c.b16 %v548, %v544
    %v637 = vpack.c.b16 %v549, %v545
    %v638 = vpack.c.b16 %v550, %v546
    %v639 = vpack.c.b16 %v555, %v551
    %v640 = vpack.c.b16 %v556, %v552
    %v641 = vpack.c.b16 %v557, %v553
    %v642 = vpack.c.b16 %v558, %v554
    %v643 = vpack.c.b16 %v563, %v559
    %v644 = vpack.c.b16 %v564, %v560
    %v645 = vpack.c.b16 %v565, %v561
    %v646 = vpack.c.b16 %v566, %v562
    %v647 = vpack.c.b16 %v571, %v567
    %v648 = vpack.c.b16 %v572, %v568
    %v649 = vpack.c.b16 %v573, %v569
    %v650 = vpack.c.b16 %v574, %v570
    %v651 = vpack.c.b16 %v579, %v575
    %v652 = vpack.c.b16 %v580, %v576
    %v653 = vpack.c.b16 %v581, %v577
    %v654 = vpack.c.b16 %v582, %v578
    %v655 = vpack.c.b16 %v587, %v583
    %v656 = vpack.c.b16 %v588, %v584
    %v657 = vpack.c.b16 %v589, %v585
    %v658 = vpack.c.b16 %v590, %v586
    %v659 = vpack.c.b16 %v595, %v591
    %v660 = vpack.c.b16 %v596, %v592
    %v661 = vpack.c.b16 %v597, %v593
    %v662 = vpack.c.b16 %v598, %v594
    %727 = vmatprep.subr.bf16.mxu0 %v628
    %728 = vmatpush1.bf16.msra.mxu0 %v627
    %729 = vmatprep.subr.bf16.mxu0 %v624
    %730 = vmatpush1.bf16.msra.mxu0 %v623
    %731 = vmatprep.subr.bf16.mxu0 %v620
    %732 = vmatpush1.bf16.msra.mxu0 %v619
    %733 = vmatprep.subr.bf16.mxu0 %v616
    %734 = vmatpush1.bf16.msra.mxu0 %v615
    %735 = vmatprep.subr.bf16.mxu0 %v612
    %736 = vmatpush1.bf16.msra.mxu0 %v611
    %737 = vmatprep.subr.bf16.mxu0 %v608
    %738 = vmatpush1.bf16.msra.mxu0 %v607
    %739 = vmatprep.subr.bf16.mxu0 %v604
    %740 = vmatpush1.bf16.msra.mxu0 %v603
    %741 = vmatprep.subr.bf16.mxu0 %v600
    %742 = vmatpush1.bf16.msra.mxu0 %v599
    %743 = vmatprep.subr.bf16.mxu0 %v660
    %744 = vmatpush2.bf16.msra.mxu0 %v659
    %745 = vmatprep.subr.bf16.mxu0 %v656
    %746 = vmatpush2.bf16.msra.mxu0 %v655
    %747 = vmatprep.subr.bf16.mxu0 %v652
    %748 = vmatpush2.bf16.msra.mxu0 %v651
    %749 = vmatprep.subr.bf16.mxu0 %v648
    %750 = vmatpush2.bf16.msra.mxu0 %v647
    %751 = vmatprep.subr.bf16.mxu0 %v644
    %752 = vmatpush2.bf16.msra.mxu0 %v643
    %753 = vmatprep.subr.bf16.mxu0 %v640
    %754 = vmatpush2.bf16.msra.mxu0 %v639
    %755 = vmatprep.subr.bf16.mxu0 %v636
    %756 = vmatpush2.bf16.msra.mxu0 %v635
    %757 = vmatprep.subr.bf16.mxu0 %v632
    %758 = vmatpush2.bf16.msra.mxu0 %v631
    %759 = vmatprep.mubr.bf16.mxu0 %v320
    %760 = vmatmul.mubr.bf16.gmra.mxu0 %v319
    %v761 = vpop.f32.mrf.mxu0
    %v762 = vadd.f32 %v390, %v761
    %v763 = vpop.f32.mrf.mxu0
    %v764 = vadd.f32 %v394, %v763
    %v765 = vpop.f32.mrf.mxu0
    %v766 = vadd.f32 %v390, %v765
    %v767 = vpop.f32.mrf.mxu0
    %v768 = vadd.f32 %v394, %v767
    %769 = vdwg.mxu0
    %770 = vmatprep.subr.bf16.mxu0 %v630
    %771 = vmatpush1.bf16.msra.mxu0 %v629
    %772 = vmatprep.subr.bf16.mxu0 %v626
    %773 = vmatpush1.bf16.msra.mxu0 %v625
    %774 = vmatprep.subr.bf16.mxu0 %v622
    %775 = vmatpush1.bf16.msra.mxu0 %v621
    %776 = vmatprep.subr.bf16.mxu0 %v618
    %777 = vmatpush1.bf16.msra.mxu0 %v617
    %778 = vmatprep.subr.bf16.mxu0 %v614
    %779 = vmatpush1.bf16.msra.mxu0 %v613
    %780 = vmatprep.subr.bf16.mxu0 %v610
    %781 = vmatpush1.bf16.msra.mxu0 %v609
    %782 = vmatprep.subr.bf16.mxu0 %v606
    %783 = vmatpush1.bf16.msra.mxu0 %v605
    %784 = vmatprep.subr.bf16.mxu0 %v602
    %785 = vmatpush1.bf16.msra.mxu0 %v601
    %786 = vmatprep.subr.bf16.mxu0 %v662
    %787 = vmatpush2.bf16.msra.mxu0 %v661
    %788 = vmatprep.subr.bf16.mxu0 %v658
    %789 = vmatpush2.bf16.msra.mxu0 %v657
    %790 = vmatprep.subr.bf16.mxu0 %v654
    %791 = vmatpush2.bf16.msra.mxu0 %v653
    %792 = vmatprep.subr.bf16.mxu0 %v650
    %793 = vmatpush2.bf16.msra.mxu0 %v649
    %794 = vmatprep.subr.bf16.mxu0 %v646
    %795 = vmatpush2.bf16.msra.mxu0 %v645
    %796 = vmatprep.subr.bf16.mxu0 %v642
    %797 = vmatpush2.bf16.msra.mxu0 %v641
    %798 = vmatprep.subr.bf16.mxu0 %v638
    %799 = vmatpush2.bf16.msra.mxu0 %v637
    %800 = vmatprep.subr.bf16.mxu0 %v634
    %801 = vmatpush2.bf16.msra.mxu0 %v633
    %802 = vmatprep.mubr.bf16.mxu0 %v320
    %803 = vmatmul.mubr.bf16.gmra.mxu0 %v319
    %v804 = vpop.f32.mrf.mxu0
    %v805 = vadd.f32 %v398, %v804
    %v806 = vpop.f32.mrf.mxu0
    %v807 = vadd.f32 %v402, %v806
    %v808 = vpop.f32.mrf.mxu0
    %v809 = vadd.f32 %v398, %v808
    %v810 = vpop.f32.mrf.mxu0
    %v811 = vadd.f32 %v402, %v810
    %812 = vdwg.mxu0
    %v813 = vmax.f32 %v762, 0.0
    %v814 = vmax.f32 %v764, 0.0
    %v815 = vmax.f32 %v805, 0.0
    %v816 = vmax.f32 %v807, 0.0
    %v817 = vmax.f32 %v766, 0.0
    %v818 = vmax.f32 %v768, 0.0
    %v819 = vmax.f32 %v809, 0.0
    %v820 = vmax.f32 %v811, 0.0
    %v821 = vpack.c.bf16 %v817, %v813
    %v822 = vpack.c.bf16 %v818, %v814
    %v823 = vpack.c.bf16 %v819, %v815
    %v824 = vpack.c.bf16 %v820, %v816
    %v825 = vld [vmem:[#allocation12] sm:$0xff]
    %v826 = vld [vmem:[#allocation12 + $0x8] sm:$0xff]
    %v827 = vld [vmem:[#allocation12 + $0x10] sm:$0xff]
    %v828 = vld [vmem:[#allocation12 + $0x18] sm:$0xff]
    %v829 = vld [vmem:[#allocation12 + $0x20] sm:$0xff]
    %v830 = vld [vmem:[#allocation12 + $0x28] sm:$0xff]
    %v831 = vld [vmem:[#allocation12 + $0x30] sm:$0xff]
    %v832 = vld [vmem:[#allocation12 + $0x38] sm:$0xff]
    %v833 = vld [vmem:[#allocation12 + $0x40] sm:$0xff]
    %v834 = vld [vmem:[#allocation12 + $0x48] sm:$0xff]
    %v835 = vld [vmem:[#allocation12 + $0x50] sm:$0xff]
    %v836 = vld [vmem:[#allocation12 + $0x58] sm:$0xff]
    %v837 = vld [vmem:[#allocation12 + $0x60] sm:$0xff]
    %v838 = vld [vmem:[#allocation12 + $0x68] sm:$0xff]
    %v839 = vld [vmem:[#allocation12 + $0x70] sm:$0xff]
    %v840 = vld [vmem:[#allocation12 + $0x78] sm:$0xff]
    %v841 = vld [vmem:[#allocation12 + $0x80] sm:$0xff]
    %v842 = vld [vmem:[#allocation12 + $0x88] sm:$0xff]
    %v843 = vld [vmem:[#allocation12 + $0x90] sm:$0xff]
    %v844 = vld [vmem:[#allocation12 + $0x98] sm:$0xff]
    %v845 = vld [vmem:[#allocation12 + $0xa0] sm:$0xff]
    %v846 = vld [vmem:[#allocation12 + $0xa8] sm:$0xff]
    %v847 = vld [vmem:[#allocation12 + $0xb0] sm:$0xff]
    %v848 = vld [vmem:[#allocation12 + $0xb8] sm:$0xff]
    %v849 = vld [vmem:[#allocation12 + $0xc0] sm:$0xff]
    %v850 = vld [vmem:[#allocation12 + $0xc8] sm:$0xff]
    %v851 = vld [vmem:[#allocation12 + $0xd0] sm:$0xff]
    %v852 = vld [vmem:[#allocation12 + $0xd8] sm:$0xff]
    %v853 = vld [vmem:[#allocation12 + $0xe0] sm:$0xff]
    %v854 = vld [vmem:[#allocation12 + $0xe8] sm:$0xff]
    %v855 = vld [vmem:[#allocation12 + $0xf0] sm:$0xff]
    %v856 = vld [vmem:[#allocation12 + $0xf8] sm:$0xff]
    %v857 = vld [vmem:[#allocation12 + $0x100] sm:$0xff]
    %v858 = vld [vmem:[#allocation12 + $0x108] sm:$0xff]
    %v859 = vld [vmem:[#allocation12 + $0x110] sm:$0xff]
    %v860 = vld [vmem:[#allocation12 + $0x118] sm:$0xff]
    %v861 = vld [vmem:[#allocation12 + $0x120] sm:$0xff]
    %v862 = vld [vmem:[#allocation12 + $0x128] sm:$0xff]
    %v863 = vld [vmem:[#allocation12 + $0x130] sm:$0xff]
    %v864 = vld [vmem:[#allocation12 + $0x138] sm:$0xff]
    %v865 = vld [vmem:[#allocation12 + $0x140] sm:$0xff]
    %v866 = vld [vmem:[#allocation12 + $0x148] sm:$0xff]
    %v867 = vld [vmem:[#allocation12 + $0x150] sm:$0xff]
    %v868 = vld [vmem:[#allocation12 + $0x158] sm:$0xff]
    %v869 = vld [vmem:[#allocation12 + $0x160] sm:$0xff]
    %v870 = vld [vmem:[#allocation12 + $0x168] sm:$0xff]
    %v871 = vld [vmem:[#allocation12 + $0x170] sm:$0xff]
    %v872 = vld [vmem:[#allocation12 + $0x178] sm:$0xff]
    %v873 = vld [vmem:[#allocation12 + $0x180] sm:$0xff]
    %v874 = vld [vmem:[#allocation12 + $0x188] sm:$0xff]
    %v875 = vld [vmem:[#allocation12 + $0x190] sm:$0xff]
    %v876 = vld [vmem:[#allocation12 + $0x198] sm:$0xff]
    %v877 = vld [vmem:[#allocation12 + $0x1a0] sm:$0xff]
    %v878 = vld [vmem:[#allocation12 + $0x1a8] sm:$0xff]
    %v879 = vld [vmem:[#allocation12 + $0x1b0] sm:$0xff]
    %v880 = vld [vmem:[#allocation12 + $0x1b8] sm:$0xff]
    %v881 = vld [vmem:[#allocation12 + $0x1c0] sm:$0xff]
    %v882 = vld [vmem:[#allocation12 + $0x1c8] sm:$0xff]
    %v883 = vld [vmem:[#allocation12 + $0x1d0] sm:$0xff]
    %v884 = vld [vmem:[#allocation12 + $0x1d8] sm:$0xff]
    %v885 = vld [vmem:[#allocation12 + $0x1e0] sm:$0xff]
    %v886 = vld [vmem:[#allocation12 + $0x1e8] sm:$0xff]
    %v887 = vld [vmem:[#allocation12 + $0x1f0] sm:$0xff]
    %v888 = vld [vmem:[#allocation12 + $0x1f8] sm:$0xff]
    %v889 = vld [vmem:[#allocation12 + $0x200] sm:$0xff]
    %v890 = vld [vmem:[#allocation12 + $0x208] sm:$0xff]
    %v891 = vld [vmem:[#allocation12 + $0x210] sm:$0xff]
    %v892 = vld [vmem:[#allocation12 + $0x218] sm:$0xff]
    %v893 = vld [vmem:[#allocation12 + $0x220] sm:$0xff]
    %v894 = vld [vmem:[#allocation12 + $0x228] sm:$0xff]
    %v895 = vld [vmem:[#allocation12 + $0x230] sm:$0xff]
    %v896 = vld [vmem:[#allocation12 + $0x238] sm:$0xff]
    %v897 = vld [vmem:[#allocation12 + $0x240] sm:$0xff]
    %v898 = vld [vmem:[#allocation12 + $0x248] sm:$0xff]
    %v899 = vld [vmem:[#allocation12 + $0x250] sm:$0xff]
    %v900 = vld [vmem:[#allocation12 + $0x258] sm:$0xff]
    %v901 = vld [vmem:[#allocation12 + $0x260] sm:$0xff]
    %v902 = vld [vmem:[#allocation12 + $0x268] sm:$0xff]
    %v903 = vld [vmem:[#allocation12 + $0x270] sm:$0xff]
    %v904 = vld [vmem:[#allocation12 + $0x278] sm:$0xff]
    %v905 = vld [vmem:[#allocation12 + $0x280] sm:$0xff]
    %v906 = vld [vmem:[#allocation12 + $0x288] sm:$0xff]
    %v907 = vld [vmem:[#allocation12 + $0x290] sm:$0xff]
    %v908 = vld [vmem:[#allocation12 + $0x298] sm:$0xff]
    %v909 = vld [vmem:[#allocation12 + $0x2a0] sm:$0xff]
    %v910 = vld [vmem:[#allocation12 + $0x2a8] sm:$0xff]
    %v911 = vld [vmem:[#allocation12 + $0x2b0] sm:$0xff]
    %v912 = vld [vmem:[#allocation12 + $0x2b8] sm:$0xff]
    %v913 = vld [vmem:[#allocation12 + $0x2c0] sm:$0xff]
    %v914 = vld [vmem:[#allocation12 + $0x2c8] sm:$0xff]
    %v915 = vld [vmem:[#allocation12 + $0x2d0] sm:$0xff]
    %v916 = vld [vmem:[#allocation12 + $0x2d8] sm:$0xff]
    %v917 = vld [vmem:[#allocation12 + $0x2e0] sm:$0xff]
    %v918 = vld [vmem:[#allocation12 + $0x2e8] sm:$0xff]
    %v919 = vld [vmem:[#allocation12 + $0x2f0] sm:$0xff]
    %v920 = vld [vmem:[#allocation12 + $0x2f8] sm:$0xff]
    %v921 = vld [vmem:[#allocation12 + $0x300] sm:$0xff]
    %v922 = vld [vmem:[#allocation12 + $0x308] sm:$0xff]
    %v923 = vld [vmem:[#allocation12 + $0x310] sm:$0xff]
    %v924 = vld [vmem:[#allocation12 + $0x318] sm:$0xff]
    %v925 = vld [vmem:[#allocation12 + $0x320] sm:$0xff]
    %v926 = vld [vmem:[#allocation12 + $0x328] sm:$0xff]
    %v927 = vld [vmem:[#allocation12 + $0x330] sm:$0xff]
    %v928 = vld [vmem:[#allocation12 + $0x338] sm:$0xff]
    %v929 = vld [vmem:[#allocation12 + $0x340] sm:$0xff]
    %v930 = vld [vmem:[#allocation12 + $0x348] sm:$0xff]
    %v931 = vld [vmem:[#allocation12 + $0x350] sm:$0xff]
    %v932 = vld [vmem:[#allocation12 + $0x358] sm:$0xff]
    %v933 = vld [vmem:[#allocation12 + $0x360] sm:$0xff]
    %v934 = vld [vmem:[#allocation12 + $0x368] sm:$0xff]
    %v935 = vld [vmem:[#allocation12 + $0x370] sm:$0xff]
    %v936 = vld [vmem:[#allocation12 + $0x378] sm:$0xff]
    %v937 = vld [vmem:[#allocation12 + $0x380] sm:$0xff]
    %v938 = vld [vmem:[#allocation12 + $0x388] sm:$0xff]
    %v939 = vld [vmem:[#allocation12 + $0x390] sm:$0xff]
    %v940 = vld [vmem:[#allocation12 + $0x398] sm:$0xff]
    %v941 = vld [vmem:[#allocation12 + $0x3a0] sm:$0xff]
    %v942 = vld [vmem:[#allocation12 + $0x3a8] sm:$0xff]
    %v943 = vld [vmem:[#allocation12 + $0x3b0] sm:$0xff]
    %v944 = vld [vmem:[#allocation12 + $0x3b8] sm:$0xff]
    %v945 = vld [vmem:[#allocation12 + $0x3c0] sm:$0xff]
    %v946 = vld [vmem:[#allocation12 + $0x3c8] sm:$0xff]
    %v947 = vld [vmem:[#allocation12 + $0x3d0] sm:$0xff]
    %v948 = vld [vmem:[#allocation12 + $0x3d8] sm:$0xff]
    %v949 = vld [vmem:[#allocation12 + $0x3e0] sm:$0xff]
    %v950 = vld [vmem:[#allocation12 + $0x3e8] sm:$0xff]
    %v951 = vld [vmem:[#allocation12 + $0x3f0] sm:$0xff]
    %v952 = vld [vmem:[#allocation12 + $0x3f8] sm:$0xff]
    %v953 = vld [vmem:[#allocation12 + $0x400] sm:$0xff]
    %v954 = vld [vmem:[#allocation12 + $0x408] sm:$0xff]
    %v955 = vld [vmem:[#allocation12 + $0x410] sm:$0xff]
    %v956 = vld [vmem:[#allocation12 + $0x418] sm:$0xff]
    %v957 = vld [vmem:[#allocation12 + $0x420] sm:$0xff]
    %v958 = vld [vmem:[#allocation12 + $0x428] sm:$0xff]
    %v959 = vld [vmem:[#allocation12 + $0x430] sm:$0xff]
    %v960 = vld [vmem:[#allocation12 + $0x438] sm:$0xff]
    %v961 = vld [vmem:[#allocation12 + $0x440] sm:$0xff]
    %v962 = vld [vmem:[#allocation12 + $0x448] sm:$0xff]
    %v963 = vld [vmem:[#allocation12 + $0x450] sm:$0xff]
    %v964 = vld [vmem:[#allocation12 + $0x458] sm:$0xff]
    %v965 = vld [vmem:[#allocation12 + $0x460] sm:$0xff]
    %v966 = vld [vmem:[#allocation12 + $0x468] sm:$0xff]
    %v967 = vld [vmem:[#allocation12 + $0x470] sm:$0xff]
    %v968 = vld [vmem:[#allocation12 + $0x478] sm:$0xff]
    %v969 = vld [vmem:[#allocation12 + $0x480] sm:$0xff]
    %v970 = vld [vmem:[#allocation12 + $0x488] sm:$0xff]
    %v971 = vld [vmem:[#allocation12 + $0x490] sm:$0xff]
    %v972 = vld [vmem:[#allocation12 + $0x498] sm:$0xff]
    %v973 = vld [vmem:[#allocation12 + $0x4a0] sm:$0xff]
    %v974 = vld [vmem:[#allocation12 + $0x4a8] sm:$0xff]
    %v975 = vld [vmem:[#allocation12 + $0x4b0] sm:$0xff]
    %v976 = vld [vmem:[#allocation12 + $0x4b8] sm:$0xff]
    %v977 = vld [vmem:[#allocation12 + $0x4c0] sm:$0xff]
    %v978 = vld [vmem:[#allocation12 + $0x4c8] sm:$0xff]
    %v979 = vld [vmem:[#allocation12 + $0x4d0] sm:$0xff]
    %v980 = vld [vmem:[#allocation12 + $0x4d8] sm:$0xff]
    %v981 = vld [vmem:[#allocation12 + $0x4e0] sm:$0xff]
    %v982 = vld [vmem:[#allocation12 + $0x4e8] sm:$0xff]
    %v983 = vld [vmem:[#allocation12 + $0x4f0] sm:$0xff]
    %v984 = vld [vmem:[#allocation12 + $0x4f8] sm:$0xff]
    %v985 = vld [vmem:[#allocation12 + $0x500] sm:$0xff]
    %v986 = vld [vmem:[#allocation12 + $0x508] sm:$0xff]
    %v987 = vld [vmem:[#allocation12 + $0x510] sm:$0xff]
    %v988 = vld [vmem:[#allocation12 + $0x518] sm:$0xff]
    %v989 = vld [vmem:[#allocation12 + $0x520] sm:$0xff]
    %v990 = vld [vmem:[#allocation12 + $0x528] sm:$0xff]
    %v991 = vld [vmem:[#allocation12 + $0x530] sm:$0xff]
    %v992 = vld [vmem:[#allocation12 + $0x538] sm:$0xff]
    %v993 = vld [vmem:[#allocation12 + $0x540] sm:$0xff]
    %v994 = vld [vmem:[#allocation12 + $0x548] sm:$0xff]
    %v995 = vld [vmem:[#allocation12 + $0x550] sm:$0xff]
    %v996 = vld [vmem:[#allocation12 + $0x558] sm:$0xff]
    %v997 = vld [vmem:[#allocation12 + $0x560] sm:$0xff]
    %v998 = vld [vmem:[#allocation12 + $0x568] sm:$0xff]
    %v999 = vld [vmem:[#allocation12 + $0x570] sm:$0xff]
    %v1000 = vld [vmem:[#allocation12 + $0x578] sm:$0xff]
    %v1001 = vld [vmem:[#allocation12 + $0x580] sm:$0xff]
    %v1002 = vld [vmem:[#allocation12 + $0x588] sm:$0xff]
    %v1003 = vld [vmem:[#allocation12 + $0x590] sm:$0xff]
    %v1004 = vld [vmem:[#allocation12 + $0x598] sm:$0xff]
    %v1005 = vld [vmem:[#allocation12 + $0x5a0] sm:$0xff]
    %v1006 = vld [vmem:[#allocation12 + $0x5a8] sm:$0xff]
    %v1007 = vld [vmem:[#allocation12 + $0x5b0] sm:$0xff]
    %v1008 = vld [vmem:[#allocation12 + $0x5b8] sm:$0xff]
    %v1009 = vld [vmem:[#allocation12 + $0x5c0] sm:$0xff]
    %v1010 = vld [vmem:[#allocation12 + $0x5c8] sm:$0xff]
    %v1011 = vld [vmem:[#allocation12 + $0x5d0] sm:$0xff]
    %v1012 = vld [vmem:[#allocation12 + $0x5d8] sm:$0xff]
    %v1013 = vld [vmem:[#allocation12 + $0x5e0] sm:$0xff]
    %v1014 = vld [vmem:[#allocation12 + $0x5e8] sm:$0xff]
    %v1015 = vld [vmem:[#allocation12 + $0x5f0] sm:$0xff]
    %v1016 = vld [vmem:[#allocation12 + $0x5f8] sm:$0xff]
    %v1017 = vld [vmem:[#allocation12 + $0x600] sm:$0xff]
    %v1018 = vld [vmem:[#allocation12 + $0x608] sm:$0xff]
    %v1019 = vld [vmem:[#allocation12 + $0x610] sm:$0xff]
    %v1020 = vld [vmem:[#allocation12 + $0x618] sm:$0xff]
    %v1021 = vld [vmem:[#allocation12 + $0x620] sm:$0xff]
    %v1022 = vld [vmem:[#allocation12 + $0x628] sm:$0xff]
    %v1023 = vld [vmem:[#allocation12 + $0x630] sm:$0xff]
    %v1024 = vld [vmem:[#allocation12 + $0x638] sm:$0xff]
    %v1025 = vld [vmem:[#allocation12 + $0x640] sm:$0xff]
    %v1026 = vld [vmem:[#allocation12 + $0x648] sm:$0xff]
    %v1027 = vld [vmem:[#allocation12 + $0x650] sm:$0xff]
    %v1028 = vld [vmem:[#allocation12 + $0x658] sm:$0xff]
    %v1029 = vld [vmem:[#allocation12 + $0x660] sm:$0xff]
    %v1030 = vld [vmem:[#allocation12 + $0x668] sm:$0xff]
    %v1031 = vld [vmem:[#allocation12 + $0x670] sm:$0xff]
    %v1032 = vld [vmem:[#allocation12 + $0x678] sm:$0xff]
    %v1033 = vld [vmem:[#allocation12 + $0x680] sm:$0xff]
    %v1034 = vld [vmem:[#allocation12 + $0x688] sm:$0xff]
    %v1035 = vld [vmem:[#allocation12 + $0x690] sm:$0xff]
    %v1036 = vld [vmem:[#allocation12 + $0x698] sm:$0xff]
    %v1037 = vld [vmem:[#allocation12 + $0x6a0] sm:$0xff]
    %v1038 = vld [vmem:[#allocation12 + $0x6a8] sm:$0xff]
    %v1039 = vld [vmem:[#allocation12 + $0x6b0] sm:$0xff]
    %v1040 = vld [vmem:[#allocation12 + $0x6b8] sm:$0xff]
    %v1041 = vld [vmem:[#allocation12 + $0x6c0] sm:$0xff]
    %v1042 = vld [vmem:[#allocation12 + $0x6c8] sm:$0xff]
    %v1043 = vld [vmem:[#allocation12 + $0x6d0] sm:$0xff]
    %v1044 = vld [vmem:[#allocation12 + $0x6d8] sm:$0xff]
    %v1045 = vld [vmem:[#allocation12 + $0x6e0] sm:$0xff]
    %v1046 = vld [vmem:[#allocation12 + $0x6e8] sm:$0xff]
    %v1047 = vld [vmem:[#allocation12 + $0x6f0] sm:$0xff]
    %v1048 = vld [vmem:[#allocation12 + $0x6f8] sm:$0xff]
    %v1049 = vld [vmem:[#allocation12 + $0x700] sm:$0xff]
    %v1050 = vld [vmem:[#allocation12 + $0x708] sm:$0xff]
    %v1051 = vld [vmem:[#allocation12 + $0x710] sm:$0xff]
    %v1052 = vld [vmem:[#allocation12 + $0x718] sm:$0xff]
    %v1053 = vld [vmem:[#allocation12 + $0x720] sm:$0xff]
    %v1054 = vld [vmem:[#allocation12 + $0x728] sm:$0xff]
    %v1055 = vld [vmem:[#allocation12 + $0x730] sm:$0xff]
    %v1056 = vld [vmem:[#allocation12 + $0x738] sm:$0xff]
    %v1057 = vld [vmem:[#allocation12 + $0x740] sm:$0xff]
    %v1058 = vld [vmem:[#allocation12 + $0x748] sm:$0xff]
    %v1059 = vld [vmem:[#allocation12 + $0x750] sm:$0xff]
    %v1060 = vld [vmem:[#allocation12 + $0x758] sm:$0xff]
    %v1061 = vld [vmem:[#allocation12 + $0x760] sm:$0xff]
    %v1062 = vld [vmem:[#allocation12 + $0x768] sm:$0xff]
    %v1063 = vld [vmem:[#allocation12 + $0x770] sm:$0xff]
    %v1064 = vld [vmem:[#allocation12 + $0x778] sm:$0xff]
    %v1065 = vld [vmem:[#allocation12 + $0x780] sm:$0xff]
    %v1066 = vld [vmem:[#allocation12 + $0x788] sm:$0xff]
    %v1067 = vld [vmem:[#allocation12 + $0x790] sm:$0xff]
    %v1068 = vld [vmem:[#allocation12 + $0x798] sm:$0xff]
    %v1069 = vld [vmem:[#allocation12 + $0x7a0] sm:$0xff]
    %v1070 = vld [vmem:[#allocation12 + $0x7a8] sm:$0xff]
    %v1071 = vld [vmem:[#allocation12 + $0x7b0] sm:$0xff]
    %v1072 = vld [vmem:[#allocation12 + $0x7b8] sm:$0xff]
    %v1073 = vld [vmem:[#allocation12 + $0x7c0] sm:$0xff]
    %v1074 = vld [vmem:[#allocation12 + $0x7c8] sm:$0xff]
    %v1075 = vld [vmem:[#allocation12 + $0x7d0] sm:$0xff]
    %v1076 = vld [vmem:[#allocation12 + $0x7d8] sm:$0xff]
    %v1077 = vld [vmem:[#allocation12 + $0x7e0] sm:$0xff]
    %v1078 = vld [vmem:[#allocation12 + $0x7e8] sm:$0xff]
    %v1079 = vld [vmem:[#allocation12 + $0x7f0] sm:$0xff]
    %v1080 = vld [vmem:[#allocation12 + $0x7f8] sm:$0xff]
    %v1081 = vld [vmem:[#allocation14] sm:$0xff]
    %v1083 = vlaneseq
    %v1084 = vshrl.u32 %v1083, 7
    %v1085 = vsub.s32 0, %v1084
    %v1086 = vrot.slane %v1081, %v1085
    %v1087 = vlaneseq
    %v1088 = vshrl.u32 %v1087, 7
    %v1089 = vsub.s32 1, %v1088
    %v1090 = vrot.slane %v1081, %v1089
    %v1091 = vlaneseq
    %v1092 = vshrl.u32 %v1091, 7
    %v1093 = vsub.s32 2, %v1092
    %v1094 = vrot.slane %v1081, %v1093
    %v1095 = vlaneseq
    %v1096 = vshrl.u32 %v1095, 7
    %v1097 = vsub.s32 3, %v1096
    %v1098 = vrot.slane %v1081, %v1097
    %v1099 = vlaneseq
    %v1100 = vshrl.u32 %v1099, 7
    %v1101 = vsub.s32 4, %v1100
    %v1102 = vrot.slane %v1081, %v1101
    %v1103 = vlaneseq
    %v1104 = vshrl.u32 %v1103, 7
    %v1105 = vsub.s32 5, %v1104
    %v1106 = vrot.slane %v1081, %v1105
    %v1107 = vlaneseq
    %v1108 = vshrl.u32 %v1107, 7
    %v1109 = vsub.s32 6, %v1108
    %v1110 = vrot.slane %v1081, %v1109
    %v1111 = vlaneseq
    %v1112 = vshrl.u32 %v1111, 7
    %v1113 = vsub.s32 7, %v1112
    %v1114 = vrot.slane %v1081, %v1113
    %v1379 = vunpack.c.l.b16 %v825
    %v1380 = vunpack.c.h.b16 %v825
    %v1381 = vunpack.c.l.b16 %v826
    %v1382 = vunpack.c.h.b16 %v826
    %v1383 = vunpack.c.l.b16 %v827
    %v1384 = vunpack.c.h.b16 %v827
    %v1385 = vunpack.c.l.b16 %v828
    %v1386 = vunpack.c.h.b16 %v828
    %v1387 = vunpack.c.l.b16 %v829
    %v1388 = vunpack.c.h.b16 %v829
    %v1389 = vunpack.c.l.b16 %v830
    %v1390 = vunpack.c.h.b16 %v830
    %v1391 = vunpack.c.l.b16 %v831
    %v1392 = vunpack.c.h.b16 %v831
    %v1393 = vunpack.c.l.b16 %v832
    %v1394 = vunpack.c.h.b16 %v832
    %v1395 = vunpack.c.l.b16 %v833
    %v1396 = vunpack.c.h.b16 %v833
    %v1397 = vunpack.c.l.b16 %v834
    %v1398 = vunpack.c.h.b16 %v834
    %v1399 = vunpack.c.l.b16 %v835
    %v1400 = vunpack.c.h.b16 %v835
    %v1401 = vunpack.c.l.b16 %v836
    %v1402 = vunpack.c.h.b16 %v836
    %v1403 = vunpack.c.l.b16 %v837
    %v1404 = vunpack.c.h.b16 %v837
    %v1405 = vunpack.c.l.b16 %v838
    %v1406 = vunpack.c.h.b16 %v838
    %v1407 = vunpack.c.l.b16 %v839
    %v1408 = vunpack.c.h.b16 %v839
    %v1409 = vunpack.c.l.b16 %v840
    %v1410 = vunpack.c.h.b16 %v840
    %v1411 = vunpack.c.l.b16 %v841
    %v1412 = vunpack.c.h.b16 %v841
    %v1413 = vunpack.c.l.b16 %v842
    %v1414 = vunpack.c.h.b16 %v842
    %v1415 = vunpack.c.l.b16 %v843
    %v1416 = vunpack.c.h.b16 %v843
    %v1417 = vunpack.c.l.b16 %v844
    %v1418 = vunpack.c.h.b16 %v844
    %v1419 = vunpack.c.l.b16 %v845
    %v1420 = vunpack.c.h.b16 %v845
    %v1421 = vunpack.c.l.b16 %v846
    %v1422 = vunpack.c.h.b16 %v846
    %v1423 = vunpack.c.l.b16 %v847
    %v1424 = vunpack.c.h.b16 %v847
    %v1425 = vunpack.c.l.b16 %v848
    %v1426 = vunpack.c.h.b16 %v848
    %v1427 = vunpack.c.l.b16 %v849
    %v1428 = vunpack.c.h.b16 %v849
    %v1429 = vunpack.c.l.b16 %v850
    %v1430 = vunpack.c.h.b16 %v850
    %v1431 = vunpack.c.l.b16 %v851
    %v1432 = vunpack.c.h.b16 %v851
    %v1433 = vunpack.c.l.b16 %v852
    %v1434 = vunpack.c.h.b16 %v852
    %v1435 = vunpack.c.l.b16 %v853
    %v1436 = vunpack.c.h.b16 %v853
    %v1437 = vunpack.c.l.b16 %v854
    %v1438 = vunpack.c.h.b16 %v854
    %v1439 = vunpack.c.l.b16 %v855
    %v1440 = vunpack.c.h.b16 %v855
    %v1441 = vunpack.c.l.b16 %v856
    %v1442 = vunpack.c.h.b16 %v856
    %v1443 = vunpack.c.l.b16 %v857
    %v1444 = vunpack.c.h.b16 %v857
    %v1445 = vunpack.c.l.b16 %v858
    %v1446 = vunpack.c.h.b16 %v858
    %v1447 = vunpack.c.l.b16 %v859
    %v1448 = vunpack.c.h.b16 %v859
    %v1449 = vunpack.c.l.b16 %v860
    %v1450 = vunpack.c.h.b16 %v860
    %v1451 = vunpack.c.l.b16 %v861
    %v1452 = vunpack.c.h.b16 %v861
    %v1453 = vunpack.c.l.b16 %v862
    %v1454 = vunpack.c.h.b16 %v862
    %v1455 = vunpack.c.l.b16 %v863
    %v1456 = vunpack.c.h.b16 %v863
    %v1457 = vunpack.c.l.b16 %v864
    %v1458 = vunpack.c.h.b16 %v864
    %v1459 = vunpack.c.l.b16 %v865
    %v1460 = vunpack.c.h.b16 %v865
    %v1461 = vunpack.c.l.b16 %v866
    %v1462 = vunpack.c.h.b16 %v866
    %v1463 = vunpack.c.l.b16 %v867
    %v1464 = vunpack.c.h.b16 %v867
    %v1465 = vunpack.c.l.b16 %v868
    %v1466 = vunpack.c.h.b16 %v868
    %v1467 = vunpack.c.l.b16 %v869
    %v1468 = vunpack.c.h.b16 %v869
    %v1469 = vunpack.c.l.b16 %v870
    %v1470 = vunpack.c.h.b16 %v870
    %v1471 = vunpack.c.l.b16 %v871
    %v1472 = vunpack.c.h.b16 %v871
    %v1473 = vunpack.c.l.b16 %v872
    %v1474 = vunpack.c.h.b16 %v872
    %v1475 = vunpack.c.l.b16 %v873
    %v1476 = vunpack.c.h.b16 %v873
    %v1477 = vunpack.c.l.b16 %v874
    %v1478 = vunpack.c.h.b16 %v874
    %v1479 = vunpack.c.l.b16 %v875
    %v1480 = vunpack.c.h.b16 %v875
    %v1481 = vunpack.c.l.b16 %v876
    %v1482 = vunpack.c.h.b16 %v876
    %v1483 = vunpack.c.l.b16 %v877
    %v1484 = vunpack.c.h.b16 %v877
    %v1485 = vunpack.c.l.b16 %v878
    %v1486 = vunpack.c.h.b16 %v878
    %v1487 = vunpack.c.l.b16 %v879
    %v1488 = vunpack.c.h.b16 %v879
    %v1489 = vunpack.c.l.b16 %v880
    %v1490 = vunpack.c.h.b16 %v880
    %v1491 = vunpack.c.l.b16 %v881
    %v1492 = vunpack.c.h.b16 %v881
    %v1493 = vunpack.c.l.b16 %v882
    %v1494 = vunpack.c.h.b16 %v882
    %v1495 = vunpack.c.l.b16 %v883
    %v1496 = vunpack.c.h.b16 %v883
    %v1497 = vunpack.c.l.b16 %v884
    %v1498 = vunpack.c.h.b16 %v884
    %v1499 = vunpack.c.l.b16 %v885
    %v1500 = vunpack.c.h.b16 %v885
    %v1501 = vunpack.c.l.b16 %v886
    %v1502 = vunpack.c.h.b16 %v886
    %v1503 = vunpack.c.l.b16 %v887
    %v1504 = vunpack.c.h.b16 %v887
    %v1505 = vunpack.c.l.b16 %v888
    %v1506 = vunpack.c.h.b16 %v888
    %v1507 = vunpack.c.l.b16 %v889
    %v1508 = vunpack.c.h.b16 %v889
    %v1509 = vunpack.c.l.b16 %v890
    %v1510 = vunpack.c.h.b16 %v890
    %v1511 = vunpack.c.l.b16 %v891
    %v1512 = vunpack.c.h.b16 %v891
    %v1513 = vunpack.c.l.b16 %v892
    %v1514 = vunpack.c.h.b16 %v892
    %v1515 = vunpack.c.l.b16 %v893
    %v1516 = vunpack.c.h.b16 %v893
    %v1517 = vunpack.c.l.b16 %v894
    %v1518 = vunpack.c.h.b16 %v894
    %v1519 = vunpack.c.l.b16 %v895
    %v1520 = vunpack.c.h.b16 %v895
    %v1521 = vunpack.c.l.b16 %v896
    %v1522 = vunpack.c.h.b16 %v896
    %v1523 = vunpack.c.l.b16 %v897
    %v1524 = vunpack.c.h.b16 %v897
    %v1525 = vunpack.c.l.b16 %v898
    %v1526 = vunpack.c.h.b16 %v898
    %v1527 = vunpack.c.l.b16 %v899
    %v1528 = vunpack.c.h.b16 %v899
    %v1529 = vunpack.c.l.b16 %v900
    %v1530 = vunpack.c.h.b16 %v900
    %v1531 = vunpack.c.l.b16 %v901
    %v1532 = vunpack.c.h.b16 %v901
    %v1533 = vunpack.c.l.b16 %v902
    %v1534 = vunpack.c.h.b16 %v902
    %v1535 = vunpack.c.l.b16 %v903
    %v1536 = vunpack.c.h.b16 %v903
    %v1537 = vunpack.c.l.b16 %v904
    %v1538 = vunpack.c.h.b16 %v904
    %v1539 = vunpack.c.l.b16 %v905
    %v1540 = vunpack.c.h.b16 %v905
    %v1541 = vunpack.c.l.b16 %v906
    %v1542 = vunpack.c.h.b16 %v906
    %v1543 = vunpack.c.l.b16 %v907
    %v1544 = vunpack.c.h.b16 %v907
    %v1545 = vunpack.c.l.b16 %v908
    %v1546 = vunpack.c.h.b16 %v908
    %v1547 = vunpack.c.l.b16 %v909
    %v1548 = vunpack.c.h.b16 %v909
    %v1549 = vunpack.c.l.b16 %v910
    %v1550 = vunpack.c.h.b16 %v910
    %v1551 = vunpack.c.l.b16 %v911
    %v1552 = vunpack.c.h.b16 %v911
    %v1553 = vunpack.c.l.b16 %v912
    %v1554 = vunpack.c.h.b16 %v912
    %v1555 = vunpack.c.l.b16 %v913
    %v1556 = vunpack.c.h.b16 %v913
    %v1557 = vunpack.c.l.b16 %v914
    %v1558 = vunpack.c.h.b16 %v914
    %v1559 = vunpack.c.l.b16 %v915
    %v1560 = vunpack.c.h.b16 %v915
    %v1561 = vunpack.c.l.b16 %v916
    %v1562 = vunpack.c.h.b16 %v916
    %v1563 = vunpack.c.l.b16 %v917
    %v1564 = vunpack.c.h.b16 %v917
    %v1565 = vunpack.c.l.b16 %v918
    %v1566 = vunpack.c.h.b16 %v918
    %v1567 = vunpack.c.l.b16 %v919
    %v1568 = vunpack.c.h.b16 %v919
    %v1569 = vunpack.c.l.b16 %v920
    %v1570 = vunpack.c.h.b16 %v920
    %v1571 = vunpack.c.l.b16 %v921
    %v1572 = vunpack.c.h.b16 %v921
    %v1573 = vunpack.c.l.b16 %v922
    %v1574 = vunpack.c.h.b16 %v922
    %v1575 = vunpack.c.l.b16 %v923
    %v1576 = vunpack.c.h.b16 %v923
    %v1577 = vunpack.c.l.b16 %v924
    %v1578 = vunpack.c.h.b16 %v924
    %v1579 = vunpack.c.l.b16 %v925
    %v1580 = vunpack.c.h.b16 %v925
    %v1581 = vunpack.c.l.b16 %v926
    %v1582 = vunpack.c.h.b16 %v926
    %v1583 = vunpack.c.l.b16 %v927
    %v1584 = vunpack.c.h.b16 %v927
    %v1585 = vunpack.c.l.b16 %v928
    %v1586 = vunpack.c.h.b16 %v928
    %v1587 = vunpack.c.l.b16 %v929
    %v1588 = vunpack.c.h.b16 %v929
    %v1589 = vunpack.c.l.b16 %v930
    %v1590 = vunpack.c.h.b16 %v930
    %v1591 = vunpack.c.l.b16 %v931
    %v1592 = vunpack.c.h.b16 %v931
    %v1593 = vunpack.c.l.b16 %v932
    %v1594 = vunpack.c.h.b16 %v932
    %v1595 = vunpack.c.l.b16 %v933
    %v1596 = vunpack.c.h.b16 %v933
    %v1597 = vunpack.c.l.b16 %v934
    %v1598 = vunpack.c.h.b16 %v934
    %v1599 = vunpack.c.l.b16 %v935
    %v1600 = vunpack.c.h.b16 %v935
    %v1601 = vunpack.c.l.b16 %v936
    %v1602 = vunpack.c.h.b16 %v936
    %v1603 = vunpack.c.l.b16 %v937
    %v1604 = vunpack.c.h.b16 %v937
    %v1605 = vunpack.c.l.b16 %v938
    %v1606 = vunpack.c.h.b16 %v938
    %v1607 = vunpack.c.l.b16 %v939
    %v1608 = vunpack.c.h.b16 %v939
    %v1609 = vunpack.c.l.b16 %v940
    %v1610 = vunpack.c.h.b16 %v940
    %v1611 = vunpack.c.l.b16 %v941
    %v1612 = vunpack.c.h.b16 %v941
    %v1613 = vunpack.c.l.b16 %v942
    %v1614 = vunpack.c.h.b16 %v942
    %v1615 = vunpack.c.l.b16 %v943
    %v1616 = vunpack.c.h.b16 %v943
    %v1617 = vunpack.c.l.b16 %v944
    %v1618 = vunpack.c.h.b16 %v944
    %v1619 = vunpack.c.l.b16 %v945
    %v1620 = vunpack.c.h.b16 %v945
    %v1621 = vunpack.c.l.b16 %v946
    %v1622 = vunpack.c.h.b16 %v946
    %v1623 = vunpack.c.l.b16 %v947
    %v1624 = vunpack.c.h.b16 %v947
    %v1625 = vunpack.c.l.b16 %v948
    %v1626 = vunpack.c.h.b16 %v948
    %v1627 = vunpack.c.l.b16 %v949
    %v1628 = vunpack.c.h.b16 %v949
    %v1629 = vunpack.c.l.b16 %v950
    %v1630 = vunpack.c.h.b16 %v950
    %v1631 = vunpack.c.l.b16 %v951
    %v1632 = vunpack.c.h.b16 %v951
    %v1633 = vunpack.c.l.b16 %v952
    %v1634 = vunpack.c.h.b16 %v952
    %v1635 = vunpack.c.l.b16 %v953
    %v1636 = vunpack.c.h.b16 %v953
    %v1637 = vunpack.c.l.b16 %v954
    %v1638 = vunpack.c.h.b16 %v954
    %v1639 = vunpack.c.l.b16 %v955
    %v1640 = vunpack.c.h.b16 %v955
    %v1641 = vunpack.c.l.b16 %v956
    %v1642 = vunpack.c.h.b16 %v956
    %v1643 = vunpack.c.l.b16 %v957
    %v1644 = vunpack.c.h.b16 %v957
    %v1645 = vunpack.c.l.b16 %v958
    %v1646 = vunpack.c.h.b16 %v958
    %v1647 = vunpack.c.l.b16 %v959
    %v1648 = vunpack.c.h.b16 %v959
    %v1649 = vunpack.c.l.b16 %v960
    %v1650 = vunpack.c.h.b16 %v960
    %v1651 = vunpack.c.l.b16 %v961
    %v1652 = vunpack.c.h.b16 %v961
    %v1653 = vunpack.c.l.b16 %v962
    %v1654 = vunpack.c.h.b16 %v962
    %v1655 = vunpack.c.l.b16 %v963
    %v1656 = vunpack.c.h.b16 %v963
    %v1657 = vunpack.c.l.b16 %v964
    %v1658 = vunpack.c.h.b16 %v964
    %v1659 = vunpack.c.l.b16 %v965
    %v1660 = vunpack.c.h.b16 %v965
    %v1661 = vunpack.c.l.b16 %v966
    %v1662 = vunpack.c.h.b16 %v966
    %v1663 = vunpack.c.l.b16 %v967
    %v1664 = vunpack.c.h.b16 %v967
    %v1665 = vunpack.c.l.b16 %v968
    %v1666 = vunpack.c.h.b16 %v968
    %v1667 = vunpack.c.l.b16 %v969
    %v1668 = vunpack.c.h.b16 %v969
    %v1669 = vunpack.c.l.b16 %v970
    %v1670 = vunpack.c.h.b16 %v970
    %v1671 = vunpack.c.l.b16 %v971
    %v1672 = vunpack.c.h.b16 %v971
    %v1673 = vunpack.c.l.b16 %v972
    %v1674 = vunpack.c.h.b16 %v972
    %v1675 = vunpack.c.l.b16 %v973
    %v1676 = vunpack.c.h.b16 %v973
    %v1677 = vunpack.c.l.b16 %v974
    %v1678 = vunpack.c.h.b16 %v974
    %v1679 = vunpack.c.l.b16 %v975
    %v1680 = vunpack.c.h.b16 %v975
    %v1681 = vunpack.c.l.b16 %v976
    %v1682 = vunpack.c.h.b16 %v976
    %v1683 = vunpack.c.l.b16 %v977
    %v1684 = vunpack.c.h.b16 %v977
    %v1685 = vunpack.c.l.b16 %v978
    %v1686 = vunpack.c.h.b16 %v978
    %v1687 = vunpack.c.l.b16 %v979
    %v1688 = vunpack.c.h.b16 %v979
    %v1689 = vunpack.c.l.b16 %v980
    %v1690 = vunpack.c.h.b16 %v980
    %v1691 = vunpack.c.l.b16 %v981
    %v1692 = vunpack.c.h.b16 %v981
    %v1693 = vunpack.c.l.b16 %v982
    %v1694 = vunpack.c.h.b16 %v982
    %v1695 = vunpack.c.l.b16 %v983
    %v1696 = vunpack.c.h.b16 %v983
    %v1697 = vunpack.c.l.b16 %v984
    %v1698 = vunpack.c.h.b16 %v984
    %v1699 = vunpack.c.l.b16 %v985
    %v1700 = vunpack.c.h.b16 %v985
    %v1701 = vunpack.c.l.b16 %v986
    %v1702 = vunpack.c.h.b16 %v986
    %v1703 = vunpack.c.l.b16 %v987
    %v1704 = vunpack.c.h.b16 %v987
    %v1705 = vunpack.c.l.b16 %v988
    %v1706 = vunpack.c.h.b16 %v988
    %v1707 = vunpack.c.l.b16 %v989
    %v1708 = vunpack.c.h.b16 %v989
    %v1709 = vunpack.c.l.b16 %v990
    %v1710 = vunpack.c.h.b16 %v990
    %v1711 = vunpack.c.l.b16 %v991
    %v1712 = vunpack.c.h.b16 %v991
    %v1713 = vunpack.c.l.b16 %v992
    %v1714 = vunpack.c.h.b16 %v992
    %v1715 = vunpack.c.l.b16 %v993
    %v1716 = vunpack.c.h.b16 %v993
    %v1717 = vunpack.c.l.b16 %v994
    %v1718 = vunpack.c.h.b16 %v994
    %v1719 = vunpack.c.l.b16 %v995
    %v1720 = vunpack.c.h.b16 %v995
    %v1721 = vunpack.c.l.b16 %v996
    %v1722 = vunpack.c.h.b16 %v996
    %v1723 = vunpack.c.l.b16 %v997
    %v1724 = vunpack.c.h.b16 %v997
    %v1725 = vunpack.c.l.b16 %v998
    %v1726 = vunpack.c.h.b16 %v998
    %v1727 = vunpack.c.l.b16 %v999
    %v1728 = vunpack.c.h.b16 %v999
    %v1729 = vunpack.c.l.b16 %v1000
    %v1730 = vunpack.c.h.b16 %v1000
    %v1731 = vunpack.c.l.b16 %v1001
    %v1732 = vunpack.c.h.b16 %v1001
    %v1733 = vunpack.c.l.b16 %v1002
    %v1734 = vunpack.c.h.b16 %v1002
    %v1735 = vunpack.c.l.b16 %v1003
    %v1736 = vunpack.c.h.b16 %v1003
    %v1737 = vunpack.c.l.b16 %v1004
    %v1738 = vunpack.c.h.b16 %v1004
    %v1739 = vunpack.c.l.b16 %v1005
    %v1740 = vunpack.c.h.b16 %v1005
    %v1741 = vunpack.c.l.b16 %v1006
    %v1742 = vunpack.c.h.b16 %v1006
    %v1743 = vunpack.c.l.b16 %v1007
    %v1744 = vunpack.c.h.b16 %v1007
    %v1745 = vunpack.c.l.b16 %v1008
    %v1746 = vunpack.c.h.b16 %v1008
    %v1747 = vunpack.c.l.b16 %v1009
    %v1748 = vunpack.c.h.b16 %v1009
    %v1749 = vunpack.c.l.b16 %v1010
    %v1750 = vunpack.c.h.b16 %v1010
    %v1751 = vunpack.c.l.b16 %v1011
    %v1752 = vunpack.c.h.b16 %v1011
    %v1753 = vunpack.c.l.b16 %v1012
    %v1754 = vunpack.c.h.b16 %v1012
    %v1755 = vunpack.c.l.b16 %v1013
    %v1756 = vunpack.c.h.b16 %v1013
    %v1757 = vunpack.c.l.b16 %v1014
    %v1758 = vunpack.c.h.b16 %v1014
    %v1759 = vunpack.c.l.b16 %v1015
    %v1760 = vunpack.c.h.b16 %v1015
    %v1761 = vunpack.c.l.b16 %v1016
    %v1762 = vunpack.c.h.b16 %v1016
    %v1763 = vunpack.c.l.b16 %v1017
    %v1764 = vunpack.c.h.b16 %v1017
    %v1765 = vunpack.c.l.b16 %v1018
    %v1766 = vunpack.c.h.b16 %v1018
    %v1767 = vunpack.c.l.b16 %v1019
    %v1768 = vunpack.c.h.b16 %v1019
    %v1769 = vunpack.c.l.b16 %v1020
    %v1770 = vunpack.c.h.b16 %v1020
    %v1771 = vunpack.c.l.b16 %v1021
    %v1772 = vunpack.c.h.b16 %v1021
    %v1773 = vunpack.c.l.b16 %v1022
    %v1774 = vunpack.c.h.b16 %v1022
    %v1775 = vunpack.c.l.b16 %v1023
    %v1776 = vunpack.c.h.b16 %v1023
    %v1777 = vunpack.c.l.b16 %v1024
    %v1778 = vunpack.c.h.b16 %v1024
    %v1779 = vunpack.c.l.b16 %v1025
    %v1780 = vunpack.c.h.b16 %v1025
    %v1781 = vunpack.c.l.b16 %v1026
    %v1782 = vunpack.c.h.b16 %v1026
    %v1783 = vunpack.c.l.b16 %v1027
    %v1784 = vunpack.c.h.b16 %v1027
    %v1785 = vunpack.c.l.b16 %v1028
    %v1786 = vunpack.c.h.b16 %v1028
    %v1787 = vunpack.c.l.b16 %v1029
    %v1788 = vunpack.c.h.b16 %v1029
    %v1789 = vunpack.c.l.b16 %v1030
    %v1790 = vunpack.c.h.b16 %v1030
    %v1791 = vunpack.c.l.b16 %v1031
    %v1792 = vunpack.c.h.b16 %v1031
    %v1793 = vunpack.c.l.b16 %v1032
    %v1794 = vunpack.c.h.b16 %v1032
    %v1795 = vunpack.c.l.b16 %v1033
    %v1796 = vunpack.c.h.b16 %v1033
    %v1797 = vunpack.c.l.b16 %v1034
    %v1798 = vunpack.c.h.b16 %v1034
    %v1799 = vunpack.c.l.b16 %v1035
    %v1800 = vunpack.c.h.b16 %v1035
    %v1801 = vunpack.c.l.b16 %v1036
    %v1802 = vunpack.c.h.b16 %v1036
    %v1803 = vunpack.c.l.b16 %v1037
    %v1804 = vunpack.c.h.b16 %v1037
    %v1805 = vunpack.c.l.b16 %v1038
    %v1806 = vunpack.c.h.b16 %v1038
    %v1807 = vunpack.c.l.b16 %v1039
    %v1808 = vunpack.c.h.b16 %v1039
    %v1809 = vunpack.c.l.b16 %v1040
    %v1810 = vunpack.c.h.b16 %v1040
    %v1811 = vunpack.c.l.b16 %v1041
    %v1812 = vunpack.c.h.b16 %v1041
    %v1813 = vunpack.c.l.b16 %v1042
    %v1814 = vunpack.c.h.b16 %v1042
    %v1815 = vunpack.c.l.b16 %v1043
    %v1816 = vunpack.c.h.b16 %v1043
    %v1817 = vunpack.c.l.b16 %v1044
    %v1818 = vunpack.c.h.b16 %v1044
    %v1819 = vunpack.c.l.b16 %v1045
    %v1820 = vunpack.c.h.b16 %v1045
    %v1821 = vunpack.c.l.b16 %v1046
    %v1822 = vunpack.c.h.b16 %v1046
    %v1823 = vunpack.c.l.b16 %v1047
    %v1824 = vunpack.c.h.b16 %v1047
    %v1825 = vunpack.c.l.b16 %v1048
    %v1826 = vunpack.c.h.b16 %v1048
    %v1827 = vunpack.c.l.b16 %v1049
    %v1828 = vunpack.c.h.b16 %v1049
    %v1829 = vunpack.c.l.b16 %v1050
    %v1830 = vunpack.c.h.b16 %v1050
    %v1831 = vunpack.c.l.b16 %v1051
    %v1832 = vunpack.c.h.b16 %v1051
    %v1833 = vunpack.c.l.b16 %v1052
    %v1834 = vunpack.c.h.b16 %v1052
    %v1835 = vunpack.c.l.b16 %v1053
    %v1836 = vunpack.c.h.b16 %v1053
    %v1837 = vunpack.c.l.b16 %v1054
    %v1838 = vunpack.c.h.b16 %v1054
    %v1839 = vunpack.c.l.b16 %v1055
    %v1840 = vunpack.c.h.b16 %v1055
    %v1841 = vunpack.c.l.b16 %v1056
    %v1842 = vunpack.c.h.b16 %v1056
    %v1843 = vunpack.c.l.b16 %v1057
    %v1844 = vunpack.c.h.b16 %v1057
    %v1845 = vunpack.c.l.b16 %v1058
    %v1846 = vunpack.c.h.b16 %v1058
    %v1847 = vunpack.c.l.b16 %v1059
    %v1848 = vunpack.c.h.b16 %v1059
    %v1849 = vunpack.c.l.b16 %v1060
    %v1850 = vunpack.c.h.b16 %v1060
    %v1851 = vunpack.c.l.b16 %v1061
    %v1852 = vunpack.c.h.b16 %v1061
    %v1853 = vunpack.c.l.b16 %v1062
    %v1854 = vunpack.c.h.b16 %v1062
    %v1855 = vunpack.c.l.b16 %v1063
    %v1856 = vunpack.c.h.b16 %v1063
    %v1857 = vunpack.c.l.b16 %v1064
    %v1858 = vunpack.c.h.b16 %v1064
    %v1859 = vunpack.c.l.b16 %v1065
    %v1860 = vunpack.c.h.b16 %v1065
    %v1861 = vunpack.c.l.b16 %v1066
    %v1862 = vunpack.c.h.b16 %v1066
    %v1863 = vunpack.c.l.b16 %v1067
    %v1864 = vunpack.c.h.b16 %v1067
    %v1865 = vunpack.c.l.b16 %v1068
    %v1866 = vunpack.c.h.b16 %v1068
    %v1867 = vunpack.c.l.b16 %v1069
    %v1868 = vunpack.c.h.b16 %v1069
    %v1869 = vunpack.c.l.b16 %v1070
    %v1870 = vunpack.c.h.b16 %v1070
    %v1871 = vunpack.c.l.b16 %v1071
    %v1872 = vunpack.c.h.b16 %v1071
    %v1873 = vunpack.c.l.b16 %v1072
    %v1874 = vunpack.c.h.b16 %v1072
    %v1875 = vunpack.c.l.b16 %v1073
    %v1876 = vunpack.c.h.b16 %v1073
    %v1877 = vunpack.c.l.b16 %v1074
    %v1878 = vunpack.c.h.b16 %v1074
    %v1879 = vunpack.c.l.b16 %v1075
    %v1880 = vunpack.c.h.b16 %v1075
    %v1881 = vunpack.c.l.b16 %v1076
    %v1882 = vunpack.c.h.b16 %v1076
    %v1883 = vunpack.c.l.b16 %v1077
    %v1884 = vunpack.c.h.b16 %v1077
    %v1885 = vunpack.c.l.b16 %v1078
    %v1886 = vunpack.c.h.b16 %v1078
    %v1887 = vunpack.c.l.b16 %v1079
    %v1888 = vunpack.c.h.b16 %v1079
    %v1889 = vunpack.c.l.b16 %v1080
    %v1890 = vunpack.c.h.b16 %v1080
    %v1891 = vpack.c.b16 %v1387, %v1379
    %v1892 = vpack.c.b16 %v1388, %v1380
    %v1893 = vpack.c.b16 %v1389, %v1381
    %v1894 = vpack.c.b16 %v1390, %v1382
    %v1895 = vpack.c.b16 %v1391, %v1383
    %v1896 = vpack.c.b16 %v1392, %v1384
    %v1897 = vpack.c.b16 %v1393, %v1385
    %v1898 = vpack.c.b16 %v1394, %v1386
    %v1899 = vpack.c.b16 %v1403, %v1395
    %v1900 = vpack.c.b16 %v1404, %v1396
    %v1901 = vpack.c.b16 %v1405, %v1397
    %v1902 = vpack.c.b16 %v1406, %v1398
    %v1903 = vpack.c.b16 %v1407, %v1399
    %v1904 = vpack.c.b16 %v1408, %v1400
    %v1905 = vpack.c.b16 %v1409, %v1401
    %v1906 = vpack.c.b16 %v1410, %v1402
    %v1907 = vpack.c.b16 %v1419, %v1411
    %v1908 = vpack.c.b16 %v1420, %v1412
    %v1909 = vpack.c.b16 %v1421, %v1413
    %v1910 = vpack.c.b16 %v1422, %v1414
    %v1911 = vpack.c.b16 %v1423, %v1415
    %v1912 = vpack.c.b16 %v1424, %v1416
    %v1913 = vpack.c.b16 %v1425, %v1417
    %v1914 = vpack.c.b16 %v1426, %v1418
    %v1915 = vpack.c.b16 %v1435, %v1427
    %v1916 = vpack.c.b16 %v1436, %v1428
    %v1917 = vpack.c.b16 %v1437, %v1429
    %v1918 = vpack.c.b16 %v1438, %v1430
    %v1919 = vpack.c.b16 %v1439, %v1431
    %v1920 = vpack.c.b16 %v1440, %v1432
    %v1921 = vpack.c.b16 %v1441, %v1433
    %v1922 = vpack.c.b16 %v1442, %v1434
    %v1923 = vpack.c.b16 %v1451, %v1443
    %v1924 = vpack.c.b16 %v1452, %v1444
    %v1925 = vpack.c.b16 %v1453, %v1445
    %v1926 = vpack.c.b16 %v1454, %v1446
    %v1927 = vpack.c.b16 %v1455, %v1447
    %v1928 = vpack.c.b16 %v1456, %v1448
    %v1929 = vpack.c.b16 %v1457, %v1449
    %v1930 = vpack.c.b16 %v1458, %v1450
    %v1931 = vpack.c.b16 %v1467, %v1459
    %v1932 = vpack.c.b16 %v1468, %v1460
    %v1933 = vpack.c.b16 %v1469, %v1461
    %v1934 = vpack.c.b16 %v1470, %v1462
    %v1935 = vpack.c.b16 %v1471, %v1463
    %v1936 = vpack.c.b16 %v1472, %v1464
    %v1937 = vpack.c.b16 %v1473, %v1465
    %v1938 = vpack.c.b16 %v1474, %v1466
    %v1939 = vpack.c.b16 %v1483, %v1475
    %v1940 = vpack.c.b16 %v1484, %v1476
    %v1941 = vpack.c.b16 %v1485, %v1477
    %v1942 = vpack.c.b16 %v1486, %v1478
    %v1943 = vpack.c.b16 %v1487, %v1479
    %v1944 = vpack.c.b16 %v1488, %v1480
    %v1945 = vpack.c.b16 %v1489, %v1481
    %v1946 = vpack.c.b16 %v1490, %v1482
    %v1947 = vpack.c.b16 %v1499, %v1491
    %v1948 = vpack.c.b16 %v1500, %v1492
    %v1949 = vpack.c.b16 %v1501, %v1493
    %v1950 = vpack.c.b16 %v1502, %v1494
    %v1951 = vpack.c.b16 %v1503, %v1495
    %v1952 = vpack.c.b16 %v1504, %v1496
    %v1953 = vpack.c.b16 %v1505, %v1497
    %v1954 = vpack.c.b16 %v1506, %v1498
    %v1955 = vpack.c.b16 %v1515, %v1507
    %v1956 = vpack.c.b16 %v1516, %v1508
    %v1957 = vpack.c.b16 %v1517, %v1509
    %v1958 = vpack.c.b16 %v1518, %v1510
    %v1959 = vpack.c.b16 %v1519, %v1511
    %v1960 = vpack.c.b16 %v1520, %v1512
    %v1961 = vpack.c.b16 %v1521, %v1513
    %v1962 = vpack.c.b16 %v1522, %v1514
    %v1963 = vpack.c.b16 %v1531, %v1523
    %v1964 = vpack.c.b16 %v1532, %v1524
    %v1965 = vpack.c.b16 %v1533, %v1525
    %v1966 = vpack.c.b16 %v1534, %v1526
    %v1967 = vpack.c.b16 %v1535, %v1527
    %v1968 = vpack.c.b16 %v1536, %v1528
    %v1969 = vpack.c.b16 %v1537, %v1529
    %v1970 = vpack.c.b16 %v1538, %v1530
    %v1971 = vpack.c.b16 %v1547, %v1539
    %v1972 = vpack.c.b16 %v1548, %v1540
    %v1973 = vpack.c.b16 %v1549, %v1541
    %v1974 = vpack.c.b16 %v1550, %v1542
    %v1975 = vpack.c.b16 %v1551, %v1543
    %v1976 = vpack.c.b16 %v1552, %v1544
    %v1977 = vpack.c.b16 %v1553, %v1545
    %v1978 = vpack.c.b16 %v1554, %v1546
    %v1979 = vpack.c.b16 %v1563, %v1555
    %v1980 = vpack.c.b16 %v1564, %v1556
    %v1981 = vpack.c.b16 %v1565, %v1557
    %v1982 = vpack.c.b16 %v1566, %v1558
    %v1983 = vpack.c.b16 %v1567, %v1559
    %v1984 = vpack.c.b16 %v1568, %v1560
    %v1985 = vpack.c.b16 %v1569, %v1561
    %v1986 = vpack.c.b16 %v1570, %v1562
    %v1987 = vpack.c.b16 %v1579, %v1571
    %v1988 = vpack.c.b16 %v1580, %v1572
    %v1989 = vpack.c.b16 %v1581, %v1573
    %v1990 = vpack.c.b16 %v1582, %v1574
    %v1991 = vpack.c.b16 %v1583, %v1575
    %v1992 = vpack.c.b16 %v1584, %v1576
    %v1993 = vpack.c.b16 %v1585, %v1577
    %v1994 = vpack.c.b16 %v1586, %v1578
    %v1995 = vpack.c.b16 %v1595, %v1587
    %v1996 = vpack.c.b16 %v1596, %v1588
    %v1997 = vpack.c.b16 %v1597, %v1589
    %v1998 = vpack.c.b16 %v1598, %v1590
    %v1999 = vpack.c.b16 %v1599, %v1591
    %v2000 = vpack.c.b16 %v1600, %v1592
    %v2001 = vpack.c.b16 %v1601, %v1593
    %v2002 = vpack.c.b16 %v1602, %v1594
    %v2003 = vpack.c.b16 %v1611, %v1603
    %v2004 = vpack.c.b16 %v1612, %v1604
    %v2005 = vpack.c.b16 %v1613, %v1605
    %v2006 = vpack.c.b16 %v1614, %v1606
    %v2007 = vpack.c.b16 %v1615, %v1607
    %v2008 = vpack.c.b16 %v1616, %v1608
    %v2009 = vpack.c.b16 %v1617, %v1609
    %v2010 = vpack.c.b16 %v1618, %v1610
    %v2011 = vpack.c.b16 %v1627, %v1619
    %v2012 = vpack.c.b16 %v1628, %v1620
    %v2013 = vpack.c.b16 %v1629, %v1621
    %v2014 = vpack.c.b16 %v1630, %v1622
    %v2015 = vpack.c.b16 %v1631, %v1623
    %v2016 = vpack.c.b16 %v1632, %v1624
    %v2017 = vpack.c.b16 %v1633, %v1625
    %v2018 = vpack.c.b16 %v1634, %v1626
    %v2019 = vpack.c.b16 %v1643, %v1635
    %v2020 = vpack.c.b16 %v1644, %v1636
    %v2021 = vpack.c.b16 %v1645, %v1637
    %v2022 = vpack.c.b16 %v1646, %v1638
    %v2023 = vpack.c.b16 %v1647, %v1639
    %v2024 = vpack.c.b16 %v1648, %v1640
    %v2025 = vpack.c.b16 %v1649, %v1641
    %v2026 = vpack.c.b16 %v1650, %v1642
    %v2027 = vpack.c.b16 %v1659, %v1651
    %v2028 = vpack.c.b16 %v1660, %v1652
    %v2029 = vpack.c.b16 %v1661, %v1653
    %v2030 = vpack.c.b16 %v1662, %v1654
    %v2031 = vpack.c.b16 %v1663, %v1655
    %v2032 = vpack.c.b16 %v1664, %v1656
    %v2033 = vpack.c.b16 %v1665, %v1657
    %v2034 = vpack.c.b16 %v1666, %v1658
    %v2035 = vpack.c.b16 %v1675, %v1667
    %v2036 = vpack.c.b16 %v1676, %v1668
    %v2037 = vpack.c.b16 %v1677, %v1669
    %v2038 = vpack.c.b16 %v1678, %v1670
    %v2039 = vpack.c.b16 %v1679, %v1671
    %v2040 = vpack.c.b16 %v1680, %v1672
    %v2041 = vpack.c.b16 %v1681, %v1673
    %v2042 = vpack.c.b16 %v1682, %v1674
    %v2043 = vpack.c.b16 %v1691, %v1683
    %v2044 = vpack.c.b16 %v1692, %v1684
    %v2045 = vpack.c.b16 %v1693, %v1685
    %v2046 = vpack.c.b16 %v1694, %v1686
    %v2047 = vpack.c.b16 %v1695, %v1687
    %v2048 = vpack.c.b16 %v1696, %v1688
    %v2049 = vpack.c.b16 %v1697, %v1689
    %v2050 = vpack.c.b16 %v1698, %v1690
    %v2051 = vpack.c.b16 %v1707, %v1699
    %v2052 = vpack.c.b16 %v1708, %v1700
    %v2053 = vpack.c.b16 %v1709, %v1701
    %v2054 = vpack.c.b16 %v1710, %v1702
    %v2055 = vpack.c.b16 %v1711, %v1703
    %v2056 = vpack.c.b16 %v1712, %v1704
    %v2057 = vpack.c.b16 %v1713, %v1705
    %v2058 = vpack.c.b16 %v1714, %v1706
    %v2059 = vpack.c.b16 %v1723, %v1715
    %v2060 = vpack.c.b16 %v1724, %v1716
    %v2061 = vpack.c.b16 %v1725, %v1717
    %v2062 = vpack.c.b16 %v1726, %v1718
    %v2063 = vpack.c.b16 %v1727, %v1719
    %v2064 = vpack.c.b16 %v1728, %v1720
    %v2065 = vpack.c.b16 %v1729, %v1721
    %v2066 = vpack.c.b16 %v1730, %v1722
    %v2067 = vpack.c.b16 %v1739, %v1731
    %v2068 = vpack.c.b16 %v1740, %v1732
    %v2069 = vpack.c.b16 %v1741, %v1733
    %v2070 = vpack.c.b16 %v1742, %v1734
    %v2071 = vpack.c.b16 %v1743, %v1735
    %v2072 = vpack.c.b16 %v1744, %v1736
    %v2073 = vpack.c.b16 %v1745, %v1737
    %v2074 = vpack.c.b16 %v1746, %v1738
    %v2075 = vpack.c.b16 %v1755, %v1747
    %v2076 = vpack.c.b16 %v1756, %v1748
    %v2077 = vpack.c.b16 %v1757, %v1749
    %v2078 = vpack.c.b16 %v1758, %v1750
    %v2079 = vpack.c.b16 %v1759, %v1751
    %v2080 = vpack.c.b16 %v1760, %v1752
    %v2081 = vpack.c.b16 %v1761, %v1753
    %v2082 = vpack.c.b16 %v1762, %v1754
    %v2083 = vpack.c.b16 %v1771, %v1763
    %v2084 = vpack.c.b16 %v1772, %v1764
    %v2085 = vpack.c.b16 %v1773, %v1765
    %v2086 = vpack.c.b16 %v1774, %v1766
    %v2087 = vpack.c.b16 %v1775, %v1767
    %v2088 = vpack.c.b16 %v1776, %v1768
    %v2089 = vpack.c.b16 %v1777, %v1769
    %v2090 = vpack.c.b16 %v1778, %v1770
    %v2091 = vpack.c.b16 %v1787, %v1779
    %v2092 = vpack.c.b16 %v1788, %v1780
    %v2093 = vpack.c.b16 %v1789, %v1781
    %v2094 = vpack.c.b16 %v1790, %v1782
    %v2095 = vpack.c.b16 %v1791, %v1783
    %v2096 = vpack.c.b16 %v1792, %v1784
    %v2097 = vpack.c.b16 %v1793, %v1785
    %v2098 = vpack.c.b16 %v1794, %v1786
    %v2099 = vpack.c.b16 %v1803, %v1795
    %v2100 = vpack.c.b16 %v1804, %v1796
    %v2101 = vpack.c.b16 %v1805, %v1797
    %v2102 = vpack.c.b16 %v1806, %v1798
    %v2103 = vpack.c.b16 %v1807, %v1799
    %v2104 = vpack.c.b16 %v1808, %v1800
    %v2105 = vpack.c.b16 %v1809, %v1801
    %v2106 = vpack.c.b16 %v1810, %v1802
    %v2107 = vpack.c.b16 %v1819, %v1811
    %v2108 = vpack.c.b16 %v1820, %v1812
    %v2109 = vpack.c.b16 %v1821, %v1813
    %v2110 = vpack.c.b16 %v1822, %v1814
    %v2111 = vpack.c.b16 %v1823, %v1815
    %v2112 = vpack.c.b16 %v1824, %v1816
    %v2113 = vpack.c.b16 %v1825, %v1817
    %v2114 = vpack.c.b16 %v1826, %v1818
    %v2115 = vpack.c.b16 %v1835, %v1827
    %v2116 = vpack.c.b16 %v1836, %v1828
    %v2117 = vpack.c.b16 %v1837, %v1829
    %v2118 = vpack.c.b16 %v1838, %v1830
    %v2119 = vpack.c.b16 %v1839, %v1831
    %v2120 = vpack.c.b16 %v1840, %v1832
    %v2121 = vpack.c.b16 %v1841, %v1833
    %v2122 = vpack.c.b16 %v1842, %v1834
    %v2123 = vpack.c.b16 %v1851, %v1843
    %v2124 = vpack.c.b16 %v1852, %v1844
    %v2125 = vpack.c.b16 %v1853, %v1845
    %v2126 = vpack.c.b16 %v1854, %v1846
    %v2127 = vpack.c.b16 %v1855, %v1847
    %v2128 = vpack.c.b16 %v1856, %v1848
    %v2129 = vpack.c.b16 %v1857, %v1849
    %v2130 = vpack.c.b16 %v1858, %v1850
    %v2131 = vpack.c.b16 %v1867, %v1859
    %v2132 = vpack.c.b16 %v1868, %v1860
    %v2133 = vpack.c.b16 %v1869, %v1861
    %v2134 = vpack.c.b16 %v1870, %v1862
    %v2135 = vpack.c.b16 %v1871, %v1863
    %v2136 = vpack.c.b16 %v1872, %v1864
    %v2137 = vpack.c.b16 %v1873, %v1865
    %v2138 = vpack.c.b16 %v1874, %v1866
    %v2139 = vpack.c.b16 %v1883, %v1875
    %v2140 = vpack.c.b16 %v1884, %v1876
    %v2141 = vpack.c.b16 %v1885, %v1877
    %v2142 = vpack.c.b16 %v1886, %v1878
    %v2143 = vpack.c.b16 %v1887, %v1879
    %v2144 = vpack.c.b16 %v1888, %v1880
    %v2145 = vpack.c.b16 %v1889, %v1881
    %v2146 = vpack.c.b16 %v1890, %v1882
    %2403 = vmatprep.subr.bf16.mxu0 %v1948
    %2404 = vmatpush1.bf16.msra.mxu0 %v1947
    %2405 = vmatprep.subr.bf16.mxu0 %v1940
    %2406 = vmatpush1.bf16.msra.mxu0 %v1939
    %2407 = vmatprep.subr.bf16.mxu0 %v1932
    %2408 = vmatpush1.bf16.msra.mxu0 %v1931
    %2409 = vmatprep.subr.bf16.mxu0 %v1924
    %2410 = vmatpush1.bf16.msra.mxu0 %v1923
    %2411 = vmatprep.subr.bf16.mxu0 %v1916
    %2412 = vmatpush1.bf16.msra.mxu0 %v1915
    %2413 = vmatprep.subr.bf16.mxu0 %v1908
    %2414 = vmatpush1.bf16.msra.mxu0 %v1907
    %2415 = vmatprep.subr.bf16.mxu0 %v1900
    %2416 = vmatpush1.bf16.msra.mxu0 %v1899
    %2417 = vmatprep.subr.bf16.mxu0 %v1892
    %2418 = vmatpush1.bf16.msra.mxu0 %v1891
    %2419 = vmatprep.subr.bf16.mxu0 %v2012
    %2420 = vmatpush2.bf16.msra.mxu0 %v2011
    %2421 = vmatprep.subr.bf16.mxu0 %v2004
    %2422 = vmatpush2.bf16.msra.mxu0 %v2003
    %2423 = vmatprep.subr.bf16.mxu0 %v1996
    %2424 = vmatpush2.bf16.msra.mxu0 %v1995
    %2425 = vmatprep.subr.bf16.mxu0 %v1988
    %2426 = vmatpush2.bf16.msra.mxu0 %v1987
    %2427 = vmatprep.subr.bf16.mxu0 %v1980
    %2428 = vmatpush2.bf16.msra.mxu0 %v1979
    %2429 = vmatprep.subr.bf16.mxu0 %v1972
    %2430 = vmatpush2.bf16.msra.mxu0 %v1971
    %2431 = vmatprep.subr.bf16.mxu0 %v1964
    %2432 = vmatpush2.bf16.msra.mxu0 %v1963
    %2433 = vmatprep.subr.bf16.mxu0 %v1956
    %2434 = vmatpush2.bf16.msra.mxu0 %v1955
    %2435 = vmatprep.mubr.bf16.mxu0 %v822
    %2436 = vmatmul.mubr.bf16.gmra.mxu0 %v821
    %v2437 = vpop.f32.mrf.mxu0
    %v2438 = vadd.f32 %v1086, %v2437
    %v2439 = vpop.f32.mrf.mxu0
    %v2440 = vadd.f32 %v1090, %v2439
    %v2441 = vpop.f32.mrf.mxu0
    %v2442 = vadd.f32 %v1086, %v2441
    %v2443 = vpop.f32.mrf.mxu0
    %v2444 = vadd.f32 %v1090, %v2443
    %2445 = vdwg.mxu0
    %2446 = vmatprep.subr.bf16.mxu0 %v2076
    %2447 = vmatpush1.bf16.msra.mxu0 %v2075
    %2448 = vmatprep.subr.bf16.mxu0 %v2068
    %2449 = vmatpush1.bf16.msra.mxu0 %v2067
    %2450 = vmatprep.subr.bf16.mxu0 %v2060
    %2451 = vmatpush1.bf16.msra.mxu0 %v2059
    %2452 = vmatprep.subr.bf16.mxu0 %v2052
    %2453 = vmatpush1.bf16.msra.mxu0 %v2051
    %2454 = vmatprep.subr.bf16.mxu0 %v2044
    %2455 = vmatpush1.bf16.msra.mxu0 %v2043
    %2456 = vmatprep.subr.bf16.mxu0 %v2036
    %2457 = vmatpush1.bf16.msra.mxu0 %v2035
    %2458 = vmatprep.subr.bf16.mxu0 %v2028
    %2459 = vmatpush1.bf16.msra.mxu0 %v2027
    %2460 = vmatprep.subr.bf16.mxu0 %v2020
    %2461 = vmatpush1.bf16.msra.mxu0 %v2019
    %2462 = vmatprep.subr.bf16.mxu0 %v2140
    %2463 = vmatpush2.bf16.msra.mxu0 %v2139
    %2464 = vmatprep.subr.bf16.mxu0 %v2132
    %2465 = vmatpush2.bf16.msra.mxu0 %v2131
    %2466 = vmatprep.subr.bf16.mxu0 %v2124
    %2467 = vmatpush2.bf16.msra.mxu0 %v2123
    %2468 = vmatprep.subr.bf16.mxu0 %v2116
    %2469 = vmatpush2.bf16.msra.mxu0 %v2115
    %2470 = vmatprep.subr.bf16.mxu0 %v2108
    %2471 = vmatpush2.bf16.msra.mxu0 %v2107
    %2472 = vmatprep.subr.bf16.mxu0 %v2100
    %2473 = vmatpush2.bf16.msra.mxu0 %v2099
    %2474 = vmatprep.subr.bf16.mxu0 %v2092
    %2475 = vmatpush2.bf16.msra.mxu0 %v2091
    %2476 = vmatprep.subr.bf16.mxu0 %v2084
    %2477 = vmatpush2.bf16.msra.mxu0 %v2083
    %2478 = vmatprep.mubr.bf16.mxu0 %v824
    %2479 = vmatmul.mubr.bf16.gmra.mxu0 %v823
    %v2480 = vpop.f32.mrf.mxu0
    %v2481 = vadd.f32 %v2438, %v2480
    %v2482 = vpop.f32.mrf.mxu0
    %v2483 = vadd.f32 %v2440, %v2482
    %v2484 = vpop.f32.mrf.mxu0
    %v2485 = vadd.f32 %v2442, %v2484
    %v2486 = vpop.f32.mrf.mxu0
    %v2487 = vadd.f32 %v2444, %v2486
    %2488 = vdwg.mxu0
    %2489 = vmatprep.subr.bf16.mxu0 %v1950
    %2490 = vmatpush1.bf16.msra.mxu0 %v1949
    %2491 = vmatprep.subr.bf16.mxu0 %v1942
    %2492 = vmatpush1.bf16.msra.mxu0 %v1941
    %2493 = vmatprep.subr.bf16.mxu0 %v1934
    %2494 = vmatpush1.bf16.msra.mxu0 %v1933
    %2495 = vmatprep.subr.bf16.mxu0 %v1926
    %2496 = vmatpush1.bf16.msra.mxu0 %v1925
    %2497 = vmatprep.subr.bf16.mxu0 %v1918
    %2498 = vmatpush1.bf16.msra.mxu0 %v1917
    %2499 = vmatprep.subr.bf16.mxu0 %v1910
    %2500 = vmatpush1.bf16.msra.mxu0 %v1909
    %2501 = vmatprep.subr.bf16.mxu0 %v1902
    %2502 = vmatpush1.bf16.msra.mxu0 %v1901
    %2503 = vmatprep.subr.bf16.mxu0 %v1894
    %2504 = vmatpush1.bf16.msra.mxu0 %v1893
    %2505 = vmatprep.subr.bf16.mxu0 %v2014
    %2506 = vmatpush2.bf16.msra.mxu0 %v2013
    %2507 = vmatprep.subr.bf16.mxu0 %v2006
    %2508 = vmatpush2.bf16.msra.mxu0 %v2005
    %2509 = vmatprep.subr.bf16.mxu0 %v1998
    %2510 = vmatpush2.bf16.msra.mxu0 %v1997
    %2511 = vmatprep.subr.bf16.mxu0 %v1990
    %2512 = vmatpush2.bf16.msra.mxu0 %v1989
    %2513 = vmatprep.subr.bf16.mxu0 %v1982
    %2514 = vmatpush2.bf16.msra.mxu0 %v1981
    %2515 = vmatprep.subr.bf16.mxu0 %v1974
    %2516 = vmatpush2.bf16.msra.mxu0 %v1973
    %2517 = vmatprep.subr.bf16.mxu0 %v1966
    %2518 = vmatpush2.bf16.msra.mxu0 %v1965
    %2519 = vmatprep.subr.bf16.mxu0 %v1958
    %2520 = vmatpush2.bf16.msra.mxu0 %v1957
    %2521 = vmatprep.mubr.bf16.mxu0 %v822
    %2522 = vmatmul.mubr.bf16.gmra.mxu0 %v821
    %v2523 = vpop.f32.mrf.mxu0
    %v2524 = vadd.f32 %v1094, %v2523
    %v2525 = vpop.f32.mrf.mxu0
    %v2526 = vadd.f32 %v1098, %v2525
    %v2527 = vpop.f32.mrf.mxu0
    %v2528 = vadd.f32 %v1094, %v2527
    %v2529 = vpop.f32.mrf.mxu0
    %v2530 = vadd.f32 %v1098, %v2529
    %2531 = vdwg.mxu0
    %2532 = vmatprep.subr.bf16.mxu0 %v2078
    %2533 = vmatpush1.bf16.msra.mxu0 %v2077
    %2534 = vmatprep.subr.bf16.mxu0 %v2070
    %2535 = vmatpush1.bf16.msra.mxu0 %v2069
    %2536 = vmatprep.subr.bf16.mxu0 %v2062
    %2537 = vmatpush1.bf16.msra.mxu0 %v2061
    %2538 = vmatprep.subr.bf16.mxu0 %v2054
    %2539 = vmatpush1.bf16.msra.mxu0 %v2053
    %2540 = vmatprep.subr.bf16.mxu0 %v2046
    %2541 = vmatpush1.bf16.msra.mxu0 %v2045
    %2542 = vmatprep.subr.bf16.mxu0 %v2038
    %2543 = vmatpush1.bf16.msra.mxu0 %v2037
    %2544 = vmatprep.subr.bf16.mxu0 %v2030
    %2545 = vmatpush1.bf16.msra.mxu0 %v2029
    %2546 = vmatprep.subr.bf16.mxu0 %v2022
    %2547 = vmatpush1.bf16.msra.mxu0 %v2021
    %2548 = vmatprep.subr.bf16.mxu0 %v2142
    %2549 = vmatpush2.bf16.msra.mxu0 %v2141
    %2550 = vmatprep.subr.bf16.mxu0 %v2134
    %2551 = vmatpush2.bf16.msra.mxu0 %v2133
    %2552 = vmatprep.subr.bf16.mxu0 %v2126
    %2553 = vmatpush2.bf16.msra.mxu0 %v2125
    %2554 = vmatprep.subr.bf16.mxu0 %v2118
    %2555 = vmatpush2.bf16.msra.mxu0 %v2117
    %2556 = vmatprep.subr.bf16.mxu0 %v2110
    %2557 = vmatpush2.bf16.msra.mxu0 %v2109
    %2558 = vmatprep.subr.bf16.mxu0 %v2102
    %2559 = vmatpush2.bf16.msra.mxu0 %v2101
    %2560 = vmatprep.subr.bf16.mxu0 %v2094
    %2561 = vmatpush2.bf16.msra.mxu0 %v2093
    %2562 = vmatprep.subr.bf16.mxu0 %v2086
    %2563 = vmatpush2.bf16.msra.mxu0 %v2085
    %2564 = vmatprep.mubr.bf16.mxu0 %v824
    %2565 = vmatmul.mubr.bf16.gmra.mxu0 %v823
    %v2566 = vpop.f32.mrf.mxu0
    %v2567 = vadd.f32 %v2524, %v2566
    %v2568 = vpop.f32.mrf.mxu0
    %v2569 = vadd.f32 %v2526, %v2568
    %v2570 = vpop.f32.mrf.mxu0
    %v2571 = vadd.f32 %v2528, %v2570
    %v2572 = vpop.f32.mrf.mxu0
    %v2573 = vadd.f32 %v2530, %v2572
    %2574 = vdwg.mxu0
    %2575 = vmatprep.subr.bf16.mxu0 %v1952
    %2576 = vmatpush1.bf16.msra.mxu0 %v1951
    %2577 = vmatprep.subr.bf16.mxu0 %v1944
    %2578 = vmatpush1.bf16.msra.mxu0 %v1943
    %2579 = vmatprep.subr.bf16.mxu0 %v1936
    %2580 = vmatpush1.bf16.msra.mxu0 %v1935
    %2581 = vmatprep.subr.bf16.mxu0 %v1928
    %2582 = vmatpush1.bf16.msra.mxu0 %v1927
    %2583 = vmatprep.subr.bf16.mxu0 %v1920
    %2584 = vmatpush1.bf16.msra.mxu0 %v1919
    %2585 = vmatprep.subr.bf16.mxu0 %v1912
    %2586 = vmatpush1.bf16.msra.mxu0 %v1911
    %2587 = vmatprep.subr.bf16.mxu0 %v1904
    %2588 = vmatpush1.bf16.msra.mxu0 %v1903
    %2589 = vmatprep.subr.bf16.mxu0 %v1896
    %2590 = vmatpush1.bf16.msra.mxu0 %v1895
    %2591 = vmatprep.subr.bf16.mxu0 %v2016
    %2592 = vmatpush2.bf16.msra.mxu0 %v2015
    %2593 = vmatprep.subr.bf16.mxu0 %v2008
    %2594 = vmatpush2.bf16.msra.mxu0 %v2007
    %2595 = vmatprep.subr.bf16.mxu0 %v2000
    %2596 = vmatpush2.bf16.msra.mxu0 %v1999
    %2597 = vmatprep.subr.bf16.mxu0 %v1992
    %2598 = vmatpush2.bf16.msra.mxu0 %v1991
    %2599 = vmatprep.subr.bf16.mxu0 %v1984
    %2600 = vmatpush2.bf16.msra.mxu0 %v1983
    %2601 = vmatprep.subr.bf16.mxu0 %v1976
    %2602 = vmatpush2.bf16.msra.mxu0 %v1975
    %2603 = vmatprep.subr.bf16.mxu0 %v1968
    %2604 = vmatpush2.bf16.msra.mxu0 %v1967
    %2605 = vmatprep.subr.bf16.mxu0 %v1960
    %2606 = vmatpush2.bf16.msra.mxu0 %v1959
    %2607 = vmatprep.mubr.bf16.mxu0 %v822
    %2608 = vmatmul.mubr.bf16.gmra.mxu0 %v821
    %v2609 = vpop.f32.mrf.mxu0
    %v2610 = vadd.f32 %v1102, %v2609
    %v2611 = vpop.f32.mrf.mxu0
    %v2612 = vadd.f32 %v1106, %v2611
    %v2613 = vpop.f32.mrf.mxu0
    %v2614 = vadd.f32 %v1102, %v2613
    %v2615 = vpop.f32.mrf.mxu0
    %v2616 = vadd.f32 %v1106, %v2615
    %2617 = vdwg.mxu0
    %2618 = vmatprep.subr.bf16.mxu0 %v2080
    %2619 = vmatpush1.bf16.msra.mxu0 %v2079
    %2620 = vmatprep.subr.bf16.mxu0 %v2072
    %2621 = vmatpush1.bf16.msra.mxu0 %v2071
    %2622 = vmatprep.subr.bf16.mxu0 %v2064
    %2623 = vmatpush1.bf16.msra.mxu0 %v2063
    %2624 = vmatprep.subr.bf16.mxu0 %v2056
    %2625 = vmatpush1.bf16.msra.mxu0 %v2055
    %2626 = vmatprep.subr.bf16.mxu0 %v2048
    %2627 = vmatpush1.bf16.msra.mxu0 %v2047
    %2628 = vmatprep.subr.bf16.mxu0 %v2040
    %2629 = vmatpush1.bf16.msra.mxu0 %v2039
    %2630 = vmatprep.subr.bf16.mxu0 %v2032
    %2631 = vmatpush1.bf16.msra.mxu0 %v2031
    %2632 = vmatprep.subr.bf16.mxu0 %v2024
    %2633 = vmatpush1.bf16.msra.mxu0 %v2023
    %2634 = vmatprep.subr.bf16.mxu0 %v2144
    %2635 = vmatpush2.bf16.msra.mxu0 %v2143
    %2636 = vmatprep.subr.bf16.mxu0 %v2136
    %2637 = vmatpush2.bf16.msra.mxu0 %v2135
    %2638 = vmatprep.subr.bf16.mxu0 %v2128
    %2639 = vmatpush2.bf16.msra.mxu0 %v2127
    %2640 = vmatprep.subr.bf16.mxu0 %v2120
    %2641 = vmatpush2.bf16.msra.mxu0 %v2119
    %2642 = vmatprep.subr.bf16.mxu0 %v2112
    %2643 = vmatpush2.bf16.msra.mxu0 %v2111
    %2644 = vmatprep.subr.bf16.mxu0 %v2104
    %2645 = vmatpush2.bf16.msra.mxu0 %v2103
    %2646 = vmatprep.subr.bf16.mxu0 %v2096
    %2647 = vmatpush2.bf16.msra.mxu0 %v2095
    %2648 = vmatprep.subr.bf16.mxu0 %v2088
    %2649 = vmatpush2.bf16.msra.mxu0 %v2087
    %2650 = vmatprep.mubr.bf16.mxu0 %v824
    %2651 = vmatmul.mubr.bf16.gmra.mxu0 %v823
    %v2652 = vpop.f32.mrf.mxu0
    %v2653 = vadd.f32 %v2610, %v2652
    %v2654 = vpop.f32.mrf.mxu0
    %v2655 = vadd.f32 %v2612, %v2654
    %v2656 = vpop.f32.mrf.mxu0
    %v2657 = vadd.f32 %v2614, %v2656
    %v2658 = vpop.f32.mrf.mxu0
    %v2659 = vadd.f32 %v2616, %v2658
    %2660 = vdwg.mxu0
    %2661 = vmatprep.subr.bf16.mxu0 %v1954
    %2662 = vmatpush1.bf16.msra.mxu0 %v1953
    %2663 = vmatprep.subr.bf16.mxu0 %v1946
    %2664 = vmatpush1.bf16.msra.mxu0 %v1945
    %2665 = vmatprep.subr.bf16.mxu0 %v1938
    %2666 = vmatpush1.bf16.msra.mxu0 %v1937
    %2667 = vmatprep.subr.bf16.mxu0 %v1930
    %2668 = vmatpush1.bf16.msra.mxu0 %v1929
    %2669 = vmatprep.subr.bf16.mxu0 %v1922
    %2670 = vmatpush1.bf16.msra.mxu0 %v1921
    %2671 = vmatprep.subr.bf16.mxu0 %v1914
    %2672 = vmatpush1.bf16.msra.mxu0 %v1913
    %2673 = vmatprep.subr.bf16.mxu0 %v1906
    %2674 = vmatpush1.bf16.msra.mxu0 %v1905
    %2675 = vmatprep.subr.bf16.mxu0 %v1898
    %2676 = vmatpush1.bf16.msra.mxu0 %v1897
    %2677 = vmatprep.subr.bf16.mxu0 %v2018
    %2678 = vmatpush2.bf16.msra.mxu0 %v2017
    %2679 = vmatprep.subr.bf16.mxu0 %v2010
    %2680 = vmatpush2.bf16.msra.mxu0 %v2009
    %2681 = vmatprep.subr.bf16.mxu0 %v2002
    %2682 = vmatpush2.bf16.msra.mxu0 %v2001
    %2683 = vmatprep.subr.bf16.mxu0 %v1994
    %2684 = vmatpush2.bf16.msra.mxu0 %v1993
    %2685 = vmatprep.subr.bf16.mxu0 %v1986
    %2686 = vmatpush2.bf16.msra.mxu0 %v1985
    %2687 = vmatprep.subr.bf16.mxu0 %v1978
    %2688 = vmatpush2.bf16.msra.mxu0 %v1977
    %2689 = vmatprep.subr.bf16.mxu0 %v1970
    %2690 = vmatpush2.bf16.msra.mxu0 %v1969
    %2691 = vmatprep.subr.bf16.mxu0 %v1962
    %2692 = vmatpush2.bf16.msra.mxu0 %v1961
    %2693 = vmatprep.mubr.bf16.mxu0 %v822
    %2694 = vmatmul.mubr.bf16.gmra.mxu0 %v821
    %v2695 = vpop.f32.mrf.mxu0
    %v2696 = vadd.f32 %v1110, %v2695
    %v2697 = vpop.f32.mrf.mxu0
    %v2698 = vadd.f32 %v1114, %v2697
    %v2699 = vpop.f32.mrf.mxu0
    %v2700 = vadd.f32 %v1110, %v2699
    %v2701 = vpop.f32.mrf.mxu0
    %v2702 = vadd.f32 %v1114, %v2701
    %2703 = vdwg.mxu0
    %2704 = vmatprep.subr.bf16.mxu0 %v2082
    %2705 = vmatpush1.bf16.msra.mxu0 %v2081
    %2706 = vmatprep.subr.bf16.mxu0 %v2074
    %2707 = vmatpush1.bf16.msra.mxu0 %v2073
    %2708 = vmatprep.subr.bf16.mxu0 %v2066
    %2709 = vmatpush1.bf16.msra.mxu0 %v2065
    %2710 = vmatprep.subr.bf16.mxu0 %v2058
    %2711 = vmatpush1.bf16.msra.mxu0 %v2057
    %2712 = vmatprep.subr.bf16.mxu0 %v2050
    %2713 = vmatpush1.bf16.msra.mxu0 %v2049
    %2714 = vmatprep.subr.bf16.mxu0 %v2042
    %2715 = vmatpush1.bf16.msra.mxu0 %v2041
    %2716 = vmatprep.subr.bf16.mxu0 %v2034
    %2717 = vmatpush1.bf16.msra.mxu0 %v2033
    %2718 = vmatprep.subr.bf16.mxu0 %v2026
    %2719 = vmatpush1.bf16.msra.mxu0 %v2025
    %2720 = vmatprep.subr.bf16.mxu0 %v2146
    %2721 = vmatpush2.bf16.msra.mxu0 %v2145
    %2722 = vmatprep.subr.bf16.mxu0 %v2138
    %2723 = vmatpush2.bf16.msra.mxu0 %v2137
    %2724 = vmatprep.subr.bf16.mxu0 %v2130
    %2725 = vmatpush2.bf16.msra.mxu0 %v2129
    %2726 = vmatprep.subr.bf16.mxu0 %v2122
    %2727 = vmatpush2.bf16.msra.mxu0 %v2121
    %2728 = vmatprep.subr.bf16.mxu0 %v2114
    %2729 = vmatpush2.bf16.msra.mxu0 %v2113
    %2730 = vmatprep.subr.bf16.mxu0 %v2106
    %2731 = vmatpush2.bf16.msra.mxu0 %v2105
    %2732 = vmatprep.subr.bf16.mxu0 %v2098
    %2733 = vmatpush2.bf16.msra.mxu0 %v2097
    %2734 = vmatprep.subr.bf16.mxu0 %v2090
    %2735 = vmatpush2.bf16.msra.mxu0 %v2089
    %2736 = vmatprep.mubr.bf16.mxu0 %v824
    %2737 = vmatmul.mubr.bf16.gmra.mxu0 %v823
    %v2738 = vpop.f32.mrf.mxu0
    %v2739 = vadd.f32 %v2696, %v2738
    %v2740 = vpop.f32.mrf.mxu0
    %v2741 = vadd.f32 %v2698, %v2740
    %v2742 = vpop.f32.mrf.mxu0
    %v2743 = vadd.f32 %v2700, %v2742
    %v2744 = vpop.f32.mrf.mxu0
    %v2745 = vadd.f32 %v2702, %v2744
    %2746 = vdwg.mxu0
    %v2747 = vmax.f32 %v2481, 0.0
    %v2748 = vmax.f32 %v2483, 0.0
    %v2749 = vmax.f32 %v2567, 0.0
    %v2750 = vmax.f32 %v2569, 0.0
    %v2751 = vmax.f32 %v2653, 0.0
    %v2752 = vmax.f32 %v2655, 0.0
    %v2753 = vmax.f32 %v2739, 0.0
    %v2754 = vmax.f32 %v2741, 0.0
    %v2755 = vmax.f32 %v2485, 0.0
    %v2756 = vmax.f32 %v2487, 0.0
    %v2757 = vmax.f32 %v2571, 0.0
    %v2758 = vmax.f32 %v2573, 0.0
    %v2759 = vmax.f32 %v2657, 0.0
    %v2760 = vmax.f32 %v2659, 0.0
    %v2761 = vmax.f32 %v2743, 0.0
    %v2762 = vmax.f32 %v2745, 0.0
    %v2763 = vpack.c.bf16 %v2755, %v2747
    %v2764 = vpack.c.bf16 %v2756, %v2748
    %v2765 = vpack.c.bf16 %v2757, %v2749
    %v2766 = vpack.c.bf16 %v2758, %v2750
    %v2767 = vpack.c.bf16 %v2759, %v2751
    %v2768 = vpack.c.bf16 %v2760, %v2752
    %v2769 = vpack.c.bf16 %v2761, %v2753
    %v2770 = vpack.c.bf16 %v2762, %v2754
    %v2771 = vld [vmem:[#allocation15] sm:$0xff]
    %v2772 = vld [vmem:[#allocation15 + $0x8] sm:$0xff]
    %v2773 = vld [vmem:[#allocation15 + $0x10] sm:$0xff]
    %v2774 = vld [vmem:[#allocation15 + $0x18] sm:$0xf]
    %v2775 = vld [vmem:[#allocation15 + $0x1c] sm:$0xff]
    %v2776 = vld [vmem:[#allocation15 + $0x24] sm:$0xff]
    %v2777 = vld [vmem:[#allocation15 + $0x2c] sm:$0xff]
    %v2778 = vld [vmem:[#allocation15 + $0x34] sm:$0xf]
    %v2779 = vld [vmem:[#allocation15 + $0x38] sm:$0xff]
    %v2780 = vld [vmem:[#allocation15 + $0x40] sm:$0xff]
    %v2781 = vld [vmem:[#allocation15 + $0x48] sm:$0xff]
    %v2782 = vld [vmem:[#allocation15 + $0x50] sm:$0xf]
    %v2783 = vld [vmem:[#allocation15 + $0x54] sm:$0xff]
    %v2784 = vld [vmem:[#allocation15 + $0x5c] sm:$0xff]
    %v2785 = vld [vmem:[#allocation15 + $0x64] sm:$0xff]
    %v2786 = vld [vmem:[#allocation15 + $0x6c] sm:$0xf]
    %v2787 = vld [vmem:[#allocation15 + $0x70] sm:$0xff]
    %v2788 = vld [vmem:[#allocation15 + $0x78] sm:$0xff]
    %v2789 = vld [vmem:[#allocation15 + $0x80] sm:$0xff]
    %v2790 = vld [vmem:[#allocation15 + $0x88] sm:$0xf]
    %v2791 = vld [vmem:[#allocation15 + $0x8c] sm:$0xff]
    %v2792 = vld [vmem:[#allocation15 + $0x94] sm:$0xff]
    %v2793 = vld [vmem:[#allocation15 + $0x9c] sm:$0xff]
    %v2794 = vld [vmem:[#allocation15 + $0xa4] sm:$0xf]
    %v2795 = vld [vmem:[#allocation15 + $0xa8] sm:$0xff]
    %v2796 = vld [vmem:[#allocation15 + $0xb0] sm:$0xff]
    %v2797 = vld [vmem:[#allocation15 + $0xb8] sm:$0xff]
    %v2798 = vld [vmem:[#allocation15 + $0xc0] sm:$0xf]
    %v2799 = vld [vmem:[#allocation15 + $0xc4] sm:$0xff]
    %v2800 = vld [vmem:[#allocation15 + $0xcc] sm:$0xff]
    %v2801 = vld [vmem:[#allocation15 + $0xd4] sm:$0xff]
    %v2802 = vld [vmem:[#allocation15 + $0xdc] sm:$0xf]
    %v2803 = vld [vmem:[#allocation15 + $0xe0] sm:$0xff]
    %v2804 = vld [vmem:[#allocation15 + $0xe8] sm:$0xff]
    %v2805 = vld [vmem:[#allocation15 + $0xf0] sm:$0xff]
    %v2806 = vld [vmem:[#allocation15 + $0xf8] sm:$0xf]
    %v2807 = vld [vmem:[#allocation15 + $0xfc] sm:$0xff]
    %v2808 = vld [vmem:[#allocation15 + $0x104] sm:$0xff]
    %v2809 = vld [vmem:[#allocation15 + $0x10c] sm:$0xff]
    %v2810 = vld [vmem:[#allocation15 + $0x114] sm:$0xf]
    %v2811 = vld [vmem:[#allocation15 + $0x118] sm:$0xff]
    %v2812 = vld [vmem:[#allocation15 + $0x120] sm:$0xff]
    %v2813 = vld [vmem:[#allocation15 + $0x128] sm:$0xff]
    %v2814 = vld [vmem:[#allocation15 + $0x130] sm:$0xf]
    %v2815 = vld [vmem:[#allocation15 + $0x134] sm:$0xff]
    %v2816 = vld [vmem:[#allocation15 + $0x13c] sm:$0xff]
    %v2817 = vld [vmem:[#allocation15 + $0x144] sm:$0xff]
    %v2818 = vld [vmem:[#allocation15 + $0x14c] sm:$0xf]
    %v2819 = vld [vmem:[#allocation15 + $0x150] sm:$0xff]
    %v2820 = vld [vmem:[#allocation15 + $0x158] sm:$0xff]
    %v2821 = vld [vmem:[#allocation15 + $0x160] sm:$0xff]
    %v2822 = vld [vmem:[#allocation15 + $0x168] sm:$0xf]
    %v2823 = vld [vmem:[#allocation15 + $0x16c] sm:$0xff]
    %v2824 = vld [vmem:[#allocation15 + $0x174] sm:$0xff]
    %v2825 = vld [vmem:[#allocation15 + $0x17c] sm:$0xff]
    %v2826 = vld [vmem:[#allocation15 + $0x184] sm:$0xf]
    %v2827 = vld [vmem:[#allocation15 + $0x188] sm:$0xff]
    %v2828 = vld [vmem:[#allocation15 + $0x190] sm:$0xff]
    %v2829 = vld [vmem:[#allocation15 + $0x198] sm:$0xff]
    %v2830 = vld [vmem:[#allocation15 + $0x1a0] sm:$0xf]
    %v2831 = vld [vmem:[#allocation15 + $0x1a4] sm:$0xff]
    %v2832 = vld [vmem:[#allocation15 + $0x1ac] sm:$0xff]
    %v2833 = vld [vmem:[#allocation15 + $0x1b4] sm:$0xff]
    %v2834 = vld [vmem:[#allocation15 + $0x1bc] sm:$0xf]
    %v2835 = vld [vmem:[#allocation15 + $0x1c0] sm:$0xff]
    %v2836 = vld [vmem:[#allocation15 + $0x1c8] sm:$0xff]
    %v2837 = vld [vmem:[#allocation15 + $0x1d0] sm:$0xff]
    %v2838 = vld [vmem:[#allocation15 + $0x1d8] sm:$0xf]
    %v2839 = vld [vmem:[#allocation15 + $0x1dc] sm:$0xff]
    %v2840 = vld [vmem:[#allocation15 + $0x1e4] sm:$0xff]
    %v2841 = vld [vmem:[#allocation15 + $0x1ec] sm:$0xff]
    %v2842 = vld [vmem:[#allocation15 + $0x1f4] sm:$0xf]
    %v2843 = vld [vmem:[#allocation15 + $0x1f8] sm:$0xff]
    %v2844 = vld [vmem:[#allocation15 + $0x200] sm:$0xff]
    %v2845 = vld [vmem:[#allocation15 + $0x208] sm:$0xff]
    %v2846 = vld [vmem:[#allocation15 + $0x210] sm:$0xf]
    %v2847 = vld [vmem:[#allocation15 + $0x214] sm:$0xff]
    %v2848 = vld [vmem:[#allocation15 + $0x21c] sm:$0xff]
    %v2849 = vld [vmem:[#allocation15 + $0x224] sm:$0xff]
    %v2850 = vld [vmem:[#allocation15 + $0x22c] sm:$0xf]
    %v2851 = vld [vmem:[#allocation15 + $0x230] sm:$0xff]
    %v2852 = vld [vmem:[#allocation15 + $0x238] sm:$0xff]
    %v2853 = vld [vmem:[#allocation15 + $0x240] sm:$0xff]
    %v2854 = vld [vmem:[#allocation15 + $0x248] sm:$0xf]
    %v2855 = vld [vmem:[#allocation15 + $0x24c] sm:$0xff]
    %v2856 = vld [vmem:[#allocation15 + $0x254] sm:$0xff]
    %v2857 = vld [vmem:[#allocation15 + $0x25c] sm:$0xff]
    %v2858 = vld [vmem:[#allocation15 + $0x264] sm:$0xf]
    %v2859 = vld [vmem:[#allocation15 + $0x268] sm:$0xff]
    %v2860 = vld [vmem:[#allocation15 + $0x270] sm:$0xff]
    %v2861 = vld [vmem:[#allocation15 + $0x278] sm:$0xff]
    %v2862 = vld [vmem:[#allocation15 + $0x280] sm:$0xf]
    %v2863 = vld [vmem:[#allocation15 + $0x284] sm:$0xff]
    %v2864 = vld [vmem:[#allocation15 + $0x28c] sm:$0xff]
    %v2865 = vld [vmem:[#allocation15 + $0x294] sm:$0xff]
    %v2866 = vld [vmem:[#allocation15 + $0x29c] sm:$0xf]
    %v2867 = vld [vmem:[#allocation15 + $0x2a0] sm:$0xff]
    %v2868 = vld [vmem:[#allocation15 + $0x2a8] sm:$0xff]
    %v2869 = vld [vmem:[#allocation15 + $0x2b0] sm:$0xff]
    %v2870 = vld [vmem:[#allocation15 + $0x2b8] sm:$0xf]
    %v2871 = vld [vmem:[#allocation15 + $0x2bc] sm:$0xff]
    %v2872 = vld [vmem:[#allocation15 + $0x2c4] sm:$0xff]
    %v2873 = vld [vmem:[#allocation15 + $0x2cc] sm:$0xff]
    %v2874 = vld [vmem:[#allocation15 + $0x2d4] sm:$0xf]
    %v2875 = vld [vmem:[#allocation15 + $0x2d8] sm:$0xff]
    %v2876 = vld [vmem:[#allocation15 + $0x2e0] sm:$0xff]
    %v2877 = vld [vmem:[#allocation15 + $0x2e8] sm:$0xff]
    %v2878 = vld [vmem:[#allocation15 + $0x2f0] sm:$0xf]
    %v2879 = vld [vmem:[#allocation15 + $0x2f4] sm:$0xff]
    %v2880 = vld [vmem:[#allocation15 + $0x2fc] sm:$0xff]
    %v2881 = vld [vmem:[#allocation15 + $0x304] sm:$0xff]
    %v2882 = vld [vmem:[#allocation15 + $0x30c] sm:$0xf]
    %v2883 = vld [vmem:[#allocation15 + $0x310] sm:$0xff]
    %v2884 = vld [vmem:[#allocation15 + $0x318] sm:$0xff]
    %v2885 = vld [vmem:[#allocation15 + $0x320] sm:$0xff]
    %v2886 = vld [vmem:[#allocation15 + $0x328] sm:$0xf]
    %v2887 = vld [vmem:[#allocation15 + $0x32c] sm:$0xff]
    %v2888 = vld [vmem:[#allocation15 + $0x334] sm:$0xff]
    %v2889 = vld [vmem:[#allocation15 + $0x33c] sm:$0xff]
    %v2890 = vld [vmem:[#allocation15 + $0x344] sm:$0xf]
    %v2891 = vld [vmem:[#allocation15 + $0x348] sm:$0xff]
    %v2892 = vld [vmem:[#allocation15 + $0x350] sm:$0xff]
    %v2893 = vld [vmem:[#allocation15 + $0x358] sm:$0xff]
    %v2894 = vld [vmem:[#allocation15 + $0x360] sm:$0xf]
    %v2895 = vld [vmem:[#allocation15 + $0x364] sm:$0xff]
    %v2896 = vld [vmem:[#allocation15 + $0x36c] sm:$0xff]
    %v2897 = vld [vmem:[#allocation15 + $0x374] sm:$0xff]
    %v2898 = vld [vmem:[#allocation15 + $0x37c] sm:$0xf]
    %v2899 = vld [vmem:[#allocation15 + $0x380] sm:$0xff]
    %v2900 = vld [vmem:[#allocation15 + $0x388] sm:$0xff]
    %v2901 = vld [vmem:[#allocation15 + $0x390] sm:$0xff]
    %v2902 = vld [vmem:[#allocation15 + $0x398] sm:$0xf]
    %v2903 = vld [vmem:[#allocation15 + $0x39c] sm:$0xff]
    %v2904 = vld [vmem:[#allocation15 + $0x3a4] sm:$0xff]
    %v2905 = vld [vmem:[#allocation15 + $0x3ac] sm:$0xff]
    %v2906 = vld [vmem:[#allocation15 + $0x3b4] sm:$0xf]
    %v2907 = vld [vmem:[#allocation15 + $0x3b8] sm:$0xff]
    %v2908 = vld [vmem:[#allocation15 + $0x3c0] sm:$0xff]
    %v2909 = vld [vmem:[#allocation15 + $0x3c8] sm:$0xff]
    %v2910 = vld [vmem:[#allocation15 + $0x3d0] sm:$0xf]
    %v2911 = vld [vmem:[#allocation15 + $0x3d4] sm:$0xff]
    %v2912 = vld [vmem:[#allocation15 + $0x3dc] sm:$0xff]
    %v2913 = vld [vmem:[#allocation15 + $0x3e4] sm:$0xff]
    %v2914 = vld [vmem:[#allocation15 + $0x3ec] sm:$0xf]
    %v2915 = vld [vmem:[#allocation15 + $0x3f0] sm:$0xff]
    %v2916 = vld [vmem:[#allocation15 + $0x3f8] sm:$0xff]
    %v2917 = vld [vmem:[#allocation15 + $0x400] sm:$0xff]
    %v2918 = vld [vmem:[#allocation15 + $0x408] sm:$0xf]
    %v2919 = vld [vmem:[#allocation15 + $0x40c] sm:$0xff]
    %v2920 = vld [vmem:[#allocation15 + $0x414] sm:$0xff]
    %v2921 = vld [vmem:[#allocation15 + $0x41c] sm:$0xff]
    %v2922 = vld [vmem:[#allocation15 + $0x424] sm:$0xf]
    %v2923 = vld [vmem:[#allocation15 + $0x428] sm:$0xff]
    %v2924 = vld [vmem:[#allocation15 + $0x430] sm:$0xff]
    %v2925 = vld [vmem:[#allocation15 + $0x438] sm:$0xff]
    %v2926 = vld [vmem:[#allocation15 + $0x440] sm:$0xf]
    %v2927 = vld [vmem:[#allocation15 + $0x444] sm:$0xff]
    %v2928 = vld [vmem:[#allocation15 + $0x44c] sm:$0xff]
    %v2929 = vld [vmem:[#allocation15 + $0x454] sm:$0xff]
    %v2930 = vld [vmem:[#allocation15 + $0x45c] sm:$0xf]
    %v2931 = vld [vmem:[#allocation15 + $0x460] sm:$0xff]
    %v2932 = vld [vmem:[#allocation15 + $0x468] sm:$0xff]
    %v2933 = vld [vmem:[#allocation15 + $0x470] sm:$0xff]
    %v2934 = vld [vmem:[#allocation15 + $0x478] sm:$0xf]
    %v2935 = vld [vmem:[#allocation15 + $0x47c] sm:$0xff]
    %v2936 = vld [vmem:[#allocation15 + $0x484] sm:$0xff]
    %v2937 = vld [vmem:[#allocation15 + $0x48c] sm:$0xff]
    %v2938 = vld [vmem:[#allocation15 + $0x494] sm:$0xf]
    %v2939 = vld [vmem:[#allocation15 + $0x498] sm:$0xff]
    %v2940 = vld [vmem:[#allocation15 + $0x4a0] sm:$0xff]
    %v2941 = vld [vmem:[#allocation15 + $0x4a8] sm:$0xff]
    %v2942 = vld [vmem:[#allocation15 + $0x4b0] sm:$0xf]
    %v2943 = vld [vmem:[#allocation15 + $0x4b4] sm:$0xff]
    %v2944 = vld [vmem:[#allocation15 + $0x4bc] sm:$0xff]
    %v2945 = vld [vmem:[#allocation15 + $0x4c4] sm:$0xff]
    %v2946 = vld [vmem:[#allocation15 + $0x4cc] sm:$0xf]
    %v2947 = vld [vmem:[#allocation15 + $0x4d0] sm:$0xff]
    %v2948 = vld [vmem:[#allocation15 + $0x4d8] sm:$0xff]
    %v2949 = vld [vmem:[#allocation15 + $0x4e0] sm:$0xff]
    %v2950 = vld [vmem:[#allocation15 + $0x4e8] sm:$0xf]
    %v2951 = vld [vmem:[#allocation15 + $0x4ec] sm:$0xff]
    %v2952 = vld [vmem:[#allocation15 + $0x4f4] sm:$0xff]
    %v2953 = vld [vmem:[#allocation15 + $0x4fc] sm:$0xff]
    %v2954 = vld [vmem:[#allocation15 + $0x504] sm:$0xf]
    %v2955 = vld [vmem:[#allocation15 + $0x508] sm:$0xff]
    %v2956 = vld [vmem:[#allocation15 + $0x510] sm:$0xff]
    %v2957 = vld [vmem:[#allocation15 + $0x518] sm:$0xff]
    %v2958 = vld [vmem:[#allocation15 + $0x520] sm:$0xf]
    %v2959 = vld [vmem:[#allocation15 + $0x524] sm:$0xff]
    %v2960 = vld [vmem:[#allocation15 + $0x52c] sm:$0xff]
    %v2961 = vld [vmem:[#allocation15 + $0x534] sm:$0xff]
    %v2962 = vld [vmem:[#allocation15 + $0x53c] sm:$0xf]
    %v2963 = vld [vmem:[#allocation15 + $0x540] sm:$0xff]
    %v2964 = vld [vmem:[#allocation15 + $0x548] sm:$0xff]
    %v2965 = vld [vmem:[#allocation15 + $0x550] sm:$0xff]
    %v2966 = vld [vmem:[#allocation15 + $0x558] sm:$0xf]
    %v2967 = vld [vmem:[#allocation15 + $0x55c] sm:$0xff]
    %v2968 = vld [vmem:[#allocation15 + $0x564] sm:$0xff]
    %v2969 = vld [vmem:[#allocation15 + $0x56c] sm:$0xff]
    %v2970 = vld [vmem:[#allocation15 + $0x574] sm:$0xf]
    %v2971 = vld [vmem:[#allocation15 + $0x578] sm:$0xff]
    %v2972 = vld [vmem:[#allocation15 + $0x580] sm:$0xff]
    %v2973 = vld [vmem:[#allocation15 + $0x588] sm:$0xff]
    %v2974 = vld [vmem:[#allocation15 + $0x590] sm:$0xf]
    %v2975 = vld [vmem:[#allocation15 + $0x594] sm:$0xff]
    %v2976 = vld [vmem:[#allocation15 + $0x59c] sm:$0xff]
    %v2977 = vld [vmem:[#allocation15 + $0x5a4] sm:$0xff]
    %v2978 = vld [vmem:[#allocation15 + $0x5ac] sm:$0xf]
    %v2979 = vld [vmem:[#allocation15 + $0x5b0] sm:$0xff]
    %v2980 = vld [vmem:[#allocation15 + $0x5b8] sm:$0xff]
    %v2981 = vld [vmem:[#allocation15 + $0x5c0] sm:$0xff]
    %v2982 = vld [vmem:[#allocation15 + $0x5c8] sm:$0xf]
    %v2983 = vld [vmem:[#allocation15 + $0x5cc] sm:$0xff]
    %v2984 = vld [vmem:[#allocation15 + $0x5d4] sm:$0xff]
    %v2985 = vld [vmem:[#allocation15 + $0x5dc] sm:$0xff]
    %v2986 = vld [vmem:[#allocation15 + $0x5e4] sm:$0xf]
    %v2987 = vld [vmem:[#allocation15 + $0x5e8] sm:$0xff]
    %v2988 = vld [vmem:[#allocation15 + $0x5f0] sm:$0xff]
    %v2989 = vld [vmem:[#allocation15 + $0x5f8] sm:$0xff]
    %v2990 = vld [vmem:[#allocation15 + $0x600] sm:$0xf]
    %v2991 = vld [vmem:[#allocation15 + $0x604] sm:$0xff]
    %v2992 = vld [vmem:[#allocation15 + $0x60c] sm:$0xff]
    %v2993 = vld [vmem:[#allocation15 + $0x614] sm:$0xff]
    %v2994 = vld [vmem:[#allocation15 + $0x61c] sm:$0xf]
    %v2995 = vld [vmem:[#allocation15 + $0x620] sm:$0xff]
    %v2996 = vld [vmem:[#allocation15 + $0x628] sm:$0xff]
    %v2997 = vld [vmem:[#allocation15 + $0x630] sm:$0xff]
    %v2998 = vld [vmem:[#allocation15 + $0x638] sm:$0xf]
    %v2999 = vld [vmem:[#allocation15 + $0x63c] sm:$0xff]
    %v3000 = vld [vmem:[#allocation15 + $0x644] sm:$0xff]
    %v3001 = vld [vmem:[#allocation15 + $0x64c] sm:$0xff]
    %v3002 = vld [vmem:[#allocation15 + $0x654] sm:$0xf]
    %v3003 = vld [vmem:[#allocation15 + $0x658] sm:$0xff]
    %v3004 = vld [vmem:[#allocation15 + $0x660] sm:$0xff]
    %v3005 = vld [vmem:[#allocation15 + $0x668] sm:$0xff]
    %v3006 = vld [vmem:[#allocation15 + $0x670] sm:$0xf]
    %v3007 = vld [vmem:[#allocation15 + $0x674] sm:$0xff]
    %v3008 = vld [vmem:[#allocation15 + $0x67c] sm:$0xff]
    %v3009 = vld [vmem:[#allocation15 + $0x684] sm:$0xff]
    %v3010 = vld [vmem:[#allocation15 + $0x68c] sm:$0xf]
    %v3011 = vld [vmem:[#allocation15 + $0x690] sm:$0xff]
    %v3012 = vld [vmem:[#allocation15 + $0x698] sm:$0xff]
    %v3013 = vld [vmem:[#allocation15 + $0x6a0] sm:$0xff]
    %v3014 = vld [vmem:[#allocation15 + $0x6a8] sm:$0xf]
    %v3015 = vld [vmem:[#allocation15 + $0x6ac] sm:$0xff]
    %v3016 = vld [vmem:[#allocation15 + $0x6b4] sm:$0xff]
    %v3017 = vld [vmem:[#allocation15 + $0x6bc] sm:$0xff]
    %v3018 = vld [vmem:[#allocation15 + $0x6c4] sm:$0xf]
    %v3019 = vld [vmem:[#allocation15 + $0x6c8] sm:$0xff]
    %v3020 = vld [vmem:[#allocation15 + $0x6d0] sm:$0xff]
    %v3021 = vld [vmem:[#allocation15 + $0x6d8] sm:$0xff]
    %v3022 = vld [vmem:[#allocation15 + $0x6e0] sm:$0xf]
    %v3023 = vld [vmem:[#allocation15 + $0x6e4] sm:$0xff]
    %v3024 = vld [vmem:[#allocation15 + $0x6ec] sm:$0xff]
    %v3025 = vld [vmem:[#allocation15 + $0x6f4] sm:$0xff]
    %v3026 = vld [vmem:[#allocation15 + $0x6fc] sm:$0xf]
    %v3027 = vld [vmem:[#allocation15 + $0x700] sm:$0xff]
    %v3028 = vld [vmem:[#allocation15 + $0x708] sm:$0xff]
    %v3029 = vld [vmem:[#allocation15 + $0x710] sm:$0xff]
    %v3030 = vld [vmem:[#allocation15 + $0x718] sm:$0xf]
    %v3031 = vld [vmem:[#allocation15 + $0x71c] sm:$0xff]
    %v3032 = vld [vmem:[#allocation15 + $0x724] sm:$0xff]
    %v3033 = vld [vmem:[#allocation15 + $0x72c] sm:$0xff]
    %v3034 = vld [vmem:[#allocation15 + $0x734] sm:$0xf]
    %v3035 = vld [vmem:[#allocation15 + $0x738] sm:$0xff]
    %v3036 = vld [vmem:[#allocation15 + $0x740] sm:$0xff]
    %v3037 = vld [vmem:[#allocation15 + $0x748] sm:$0xff]
    %v3038 = vld [vmem:[#allocation15 + $0x750] sm:$0xf]
    %v3039 = vld [vmem:[#allocation15 + $0x754] sm:$0xff]
    %v3040 = vld [vmem:[#allocation15 + $0x75c] sm:$0xff]
    %v3041 = vld [vmem:[#allocation15 + $0x764] sm:$0xff]
    %v3042 = vld [vmem:[#allocation15 + $0x76c] sm:$0xf]
    %v3043 = vld [vmem:[#allocation15 + $0x770] sm:$0xff]
    %v3044 = vld [vmem:[#allocation15 + $0x778] sm:$0xff]
    %v3045 = vld [vmem:[#allocation15 + $0x780] sm:$0xff]
    %v3046 = vld [vmem:[#allocation15 + $0x788] sm:$0xf]
    %v3047 = vld [vmem:[#allocation15 + $0x78c] sm:$0xff]
    %v3048 = vld [vmem:[#allocation15 + $0x794] sm:$0xff]
    %v3049 = vld [vmem:[#allocation15 + $0x79c] sm:$0xff]
    %v3050 = vld [vmem:[#allocation15 + $0x7a4] sm:$0xf]
    %v3051 = vld [vmem:[#allocation15 + $0x7a8] sm:$0xff]
    %v3052 = vld [vmem:[#allocation15 + $0x7b0] sm:$0xff]
    %v3053 = vld [vmem:[#allocation15 + $0x7b8] sm:$0xff]
    %v3054 = vld [vmem:[#allocation15 + $0x7c0] sm:$0xf]
    %v3055 = vld [vmem:[#allocation15 + $0x7c4] sm:$0xff]
    %v3056 = vld [vmem:[#allocation15 + $0x7cc] sm:$0xff]
    %v3057 = vld [vmem:[#allocation15 + $0x7d4] sm:$0xff]
    %v3058 = vld [vmem:[#allocation15 + $0x7dc] sm:$0xf]
    %v3059 = vld [vmem:[#allocation15 + $0x7e0] sm:$0xff]
    %v3060 = vld [vmem:[#allocation15 + $0x7e8] sm:$0xff]
    %v3061 = vld [vmem:[#allocation15 + $0x7f0] sm:$0xff]
    %v3062 = vld [vmem:[#allocation15 + $0x7f8] sm:$0xf]
    %v3063 = vld [vmem:[#allocation15 + $0x7fc] sm:$0xff]
    %v3064 = vld [vmem:[#allocation15 + $0x804] sm:$0xff]
    %v3065 = vld [vmem:[#allocation15 + $0x80c] sm:$0xff]
    %v3066 = vld [vmem:[#allocation15 + $0x814] sm:$0xf]
    %v3067 = vld [vmem:[#allocation15 + $0x818] sm:$0xff]
    %v3068 = vld [vmem:[#allocation15 + $0x820] sm:$0xff]
    %v3069 = vld [vmem:[#allocation15 + $0x828] sm:$0xff]
    %v3070 = vld [vmem:[#allocation15 + $0x830] sm:$0xf]
    %v3071 = vld [vmem:[#allocation15 + $0x834] sm:$0xff]
    %v3072 = vld [vmem:[#allocation15 + $0x83c] sm:$0xff]
    %v3073 = vld [vmem:[#allocation15 + $0x844] sm:$0xff]
    %v3074 = vld [vmem:[#allocation15 + $0x84c] sm:$0xf]
    %v3075 = vld [vmem:[#allocation15 + $0x850] sm:$0xff]
    %v3076 = vld [vmem:[#allocation15 + $0x858] sm:$0xff]
    %v3077 = vld [vmem:[#allocation15 + $0x860] sm:$0xff]
    %v3078 = vld [vmem:[#allocation15 + $0x868] sm:$0xf]
    %v3079 = vld [vmem:[#allocation15 + $0x86c] sm:$0xff]
    %v3080 = vld [vmem:[#allocation15 + $0x874] sm:$0xff]
    %v3081 = vld [vmem:[#allocation15 + $0x87c] sm:$0xff]
    %v3082 = vld [vmem:[#allocation15 + $0x884] sm:$0xf]
    %v3083 = vld [vmem:[#allocation15 + $0x888] sm:$0xff]
    %v3084 = vld [vmem:[#allocation15 + $0x890] sm:$0xff]
    %v3085 = vld [vmem:[#allocation15 + $0x898] sm:$0xff]
    %v3086 = vld [vmem:[#allocation15 + $0x8a0] sm:$0xf]
    %v3087 = vld [vmem:[#allocation15 + $0x8a4] sm:$0xff]
    %v3088 = vld [vmem:[#allocation15 + $0x8ac] sm:$0xff]
    %v3089 = vld [vmem:[#allocation15 + $0x8b4] sm:$0xff]
    %v3090 = vld [vmem:[#allocation15 + $0x8bc] sm:$0xf]
    %v3091 = vld [vmem:[#allocation15 + $0x8c0] sm:$0xff]
    %v3092 = vld [vmem:[#allocation15 + $0x8c8] sm:$0xff]
    %v3093 = vld [vmem:[#allocation15 + $0x8d0] sm:$0xff]
    %v3094 = vld [vmem:[#allocation15 + $0x8d8] sm:$0xf]
    %v3095 = vld [vmem:[#allocation15 + $0x8dc] sm:$0xff]
    %v3096 = vld [vmem:[#allocation15 + $0x8e4] sm:$0xff]
    %v3097 = vld [vmem:[#allocation15 + $0x8ec] sm:$0xff]
    %v3098 = vld [vmem:[#allocation15 + $0x8f4] sm:$0xf]
    %v3099 = vld [vmem:[#allocation15 + $0x8f8] sm:$0xff]
    %v3100 = vld [vmem:[#allocation15 + $0x900] sm:$0xff]
    %v3101 = vld [vmem:[#allocation15 + $0x908] sm:$0xff]
    %v3102 = vld [vmem:[#allocation15 + $0x910] sm:$0xf]
    %v3103 = vld [vmem:[#allocation15 + $0x914] sm:$0xff]
    %v3104 = vld [vmem:[#allocation15 + $0x91c] sm:$0xff]
    %v3105 = vld [vmem:[#allocation15 + $0x924] sm:$0xff]
    %v3106 = vld [vmem:[#allocation15 + $0x92c] sm:$0xf]
    %v3107 = vld [vmem:[#allocation15 + $0x930] sm:$0xff]
    %v3108 = vld [vmem:[#allocation15 + $0x938] sm:$0xff]
    %v3109 = vld [vmem:[#allocation15 + $0x940] sm:$0xff]
    %v3110 = vld [vmem:[#allocation15 + $0x948] sm:$0xf]
    %v3111 = vld [vmem:[#allocation15 + $0x94c] sm:$0xff]
    %v3112 = vld [vmem:[#allocation15 + $0x954] sm:$0xff]
    %v3113 = vld [vmem:[#allocation15 + $0x95c] sm:$0xff]
    %v3114 = vld [vmem:[#allocation15 + $0x964] sm:$0xf]
    %v3115 = vld [vmem:[#allocation15 + $0x968] sm:$0xff]
    %v3116 = vld [vmem:[#allocation15 + $0x970] sm:$0xff]
    %v3117 = vld [vmem:[#allocation15 + $0x978] sm:$0xff]
    %v3118 = vld [vmem:[#allocation15 + $0x980] sm:$0xf]
    %v3119 = vld [vmem:[#allocation15 + $0x984] sm:$0xff]
    %v3120 = vld [vmem:[#allocation15 + $0x98c] sm:$0xff]
    %v3121 = vld [vmem:[#allocation15 + $0x994] sm:$0xff]
    %v3122 = vld [vmem:[#allocation15 + $0x99c] sm:$0xf]
    %v3123 = vld [vmem:[#allocation15 + $0x9a0] sm:$0xff]
    %v3124 = vld [vmem:[#allocation15 + $0x9a8] sm:$0xff]
    %v3125 = vld [vmem:[#allocation15 + $0x9b0] sm:$0xff]
    %v3126 = vld [vmem:[#allocation15 + $0x9b8] sm:$0xf]
    %v3127 = vld [vmem:[#allocation15 + $0x9bc] sm:$0xff]
    %v3128 = vld [vmem:[#allocation15 + $0x9c4] sm:$0xff]
    %v3129 = vld [vmem:[#allocation15 + $0x9cc] sm:$0xff]
    %v3130 = vld [vmem:[#allocation15 + $0x9d4] sm:$0xf]
    %v3131 = vld [vmem:[#allocation15 + $0x9d8] sm:$0xff]
    %v3132 = vld [vmem:[#allocation15 + $0x9e0] sm:$0xff]
    %v3133 = vld [vmem:[#allocation15 + $0x9e8] sm:$0xff]
    %v3134 = vld [vmem:[#allocation15 + $0x9f0] sm:$0xf]
    %v3135 = vld [vmem:[#allocation15 + $0x9f4] sm:$0xff]
    %v3136 = vld [vmem:[#allocation15 + $0x9fc] sm:$0xff]
    %v3137 = vld [vmem:[#allocation15 + $0xa04] sm:$0xff]
    %v3138 = vld [vmem:[#allocation15 + $0xa0c] sm:$0xf]
    %v3139 = vld [vmem:[#allocation15 + $0xa10] sm:$0xff]
    %v3140 = vld [vmem:[#allocation15 + $0xa18] sm:$0xff]
    %v3141 = vld [vmem:[#allocation15 + $0xa20] sm:$0xff]
    %v3142 = vld [vmem:[#allocation15 + $0xa28] sm:$0xf]
    %v3143 = vld [vmem:[#allocation15 + $0xa2c] sm:$0xff]
    %v3144 = vld [vmem:[#allocation15 + $0xa34] sm:$0xff]
    %v3145 = vld [vmem:[#allocation15 + $0xa3c] sm:$0xff]
    %v3146 = vld [vmem:[#allocation15 + $0xa44] sm:$0xf]
    %v3147 = vld [vmem:[#allocation15 + $0xa48] sm:$0xff]
    %v3148 = vld [vmem:[#allocation15 + $0xa50] sm:$0xff]
    %v3149 = vld [vmem:[#allocation15 + $0xa58] sm:$0xff]
    %v3150 = vld [vmem:[#allocation15 + $0xa60] sm:$0xf]
    %v3151 = vld [vmem:[#allocation15 + $0xa64] sm:$0xff]
    %v3152 = vld [vmem:[#allocation15 + $0xa6c] sm:$0xff]
    %v3153 = vld [vmem:[#allocation15 + $0xa74] sm:$0xff]
    %v3154 = vld [vmem:[#allocation15 + $0xa7c] sm:$0xf]
    %v3155 = vld [vmem:[#allocation15 + $0xa80] sm:$0xff]
    %v3156 = vld [vmem:[#allocation15 + $0xa88] sm:$0xff]
    %v3157 = vld [vmem:[#allocation15 + $0xa90] sm:$0xff]
    %v3158 = vld [vmem:[#allocation15 + $0xa98] sm:$0xf]
    %v3159 = vld [vmem:[#allocation15 + $0xa9c] sm:$0xff]
    %v3160 = vld [vmem:[#allocation15 + $0xaa4] sm:$0xff]
    %v3161 = vld [vmem:[#allocation15 + $0xaac] sm:$0xff]
    %v3162 = vld [vmem:[#allocation15 + $0xab4] sm:$0xf]
    %v3163 = vld [vmem:[#allocation15 + $0xab8] sm:$0xff]
    %v3164 = vld [vmem:[#allocation15 + $0xac0] sm:$0xff]
    %v3165 = vld [vmem:[#allocation15 + $0xac8] sm:$0xff]
    %v3166 = vld [vmem:[#allocation15 + $0xad0] sm:$0xf]
    %v3167 = vld [vmem:[#allocation15 + $0xad4] sm:$0xff]
    %v3168 = vld [vmem:[#allocation15 + $0xadc] sm:$0xff]
    %v3169 = vld [vmem:[#allocation15 + $0xae4] sm:$0xff]
    %v3170 = vld [vmem:[#allocation15 + $0xaec] sm:$0xf]
    %v3171 = vld [vmem:[#allocation15 + $0xaf0] sm:$0xff]
    %v3172 = vld [vmem:[#allocation15 + $0xaf8] sm:$0xff]
    %v3173 = vld [vmem:[#allocation15 + $0xb00] sm:$0xff]
    %v3174 = vld [vmem:[#allocation15 + $0xb08] sm:$0xf]
    %v3175 = vld [vmem:[#allocation15 + $0xb0c] sm:$0xff]
    %v3176 = vld [vmem:[#allocation15 + $0xb14] sm:$0xff]
    %v3177 = vld [vmem:[#allocation15 + $0xb1c] sm:$0xff]
    %v3178 = vld [vmem:[#allocation15 + $0xb24] sm:$0xf]
    %v3179 = vld [vmem:[#allocation15 + $0xb28] sm:$0xff]
    %v3180 = vld [vmem:[#allocation15 + $0xb30] sm:$0xff]
    %v3181 = vld [vmem:[#allocation15 + $0xb38] sm:$0xff]
    %v3182 = vld [vmem:[#allocation15 + $0xb40] sm:$0xf]
    %v3183 = vld [vmem:[#allocation15 + $0xb44] sm:$0xff]
    %v3184 = vld [vmem:[#allocation15 + $0xb4c] sm:$0xff]
    %v3185 = vld [vmem:[#allocation15 + $0xb54] sm:$0xff]
    %v3186 = vld [vmem:[#allocation15 + $0xb5c] sm:$0xf]
    %v3187 = vld [vmem:[#allocation15 + $0xb60] sm:$0xff]
    %v3188 = vld [vmem:[#allocation15 + $0xb68] sm:$0xff]
    %v3189 = vld [vmem:[#allocation15 + $0xb70] sm:$0xff]
    %v3190 = vld [vmem:[#allocation15 + $0xb78] sm:$0xf]
    %v3191 = vld [vmem:[#allocation15 + $0xb7c] sm:$0xff]
    %v3192 = vld [vmem:[#allocation15 + $0xb84] sm:$0xff]
    %v3193 = vld [vmem:[#allocation15 + $0xb8c] sm:$0xff]
    %v3194 = vld [vmem:[#allocation15 + $0xb94] sm:$0xf]
    %v3195 = vld [vmem:[#allocation15 + $0xb98] sm:$0xff]
    %v3196 = vld [vmem:[#allocation15 + $0xba0] sm:$0xff]
    %v3197 = vld [vmem:[#allocation15 + $0xba8] sm:$0xff]
    %v3198 = vld [vmem:[#allocation15 + $0xbb0] sm:$0xf]
    %v3199 = vld [vmem:[#allocation15 + $0xbb4] sm:$0xff]
    %v3200 = vld [vmem:[#allocation15 + $0xbbc] sm:$0xff]
    %v3201 = vld [vmem:[#allocation15 + $0xbc4] sm:$0xff]
    %v3202 = vld [vmem:[#allocation15 + $0xbcc] sm:$0xf]
    %v3203 = vld [vmem:[#allocation15 + $0xbd0] sm:$0xff]
    %v3204 = vld [vmem:[#allocation15 + $0xbd8] sm:$0xff]
    %v3205 = vld [vmem:[#allocation15 + $0xbe0] sm:$0xff]
    %v3206 = vld [vmem:[#allocation15 + $0xbe8] sm:$0xf]
    %v3207 = vld [vmem:[#allocation15 + $0xbec] sm:$0xff]
    %v3208 = vld [vmem:[#allocation15 + $0xbf4] sm:$0xff]
    %v3209 = vld [vmem:[#allocation15 + $0xbfc] sm:$0xff]
    %v3210 = vld [vmem:[#allocation15 + $0xc04] sm:$0xf]
    %v3211 = vld [vmem:[#allocation15 + $0xc08] sm:$0xff]
    %v3212 = vld [vmem:[#allocation15 + $0xc10] sm:$0xff]
    %v3213 = vld [vmem:[#allocation15 + $0xc18] sm:$0xff]
    %v3214 = vld [vmem:[#allocation15 + $0xc20] sm:$0xf]
    %v3215 = vld [vmem:[#allocation15 + $0xc24] sm:$0xff]
    %v3216 = vld [vmem:[#allocation15 + $0xc2c] sm:$0xff]
    %v3217 = vld [vmem:[#allocation15 + $0xc34] sm:$0xff]
    %v3218 = vld [vmem:[#allocation15 + $0xc3c] sm:$0xf]
    %v3219 = vld [vmem:[#allocation15 + $0xc40] sm:$0xff]
    %v3220 = vld [vmem:[#allocation15 + $0xc48] sm:$0xff]
    %v3221 = vld [vmem:[#allocation15 + $0xc50] sm:$0xff]
    %v3222 = vld [vmem:[#allocation15 + $0xc58] sm:$0xf]
    %v3223 = vld [vmem:[#allocation15 + $0xc5c] sm:$0xff]
    %v3224 = vld [vmem:[#allocation15 + $0xc64] sm:$0xff]
    %v3225 = vld [vmem:[#allocation15 + $0xc6c] sm:$0xff]
    %v3226 = vld [vmem:[#allocation15 + $0xc74] sm:$0xf]
    %v3227 = vld [vmem:[#allocation15 + $0xc78] sm:$0xff]
    %v3228 = vld [vmem:[#allocation15 + $0xc80] sm:$0xff]
    %v3229 = vld [vmem:[#allocation15 + $0xc88] sm:$0xff]
    %v3230 = vld [vmem:[#allocation15 + $0xc90] sm:$0xf]
    %v3231 = vld [vmem:[#allocation15 + $0xc94] sm:$0xff]
    %v3232 = vld [vmem:[#allocation15 + $0xc9c] sm:$0xff]
    %v3233 = vld [vmem:[#allocation15 + $0xca4] sm:$0xff]
    %v3234 = vld [vmem:[#allocation15 + $0xcac] sm:$0xf]
    %v3235 = vld [vmem:[#allocation15 + $0xcb0] sm:$0xff]
    %v3236 = vld [vmem:[#allocation15 + $0xcb8] sm:$0xff]
    %v3237 = vld [vmem:[#allocation15 + $0xcc0] sm:$0xff]
    %v3238 = vld [vmem:[#allocation15 + $0xcc8] sm:$0xf]
    %v3239 = vld [vmem:[#allocation15 + $0xccc] sm:$0xff]
    %v3240 = vld [vmem:[#allocation15 + $0xcd4] sm:$0xff]
    %v3241 = vld [vmem:[#allocation15 + $0xcdc] sm:$0xff]
    %v3242 = vld [vmem:[#allocation15 + $0xce4] sm:$0xf]
    %v3243 = vld [vmem:[#allocation15 + $0xce8] sm:$0xff]
    %v3244 = vld [vmem:[#allocation15 + $0xcf0] sm:$0xff]
    %v3245 = vld [vmem:[#allocation15 + $0xcf8] sm:$0xff]
    %v3246 = vld [vmem:[#allocation15 + $0xd00] sm:$0xf]
    %v3247 = vld [vmem:[#allocation15 + $0xd04] sm:$0xff]
    %v3248 = vld [vmem:[#allocation15 + $0xd0c] sm:$0xff]
    %v3249 = vld [vmem:[#allocation15 + $0xd14] sm:$0xff]
    %v3250 = vld [vmem:[#allocation15 + $0xd1c] sm:$0xf]
    %v3251 = vld [vmem:[#allocation15 + $0xd20] sm:$0xff]
    %v3252 = vld [vmem:[#allocation15 + $0xd28] sm:$0xff]
    %v3253 = vld [vmem:[#allocation15 + $0xd30] sm:$0xff]
    %v3254 = vld [vmem:[#allocation15 + $0xd38] sm:$0xf]
    %v3255 = vld [vmem:[#allocation15 + $0xd3c] sm:$0xff]
    %v3256 = vld [vmem:[#allocation15 + $0xd44] sm:$0xff]
    %v3257 = vld [vmem:[#allocation15 + $0xd4c] sm:$0xff]
    %v3258 = vld [vmem:[#allocation15 + $0xd54] sm:$0xf]
    %v3259 = vld [vmem:[#allocation15 + $0xd58] sm:$0xff]
    %v3260 = vld [vmem:[#allocation15 + $0xd60] sm:$0xff]
    %v3261 = vld [vmem:[#allocation15 + $0xd68] sm:$0xff]
    %v3262 = vld [vmem:[#allocation15 + $0xd70] sm:$0xf]
    %v3263 = vld [vmem:[#allocation15 + $0xd74] sm:$0xff]
    %v3264 = vld [vmem:[#allocation15 + $0xd7c] sm:$0xff]
    %v3265 = vld [vmem:[#allocation15 + $0xd84] sm:$0xff]
    %v3266 = vld [vmem:[#allocation15 + $0xd8c] sm:$0xf]
    %v3267 = vld [vmem:[#allocation15 + $0xd90] sm:$0xff]
    %v3268 = vld [vmem:[#allocation15 + $0xd98] sm:$0xff]
    %v3269 = vld [vmem:[#allocation15 + $0xda0] sm:$0xff]
    %v3270 = vld [vmem:[#allocation15 + $0xda8] sm:$0xf]
    %v3271 = vld [vmem:[#allocation15 + $0xdac] sm:$0xff]
    %v3272 = vld [vmem:[#allocation15 + $0xdb4] sm:$0xff]
    %v3273 = vld [vmem:[#allocation15 + $0xdbc] sm:$0xff]
    %v3274 = vld [vmem:[#allocation15 + $0xdc4] sm:$0xf]
    %v3275 = vld [vmem:[#allocation15 + $0xdc8] sm:$0xff]
    %v3276 = vld [vmem:[#allocation15 + $0xdd0] sm:$0xff]
    %v3277 = vld [vmem:[#allocation15 + $0xdd8] sm:$0xff]
    %v3278 = vld [vmem:[#allocation15 + $0xde0] sm:$0xf]
    %v3279 = vld [vmem:[#allocation15 + $0xde4] sm:$0xff]
    %v3280 = vld [vmem:[#allocation15 + $0xdec] sm:$0xff]
    %v3281 = vld [vmem:[#allocation15 + $0xdf4] sm:$0xff]
    %v3282 = vld [vmem:[#allocation15 + $0xdfc] sm:$0xf]
    %v3283 = vld [vmem:[#allocation17] sm:$0xff]
    %v3285 = vlaneseq
    %v3286 = vshrl.u32 %v3285, 7
    %v3287 = vsub.s32 0, %v3286
    %v3288 = vrot.slane %v3283, %v3287
    %v3289 = vlaneseq
    %v3290 = vshrl.u32 %v3289, 7
    %v3291 = vsub.s32 1, %v3290
    %v3292 = vrot.slane %v3283, %v3291
    %v3293 = vlaneseq
    %v3294 = vshrl.u32 %v3293, 7
    %v3295 = vsub.s32 2, %v3294
    %v3296 = vrot.slane %v3283, %v3295
    %v3297 = vlaneseq
    %v3298 = vshrl.u32 %v3297, 7
    %v3299 = vsub.s32 3, %v3298
    %v3300 = vrot.slane %v3283, %v3299
    %v3301 = vlaneseq
    %v3302 = vshrl.u32 %v3301, 7
    %v3303 = vsub.s32 4, %v3302
    %v3304 = vrot.slane %v3283, %v3303
    %v3305 = vlaneseq
    %v3306 = vshrl.u32 %v3305, 7
    %v3307 = vsub.s32 5, %v3306
    %v3308 = vrot.slane %v3283, %v3307
    %v3309 = vlaneseq
    %v3310 = vshrl.u32 %v3309, 7
    %v3311 = vsub.s32 6, %v3310
    %v3312 = vrot.slane %v3283, %v3311
    %v3832 = vunpack.c.l.b16 %v2771
    %v3833 = vunpack.c.h.b16 %v2771
    %v3834 = vunpack.c.l.b16 %v2772
    %v3835 = vunpack.c.h.b16 %v2772
    %v3836 = vunpack.c.l.b16 %v2773
    %v3837 = vunpack.c.h.b16 %v2773
    %v3838 = vunpack.c.l.b16 %v2774
    %v3839 = vunpack.c.l.b16 %v2775
    %v3840 = vunpack.c.h.b16 %v2775
    %v3841 = vunpack.c.l.b16 %v2776
    %v3842 = vunpack.c.h.b16 %v2776
    %v3843 = vunpack.c.l.b16 %v2777
    %v3844 = vunpack.c.h.b16 %v2777
    %v3845 = vunpack.c.l.b16 %v2778
    %v3846 = vunpack.c.l.b16 %v2779
    %v3847 = vunpack.c.h.b16 %v2779
    %v3848 = vunpack.c.l.b16 %v2780
    %v3849 = vunpack.c.h.b16 %v2780
    %v3850 = vunpack.c.l.b16 %v2781
    %v3851 = vunpack.c.h.b16 %v2781
    %v3852 = vunpack.c.l.b16 %v2782
    %v3853 = vunpack.c.l.b16 %v2783
    %v3854 = vunpack.c.h.b16 %v2783
    %v3855 = vunpack.c.l.b16 %v2784
    %v3856 = vunpack.c.h.b16 %v2784
    %v3857 = vunpack.c.l.b16 %v2785
    %v3858 = vunpack.c.h.b16 %v2785
    %v3859 = vunpack.c.l.b16 %v2786
    %v3860 = vunpack.c.l.b16 %v2787
    %v3861 = vunpack.c.h.b16 %v2787
    %v3862 = vunpack.c.l.b16 %v2788
    %v3863 = vunpack.c.h.b16 %v2788
    %v3864 = vunpack.c.l.b16 %v2789
    %v3865 = vunpack.c.h.b16 %v2789
    %v3866 = vunpack.c.l.b16 %v2790
    %v3867 = vunpack.c.l.b16 %v2791
    %v3868 = vunpack.c.h.b16 %v2791
    %v3869 = vunpack.c.l.b16 %v2792
    %v3870 = vunpack.c.h.b16 %v2792
    %v3871 = vunpack.c.l.b16 %v2793
    %v3872 = vunpack.c.h.b16 %v2793
    %v3873 = vunpack.c.l.b16 %v2794
    %v3874 = vunpack.c.l.b16 %v2795
    %v3875 = vunpack.c.h.b16 %v2795
    %v3876 = vunpack.c.l.b16 %v2796
    %v3877 = vunpack.c.h.b16 %v2796
    %v3878 = vunpack.c.l.b16 %v2797
    %v3879 = vunpack.c.h.b16 %v2797
    %v3880 = vunpack.c.l.b16 %v2798
    %v3881 = vunpack.c.l.b16 %v2799
    %v3882 = vunpack.c.h.b16 %v2799
    %v3883 = vunpack.c.l.b16 %v2800
    %v3884 = vunpack.c.h.b16 %v2800
    %v3885 = vunpack.c.l.b16 %v2801
    %v3886 = vunpack.c.h.b16 %v2801
    %v3887 = vunpack.c.l.b16 %v2802
    %v3888 = vunpack.c.l.b16 %v2803
    %v3889 = vunpack.c.h.b16 %v2803
    %v3890 = vunpack.c.l.b16 %v2804
    %v3891 = vunpack.c.h.b16 %v2804
    %v3892 = vunpack.c.l.b16 %v2805
    %v3893 = vunpack.c.h.b16 %v2805
    %v3894 = vunpack.c.l.b16 %v2806
    %v3895 = vunpack.c.l.b16 %v2807
    %v3896 = vunpack.c.h.b16 %v2807
    %v3897 = vunpack.c.l.b16 %v2808
    %v3898 = vunpack.c.h.b16 %v2808
    %v3899 = vunpack.c.l.b16 %v2809
    %v3900 = vunpack.c.h.b16 %v2809
    %v3901 = vunpack.c.l.b16 %v2810
    %v3902 = vunpack.c.l.b16 %v2811
    %v3903 = vunpack.c.h.b16 %v2811
    %v3904 = vunpack.c.l.b16 %v2812
    %v3905 = vunpack.c.h.b16 %v2812
    %v3906 = vunpack.c.l.b16 %v2813
    %v3907 = vunpack.c.h.b16 %v2813
    %v3908 = vunpack.c.l.b16 %v2814
    %v3909 = vunpack.c.l.b16 %v2815
    %v3910 = vunpack.c.h.b16 %v2815
    %v3911 = vunpack.c.l.b16 %v2816
    %v3912 = vunpack.c.h.b16 %v2816
    %v3913 = vunpack.c.l.b16 %v2817
    %v3914 = vunpack.c.h.b16 %v2817
    %v3915 = vunpack.c.l.b16 %v2818
    %v3916 = vunpack.c.l.b16 %v2819
    %v3917 = vunpack.c.h.b16 %v2819
    %v3918 = vunpack.c.l.b16 %v2820
    %v3919 = vunpack.c.h.b16 %v2820
    %v3920 = vunpack.c.l.b16 %v2821
    %v3921 = vunpack.c.h.b16 %v2821
    %v3922 = vunpack.c.l.b16 %v2822
    %v3923 = vunpack.c.l.b16 %v2823
    %v3924 = vunpack.c.h.b16 %v2823
    %v3925 = vunpack.c.l.b16 %v2824
    %v3926 = vunpack.c.h.b16 %v2824
    %v3927 = vunpack.c.l.b16 %v2825
    %v3928 = vunpack.c.h.b16 %v2825
    %v3929 = vunpack.c.l.b16 %v2826
    %v3930 = vunpack.c.l.b16 %v2827
    %v3931 = vunpack.c.h.b16 %v2827
    %v3932 = vunpack.c.l.b16 %v2828
    %v3933 = vunpack.c.h.b16 %v2828
    %v3934 = vunpack.c.l.b16 %v2829
    %v3935 = vunpack.c.h.b16 %v2829
    %v3936 = vunpack.c.l.b16 %v2830
    %v3937 = vunpack.c.l.b16 %v2831
    %v3938 = vunpack.c.h.b16 %v2831
    %v3939 = vunpack.c.l.b16 %v2832
    %v3940 = vunpack.c.h.b16 %v2832
    %v3941 = vunpack.c.l.b16 %v2833
    %v3942 = vunpack.c.h.b16 %v2833
    %v3943 = vunpack.c.l.b16 %v2834
    %v3944 = vunpack.c.l.b16 %v2835
    %v3945 = vunpack.c.h.b16 %v2835
    %v3946 = vunpack.c.l.b16 %v2836
    %v3947 = vunpack.c.h.b16 %v2836
    %v3948 = vunpack.c.l.b16 %v2837
    %v3949 = vunpack.c.h.b16 %v2837
    %v3950 = vunpack.c.l.b16 %v2838
    %v3951 = vunpack.c.l.b16 %v2839
    %v3952 = vunpack.c.h.b16 %v2839
    %v3953 = vunpack.c.l.b16 %v2840
    %v3954 = vunpack.c.h.b16 %v2840
    %v3955 = vunpack.c.l.b16 %v2841
    %v3956 = vunpack.c.h.b16 %v2841
    %v3957 = vunpack.c.l.b16 %v2842
    %v3958 = vunpack.c.l.b16 %v2843
    %v3959 = vunpack.c.h.b16 %v2843
    %v3960 = vunpack.c.l.b16 %v2844
    %v3961 = vunpack.c.h.b16 %v2844
    %v3962 = vunpack.c.l.b16 %v2845
    %v3963 = vunpack.c.h.b16 %v2845
    %v3964 = vunpack.c.l.b16 %v2846
    %v3965 = vunpack.c.l.b16 %v2847
    %v3966 = vunpack.c.h.b16 %v2847
    %v3967 = vunpack.c.l.b16 %v2848
    %v3968 = vunpack.c.h.b16 %v2848
    %v3969 = vunpack.c.l.b16 %v2849
    %v3970 = vunpack.c.h.b16 %v2849
    %v3971 = vunpack.c.l.b16 %v2850
    %v3972 = vunpack.c.l.b16 %v2851
    %v3973 = vunpack.c.h.b16 %v2851
    %v3974 = vunpack.c.l.b16 %v2852
    %v3975 = vunpack.c.h.b16 %v2852
    %v3976 = vunpack.c.l.b16 %v2853
    %v3977 = vunpack.c.h.b16 %v2853
    %v3978 = vunpack.c.l.b16 %v2854
    %v3979 = vunpack.c.l.b16 %v2855
    %v3980 = vunpack.c.h.b16 %v2855
    %v3981 = vunpack.c.l.b16 %v2856
    %v3982 = vunpack.c.h.b16 %v2856
    %v3983 = vunpack.c.l.b16 %v2857
    %v3984 = vunpack.c.h.b16 %v2857
    %v3985 = vunpack.c.l.b16 %v2858
    %v3986 = vunpack.c.l.b16 %v2859
    %v3987 = vunpack.c.h.b16 %v2859
    %v3988 = vunpack.c.l.b16 %v2860
    %v3989 = vunpack.c.h.b16 %v2860
    %v3990 = vunpack.c.l.b16 %v2861
    %v3991 = vunpack.c.h.b16 %v2861
    %v3992 = vunpack.c.l.b16 %v2862
    %v3993 = vunpack.c.l.b16 %v2863
    %v3994 = vunpack.c.h.b16 %v2863
    %v3995 = vunpack.c.l.b16 %v2864
    %v3996 = vunpack.c.h.b16 %v2864
    %v3997 = vunpack.c.l.b16 %v2865
    %v3998 = vunpack.c.h.b16 %v2865
    %v3999 = vunpack.c.l.b16 %v2866
    %v4000 = vunpack.c.l.b16 %v2867
    %v4001 = vunpack.c.h.b16 %v2867
    %v4002 = vunpack.c.l.b16 %v2868
    %v4003 = vunpack.c.h.b16 %v2868
    %v4004 = vunpack.c.l.b16 %v2869
    %v4005 = vunpack.c.h.b16 %v2869
    %v4006 = vunpack.c.l.b16 %v2870
    %v4007 = vunpack.c.l.b16 %v2871
    %v4008 = vunpack.c.h.b16 %v2871
    %v4009 = vunpack.c.l.b16 %v2872
    %v4010 = vunpack.c.h.b16 %v2872
    %v4011 = vunpack.c.l.b16 %v2873
    %v4012 = vunpack.c.h.b16 %v2873
    %v4013 = vunpack.c.l.b16 %v2874
    %v4014 = vunpack.c.l.b16 %v2875
    %v4015 = vunpack.c.h.b16 %v2875
    %v4016 = vunpack.c.l.b16 %v2876
    %v4017 = vunpack.c.h.b16 %v2876
    %v4018 = vunpack.c.l.b16 %v2877
    %v4019 = vunpack.c.h.b16 %v2877
    %v4020 = vunpack.c.l.b16 %v2878
    %v4021 = vunpack.c.l.b16 %v2879
    %v4022 = vunpack.c.h.b16 %v2879
    %v4023 = vunpack.c.l.b16 %v2880
    %v4024 = vunpack.c.h.b16 %v2880
    %v4025 = vunpack.c.l.b16 %v2881
    %v4026 = vunpack.c.h.b16 %v2881
    %v4027 = vunpack.c.l.b16 %v2882
    %v4028 = vunpack.c.l.b16 %v2883
    %v4029 = vunpack.c.h.b16 %v2883
    %v4030 = vunpack.c.l.b16 %v2884
    %v4031 = vunpack.c.h.b16 %v2884
    %v4032 = vunpack.c.l.b16 %v2885
    %v4033 = vunpack.c.h.b16 %v2885
    %v4034 = vunpack.c.l.b16 %v2886
    %v4035 = vunpack.c.l.b16 %v2887
    %v4036 = vunpack.c.h.b16 %v2887
    %v4037 = vunpack.c.l.b16 %v2888
    %v4038 = vunpack.c.h.b16 %v2888
    %v4039 = vunpack.c.l.b16 %v2889
    %v4040 = vunpack.c.h.b16 %v2889
    %v4041 = vunpack.c.l.b16 %v2890
    %v4042 = vunpack.c.l.b16 %v2891
    %v4043 = vunpack.c.h.b16 %v2891
    %v4044 = vunpack.c.l.b16 %v2892
    %v4045 = vunpack.c.h.b16 %v2892
    %v4046 = vunpack.c.l.b16 %v2893
    %v4047 = vunpack.c.h.b16 %v2893
    %v4048 = vunpack.c.l.b16 %v2894
    %v4049 = vunpack.c.l.b16 %v2895
    %v4050 = vunpack.c.h.b16 %v2895
    %v4051 = vunpack.c.l.b16 %v2896
    %v4052 = vunpack.c.h.b16 %v2896
    %v4053 = vunpack.c.l.b16 %v2897
    %v4054 = vunpack.c.h.b16 %v2897
    %v4055 = vunpack.c.l.b16 %v2898
    %v4056 = vunpack.c.l.b16 %v2899
    %v4057 = vunpack.c.h.b16 %v2899
    %v4058 = vunpack.c.l.b16 %v2900
    %v4059 = vunpack.c.h.b16 %v2900
    %v4060 = vunpack.c.l.b16 %v2901
    %v4061 = vunpack.c.h.b16 %v2901
    %v4062 = vunpack.c.l.b16 %v2902
    %v4063 = vunpack.c.l.b16 %v2903
    %v4064 = vunpack.c.h.b16 %v2903
    %v4065 = vunpack.c.l.b16 %v2904
    %v4066 = vunpack.c.h.b16 %v2904
    %v4067 = vunpack.c.l.b16 %v2905
    %v4068 = vunpack.c.h.b16 %v2905
    %v4069 = vunpack.c.l.b16 %v2906
    %v4070 = vunpack.c.l.b16 %v2907
    %v4071 = vunpack.c.h.b16 %v2907
    %v4072 = vunpack.c.l.b16 %v2908
    %v4073 = vunpack.c.h.b16 %v2908
    %v4074 = vunpack.c.l.b16 %v2909
    %v4075 = vunpack.c.h.b16 %v2909
    %v4076 = vunpack.c.l.b16 %v2910
    %v4077 = vunpack.c.l.b16 %v2911
    %v4078 = vunpack.c.h.b16 %v2911
    %v4079 = vunpack.c.l.b16 %v2912
    %v4080 = vunpack.c.h.b16 %v2912
    %v4081 = vunpack.c.l.b16 %v2913
    %v4082 = vunpack.c.h.b16 %v2913
    %v4083 = vunpack.c.l.b16 %v2914
    %v4084 = vunpack.c.l.b16 %v2915
    %v4085 = vunpack.c.h.b16 %v2915
    %v4086 = vunpack.c.l.b16 %v2916
    %v4087 = vunpack.c.h.b16 %v2916
    %v4088 = vunpack.c.l.b16 %v2917
    %v4089 = vunpack.c.h.b16 %v2917
    %v4090 = vunpack.c.l.b16 %v2918
    %v4091 = vunpack.c.l.b16 %v2919
    %v4092 = vunpack.c.h.b16 %v2919
    %v4093 = vunpack.c.l.b16 %v2920
    %v4094 = vunpack.c.h.b16 %v2920
    %v4095 = vunpack.c.l.b16 %v2921
    %v4096 = vunpack.c.h.b16 %v2921
    %v4097 = vunpack.c.l.b16 %v2922
    %v4098 = vunpack.c.l.b16 %v2923
    %v4099 = vunpack.c.h.b16 %v2923
    %v4100 = vunpack.c.l.b16 %v2924
    %v4101 = vunpack.c.h.b16 %v2924
    %v4102 = vunpack.c.l.b16 %v2925
    %v4103 = vunpack.c.h.b16 %v2925
    %v4104 = vunpack.c.l.b16 %v2926
    %v4105 = vunpack.c.l.b16 %v2927
    %v4106 = vunpack.c.h.b16 %v2927
    %v4107 = vunpack.c.l.b16 %v2928
    %v4108 = vunpack.c.h.b16 %v2928
    %v4109 = vunpack.c.l.b16 %v2929
    %v4110 = vunpack.c.h.b16 %v2929
    %v4111 = vunpack.c.l.b16 %v2930
    %v4112 = vunpack.c.l.b16 %v2931
    %v4113 = vunpack.c.h.b16 %v2931
    %v4114 = vunpack.c.l.b16 %v2932
    %v4115 = vunpack.c.h.b16 %v2932
    %v4116 = vunpack.c.l.b16 %v2933
    %v4117 = vunpack.c.h.b16 %v2933
    %v4118 = vunpack.c.l.b16 %v2934
    %v4119 = vunpack.c.l.b16 %v2935
    %v4120 = vunpack.c.h.b16 %v2935
    %v4121 = vunpack.c.l.b16 %v2936
    %v4122 = vunpack.c.h.b16 %v2936
    %v4123 = vunpack.c.l.b16 %v2937
    %v4124 = vunpack.c.h.b16 %v2937
    %v4125 = vunpack.c.l.b16 %v2938
    %v4126 = vunpack.c.l.b16 %v2939
    %v4127 = vunpack.c.h.b16 %v2939
    %v4128 = vunpack.c.l.b16 %v2940
    %v4129 = vunpack.c.h.b16 %v2940
    %v4130 = vunpack.c.l.b16 %v2941
    %v4131 = vunpack.c.h.b16 %v2941
    %v4132 = vunpack.c.l.b16 %v2942
    %v4133 = vunpack.c.l.b16 %v2943
    %v4134 = vunpack.c.h.b16 %v2943
    %v4135 = vunpack.c.l.b16 %v2944
    %v4136 = vunpack.c.h.b16 %v2944
    %v4137 = vunpack.c.l.b16 %v2945
    %v4138 = vunpack.c.h.b16 %v2945
    %v4139 = vunpack.c.l.b16 %v2946
    %v4140 = vunpack.c.l.b16 %v2947
    %v4141 = vunpack.c.h.b16 %v2947
    %v4142 = vunpack.c.l.b16 %v2948
    %v4143 = vunpack.c.h.b16 %v2948
    %v4144 = vunpack.c.l.b16 %v2949
    %v4145 = vunpack.c.h.b16 %v2949
    %v4146 = vunpack.c.l.b16 %v2950
    %v4147 = vunpack.c.l.b16 %v2951
    %v4148 = vunpack.c.h.b16 %v2951
    %v4149 = vunpack.c.l.b16 %v2952
    %v4150 = vunpack.c.h.b16 %v2952
    %v4151 = vunpack.c.l.b16 %v2953
    %v4152 = vunpack.c.h.b16 %v2953
    %v4153 = vunpack.c.l.b16 %v2954
    %v4154 = vunpack.c.l.b16 %v2955
    %v4155 = vunpack.c.h.b16 %v2955
    %v4156 = vunpack.c.l.b16 %v2956
    %v4157 = vunpack.c.h.b16 %v2956
    %v4158 = vunpack.c.l.b16 %v2957
    %v4159 = vunpack.c.h.b16 %v2957
    %v4160 = vunpack.c.l.b16 %v2958
    %v4161 = vunpack.c.l.b16 %v2959
    %v4162 = vunpack.c.h.b16 %v2959
    %v4163 = vunpack.c.l.b16 %v2960
    %v4164 = vunpack.c.h.b16 %v2960
    %v4165 = vunpack.c.l.b16 %v2961
    %v4166 = vunpack.c.h.b16 %v2961
    %v4167 = vunpack.c.l.b16 %v2962
    %v4168 = vunpack.c.l.b16 %v2963
    %v4169 = vunpack.c.h.b16 %v2963
    %v4170 = vunpack.c.l.b16 %v2964
    %v4171 = vunpack.c.h.b16 %v2964
    %v4172 = vunpack.c.l.b16 %v2965
    %v4173 = vunpack.c.h.b16 %v2965
    %v4174 = vunpack.c.l.b16 %v2966
    %v4175 = vunpack.c.l.b16 %v2967
    %v4176 = vunpack.c.h.b16 %v2967
    %v4177 = vunpack.c.l.b16 %v2968
    %v4178 = vunpack.c.h.b16 %v2968
    %v4179 = vunpack.c.l.b16 %v2969
    %v4180 = vunpack.c.h.b16 %v2969
    %v4181 = vunpack.c.l.b16 %v2970
    %v4182 = vunpack.c.l.b16 %v2971
    %v4183 = vunpack.c.h.b16 %v2971
    %v4184 = vunpack.c.l.b16 %v2972
    %v4185 = vunpack.c.h.b16 %v2972
    %v4186 = vunpack.c.l.b16 %v2973
    %v4187 = vunpack.c.h.b16 %v2973
    %v4188 = vunpack.c.l.b16 %v2974
    %v4189 = vunpack.c.l.b16 %v2975
    %v4190 = vunpack.c.h.b16 %v2975
    %v4191 = vunpack.c.l.b16 %v2976
    %v4192 = vunpack.c.h.b16 %v2976
    %v4193 = vunpack.c.l.b16 %v2977
    %v4194 = vunpack.c.h.b16 %v2977
    %v4195 = vunpack.c.l.b16 %v2978
    %v4196 = vunpack.c.l.b16 %v2979
    %v4197 = vunpack.c.h.b16 %v2979
    %v4198 = vunpack.c.l.b16 %v2980
    %v4199 = vunpack.c.h.b16 %v2980
    %v4200 = vunpack.c.l.b16 %v2981
    %v4201 = vunpack.c.h.b16 %v2981
    %v4202 = vunpack.c.l.b16 %v2982
    %v4203 = vunpack.c.l.b16 %v2983
    %v4204 = vunpack.c.h.b16 %v2983
    %v4205 = vunpack.c.l.b16 %v2984
    %v4206 = vunpack.c.h.b16 %v2984
    %v4207 = vunpack.c.l.b16 %v2985
    %v4208 = vunpack.c.h.b16 %v2985
    %v4209 = vunpack.c.l.b16 %v2986
    %v4210 = vunpack.c.l.b16 %v2987
    %v4211 = vunpack.c.h.b16 %v2987
    %v4212 = vunpack.c.l.b16 %v2988
    %v4213 = vunpack.c.h.b16 %v2988
    %v4214 = vunpack.c.l.b16 %v2989
    %v4215 = vunpack.c.h.b16 %v2989
    %v4216 = vunpack.c.l.b16 %v2990
    %v4217 = vunpack.c.l.b16 %v2991
    %v4218 = vunpack.c.h.b16 %v2991
    %v4219 = vunpack.c.l.b16 %v2992
    %v4220 = vunpack.c.h.b16 %v2992
    %v4221 = vunpack.c.l.b16 %v2993
    %v4222 = vunpack.c.h.b16 %v2993
    %v4223 = vunpack.c.l.b16 %v2994
    %v4224 = vunpack.c.l.b16 %v2995
    %v4225 = vunpack.c.h.b16 %v2995
    %v4226 = vunpack.c.l.b16 %v2996
    %v4227 = vunpack.c.h.b16 %v2996
    %v4228 = vunpack.c.l.b16 %v2997
    %v4229 = vunpack.c.h.b16 %v2997
    %v4230 = vunpack.c.l.b16 %v2998
    %v4231 = vunpack.c.l.b16 %v2999
    %v4232 = vunpack.c.h.b16 %v2999
    %v4233 = vunpack.c.l.b16 %v3000
    %v4234 = vunpack.c.h.b16 %v3000
    %v4235 = vunpack.c.l.b16 %v3001
    %v4236 = vunpack.c.h.b16 %v3001
    %v4237 = vunpack.c.l.b16 %v3002
    %v4238 = vunpack.c.l.b16 %v3003
    %v4239 = vunpack.c.h.b16 %v3003
    %v4240 = vunpack.c.l.b16 %v3004
    %v4241 = vunpack.c.h.b16 %v3004
    %v4242 = vunpack.c.l.b16 %v3005
    %v4243 = vunpack.c.h.b16 %v3005
    %v4244 = vunpack.c.l.b16 %v3006
    %v4245 = vunpack.c.l.b16 %v3007
    %v4246 = vunpack.c.h.b16 %v3007
    %v4247 = vunpack.c.l.b16 %v3008
    %v4248 = vunpack.c.h.b16 %v3008
    %v4249 = vunpack.c.l.b16 %v3009
    %v4250 = vunpack.c.h.b16 %v3009
    %v4251 = vunpack.c.l.b16 %v3010
    %v4252 = vunpack.c.l.b16 %v3011
    %v4253 = vunpack.c.h.b16 %v3011
    %v4254 = vunpack.c.l.b16 %v3012
    %v4255 = vunpack.c.h.b16 %v3012
    %v4256 = vunpack.c.l.b16 %v3013
    %v4257 = vunpack.c.h.b16 %v3013
    %v4258 = vunpack.c.l.b16 %v3014
    %v4259 = vunpack.c.l.b16 %v3015
    %v4260 = vunpack.c.h.b16 %v3015
    %v4261 = vunpack.c.l.b16 %v3016
    %v4262 = vunpack.c.h.b16 %v3016
    %v4263 = vunpack.c.l.b16 %v3017
    %v4264 = vunpack.c.h.b16 %v3017
    %v4265 = vunpack.c.l.b16 %v3018
    %v4266 = vunpack.c.l.b16 %v3019
    %v4267 = vunpack.c.h.b16 %v3019
    %v4268 = vunpack.c.l.b16 %v3020
    %v4269 = vunpack.c.h.b16 %v3020
    %v4270 = vunpack.c.l.b16 %v3021
    %v4271 = vunpack.c.h.b16 %v3021
    %v4272 = vunpack.c.l.b16 %v3022
    %v4273 = vunpack.c.l.b16 %v3023
    %v4274 = vunpack.c.h.b16 %v3023
    %v4275 = vunpack.c.l.b16 %v3024
    %v4276 = vunpack.c.h.b16 %v3024
    %v4277 = vunpack.c.l.b16 %v3025
    %v4278 = vunpack.c.h.b16 %v3025
    %v4279 = vunpack.c.l.b16 %v3026
    %v4280 = vunpack.c.l.b16 %v3027
    %v4281 = vunpack.c.h.b16 %v3027
    %v4282 = vunpack.c.l.b16 %v3028
    %v4283 = vunpack.c.h.b16 %v3028
    %v4284 = vunpack.c.l.b16 %v3029
    %v4285 = vunpack.c.h.b16 %v3029
    %v4286 = vunpack.c.l.b16 %v3030
    %v4287 = vunpack.c.l.b16 %v3031
    %v4288 = vunpack.c.h.b16 %v3031
    %v4289 = vunpack.c.l.b16 %v3032
    %v4290 = vunpack.c.h.b16 %v3032
    %v4291 = vunpack.c.l.b16 %v3033
    %v4292 = vunpack.c.h.b16 %v3033
    %v4293 = vunpack.c.l.b16 %v3034
    %v4294 = vunpack.c.l.b16 %v3035
    %v4295 = vunpack.c.h.b16 %v3035
    %v4296 = vunpack.c.l.b16 %v3036
    %v4297 = vunpack.c.h.b16 %v3036
    %v4298 = vunpack.c.l.b16 %v3037
    %v4299 = vunpack.c.h.b16 %v3037
    %v4300 = vunpack.c.l.b16 %v3038
    %v4301 = vunpack.c.l.b16 %v3039
    %v4302 = vunpack.c.h.b16 %v3039
    %v4303 = vunpack.c.l.b16 %v3040
    %v4304 = vunpack.c.h.b16 %v3040
    %v4305 = vunpack.c.l.b16 %v3041
    %v4306 = vunpack.c.h.b16 %v3041
    %v4307 = vunpack.c.l.b16 %v3042
    %v4308 = vunpack.c.l.b16 %v3043
    %v4309 = vunpack.c.h.b16 %v3043
    %v4310 = vunpack.c.l.b16 %v3044
    %v4311 = vunpack.c.h.b16 %v3044
    %v4312 = vunpack.c.l.b16 %v3045
    %v4313 = vunpack.c.h.b16 %v3045
    %v4314 = vunpack.c.l.b16 %v3046
    %v4315 = vunpack.c.l.b16 %v3047
    %v4316 = vunpack.c.h.b16 %v3047
    %v4317 = vunpack.c.l.b16 %v3048
    %v4318 = vunpack.c.h.b16 %v3048
    %v4319 = vunpack.c.l.b16 %v3049
    %v4320 = vunpack.c.h.b16 %v3049
    %v4321 = vunpack.c.l.b16 %v3050
    %v4322 = vunpack.c.l.b16 %v3051
    %v4323 = vunpack.c.h.b16 %v3051
    %v4324 = vunpack.c.l.b16 %v3052
    %v4325 = vunpack.c.h.b16 %v3052
    %v4326 = vunpack.c.l.b16 %v3053
    %v4327 = vunpack.c.h.b16 %v3053
    %v4328 = vunpack.c.l.b16 %v3054
    %v4329 = vunpack.c.l.b16 %v3055
    %v4330 = vunpack.c.h.b16 %v3055
    %v4331 = vunpack.c.l.b16 %v3056
    %v4332 = vunpack.c.h.b16 %v3056
    %v4333 = vunpack.c.l.b16 %v3057
    %v4334 = vunpack.c.h.b16 %v3057
    %v4335 = vunpack.c.l.b16 %v3058
    %v4336 = vunpack.c.l.b16 %v3059
    %v4337 = vunpack.c.h.b16 %v3059
    %v4338 = vunpack.c.l.b16 %v3060
    %v4339 = vunpack.c.h.b16 %v3060
    %v4340 = vunpack.c.l.b16 %v3061
    %v4341 = vunpack.c.h.b16 %v3061
    %v4342 = vunpack.c.l.b16 %v3062
    %v4343 = vunpack.c.l.b16 %v3063
    %v4344 = vunpack.c.h.b16 %v3063
    %v4345 = vunpack.c.l.b16 %v3064
    %v4346 = vunpack.c.h.b16 %v3064
    %v4347 = vunpack.c.l.b16 %v3065
    %v4348 = vunpack.c.h.b16 %v3065
    %v4349 = vunpack.c.l.b16 %v3066
    %v4350 = vunpack.c.l.b16 %v3067
    %v4351 = vunpack.c.h.b16 %v3067
    %v4352 = vunpack.c.l.b16 %v3068
    %v4353 = vunpack.c.h.b16 %v3068
    %v4354 = vunpack.c.l.b16 %v3069
    %v4355 = vunpack.c.h.b16 %v3069
    %v4356 = vunpack.c.l.b16 %v3070
    %v4357 = vunpack.c.l.b16 %v3071
    %v4358 = vunpack.c.h.b16 %v3071
    %v4359 = vunpack.c.l.b16 %v3072
    %v4360 = vunpack.c.h.b16 %v3072
    %v4361 = vunpack.c.l.b16 %v3073
    %v4362 = vunpack.c.h.b16 %v3073
    %v4363 = vunpack.c.l.b16 %v3074
    %v4364 = vunpack.c.l.b16 %v3075
    %v4365 = vunpack.c.h.b16 %v3075
    %v4366 = vunpack.c.l.b16 %v3076
    %v4367 = vunpack.c.h.b16 %v3076
    %v4368 = vunpack.c.l.b16 %v3077
    %v4369 = vunpack.c.h.b16 %v3077
    %v4370 = vunpack.c.l.b16 %v3078
    %v4371 = vunpack.c.l.b16 %v3079
    %v4372 = vunpack.c.h.b16 %v3079
    %v4373 = vunpack.c.l.b16 %v3080
    %v4374 = vunpack.c.h.b16 %v3080
    %v4375 = vunpack.c.l.b16 %v3081
    %v4376 = vunpack.c.h.b16 %v3081
    %v4377 = vunpack.c.l.b16 %v3082
    %v4378 = vunpack.c.l.b16 %v3083
    %v4379 = vunpack.c.h.b16 %v3083
    %v4380 = vunpack.c.l.b16 %v3084
    %v4381 = vunpack.c.h.b16 %v3084
    %v4382 = vunpack.c.l.b16 %v3085
    %v4383 = vunpack.c.h.b16 %v3085
    %v4384 = vunpack.c.l.b16 %v3086
    %v4385 = vunpack.c.l.b16 %v3087
    %v4386 = vunpack.c.h.b16 %v3087
    %v4387 = vunpack.c.l.b16 %v3088
    %v4388 = vunpack.c.h.b16 %v3088
    %v4389 = vunpack.c.l.b16 %v3089
    %v4390 = vunpack.c.h.b16 %v3089
    %v4391 = vunpack.c.l.b16 %v3090
    %v4392 = vunpack.c.l.b16 %v3091
    %v4393 = vunpack.c.h.b16 %v3091
    %v4394 = vunpack.c.l.b16 %v3092
    %v4395 = vunpack.c.h.b16 %v3092
    %v4396 = vunpack.c.l.b16 %v3093
    %v4397 = vunpack.c.h.b16 %v3093
    %v4398 = vunpack.c.l.b16 %v3094
    %v4399 = vunpack.c.l.b16 %v3095
    %v4400 = vunpack.c.h.b16 %v3095
    %v4401 = vunpack.c.l.b16 %v3096
    %v4402 = vunpack.c.h.b16 %v3096
    %v4403 = vunpack.c.l.b16 %v3097
    %v4404 = vunpack.c.h.b16 %v3097
    %v4405 = vunpack.c.l.b16 %v3098
    %v4406 = vunpack.c.l.b16 %v3099
    %v4407 = vunpack.c.h.b16 %v3099
    %v4408 = vunpack.c.l.b16 %v3100
    %v4409 = vunpack.c.h.b16 %v3100
    %v4410 = vunpack.c.l.b16 %v3101
    %v4411 = vunpack.c.h.b16 %v3101
    %v4412 = vunpack.c.l.b16 %v3102
    %v4413 = vunpack.c.l.b16 %v3103
    %v4414 = vunpack.c.h.b16 %v3103
    %v4415 = vunpack.c.l.b16 %v3104
    %v4416 = vunpack.c.h.b16 %v3104
    %v4417 = vunpack.c.l.b16 %v3105
    %v4418 = vunpack.c.h.b16 %v3105
    %v4419 = vunpack.c.l.b16 %v3106
    %v4420 = vunpack.c.l.b16 %v3107
    %v4421 = vunpack.c.h.b16 %v3107
    %v4422 = vunpack.c.l.b16 %v3108
    %v4423 = vunpack.c.h.b16 %v3108
    %v4424 = vunpack.c.l.b16 %v3109
    %v4425 = vunpack.c.h.b16 %v3109
    %v4426 = vunpack.c.l.b16 %v3110
    %v4427 = vunpack.c.l.b16 %v3111
    %v4428 = vunpack.c.h.b16 %v3111
    %v4429 = vunpack.c.l.b16 %v3112
    %v4430 = vunpack.c.h.b16 %v3112
    %v4431 = vunpack.c.l.b16 %v3113
    %v4432 = vunpack.c.h.b16 %v3113
    %v4433 = vunpack.c.l.b16 %v3114
    %v4434 = vunpack.c.l.b16 %v3115
    %v4435 = vunpack.c.h.b16 %v3115
    %v4436 = vunpack.c.l.b16 %v3116
    %v4437 = vunpack.c.h.b16 %v3116
    %v4438 = vunpack.c.l.b16 %v3117
    %v4439 = vunpack.c.h.b16 %v3117
    %v4440 = vunpack.c.l.b16 %v3118
    %v4441 = vunpack.c.l.b16 %v3119
    %v4442 = vunpack.c.h.b16 %v3119
    %v4443 = vunpack.c.l.b16 %v3120
    %v4444 = vunpack.c.h.b16 %v3120
    %v4445 = vunpack.c.l.b16 %v3121
    %v4446 = vunpack.c.h.b16 %v3121
    %v4447 = vunpack.c.l.b16 %v3122
    %v4448 = vunpack.c.l.b16 %v3123
    %v4449 = vunpack.c.h.b16 %v3123
    %v4450 = vunpack.c.l.b16 %v3124
    %v4451 = vunpack.c.h.b16 %v3124
    %v4452 = vunpack.c.l.b16 %v3125
    %v4453 = vunpack.c.h.b16 %v3125
    %v4454 = vunpack.c.l.b16 %v3126
    %v4455 = vunpack.c.l.b16 %v3127
    %v4456 = vunpack.c.h.b16 %v3127
    %v4457 = vunpack.c.l.b16 %v3128
    %v4458 = vunpack.c.h.b16 %v3128
    %v4459 = vunpack.c.l.b16 %v3129
    %v4460 = vunpack.c.h.b16 %v3129
    %v4461 = vunpack.c.l.b16 %v3130
    %v4462 = vunpack.c.l.b16 %v3131
    %v4463 = vunpack.c.h.b16 %v3131
    %v4464 = vunpack.c.l.b16 %v3132
    %v4465 = vunpack.c.h.b16 %v3132
    %v4466 = vunpack.c.l.b16 %v3133
    %v4467 = vunpack.c.h.b16 %v3133
    %v4468 = vunpack.c.l.b16 %v3134
    %v4469 = vunpack.c.l.b16 %v3135
    %v4470 = vunpack.c.h.b16 %v3135
    %v4471 = vunpack.c.l.b16 %v3136
    %v4472 = vunpack.c.h.b16 %v3136
    %v4473 = vunpack.c.l.b16 %v3137
    %v4474 = vunpack.c.h.b16 %v3137
    %v4475 = vunpack.c.l.b16 %v3138
    %v4476 = vunpack.c.l.b16 %v3139
    %v4477 = vunpack.c.h.b16 %v3139
    %v4478 = vunpack.c.l.b16 %v3140
    %v4479 = vunpack.c.h.b16 %v3140
    %v4480 = vunpack.c.l.b16 %v3141
    %v4481 = vunpack.c.h.b16 %v3141
    %v4482 = vunpack.c.l.b16 %v3142
    %v4483 = vunpack.c.l.b16 %v3143
    %v4484 = vunpack.c.h.b16 %v3143
    %v4485 = vunpack.c.l.b16 %v3144
    %v4486 = vunpack.c.h.b16 %v3144
    %v4487 = vunpack.c.l.b16 %v3145
    %v4488 = vunpack.c.h.b16 %v3145
    %v4489 = vunpack.c.l.b16 %v3146
    %v4490 = vunpack.c.l.b16 %v3147
    %v4491 = vunpack.c.h.b16 %v3147
    %v4492 = vunpack.c.l.b16 %v3148
    %v4493 = vunpack.c.h.b16 %v3148
    %v4494 = vunpack.c.l.b16 %v3149
    %v4495 = vunpack.c.h.b16 %v3149
    %v4496 = vunpack.c.l.b16 %v3150
    %v4497 = vunpack.c.l.b16 %v3151
    %v4498 = vunpack.c.h.b16 %v3151
    %v4499 = vunpack.c.l.b16 %v3152
    %v4500 = vunpack.c.h.b16 %v3152
    %v4501 = vunpack.c.l.b16 %v3153
    %v4502 = vunpack.c.h.b16 %v3153
    %v4503 = vunpack.c.l.b16 %v3154
    %v4504 = vunpack.c.l.b16 %v3155
    %v4505 = vunpack.c.h.b16 %v3155
    %v4506 = vunpack.c.l.b16 %v3156
    %v4507 = vunpack.c.h.b16 %v3156
    %v4508 = vunpack.c.l.b16 %v3157
    %v4509 = vunpack.c.h.b16 %v3157
    %v4510 = vunpack.c.l.b16 %v3158
    %v4511 = vunpack.c.l.b16 %v3159
    %v4512 = vunpack.c.h.b16 %v3159
    %v4513 = vunpack.c.l.b16 %v3160
    %v4514 = vunpack.c.h.b16 %v3160
    %v4515 = vunpack.c.l.b16 %v3161
    %v4516 = vunpack.c.h.b16 %v3161
    %v4517 = vunpack.c.l.b16 %v3162
    %v4518 = vunpack.c.l.b16 %v3163
    %v4519 = vunpack.c.h.b16 %v3163
    %v4520 = vunpack.c.l.b16 %v3164
    %v4521 = vunpack.c.h.b16 %v3164
    %v4522 = vunpack.c.l.b16 %v3165
    %v4523 = vunpack.c.h.b16 %v3165
    %v4524 = vunpack.c.l.b16 %v3166
    %v4525 = vunpack.c.l.b16 %v3167
    %v4526 = vunpack.c.h.b16 %v3167
    %v4527 = vunpack.c.l.b16 %v3168
    %v4528 = vunpack.c.h.b16 %v3168
    %v4529 = vunpack.c.l.b16 %v3169
    %v4530 = vunpack.c.h.b16 %v3169
    %v4531 = vunpack.c.l.b16 %v3170
    %v4532 = vunpack.c.l.b16 %v3171
    %v4533 = vunpack.c.h.b16 %v3171
    %v4534 = vunpack.c.l.b16 %v3172
    %v4535 = vunpack.c.h.b16 %v3172
    %v4536 = vunpack.c.l.b16 %v3173
    %v4537 = vunpack.c.h.b16 %v3173
    %v4538 = vunpack.c.l.b16 %v3174
    %v4539 = vunpack.c.l.b16 %v3175
    %v4540 = vunpack.c.h.b16 %v3175
    %v4541 = vunpack.c.l.b16 %v3176
    %v4542 = vunpack.c.h.b16 %v3176
    %v4543 = vunpack.c.l.b16 %v3177
    %v4544 = vunpack.c.h.b16 %v3177
    %v4545 = vunpack.c.l.b16 %v3178
    %v4546 = vunpack.c.l.b16 %v3179
    %v4547 = vunpack.c.h.b16 %v3179
    %v4548 = vunpack.c.l.b16 %v3180
    %v4549 = vunpack.c.h.b16 %v3180
    %v4550 = vunpack.c.l.b16 %v3181
    %v4551 = vunpack.c.h.b16 %v3181
    %v4552 = vunpack.c.l.b16 %v3182
    %v4553 = vunpack.c.l.b16 %v3183
    %v4554 = vunpack.c.h.b16 %v3183
    %v4555 = vunpack.c.l.b16 %v3184
    %v4556 = vunpack.c.h.b16 %v3184
    %v4557 = vunpack.c.l.b16 %v3185
    %v4558 = vunpack.c.h.b16 %v3185
    %v4559 = vunpack.c.l.b16 %v3186
    %v4560 = vunpack.c.l.b16 %v3187
    %v4561 = vunpack.c.h.b16 %v3187
    %v4562 = vunpack.c.l.b16 %v3188
    %v4563 = vunpack.c.h.b16 %v3188
    %v4564 = vunpack.c.l.b16 %v3189
    %v4565 = vunpack.c.h.b16 %v3189
    %v4566 = vunpack.c.l.b16 %v3190
    %v4567 = vunpack.c.l.b16 %v3191
    %v4568 = vunpack.c.h.b16 %v3191
    %v4569 = vunpack.c.l.b16 %v3192
    %v4570 = vunpack.c.h.b16 %v3192
    %v4571 = vunpack.c.l.b16 %v3193
    %v4572 = vunpack.c.h.b16 %v3193
    %v4573 = vunpack.c.l.b16 %v3194
    %v4574 = vunpack.c.l.b16 %v3195
    %v4575 = vunpack.c.h.b16 %v3195
    %v4576 = vunpack.c.l.b16 %v3196
    %v4577 = vunpack.c.h.b16 %v3196
    %v4578 = vunpack.c.l.b16 %v3197
    %v4579 = vunpack.c.h.b16 %v3197
    %v4580 = vunpack.c.l.b16 %v3198
    %v4581 = vunpack.c.l.b16 %v3199
    %v4582 = vunpack.c.h.b16 %v3199
    %v4583 = vunpack.c.l.b16 %v3200
    %v4584 = vunpack.c.h.b16 %v3200
    %v4585 = vunpack.c.l.b16 %v3201
    %v4586 = vunpack.c.h.b16 %v3201
    %v4587 = vunpack.c.l.b16 %v3202
    %v4588 = vunpack.c.l.b16 %v3203
    %v4589 = vunpack.c.h.b16 %v3203
    %v4590 = vunpack.c.l.b16 %v3204
    %v4591 = vunpack.c.h.b16 %v3204
    %v4592 = vunpack.c.l.b16 %v3205
    %v4593 = vunpack.c.h.b16 %v3205
    %v4594 = vunpack.c.l.b16 %v3206
    %v4595 = vunpack.c.l.b16 %v3207
    %v4596 = vunpack.c.h.b16 %v3207
    %v4597 = vunpack.c.l.b16 %v3208
    %v4598 = vunpack.c.h.b16 %v3208
    %v4599 = vunpack.c.l.b16 %v3209
    %v4600 = vunpack.c.h.b16 %v3209
    %v4601 = vunpack.c.l.b16 %v3210
    %v4602 = vunpack.c.l.b16 %v3211
    %v4603 = vunpack.c.h.b16 %v3211
    %v4604 = vunpack.c.l.b16 %v3212
    %v4605 = vunpack.c.h.b16 %v3212
    %v4606 = vunpack.c.l.b16 %v3213
    %v4607 = vunpack.c.h.b16 %v3213
    %v4608 = vunpack.c.l.b16 %v3214
    %v4609 = vunpack.c.l.b16 %v3215
    %v4610 = vunpack.c.h.b16 %v3215
    %v4611 = vunpack.c.l.b16 %v3216
    %v4612 = vunpack.c.h.b16 %v3216
    %v4613 = vunpack.c.l.b16 %v3217
    %v4614 = vunpack.c.h.b16 %v3217
    %v4615 = vunpack.c.l.b16 %v3218
    %v4616 = vunpack.c.l.b16 %v3219
    %v4617 = vunpack.c.h.b16 %v3219
    %v4618 = vunpack.c.l.b16 %v3220
    %v4619 = vunpack.c.h.b16 %v3220
    %v4620 = vunpack.c.l.b16 %v3221
    %v4621 = vunpack.c.h.b16 %v3221
    %v4622 = vunpack.c.l.b16 %v3222
    %v4623 = vunpack.c.l.b16 %v3223
    %v4624 = vunpack.c.h.b16 %v3223
    %v4625 = vunpack.c.l.b16 %v3224
    %v4626 = vunpack.c.h.b16 %v3224
    %v4627 = vunpack.c.l.b16 %v3225
    %v4628 = vunpack.c.h.b16 %v3225
    %v4629 = vunpack.c.l.b16 %v3226
    %v4630 = vunpack.c.l.b16 %v3227
    %v4631 = vunpack.c.h.b16 %v3227
    %v4632 = vunpack.c.l.b16 %v3228
    %v4633 = vunpack.c.h.b16 %v3228
    %v4634 = vunpack.c.l.b16 %v3229
    %v4635 = vunpack.c.h.b16 %v3229
    %v4636 = vunpack.c.l.b16 %v3230
    %v4637 = vunpack.c.l.b16 %v3231
    %v4638 = vunpack.c.h.b16 %v3231
    %v4639 = vunpack.c.l.b16 %v3232
    %v4640 = vunpack.c.h.b16 %v3232
    %v4641 = vunpack.c.l.b16 %v3233
    %v4642 = vunpack.c.h.b16 %v3233
    %v4643 = vunpack.c.l.b16 %v3234
    %v4644 = vunpack.c.l.b16 %v3235
    %v4645 = vunpack.c.h.b16 %v3235
    %v4646 = vunpack.c.l.b16 %v3236
    %v4647 = vunpack.c.h.b16 %v3236
    %v4648 = vunpack.c.l.b16 %v3237
    %v4649 = vunpack.c.h.b16 %v3237
    %v4650 = vunpack.c.l.b16 %v3238
    %v4651 = vunpack.c.l.b16 %v3239
    %v4652 = vunpack.c.h.b16 %v3239
    %v4653 = vunpack.c.l.b16 %v3240
    %v4654 = vunpack.c.h.b16 %v3240
    %v4655 = vunpack.c.l.b16 %v3241
    %v4656 = vunpack.c.h.b16 %v3241
    %v4657 = vunpack.c.l.b16 %v3242
    %v4658 = vunpack.c.l.b16 %v3243
    %v4659 = vunpack.c.h.b16 %v3243
    %v4660 = vunpack.c.l.b16 %v3244
    %v4661 = vunpack.c.h.b16 %v3244
    %v4662 = vunpack.c.l.b16 %v3245
    %v4663 = vunpack.c.h.b16 %v3245
    %v4664 = vunpack.c.l.b16 %v3246
    %v4665 = vunpack.c.l.b16 %v3247
    %v4666 = vunpack.c.h.b16 %v3247
    %v4667 = vunpack.c.l.b16 %v3248
    %v4668 = vunpack.c.h.b16 %v3248
    %v4669 = vunpack.c.l.b16 %v3249
    %v4670 = vunpack.c.h.b16 %v3249
    %v4671 = vunpack.c.l.b16 %v3250
    %v4672 = vunpack.c.l.b16 %v3251
    %v4673 = vunpack.c.h.b16 %v3251
    %v4674 = vunpack.c.l.b16 %v3252
    %v4675 = vunpack.c.h.b16 %v3252
    %v4676 = vunpack.c.l.b16 %v3253
    %v4677 = vunpack.c.h.b16 %v3253
    %v4678 = vunpack.c.l.b16 %v3254
    %v4679 = vunpack.c.l.b16 %v3255
    %v4680 = vunpack.c.h.b16 %v3255
    %v4681 = vunpack.c.l.b16 %v3256
    %v4682 = vunpack.c.h.b16 %v3256
    %v4683 = vunpack.c.l.b16 %v3257
    %v4684 = vunpack.c.h.b16 %v3257
    %v4685 = vunpack.c.l.b16 %v3258
    %v4686 = vunpack.c.l.b16 %v3259
    %v4687 = vunpack.c.h.b16 %v3259
    %v4688 = vunpack.c.l.b16 %v3260
    %v4689 = vunpack.c.h.b16 %v3260
    %v4690 = vunpack.c.l.b16 %v3261
    %v4691 = vunpack.c.h.b16 %v3261
    %v4692 = vunpack.c.l.b16 %v3262
    %v4693 = vunpack.c.l.b16 %v3263
    %v4694 = vunpack.c.h.b16 %v3263
    %v4695 = vunpack.c.l.b16 %v3264
    %v4696 = vunpack.c.h.b16 %v3264
    %v4697 = vunpack.c.l.b16 %v3265
    %v4698 = vunpack.c.h.b16 %v3265
    %v4699 = vunpack.c.l.b16 %v3266
    %v4700 = vunpack.c.l.b16 %v3267
    %v4701 = vunpack.c.h.b16 %v3267
    %v4702 = vunpack.c.l.b16 %v3268
    %v4703 = vunpack.c.h.b16 %v3268
    %v4704 = vunpack.c.l.b16 %v3269
    %v4705 = vunpack.c.h.b16 %v3269
    %v4706 = vunpack.c.l.b16 %v3270
    %v4707 = vunpack.c.l.b16 %v3271
    %v4708 = vunpack.c.h.b16 %v3271
    %v4709 = vunpack.c.l.b16 %v3272
    %v4710 = vunpack.c.h.b16 %v3272
    %v4711 = vunpack.c.l.b16 %v3273
    %v4712 = vunpack.c.h.b16 %v3273
    %v4713 = vunpack.c.l.b16 %v3274
    %v4714 = vunpack.c.l.b16 %v3275
    %v4715 = vunpack.c.h.b16 %v3275
    %v4716 = vunpack.c.l.b16 %v3276
    %v4717 = vunpack.c.h.b16 %v3276
    %v4718 = vunpack.c.l.b16 %v3277
    %v4719 = vunpack.c.h.b16 %v3277
    %v4720 = vunpack.c.l.b16 %v3278
    %v4721 = vunpack.c.l.b16 %v3279
    %v4722 = vunpack.c.h.b16 %v3279
    %v4723 = vunpack.c.l.b16 %v3280
    %v4724 = vunpack.c.h.b16 %v3280
    %v4725 = vunpack.c.l.b16 %v3281
    %v4726 = vunpack.c.h.b16 %v3281
    %v4727 = vunpack.c.l.b16 %v3282
    %v4728 = vpack.c.b16 %v3839, %v3832
    %v4729 = vpack.c.b16 %v3840, %v3833
    %v4730 = vpack.c.b16 %v3841, %v3834
    %v4731 = vpack.c.b16 %v3842, %v3835
    %v4732 = vpack.c.b16 %v3843, %v3836
    %v4733 = vpack.c.b16 %v3844, %v3837
    %v4734 = vpack.c.b16 %v3845, %v3838
    %v4735 = vpack.c.b16 %v3853, %v3846
    %v4736 = vpack.c.b16 %v3854, %v3847
    %v4737 = vpack.c.b16 %v3855, %v3848
    %v4738 = vpack.c.b16 %v3856, %v3849
    %v4739 = vpack.c.b16 %v3857, %v3850
    %v4740 = vpack.c.b16 %v3858, %v3851
    %v4741 = vpack.c.b16 %v3859, %v3852
    %v4742 = vpack.c.b16 %v3867, %v3860
    %v4743 = vpack.c.b16 %v3868, %v3861
    %v4744 = vpack.c.b16 %v3869, %v3862
    %v4745 = vpack.c.b16 %v3870, %v3863
    %v4746 = vpack.c.b16 %v3871, %v3864
    %v4747 = vpack.c.b16 %v3872, %v3865
    %v4748 = vpack.c.b16 %v3873, %v3866
    %v4749 = vpack.c.b16 %v3881, %v3874
    %v4750 = vpack.c.b16 %v3882, %v3875
    %v4751 = vpack.c.b16 %v3883, %v3876
    %v4752 = vpack.c.b16 %v3884, %v3877
    %v4753 = vpack.c.b16 %v3885, %v3878
    %v4754 = vpack.c.b16 %v3886, %v3879
    %v4755 = vpack.c.b16 %v3887, %v3880
    %v4756 = vpack.c.b16 %v3895, %v3888
    %v4757 = vpack.c.b16 %v3896, %v3889
    %v4758 = vpack.c.b16 %v3897, %v3890
    %v4759 = vpack.c.b16 %v3898, %v3891
    %v4760 = vpack.c.b16 %v3899, %v3892
    %v4761 = vpack.c.b16 %v3900, %v3893
    %v4762 = vpack.c.b16 %v3901, %v3894
    %v4763 = vpack.c.b16 %v3909, %v3902
    %v4764 = vpack.c.b16 %v3910, %v3903
    %v4765 = vpack.c.b16 %v3911, %v3904
    %v4766 = vpack.c.b16 %v3912, %v3905
    %v4767 = vpack.c.b16 %v3913, %v3906
    %v4768 = vpack.c.b16 %v3914, %v3907
    %v4769 = vpack.c.b16 %v3915, %v3908
    %v4770 = vpack.c.b16 %v3923, %v3916
    %v4771 = vpack.c.b16 %v3924, %v3917
    %v4772 = vpack.c.b16 %v3925, %v3918
    %v4773 = vpack.c.b16 %v3926, %v3919
    %v4774 = vpack.c.b16 %v3927, %v3920
    %v4775 = vpack.c.b16 %v3928, %v3921
    %v4776 = vpack.c.b16 %v3929, %v3922
    %v4777 = vpack.c.b16 %v3937, %v3930
    %v4778 = vpack.c.b16 %v3938, %v3931
    %v4779 = vpack.c.b16 %v3939, %v3932
    %v4780 = vpack.c.b16 %v3940, %v3933
    %v4781 = vpack.c.b16 %v3941, %v3934
    %v4782 = vpack.c.b16 %v3942, %v3935
    %v4783 = vpack.c.b16 %v3943, %v3936
    %v4784 = vpack.c.b16 %v3951, %v3944
    %v4785 = vpack.c.b16 %v3952, %v3945
    %v4786 = vpack.c.b16 %v3953, %v3946
    %v4787 = vpack.c.b16 %v3954, %v3947
    %v4788 = vpack.c.b16 %v3955, %v3948
    %v4789 = vpack.c.b16 %v3956, %v3949
    %v4790 = vpack.c.b16 %v3957, %v3950
    %v4791 = vpack.c.b16 %v3965, %v3958
    %v4792 = vpack.c.b16 %v3966, %v3959
    %v4793 = vpack.c.b16 %v3967, %v3960
    %v4794 = vpack.c.b16 %v3968, %v3961
    %v4795 = vpack.c.b16 %v3969, %v3962
    %v4796 = vpack.c.b16 %v3970, %v3963
    %v4797 = vpack.c.b16 %v3971, %v3964
    %v4798 = vpack.c.b16 %v3979, %v3972
    %v4799 = vpack.c.b16 %v3980, %v3973
    %v4800 = vpack.c.b16 %v3981, %v3974
    %v4801 = vpack.c.b16 %v3982, %v3975
    %v4802 = vpack.c.b16 %v3983, %v3976
    %v4803 = vpack.c.b16 %v3984, %v3977
    %v4804 = vpack.c.b16 %v3985, %v3978
    %v4805 = vpack.c.b16 %v3993, %v3986
    %v4806 = vpack.c.b16 %v3994, %v3987
    %v4807 = vpack.c.b16 %v3995, %v3988
    %v4808 = vpack.c.b16 %v3996, %v3989
    %v4809 = vpack.c.b16 %v3997, %v3990
    %v4810 = vpack.c.b16 %v3998, %v3991
    %v4811 = vpack.c.b16 %v3999, %v3992
    %v4812 = vpack.c.b16 %v4007, %v4000
    %v4813 = vpack.c.b16 %v4008, %v4001
    %v4814 = vpack.c.b16 %v4009, %v4002
    %v4815 = vpack.c.b16 %v4010, %v4003
    %v4816 = vpack.c.b16 %v4011, %v4004
    %v4817 = vpack.c.b16 %v4012, %v4005
    %v4818 = vpack.c.b16 %v4013, %v4006
    %v4819 = vpack.c.b16 %v4021, %v4014
    %v4820 = vpack.c.b16 %v4022, %v4015
    %v4821 = vpack.c.b16 %v4023, %v4016
    %v4822 = vpack.c.b16 %v4024, %v4017
    %v4823 = vpack.c.b16 %v4025, %v4018
    %v4824 = vpack.c.b16 %v4026, %v4019
    %v4825 = vpack.c.b16 %v4027, %v4020
    %v4826 = vpack.c.b16 %v4035, %v4028
    %v4827 = vpack.c.b16 %v4036, %v4029
    %v4828 = vpack.c.b16 %v4037, %v4030
    %v4829 = vpack.c.b16 %v4038, %v4031
    %v4830 = vpack.c.b16 %v4039, %v4032
    %v4831 = vpack.c.b16 %v4040, %v4033
    %v4832 = vpack.c.b16 %v4041, %v4034
    %v4833 = vpack.c.b16 %v4049, %v4042
    %v4834 = vpack.c.b16 %v4050, %v4043
    %v4835 = vpack.c.b16 %v4051, %v4044
    %v4836 = vpack.c.b16 %v4052, %v4045
    %v4837 = vpack.c.b16 %v4053, %v4046
    %v4838 = vpack.c.b16 %v4054, %v4047
    %v4839 = vpack.c.b16 %v4055, %v4048
    %v4840 = vpack.c.b16 %v4063, %v4056
    %v4841 = vpack.c.b16 %v4064, %v4057
    %v4842 = vpack.c.b16 %v4065, %v4058
    %v4843 = vpack.c.b16 %v4066, %v4059
    %v4844 = vpack.c.b16 %v4067, %v4060
    %v4845 = vpack.c.b16 %v4068, %v4061
    %v4846 = vpack.c.b16 %v4069, %v4062
    %v4847 = vpack.c.b16 %v4077, %v4070
    %v4848 = vpack.c.b16 %v4078, %v4071
    %v4849 = vpack.c.b16 %v4079, %v4072
    %v4850 = vpack.c.b16 %v4080, %v4073
    %v4851 = vpack.c.b16 %v4081, %v4074
    %v4852 = vpack.c.b16 %v4082, %v4075
    %v4853 = vpack.c.b16 %v4083, %v4076
    %v4854 = vpack.c.b16 %v4091, %v4084
    %v4855 = vpack.c.b16 %v4092, %v4085
    %v4856 = vpack.c.b16 %v4093, %v4086
    %v4857 = vpack.c.b16 %v4094, %v4087
    %v4858 = vpack.c.b16 %v4095, %v4088
    %v4859 = vpack.c.b16 %v4096, %v4089
    %v4860 = vpack.c.b16 %v4097, %v4090
    %v4861 = vpack.c.b16 %v4105, %v4098
    %v4862 = vpack.c.b16 %v4106, %v4099
    %v4863 = vpack.c.b16 %v4107, %v4100
    %v4864 = vpack.c.b16 %v4108, %v4101
    %v4865 = vpack.c.b16 %v4109, %v4102
    %v4866 = vpack.c.b16 %v4110, %v4103
    %v4867 = vpack.c.b16 %v4111, %v4104
    %v4868 = vpack.c.b16 %v4119, %v4112
    %v4869 = vpack.c.b16 %v4120, %v4113
    %v4870 = vpack.c.b16 %v4121, %v4114
    %v4871 = vpack.c.b16 %v4122, %v4115
    %v4872 = vpack.c.b16 %v4123, %v4116
    %v4873 = vpack.c.b16 %v4124, %v4117
    %v4874 = vpack.c.b16 %v4125, %v4118
    %v4875 = vpack.c.b16 %v4133, %v4126
    %v4876 = vpack.c.b16 %v4134, %v4127
    %v4877 = vpack.c.b16 %v4135, %v4128
    %v4878 = vpack.c.b16 %v4136, %v4129
    %v4879 = vpack.c.b16 %v4137, %v4130
    %v4880 = vpack.c.b16 %v4138, %v4131
    %v4881 = vpack.c.b16 %v4139, %v4132
    %v4882 = vpack.c.b16 %v4147, %v4140
    %v4883 = vpack.c.b16 %v4148, %v4141
    %v4884 = vpack.c.b16 %v4149, %v4142
    %v4885 = vpack.c.b16 %v4150, %v4143
    %v4886 = vpack.c.b16 %v4151, %v4144
    %v4887 = vpack.c.b16 %v4152, %v4145
    %v4888 = vpack.c.b16 %v4153, %v4146
    %v4889 = vpack.c.b16 %v4161, %v4154
    %v4890 = vpack.c.b16 %v4162, %v4155
    %v4891 = vpack.c.b16 %v4163, %v4156
    %v4892 = vpack.c.b16 %v4164, %v4157
    %v4893 = vpack.c.b16 %v4165, %v4158
    %v4894 = vpack.c.b16 %v4166, %v4159
    %v4895 = vpack.c.b16 %v4167, %v4160
    %v4896 = vpack.c.b16 %v4175, %v4168
    %v4897 = vpack.c.b16 %v4176, %v4169
    %v4898 = vpack.c.b16 %v4177, %v4170
    %v4899 = vpack.c.b16 %v4178, %v4171
    %v4900 = vpack.c.b16 %v4179, %v4172
    %v4901 = vpack.c.b16 %v4180, %v4173
    %v4902 = vpack.c.b16 %v4181, %v4174
    %v4903 = vpack.c.b16 %v4189, %v4182
    %v4904 = vpack.c.b16 %v4190, %v4183
    %v4905 = vpack.c.b16 %v4191, %v4184
    %v4906 = vpack.c.b16 %v4192, %v4185
    %v4907 = vpack.c.b16 %v4193, %v4186
    %v4908 = vpack.c.b16 %v4194, %v4187
    %v4909 = vpack.c.b16 %v4195, %v4188
    %v4910 = vpack.c.b16 %v4203, %v4196
    %v4911 = vpack.c.b16 %v4204, %v4197
    %v4912 = vpack.c.b16 %v4205, %v4198
    %v4913 = vpack.c.b16 %v4206, %v4199
    %v4914 = vpack.c.b16 %v4207, %v4200
    %v4915 = vpack.c.b16 %v4208, %v4201
    %v4916 = vpack.c.b16 %v4209, %v4202
    %v4917 = vpack.c.b16 %v4217, %v4210
    %v4918 = vpack.c.b16 %v4218, %v4211
    %v4919 = vpack.c.b16 %v4219, %v4212
    %v4920 = vpack.c.b16 %v4220, %v4213
    %v4921 = vpack.c.b16 %v4221, %v4214
    %v4922 = vpack.c.b16 %v4222, %v4215
    %v4923 = vpack.c.b16 %v4223, %v4216
    %v4924 = vpack.c.b16 %v4231, %v4224
    %v4925 = vpack.c.b16 %v4232, %v4225
    %v4926 = vpack.c.b16 %v4233, %v4226
    %v4927 = vpack.c.b16 %v4234, %v4227
    %v4928 = vpack.c.b16 %v4235, %v4228
    %v4929 = vpack.c.b16 %v4236, %v4229
    %v4930 = vpack.c.b16 %v4237, %v4230
    %v4931 = vpack.c.b16 %v4245, %v4238
    %v4932 = vpack.c.b16 %v4246, %v4239
    %v4933 = vpack.c.b16 %v4247, %v4240
    %v4934 = vpack.c.b16 %v4248, %v4241
    %v4935 = vpack.c.b16 %v4249, %v4242
    %v4936 = vpack.c.b16 %v4250, %v4243
    %v4937 = vpack.c.b16 %v4251, %v4244
    %v4938 = vpack.c.b16 %v4259, %v4252
    %v4939 = vpack.c.b16 %v4260, %v4253
    %v4940 = vpack.c.b16 %v4261, %v4254
    %v4941 = vpack.c.b16 %v4262, %v4255
    %v4942 = vpack.c.b16 %v4263, %v4256
    %v4943 = vpack.c.b16 %v4264, %v4257
    %v4944 = vpack.c.b16 %v4265, %v4258
    %v4945 = vpack.c.b16 %v4273, %v4266
    %v4946 = vpack.c.b16 %v4274, %v4267
    %v4947 = vpack.c.b16 %v4275, %v4268
    %v4948 = vpack.c.b16 %v4276, %v4269
    %v4949 = vpack.c.b16 %v4277, %v4270
    %v4950 = vpack.c.b16 %v4278, %v4271
    %v4951 = vpack.c.b16 %v4279, %v4272
    %v4952 = vpack.c.b16 %v4287, %v4280
    %v4953 = vpack.c.b16 %v4288, %v4281
    %v4954 = vpack.c.b16 %v4289, %v4282
    %v4955 = vpack.c.b16 %v4290, %v4283
    %v4956 = vpack.c.b16 %v4291, %v4284
    %v4957 = vpack.c.b16 %v4292, %v4285
    %v4958 = vpack.c.b16 %v4293, %v4286
    %v4959 = vpack.c.b16 %v4301, %v4294
    %v4960 = vpack.c.b16 %v4302, %v4295
    %v4961 = vpack.c.b16 %v4303, %v4296
    %v4962 = vpack.c.b16 %v4304, %v4297
    %v4963 = vpack.c.b16 %v4305, %v4298
    %v4964 = vpack.c.b16 %v4306, %v4299
    %v4965 = vpack.c.b16 %v4307, %v4300
    %v4966 = vpack.c.b16 %v4315, %v4308
    %v4967 = vpack.c.b16 %v4316, %v4309
    %v4968 = vpack.c.b16 %v4317, %v4310
    %v4969 = vpack.c.b16 %v4318, %v4311
    %v4970 = vpack.c.b16 %v4319, %v4312
    %v4971 = vpack.c.b16 %v4320, %v4313
    %v4972 = vpack.c.b16 %v4321, %v4314
    %v4973 = vpack.c.b16 %v4329, %v4322
    %v4974 = vpack.c.b16 %v4330, %v4323
    %v4975 = vpack.c.b16 %v4331, %v4324
    %v4976 = vpack.c.b16 %v4332, %v4325
    %v4977 = vpack.c.b16 %v4333, %v4326
    %v4978 = vpack.c.b16 %v4334, %v4327
    %v4979 = vpack.c.b16 %v4335, %v4328
    %v4980 = vpack.c.b16 %v4343, %v4336
    %v4981 = vpack.c.b16 %v4344, %v4337
    %v4982 = vpack.c.b16 %v4345, %v4338
    %v4983 = vpack.c.b16 %v4346, %v4339
    %v4984 = vpack.c.b16 %v4347, %v4340
    %v4985 = vpack.c.b16 %v4348, %v4341
    %v4986 = vpack.c.b16 %v4349, %v4342
    %v4987 = vpack.c.b16 %v4357, %v4350
    %v4988 = vpack.c.b16 %v4358, %v4351
    %v4989 = vpack.c.b16 %v4359, %v4352
    %v4990 = vpack.c.b16 %v4360, %v4353
    %v4991 = vpack.c.b16 %v4361, %v4354
    %v4992 = vpack.c.b16 %v4362, %v4355
    %v4993 = vpack.c.b16 %v4363, %v4356
    %v4994 = vpack.c.b16 %v4371, %v4364
    %v4995 = vpack.c.b16 %v4372, %v4365
    %v4996 = vpack.c.b16 %v4373, %v4366
    %v4997 = vpack.c.b16 %v4374, %v4367
    %v4998 = vpack.c.b16 %v4375, %v4368
    %v4999 = vpack.c.b16 %v4376, %v4369
    %v5000 = vpack.c.b16 %v4377, %v4370
    %v5001 = vpack.c.b16 %v4385, %v4378
    %v5002 = vpack.c.b16 %v4386, %v4379
    %v5003 = vpack.c.b16 %v4387, %v4380
    %v5004 = vpack.c.b16 %v4388, %v4381
    %v5005 = vpack.c.b16 %v4389, %v4382
    %v5006 = vpack.c.b16 %v4390, %v4383
    %v5007 = vpack.c.b16 %v4391, %v4384
    %v5008 = vpack.c.b16 %v4399, %v4392
    %v5009 = vpack.c.b16 %v4400, %v4393
    %v5010 = vpack.c.b16 %v4401, %v4394
    %v5011 = vpack.c.b16 %v4402, %v4395
    %v5012 = vpack.c.b16 %v4403, %v4396
    %v5013 = vpack.c.b16 %v4404, %v4397
    %v5014 = vpack.c.b16 %v4405, %v4398
    %v5015 = vpack.c.b16 %v4413, %v4406
    %v5016 = vpack.c.b16 %v4414, %v4407
    %v5017 = vpack.c.b16 %v4415, %v4408
    %v5018 = vpack.c.b16 %v4416, %v4409
    %v5019 = vpack.c.b16 %v4417, %v4410
    %v5020 = vpack.c.b16 %v4418, %v4411
    %v5021 = vpack.c.b16 %v4419, %v4412
    %v5022 = vpack.c.b16 %v4427, %v4420
    %v5023 = vpack.c.b16 %v4428, %v4421
    %v5024 = vpack.c.b16 %v4429, %v4422
    %v5025 = vpack.c.b16 %v4430, %v4423
    %v5026 = vpack.c.b16 %v4431, %v4424
    %v5027 = vpack.c.b16 %v4432, %v4425
    %v5028 = vpack.c.b16 %v4433, %v4426
    %v5029 = vpack.c.b16 %v4441, %v4434
    %v5030 = vpack.c.b16 %v4442, %v4435
    %v5031 = vpack.c.b16 %v4443, %v4436
    %v5032 = vpack.c.b16 %v4444, %v4437
    %v5033 = vpack.c.b16 %v4445, %v4438
    %v5034 = vpack.c.b16 %v4446, %v4439
    %v5035 = vpack.c.b16 %v4447, %v4440
    %v5036 = vpack.c.b16 %v4455, %v4448
    %v5037 = vpack.c.b16 %v4456, %v4449
    %v5038 = vpack.c.b16 %v4457, %v4450
    %v5039 = vpack.c.b16 %v4458, %v4451
    %v5040 = vpack.c.b16 %v4459, %v4452
    %v5041 = vpack.c.b16 %v4460, %v4453
    %v5042 = vpack.c.b16 %v4461, %v4454
    %v5043 = vpack.c.b16 %v4469, %v4462
    %v5044 = vpack.c.b16 %v4470, %v4463
    %v5045 = vpack.c.b16 %v4471, %v4464
    %v5046 = vpack.c.b16 %v4472, %v4465
    %v5047 = vpack.c.b16 %v4473, %v4466
    %v5048 = vpack.c.b16 %v4474, %v4467
    %v5049 = vpack.c.b16 %v4475, %v4468
    %v5050 = vpack.c.b16 %v4483, %v4476
    %v5051 = vpack.c.b16 %v4484, %v4477
    %v5052 = vpack.c.b16 %v4485, %v4478
    %v5053 = vpack.c.b16 %v4486, %v4479
    %v5054 = vpack.c.b16 %v4487, %v4480
    %v5055 = vpack.c.b16 %v4488, %v4481
    %v5056 = vpack.c.b16 %v4489, %v4482
    %v5057 = vpack.c.b16 %v4497, %v4490
    %v5058 = vpack.c.b16 %v4498, %v4491
    %v5059 = vpack.c.b16 %v4499, %v4492
    %v5060 = vpack.c.b16 %v4500, %v4493
    %v5061 = vpack.c.b16 %v4501, %v4494
    %v5062 = vpack.c.b16 %v4502, %v4495
    %v5063 = vpack.c.b16 %v4503, %v4496
    %v5064 = vpack.c.b16 %v4511, %v4504
    %v5065 = vpack.c.b16 %v4512, %v4505
    %v5066 = vpack.c.b16 %v4513, %v4506
    %v5067 = vpack.c.b16 %v4514, %v4507
    %v5068 = vpack.c.b16 %v4515, %v4508
    %v5069 = vpack.c.b16 %v4516, %v4509
    %v5070 = vpack.c.b16 %v4517, %v4510
    %v5071 = vpack.c.b16 %v4525, %v4518
    %v5072 = vpack.c.b16 %v4526, %v4519
    %v5073 = vpack.c.b16 %v4527, %v4520
    %v5074 = vpack.c.b16 %v4528, %v4521
    %v5075 = vpack.c.b16 %v4529, %v4522
    %v5076 = vpack.c.b16 %v4530, %v4523
    %v5077 = vpack.c.b16 %v4531, %v4524
    %v5078 = vpack.c.b16 %v4539, %v4532
    %v5079 = vpack.c.b16 %v4540, %v4533
    %v5080 = vpack.c.b16 %v4541, %v4534
    %v5081 = vpack.c.b16 %v4542, %v4535
    %v5082 = vpack.c.b16 %v4543, %v4536
    %v5083 = vpack.c.b16 %v4544, %v4537
    %v5084 = vpack.c.b16 %v4545, %v4538
    %v5085 = vpack.c.b16 %v4553, %v4546
    %v5086 = vpack.c.b16 %v4554, %v4547
    %v5087 = vpack.c.b16 %v4555, %v4548
    %v5088 = vpack.c.b16 %v4556, %v4549
    %v5089 = vpack.c.b16 %v4557, %v4550
    %v5090 = vpack.c.b16 %v4558, %v4551
    %v5091 = vpack.c.b16 %v4559, %v4552
    %v5092 = vpack.c.b16 %v4567, %v4560
    %v5093 = vpack.c.b16 %v4568, %v4561
    %v5094 = vpack.c.b16 %v4569, %v4562
    %v5095 = vpack.c.b16 %v4570, %v4563
    %v5096 = vpack.c.b16 %v4571, %v4564
    %v5097 = vpack.c.b16 %v4572, %v4565
    %v5098 = vpack.c.b16 %v4573, %v4566
    %v5099 = vpack.c.b16 %v4581, %v4574
    %v5100 = vpack.c.b16 %v4582, %v4575
    %v5101 = vpack.c.b16 %v4583, %v4576
    %v5102 = vpack.c.b16 %v4584, %v4577
    %v5103 = vpack.c.b16 %v4585, %v4578
    %v5104 = vpack.c.b16 %v4586, %v4579
    %v5105 = vpack.c.b16 %v4587, %v4580
    %v5106 = vpack.c.b16 %v4595, %v4588
    %v5107 = vpack.c.b16 %v4596, %v4589
    %v5108 = vpack.c.b16 %v4597, %v4590
    %v5109 = vpack.c.b16 %v4598, %v4591
    %v5110 = vpack.c.b16 %v4599, %v4592
    %v5111 = vpack.c.b16 %v4600, %v4593
    %v5112 = vpack.c.b16 %v4601, %v4594
    %v5113 = vpack.c.b16 %v4609, %v4602
    %v5114 = vpack.c.b16 %v4610, %v4603
    %v5115 = vpack.c.b16 %v4611, %v4604
    %v5116 = vpack.c.b16 %v4612, %v4605
    %v5117 = vpack.c.b16 %v4613, %v4606
    %v5118 = vpack.c.b16 %v4614, %v4607
    %v5119 = vpack.c.b16 %v4615, %v4608
    %v5120 = vpack.c.b16 %v4623, %v4616
    %v5121 = vpack.c.b16 %v4624, %v4617
    %v5122 = vpack.c.b16 %v4625, %v4618
    %v5123 = vpack.c.b16 %v4626, %v4619
    %v5124 = vpack.c.b16 %v4627, %v4620
    %v5125 = vpack.c.b16 %v4628, %v4621
    %v5126 = vpack.c.b16 %v4629, %v4622
    %v5127 = vpack.c.b16 %v4637, %v4630
    %v5128 = vpack.c.b16 %v4638, %v4631
    %v5129 = vpack.c.b16 %v4639, %v4632
    %v5130 = vpack.c.b16 %v4640, %v4633
    %v5131 = vpack.c.b16 %v4641, %v4634
    %v5132 = vpack.c.b16 %v4642, %v4635
    %v5133 = vpack.c.b16 %v4643, %v4636
    %v5134 = vpack.c.b16 %v4651, %v4644
    %v5135 = vpack.c.b16 %v4652, %v4645
    %v5136 = vpack.c.b16 %v4653, %v4646
    %v5137 = vpack.c.b16 %v4654, %v4647
    %v5138 = vpack.c.b16 %v4655, %v4648
    %v5139 = vpack.c.b16 %v4656, %v4649
    %v5140 = vpack.c.b16 %v4657, %v4650
    %v5141 = vpack.c.b16 %v4665, %v4658
    %v5142 = vpack.c.b16 %v4666, %v4659
    %v5143 = vpack.c.b16 %v4667, %v4660
    %v5144 = vpack.c.b16 %v4668, %v4661
    %v5145 = vpack.c.b16 %v4669, %v4662
    %v5146 = vpack.c.b16 %v4670, %v4663
    %v5147 = vpack.c.b16 %v4671, %v4664
    %v5148 = vpack.c.b16 %v4679, %v4672
    %v5149 = vpack.c.b16 %v4680, %v4673
    %v5150 = vpack.c.b16 %v4681, %v4674
    %v5151 = vpack.c.b16 %v4682, %v4675
    %v5152 = vpack.c.b16 %v4683, %v4676
    %v5153 = vpack.c.b16 %v4684, %v4677
    %v5154 = vpack.c.b16 %v4685, %v4678
    %v5155 = vpack.c.b16 %v4693, %v4686
    %v5156 = vpack.c.b16 %v4694, %v4687
    %v5157 = vpack.c.b16 %v4695, %v4688
    %v5158 = vpack.c.b16 %v4696, %v4689
    %v5159 = vpack.c.b16 %v4697, %v4690
    %v5160 = vpack.c.b16 %v4698, %v4691
    %v5161 = vpack.c.b16 %v4699, %v4692
    %v5162 = vpack.c.b16 %v4707, %v4700
    %v5163 = vpack.c.b16 %v4708, %v4701
    %v5164 = vpack.c.b16 %v4709, %v4702
    %v5165 = vpack.c.b16 %v4710, %v4703
    %v5166 = vpack.c.b16 %v4711, %v4704
    %v5167 = vpack.c.b16 %v4712, %v4705
    %v5168 = vpack.c.b16 %v4713, %v4706
    %v5169 = vpack.c.b16 %v4721, %v4714
    %v5170 = vpack.c.b16 %v4722, %v4715
    %v5171 = vpack.c.b16 %v4723, %v4716
    %v5172 = vpack.c.b16 %v4724, %v4717
    %v5173 = vpack.c.b16 %v4725, %v4718
    %v5174 = vpack.c.b16 %v4726, %v4719
    %v5175 = vpack.c.b16 %v4727, %v4720
    %5624 = vmatprep.subr.bf16.mxu0 %v4778
    %5625 = vmatpush1.bf16.msra.mxu0 %v4777
    %5626 = vmatprep.subr.bf16.mxu0 %v4771
    %5627 = vmatpush1.bf16.msra.mxu0 %v4770
    %5628 = vmatprep.subr.bf16.mxu0 %v4764
    %5629 = vmatpush1.bf16.msra.mxu0 %v4763
    %5630 = vmatprep.subr.bf16.mxu0 %v4757
    %5631 = vmatpush1.bf16.msra.mxu0 %v4756
    %5632 = vmatprep.subr.bf16.mxu0 %v4750
    %5633 = vmatpush1.bf16.msra.mxu0 %v4749
    %5634 = vmatprep.subr.bf16.mxu0 %v4743
    %5635 = vmatpush1.bf16.msra.mxu0 %v4742
    %5636 = vmatprep.subr.bf16.mxu0 %v4736
    %5637 = vmatpush1.bf16.msra.mxu0 %v4735
    %5638 = vmatprep.subr.bf16.mxu0 %v4729
    %5639 = vmatpush1.bf16.msra.mxu0 %v4728
    %5640 = vmatprep.subr.bf16.mxu0 %v4834
    %5641 = vmatpush2.bf16.msra.mxu0 %v4833
    %5642 = vmatprep.subr.bf16.mxu0 %v4827
    %5643 = vmatpush2.bf16.msra.mxu0 %v4826
    %5644 = vmatprep.subr.bf16.mxu0 %v4820
    %5645 = vmatpush2.bf16.msra.mxu0 %v4819
    %5646 = vmatprep.subr.bf16.mxu0 %v4813
    %5647 = vmatpush2.bf16.msra.mxu0 %v4812
    %5648 = vmatprep.subr.bf16.mxu0 %v4806
    %5649 = vmatpush2.bf16.msra.mxu0 %v4805
    %5650 = vmatprep.subr.bf16.mxu0 %v4799
    %5651 = vmatpush2.bf16.msra.mxu0 %v4798
    %5652 = vmatprep.subr.bf16.mxu0 %v4792
    %5653 = vmatpush2.bf16.msra.mxu0 %v4791
    %5654 = vmatprep.subr.bf16.mxu0 %v4785
    %5655 = vmatpush2.bf16.msra.mxu0 %v4784
    %5656 = vmatprep.mubr.bf16.mxu0 %v2764
    %5657 = vmatmul.mubr.bf16.gmra.mxu0 %v2763
    %v5658 = vpop.f32.mrf.mxu0
    %v5659 = vadd.f32 %v3288, %v5658
    %v5660 = vpop.f32.mrf.mxu0
    %v5661 = vadd.f32 %v3292, %v5660
    %v5662 = vpop.f32.mrf.mxu0
    %v5663 = vadd.f32 %v3288, %v5662
    %v5664 = vpop.f32.mrf.mxu0
    %v5665 = vadd.f32 %v3292, %v5664
    %5666 = vdwg.mxu0
    %5667 = vmatprep.subr.bf16.mxu0 %v4890
    %5668 = vmatpush1.bf16.msra.mxu0 %v4889
    %5669 = vmatprep.subr.bf16.mxu0 %v4883
    %5670 = vmatpush1.bf16.msra.mxu0 %v4882
    %5671 = vmatprep.subr.bf16.mxu0 %v4876
    %5672 = vmatpush1.bf16.msra.mxu0 %v4875
    %5673 = vmatprep.subr.bf16.mxu0 %v4869
    %5674 = vmatpush1.bf16.msra.mxu0 %v4868
    %5675 = vmatprep.subr.bf16.mxu0 %v4862
    %5676 = vmatpush1.bf16.msra.mxu0 %v4861
    %5677 = vmatprep.subr.bf16.mxu0 %v4855
    %5678 = vmatpush1.bf16.msra.mxu0 %v4854
    %5679 = vmatprep.subr.bf16.mxu0 %v4848
    %5680 = vmatpush1.bf16.msra.mxu0 %v4847
    %5681 = vmatprep.subr.bf16.mxu0 %v4841
    %5682 = vmatpush1.bf16.msra.mxu0 %v4840
    %5683 = vmatprep.subr.bf16.mxu0 %v4946
    %5684 = vmatpush2.bf16.msra.mxu0 %v4945
    %5685 = vmatprep.subr.bf16.mxu0 %v4939
    %5686 = vmatpush2.bf16.msra.mxu0 %v4938
    %5687 = vmatprep.subr.bf16.mxu0 %v4932
    %5688 = vmatpush2.bf16.msra.mxu0 %v4931
    %5689 = vmatprep.subr.bf16.mxu0 %v4925
    %5690 = vmatpush2.bf16.msra.mxu0 %v4924
    %5691 = vmatprep.subr.bf16.mxu0 %v4918
    %5692 = vmatpush2.bf16.msra.mxu0 %v4917
    %5693 = vmatprep.subr.bf16.mxu0 %v4911
    %5694 = vmatpush2.bf16.msra.mxu0 %v4910
    %5695 = vmatprep.subr.bf16.mxu0 %v4904
    %5696 = vmatpush2.bf16.msra.mxu0 %v4903
    %5697 = vmatprep.subr.bf16.mxu0 %v4897
    %5698 = vmatpush2.bf16.msra.mxu0 %v4896
    %5699 = vmatprep.mubr.bf16.mxu0 %v2766
    %5700 = vmatmul.mubr.bf16.gmra.mxu0 %v2765
    %v5701 = vpop.f32.mrf.mxu0
    %v5702 = vadd.f32 %v5659, %v5701
    %v5703 = vpop.f32.mrf.mxu0
    %v5704 = vadd.f32 %v5661, %v5703
    %v5705 = vpop.f32.mrf.mxu0
    %v5706 = vadd.f32 %v5663, %v5705
    %v5707 = vpop.f32.mrf.mxu0
    %v5708 = vadd.f32 %v5665, %v5707
    %5709 = vdwg.mxu0
    %5710 = vmatprep.subr.bf16.mxu0 %v5002
    %5711 = vmatpush1.bf16.msra.mxu0 %v5001
    %5712 = vmatprep.subr.bf16.mxu0 %v4995
    %5713 = vmatpush1.bf16.msra.mxu0 %v4994
    %5714 = vmatprep.subr.bf16.mxu0 %v4988
    %5715 = vmatpush1.bf16.msra.mxu0 %v4987
    %5716 = vmatprep.subr.bf16.mxu0 %v4981
    %5717 = vmatpush1.bf16.msra.mxu0 %v4980
    %5718 = vmatprep.subr.bf16.mxu0 %v4974
    %5719 = vmatpush1.bf16.msra.mxu0 %v4973
    %5720 = vmatprep.subr.bf16.mxu0 %v4967
    %5721 = vmatpush1.bf16.msra.mxu0 %v4966
    %5722 = vmatprep.subr.bf16.mxu0 %v4960
    %5723 = vmatpush1.bf16.msra.mxu0 %v4959
    %5724 = vmatprep.subr.bf16.mxu0 %v4953
    %5725 = vmatpush1.bf16.msra.mxu0 %v4952
    %5726 = vmatprep.subr.bf16.mxu0 %v5058
    %5727 = vmatpush2.bf16.msra.mxu0 %v5057
    %5728 = vmatprep.subr.bf16.mxu0 %v5051
    %5729 = vmatpush2.bf16.msra.mxu0 %v5050
    %5730 = vmatprep.subr.bf16.mxu0 %v5044
    %5731 = vmatpush2.bf16.msra.mxu0 %v5043
    %5732 = vmatprep.subr.bf16.mxu0 %v5037
    %5733 = vmatpush2.bf16.msra.mxu0 %v5036
    %5734 = vmatprep.subr.bf16.mxu0 %v5030
    %5735 = vmatpush2.bf16.msra.mxu0 %v5029
    %5736 = vmatprep.subr.bf16.mxu0 %v5023
    %5737 = vmatpush2.bf16.msra.mxu0 %v5022
    %5738 = vmatprep.subr.bf16.mxu0 %v5016
    %5739 = vmatpush2.bf16.msra.mxu0 %v5015
    %5740 = vmatprep.subr.bf16.mxu0 %v5009
    %5741 = vmatpush2.bf16.msra.mxu0 %v5008
    %5742 = vmatprep.mubr.bf16.mxu0 %v2768
    %5743 = vmatmul.mubr.bf16.gmra.mxu0 %v2767
    %v5744 = vpop.f32.mrf.mxu0
    %v5745 = vadd.f32 %v5702, %v5744
    %v5746 = vpop.f32.mrf.mxu0
    %v5747 = vadd.f32 %v5704, %v5746
    %v5748 = vpop.f32.mrf.mxu0
    %v5749 = vadd.f32 %v5706, %v5748
    %v5750 = vpop.f32.mrf.mxu0
    %v5751 = vadd.f32 %v5708, %v5750
    %5752 = vdwg.mxu0
    %5753 = vmatprep.subr.bf16.mxu0 %v5114
    %5754 = vmatpush1.bf16.msra.mxu0 %v5113
    %5755 = vmatprep.subr.bf16.mxu0 %v5107
    %5756 = vmatpush1.bf16.msra.mxu0 %v5106
    %5757 = vmatprep.subr.bf16.mxu0 %v5100
    %5758 = vmatpush1.bf16.msra.mxu0 %v5099
    %5759 = vmatprep.subr.bf16.mxu0 %v5093
    %5760 = vmatpush1.bf16.msra.mxu0 %v5092
    %5761 = vmatprep.subr.bf16.mxu0 %v5086
    %5762 = vmatpush1.bf16.msra.mxu0 %v5085
    %5763 = vmatprep.subr.bf16.mxu0 %v5079
    %5764 = vmatpush1.bf16.msra.mxu0 %v5078
    %5765 = vmatprep.subr.bf16.mxu0 %v5072
    %5766 = vmatpush1.bf16.msra.mxu0 %v5071
    %5767 = vmatprep.subr.bf16.mxu0 %v5065
    %5768 = vmatpush1.bf16.msra.mxu0 %v5064
    %5769 = vmatprep.subr.bf16.mxu0 %v5170
    %5770 = vmatpush2.bf16.msra.mxu0 %v5169
    %5771 = vmatprep.subr.bf16.mxu0 %v5163
    %5772 = vmatpush2.bf16.msra.mxu0 %v5162
    %5773 = vmatprep.subr.bf16.mxu0 %v5156
    %5774 = vmatpush2.bf16.msra.mxu0 %v5155
    %5775 = vmatprep.subr.bf16.mxu0 %v5149
    %5776 = vmatpush2.bf16.msra.mxu0 %v5148
    %5777 = vmatprep.subr.bf16.mxu0 %v5142
    %5778 = vmatpush2.bf16.msra.mxu0 %v5141
    %5779 = vmatprep.subr.bf16.mxu0 %v5135
    %5780 = vmatpush2.bf16.msra.mxu0 %v5134
    %5781 = vmatprep.subr.bf16.mxu0 %v5128
    %5782 = vmatpush2.bf16.msra.mxu0 %v5127
    %5783 = vmatprep.subr.bf16.mxu0 %v5121
    %5784 = vmatpush2.bf16.msra.mxu0 %v5120
    %5785 = vmatprep.mubr.bf16.mxu0 %v2770
    %5786 = vmatmul.mubr.bf16.gmra.mxu0 %v2769
    %v5787 = vpop.f32.mrf.mxu0
    %v5788 = vadd.f32 %v5745, %v5787
    %v5789 = vpop.f32.mrf.mxu0
    %v5790 = vadd.f32 %v5747, %v5789
    %v5791 = vpop.f32.mrf.mxu0
    %v5792 = vadd.f32 %v5749, %v5791
    %v5793 = vpop.f32.mrf.mxu0
    %v5794 = vadd.f32 %v5751, %v5793
    %5795 = vdwg.mxu0
    %5796 = vmatprep.subr.bf16.mxu0 %v4780
    %5797 = vmatpush1.bf16.msra.mxu0 %v4779
    %5798 = vmatprep.subr.bf16.mxu0 %v4773
    %5799 = vmatpush1.bf16.msra.mxu0 %v4772
    %5800 = vmatprep.subr.bf16.mxu0 %v4766
    %5801 = vmatpush1.bf16.msra.mxu0 %v4765
    %5802 = vmatprep.subr.bf16.mxu0 %v4759
    %5803 = vmatpush1.bf16.msra.mxu0 %v4758
    %5804 = vmatprep.subr.bf16.mxu0 %v4752
    %5805 = vmatpush1.bf16.msra.mxu0 %v4751
    %5806 = vmatprep.subr.bf16.mxu0 %v4745
    %5807 = vmatpush1.bf16.msra.mxu0 %v4744
    %5808 = vmatprep.subr.bf16.mxu0 %v4738
    %5809 = vmatpush1.bf16.msra.mxu0 %v4737
    %5810 = vmatprep.subr.bf16.mxu0 %v4731
    %5811 = vmatpush1.bf16.msra.mxu0 %v4730
    %5812 = vmatprep.subr.bf16.mxu0 %v4836
    %5813 = vmatpush2.bf16.msra.mxu0 %v4835
    %5814 = vmatprep.subr.bf16.mxu0 %v4829
    %5815 = vmatpush2.bf16.msra.mxu0 %v4828
    %5816 = vmatprep.subr.bf16.mxu0 %v4822
    %5817 = vmatpush2.bf16.msra.mxu0 %v4821
    %5818 = vmatprep.subr.bf16.mxu0 %v4815
    %5819 = vmatpush2.bf16.msra.mxu0 %v4814
    %5820 = vmatprep.subr.bf16.mxu0 %v4808
    %5821 = vmatpush2.bf16.msra.mxu0 %v4807
    %5822 = vmatprep.subr.bf16.mxu0 %v4801
    %5823 = vmatpush2.bf16.msra.mxu0 %v4800
    %5824 = vmatprep.subr.bf16.mxu0 %v4794
    %5825 = vmatpush2.bf16.msra.mxu0 %v4793
    %5826 = vmatprep.subr.bf16.mxu0 %v4787
    %5827 = vmatpush2.bf16.msra.mxu0 %v4786
    %5828 = vmatprep.mubr.bf16.mxu0 %v2764
    %5829 = vmatmul.mubr.bf16.gmra.mxu0 %v2763
    %v5830 = vpop.f32.mrf.mxu0
    %v5831 = vadd.f32 %v3296, %v5830
    %v5832 = vpop.f32.mrf.mxu0
    %v5833 = vadd.f32 %v3300, %v5832
    %v5834 = vpop.f32.mrf.mxu0
    %v5835 = vadd.f32 %v3296, %v5834
    %v5836 = vpop.f32.mrf.mxu0
    %v5837 = vadd.f32 %v3300, %v5836
    %5838 = vdwg.mxu0
    %5839 = vmatprep.subr.bf16.mxu0 %v4892
    %5840 = vmatpush1.bf16.msra.mxu0 %v4891
    %5841 = vmatprep.subr.bf16.mxu0 %v4885
    %5842 = vmatpush1.bf16.msra.mxu0 %v4884
    %5843 = vmatprep.subr.bf16.mxu0 %v4878
    %5844 = vmatpush1.bf16.msra.mxu0 %v4877
    %5845 = vmatprep.subr.bf16.mxu0 %v4871
    %5846 = vmatpush1.bf16.msra.mxu0 %v4870
    %5847 = vmatprep.subr.bf16.mxu0 %v4864
    %5848 = vmatpush1.bf16.msra.mxu0 %v4863
    %5849 = vmatprep.subr.bf16.mxu0 %v4857
    %5850 = vmatpush1.bf16.msra.mxu0 %v4856
    %5851 = vmatprep.subr.bf16.mxu0 %v4850
    %5852 = vmatpush1.bf16.msra.mxu0 %v4849
    %5853 = vmatprep.subr.bf16.mxu0 %v4843
    %5854 = vmatpush1.bf16.msra.mxu0 %v4842
    %5855 = vmatprep.subr.bf16.mxu0 %v4948
    %5856 = vmatpush2.bf16.msra.mxu0 %v4947
    %5857 = vmatprep.subr.bf16.mxu0 %v4941
    %5858 = vmatpush2.bf16.msra.mxu0 %v4940
    %5859 = vmatprep.subr.bf16.mxu0 %v4934
    %5860 = vmatpush2.bf16.msra.mxu0 %v4933
    %5861 = vmatprep.subr.bf16.mxu0 %v4927
    %5862 = vmatpush2.bf16.msra.mxu0 %v4926
    %5863 = vmatprep.subr.bf16.mxu0 %v4920
    %5864 = vmatpush2.bf16.msra.mxu0 %v4919
    %5865 = vmatprep.subr.bf16.mxu0 %v4913
    %5866 = vmatpush2.bf16.msra.mxu0 %v4912
    %5867 = vmatprep.subr.bf16.mxu0 %v4906
    %5868 = vmatpush2.bf16.msra.mxu0 %v4905
    %5869 = vmatprep.subr.bf16.mxu0 %v4899
    %5870 = vmatpush2.bf16.msra.mxu0 %v4898
    %5871 = vmatprep.mubr.bf16.mxu0 %v2766
    %5872 = vmatmul.mubr.bf16.gmra.mxu0 %v2765
    %v5873 = vpop.f32.mrf.mxu0
    %v5874 = vadd.f32 %v5831, %v5873
    %v5875 = vpop.f32.mrf.mxu0
    %v5876 = vadd.f32 %v5833, %v5875
    %v5877 = vpop.f32.mrf.mxu0
    %v5878 = vadd.f32 %v5835, %v5877
    %v5879 = vpop.f32.mrf.mxu0
    %v5880 = vadd.f32 %v5837, %v5879
    %5881 = vdwg.mxu0
    %5882 = vmatprep.subr.bf16.mxu0 %v5004
    %5883 = vmatpush1.bf16.msra.mxu0 %v5003
    %5884 = vmatprep.subr.bf16.mxu0 %v4997
    %5885 = vmatpush1.bf16.msra.mxu0 %v4996
    %5886 = vmatprep.subr.bf16.mxu0 %v4990
    %5887 = vmatpush1.bf16.msra.mxu0 %v4989
    %5888 = vmatprep.subr.bf16.mxu0 %v4983
    %5889 = vmatpush1.bf16.msra.mxu0 %v4982
    %5890 = vmatprep.subr.bf16.mxu0 %v4976
    %5891 = vmatpush1.bf16.msra.mxu0 %v4975
    %5892 = vmatprep.subr.bf16.mxu0 %v4969
    %5893 = vmatpush1.bf16.msra.mxu0 %v4968
    %5894 = vmatprep.subr.bf16.mxu0 %v4962
    %5895 = vmatpush1.bf16.msra.mxu0 %v4961
    %5896 = vmatprep.subr.bf16.mxu0 %v4955
    %5897 = vmatpush1.bf16.msra.mxu0 %v4954
    %5898 = vmatprep.subr.bf16.mxu0 %v5060
    %5899 = vmatpush2.bf16.msra.mxu0 %v5059
    %5900 = vmatprep.subr.bf16.mxu0 %v5053
    %5901 = vmatpush2.bf16.msra.mxu0 %v5052
    %5902 = vmatprep.subr.bf16.mxu0 %v5046
    %5903 = vmatpush2.bf16.msra.mxu0 %v5045
    %5904 = vmatprep.subr.bf16.mxu0 %v5039
    %5905 = vmatpush2.bf16.msra.mxu0 %v5038
    %5906 = vmatprep.subr.bf16.mxu0 %v5032
    %5907 = vmatpush2.bf16.msra.mxu0 %v5031
    %5908 = vmatprep.subr.bf16.mxu0 %v5025
    %5909 = vmatpush2.bf16.msra.mxu0 %v5024
    %5910 = vmatprep.subr.bf16.mxu0 %v5018
    %5911 = vmatpush2.bf16.msra.mxu0 %v5017
    %5912 = vmatprep.subr.bf16.mxu0 %v5011
    %5913 = vmatpush2.bf16.msra.mxu0 %v5010
    %5914 = vmatprep.mubr.bf16.mxu0 %v2768
    %5915 = vmatmul.mubr.bf16.gmra.mxu0 %v2767
    %v5916 = vpop.f32.mrf.mxu0
    %v5917 = vadd.f32 %v5874, %v5916
    %v5918 = vpop.f32.mrf.mxu0
    %v5919 = vadd.f32 %v5876, %v5918
    %v5920 = vpop.f32.mrf.mxu0
    %v5921 = vadd.f32 %v5878, %v5920
    %v5922 = vpop.f32.mrf.mxu0
    %v5923 = vadd.f32 %v5880, %v5922
    %5924 = vdwg.mxu0
    %5925 = vmatprep.subr.bf16.mxu0 %v5116
    %5926 = vmatpush1.bf16.msra.mxu0 %v5115
    %5927 = vmatprep.subr.bf16.mxu0 %v5109
    %5928 = vmatpush1.bf16.msra.mxu0 %v5108
    %5929 = vmatprep.subr.bf16.mxu0 %v5102
    %5930 = vmatpush1.bf16.msra.mxu0 %v5101
    %5931 = vmatprep.subr.bf16.mxu0 %v5095
    %5932 = vmatpush1.bf16.msra.mxu0 %v5094
    %5933 = vmatprep.subr.bf16.mxu0 %v5088
    %5934 = vmatpush1.bf16.msra.mxu0 %v5087
    %5935 = vmatprep.subr.bf16.mxu0 %v5081
    %5936 = vmatpush1.bf16.msra.mxu0 %v5080
    %5937 = vmatprep.subr.bf16.mxu0 %v5074
    %5938 = vmatpush1.bf16.msra.mxu0 %v5073
    %5939 = vmatprep.subr.bf16.mxu0 %v5067
    %5940 = vmatpush1.bf16.msra.mxu0 %v5066
    %5941 = vmatprep.subr.bf16.mxu0 %v5172
    %5942 = vmatpush2.bf16.msra.mxu0 %v5171
    %5943 = vmatprep.subr.bf16.mxu0 %v5165
    %5944 = vmatpush2.bf16.msra.mxu0 %v5164
    %5945 = vmatprep.subr.bf16.mxu0 %v5158
    %5946 = vmatpush2.bf16.msra.mxu0 %v5157
    %5947 = vmatprep.subr.bf16.mxu0 %v5151
    %5948 = vmatpush2.bf16.msra.mxu0 %v5150
    %5949 = vmatprep.subr.bf16.mxu0 %v5144
    %5950 = vmatpush2.bf16.msra.mxu0 %v5143
    %5951 = vmatprep.subr.bf16.mxu0 %v5137
    %5952 = vmatpush2.bf16.msra.mxu0 %v5136
    %5953 = vmatprep.subr.bf16.mxu0 %v5130
    %5954 = vmatpush2.bf16.msra.mxu0 %v5129
    %5955 = vmatprep.subr.bf16.mxu0 %v5123
    %5956 = vmatpush2.bf16.msra.mxu0 %v5122
    %5957 = vmatprep.mubr.bf16.mxu0 %v2770
    %5958 = vmatmul.mubr.bf16.gmra.mxu0 %v2769
    %v5959 = vpop.f32.mrf.mxu0
    %v5960 = vadd.f32 %v5917, %v5959
    %v5961 = vpop.f32.mrf.mxu0
    %v5962 = vadd.f32 %v5919, %v5961
    %v5963 = vpop.f32.mrf.mxu0
    %v5964 = vadd.f32 %v5921, %v5963
    %v5965 = vpop.f32.mrf.mxu0
    %v5966 = vadd.f32 %v5923, %v5965
    %5967 = vdwg.mxu0
    %5968 = vmatprep.subr.bf16.mxu0 %v4782
    %5969 = vmatpush1.bf16.msra.mxu0 %v4781
    %5970 = vmatprep.subr.bf16.mxu0 %v4775
    %5971 = vmatpush1.bf16.msra.mxu0 %v4774
    %5972 = vmatprep.subr.bf16.mxu0 %v4768
    %5973 = vmatpush1.bf16.msra.mxu0 %v4767
    %5974 = vmatprep.subr.bf16.mxu0 %v4761
    %5975 = vmatpush1.bf16.msra.mxu0 %v4760
    %5976 = vmatprep.subr.bf16.mxu0 %v4754
    %5977 = vmatpush1.bf16.msra.mxu0 %v4753
    %5978 = vmatprep.subr.bf16.mxu0 %v4747
    %5979 = vmatpush1.bf16.msra.mxu0 %v4746
    %5980 = vmatprep.subr.bf16.mxu0 %v4740
    %5981 = vmatpush1.bf16.msra.mxu0 %v4739
    %5982 = vmatprep.subr.bf16.mxu0 %v4733
    %5983 = vmatpush1.bf16.msra.mxu0 %v4732
    %5984 = vmatprep.subr.bf16.mxu0 %v4838
    %5985 = vmatpush2.bf16.msra.mxu0 %v4837
    %5986 = vmatprep.subr.bf16.mxu0 %v4831
    %5987 = vmatpush2.bf16.msra.mxu0 %v4830
    %5988 = vmatprep.subr.bf16.mxu0 %v4824
    %5989 = vmatpush2.bf16.msra.mxu0 %v4823
    %5990 = vmatprep.subr.bf16.mxu0 %v4817
    %5991 = vmatpush2.bf16.msra.mxu0 %v4816
    %5992 = vmatprep.subr.bf16.mxu0 %v4810
    %5993 = vmatpush2.bf16.msra.mxu0 %v4809
    %5994 = vmatprep.subr.bf16.mxu0 %v4803
    %5995 = vmatpush2.bf16.msra.mxu0 %v4802
    %5996 = vmatprep.subr.bf16.mxu0 %v4796
    %5997 = vmatpush2.bf16.msra.mxu0 %v4795
    %5998 = vmatprep.subr.bf16.mxu0 %v4789
    %5999 = vmatpush2.bf16.msra.mxu0 %v4788
    %6000 = vmatprep.mubr.bf16.mxu0 %v2764
    %6001 = vmatmul.mubr.bf16.gmra.mxu0 %v2763
    %v6002 = vpop.f32.mrf.mxu0
    %v6003 = vadd.f32 %v3304, %v6002
    %v6004 = vpop.f32.mrf.mxu0
    %v6005 = vadd.f32 %v3308, %v6004
    %v6006 = vpop.f32.mrf.mxu0
    %v6007 = vadd.f32 %v3304, %v6006
    %v6008 = vpop.f32.mrf.mxu0
    %v6009 = vadd.f32 %v3308, %v6008
    %6010 = vdwg.mxu0
    %6011 = vmatprep.subr.bf16.mxu0 %v4894
    %6012 = vmatpush1.bf16.msra.mxu0 %v4893
    %6013 = vmatprep.subr.bf16.mxu0 %v4887
    %6014 = vmatpush1.bf16.msra.mxu0 %v4886
    %6015 = vmatprep.subr.bf16.mxu0 %v4880
    %6016 = vmatpush1.bf16.msra.mxu0 %v4879
    %6017 = vmatprep.subr.bf16.mxu0 %v4873
    %6018 = vmatpush1.bf16.msra.mxu0 %v4872
    %6019 = vmatprep.subr.bf16.mxu0 %v4866
    %6020 = vmatpush1.bf16.msra.mxu0 %v4865
    %6021 = vmatprep.subr.bf16.mxu0 %v4859
    %6022 = vmatpush1.bf16.msra.mxu0 %v4858
    %6023 = vmatprep.subr.bf16.mxu0 %v4852
    %6024 = vmatpush1.bf16.msra.mxu0 %v4851
    %6025 = vmatprep.subr.bf16.mxu0 %v4845
    %6026 = vmatpush1.bf16.msra.mxu0 %v4844
    %6027 = vmatprep.subr.bf16.mxu0 %v4950
    %6028 = vmatpush2.bf16.msra.mxu0 %v4949
    %6029 = vmatprep.subr.bf16.mxu0 %v4943
    %6030 = vmatpush2.bf16.msra.mxu0 %v4942
    %6031 = vmatprep.subr.bf16.mxu0 %v4936
    %6032 = vmatpush2.bf16.msra.mxu0 %v4935
    %6033 = vmatprep.subr.bf16.mxu0 %v4929
    %6034 = vmatpush2.bf16.msra.mxu0 %v4928
    %6035 = vmatprep.subr.bf16.mxu0 %v4922
    %6036 = vmatpush2.bf16.msra.mxu0 %v4921
    %6037 = vmatprep.subr.bf16.mxu0 %v4915
    %6038 = vmatpush2.bf16.msra.mxu0 %v4914
    %6039 = vmatprep.subr.bf16.mxu0 %v4908
    %6040 = vmatpush2.bf16.msra.mxu0 %v4907
    %6041 = vmatprep.subr.bf16.mxu0 %v4901
    %6042 = vmatpush2.bf16.msra.mxu0 %v4900
    %6043 = vmatprep.mubr.bf16.mxu0 %v2766
    %6044 = vmatmul.mubr.bf16.gmra.mxu0 %v2765
    %v6045 = vpop.f32.mrf.mxu0
    %v6046 = vadd.f32 %v6003, %v6045
    %v6047 = vpop.f32.mrf.mxu0
    %v6048 = vadd.f32 %v6005, %v6047
    %v6049 = vpop.f32.mrf.mxu0
    %v6050 = vadd.f32 %v6007, %v6049
    %v6051 = vpop.f32.mrf.mxu0
    %v6052 = vadd.f32 %v6009, %v6051
    %6053 = vdwg.mxu0
    %6054 = vmatprep.subr.bf16.mxu0 %v5006
    %6055 = vmatpush1.bf16.msra.mxu0 %v5005
    %6056 = vmatprep.subr.bf16.mxu0 %v4999
    %6057 = vmatpush1.bf16.msra.mxu0 %v4998
    %6058 = vmatprep.subr.bf16.mxu0 %v4992
    %6059 = vmatpush1.bf16.msra.mxu0 %v4991
    %6060 = vmatprep.subr.bf16.mxu0 %v4985
    %6061 = vmatpush1.bf16.msra.mxu0 %v4984
    %6062 = vmatprep.subr.bf16.mxu0 %v4978
    %6063 = vmatpush1.bf16.msra.mxu0 %v4977
    %6064 = vmatprep.subr.bf16.mxu0 %v4971
    %6065 = vmatpush1.bf16.msra.mxu0 %v4970
    %6066 = vmatprep.subr.bf16.mxu0 %v4964
    %6067 = vmatpush1.bf16.msra.mxu0 %v4963
    %6068 = vmatprep.subr.bf16.mxu0 %v4957
    %6069 = vmatpush1.bf16.msra.mxu0 %v4956
    %6070 = vmatprep.subr.bf16.mxu0 %v5062
    %6071 = vmatpush2.bf16.msra.mxu0 %v5061
    %6072 = vmatprep.subr.bf16.mxu0 %v5055
    %6073 = vmatpush2.bf16.msra.mxu0 %v5054
    %6074 = vmatprep.subr.bf16.mxu0 %v5048
    %6075 = vmatpush2.bf16.msra.mxu0 %v5047
    %6076 = vmatprep.subr.bf16.mxu0 %v5041
    %6077 = vmatpush2.bf16.msra.mxu0 %v5040
    %6078 = vmatprep.subr.bf16.mxu0 %v5034
    %6079 = vmatpush2.bf16.msra.mxu0 %v5033
    %6080 = vmatprep.subr.bf16.mxu0 %v5027
    %6081 = vmatpush2.bf16.msra.mxu0 %v5026
    %6082 = vmatprep.subr.bf16.mxu0 %v5020
    %6083 = vmatpush2.bf16.msra.mxu0 %v5019
    %6084 = vmatprep.subr.bf16.mxu0 %v5013
    %6085 = vmatpush2.bf16.msra.mxu0 %v5012
    %6086 = vmatprep.mubr.bf16.mxu0 %v2768
    %6087 = vmatmul.mubr.bf16.gmra.mxu0 %v2767
    %v6088 = vpop.f32.mrf.mxu0
    %v6089 = vadd.f32 %v6046, %v6088
    %v6090 = vpop.f32.mrf.mxu0
    %v6091 = vadd.f32 %v6048, %v6090
    %v6092 = vpop.f32.mrf.mxu0
    %v6093 = vadd.f32 %v6050, %v6092
    %v6094 = vpop.f32.mrf.mxu0
    %v6095 = vadd.f32 %v6052, %v6094
    %6096 = vdwg.mxu0
    %6097 = vmatprep.subr.bf16.mxu0 %v5118
    %6098 = vmatpush1.bf16.msra.mxu0 %v5117
    %6099 = vmatprep.subr.bf16.mxu0 %v5111
    %6100 = vmatpush1.bf16.msra.mxu0 %v5110
    %6101 = vmatprep.subr.bf16.mxu0 %v5104
    %6102 = vmatpush1.bf16.msra.mxu0 %v5103
    %6103 = vmatprep.subr.bf16.mxu0 %v5097
    %6104 = vmatpush1.bf16.msra.mxu0 %v5096
    %6105 = vmatprep.subr.bf16.mxu0 %v5090
    %6106 = vmatpush1.bf16.msra.mxu0 %v5089
    %6107 = vmatprep.subr.bf16.mxu0 %v5083
    %6108 = vmatpush1.bf16.msra.mxu0 %v5082
    %6109 = vmatprep.subr.bf16.mxu0 %v5076
    %6110 = vmatpush1.bf16.msra.mxu0 %v5075
    %6111 = vmatprep.subr.bf16.mxu0 %v5069
    %6112 = vmatpush1.bf16.msra.mxu0 %v5068
    %6113 = vmatprep.subr.bf16.mxu0 %v5174
    %6114 = vmatpush2.bf16.msra.mxu0 %v5173
    %6115 = vmatprep.subr.bf16.mxu0 %v5167
    %6116 = vmatpush2.bf16.msra.mxu0 %v5166
    %6117 = vmatprep.subr.bf16.mxu0 %v5160
    %6118 = vmatpush2.bf16.msra.mxu0 %v5159
    %6119 = vmatprep.subr.bf16.mxu0 %v5153
    %6120 = vmatpush2.bf16.msra.mxu0 %v5152
    %6121 = vmatprep.subr.bf16.mxu0 %v5146
    %6122 = vmatpush2.bf16.msra.mxu0 %v5145
    %6123 = vmatprep.subr.bf16.mxu0 %v5139
    %6124 = vmatpush2.bf16.msra.mxu0 %v5138
    %6125 = vmatprep.subr.bf16.mxu0 %v5132
    %6126 = vmatpush2.bf16.msra.mxu0 %v5131
    %6127 = vmatprep.subr.bf16.mxu0 %v5125
    %6128 = vmatpush2.bf16.msra.mxu0 %v5124
    %6129 = vmatprep.mubr.bf16.mxu0 %v2770
    %6130 = vmatmul.mubr.bf16.gmra.mxu0 %v2769
    %v6131 = vpop.f32.mrf.mxu0
    %v6132 = vadd.f32 %v6089, %v6131
    %v6133 = vpop.f32.mrf.mxu0
    %v6134 = vadd.f32 %v6091, %v6133
    %v6135 = vpop.f32.mrf.mxu0
    %v6136 = vadd.f32 %v6093, %v6135
    %v6137 = vpop.f32.mrf.mxu0
    %v6138 = vadd.f32 %v6095, %v6137
    %6139 = vdwg.mxu0
    %6140 = vmatprep.subr.bf16.mxu0 0
    %6141 = vmatpush1.bf16.msra.mxu0 %v4783
    %6142 = vmatprep.subr.bf16.mxu0 0
    %6143 = vmatpush1.bf16.msra.mxu0 %v4776
    %6144 = vmatprep.subr.bf16.mxu0 0
    %6145 = vmatpush1.bf16.msra.mxu0 %v4769
    %6146 = vmatprep.subr.bf16.mxu0 0
    %6147 = vmatpush1.bf16.msra.mxu0 %v4762
    %6148 = vmatprep.subr.bf16.mxu0 0
    %6149 = vmatpush1.bf16.msra.mxu0 %v4755
    %6150 = vmatprep.subr.bf16.mxu0 0
    %6151 = vmatpush1.bf16.msra.mxu0 %v4748
    %6152 = vmatprep.subr.bf16.mxu0 0
    %6153 = vmatpush1.bf16.msra.mxu0 %v4741
    %6154 = vmatprep.subr.bf16.mxu0 0
    %6155 = vmatpush1.bf16.msra.mxu0 %v4734
    %6156 = vmatprep.subr.bf16.mxu0 0
    %6157 = vmatpush2.bf16.msra.mxu0 %v4839
    %6158 = vmatprep.subr.bf16.mxu0 0
    %6159 = vmatpush2.bf16.msra.mxu0 %v4832
    %6160 = vmatprep.subr.bf16.mxu0 0
    %6161 = vmatpush2.bf16.msra.mxu0 %v4825
    %6162 = vmatprep.subr.bf16.mxu0 0
    %6163 = vmatpush2.bf16.msra.mxu0 %v4818
    %6164 = vmatprep.subr.bf16.mxu0 0
    %6165 = vmatpush2.bf16.msra.mxu0 %v4811
    %6166 = vmatprep.subr.bf16.mxu0 0
    %6167 = vmatpush2.bf16.msra.mxu0 %v4804
    %6168 = vmatprep.subr.bf16.mxu0 0
    %6169 = vmatpush2.bf16.msra.mxu0 %v4797
    %6170 = vmatprep.subr.bf16.mxu0 0
    %6171 = vmatpush2.bf16.msra.mxu0 %v4790
    %6172 = vmatprep.mubr.bf16.mxu0 %v2764
    %6173 = vmatmul.mubr.bf16.gmra.mxu0 %v2763
    %v6174 = vpop.f32.mrf.mxu0
    %v6175 = vadd.f32 %v3312, %v6174
    %v6176 = vpop.f32.mrf.mxu0
    %v6177 = vpop.f32.mrf.mxu0
    %v6178 = vadd.f32 %v3312, %v6177
    %v6179 = vpop.f32.mrf.mxu0
    %6180 = vdwg.mxu0
    %6181 = vmatprep.subr.bf16.mxu0 0
    %6182 = vmatpush1.bf16.msra.mxu0 %v4895
    %6183 = vmatprep.subr.bf16.mxu0 0
    %6184 = vmatpush1.bf16.msra.mxu0 %v4888
    %6185 = vmatprep.subr.bf16.mxu0 0
    %6186 = vmatpush1.bf16.msra.mxu0 %v4881
    %6187 = vmatprep.subr.bf16.mxu0 0
    %6188 = vmatpush1.bf16.msra.mxu0 %v4874
    %6189 = vmatprep.subr.bf16.mxu0 0
    %6190 = vmatpush1.bf16.msra.mxu0 %v4867
    %6191 = vmatprep.subr.bf16.mxu0 0
    %6192 = vmatpush1.bf16.msra.mxu0 %v4860
    %6193 = vmatprep.subr.bf16.mxu0 0
    %6194 = vmatpush1.bf16.msra.mxu0 %v4853
    %6195 = vmatprep.subr.bf16.mxu0 0
    %6196 = vmatpush1.bf16.msra.mxu0 %v4846
    %6197 = vmatprep.subr.bf16.mxu0 0
    %6198 = vmatpush2.bf16.msra.mxu0 %v4951
    %6199 = vmatprep.subr.bf16.mxu0 0
    %6200 = vmatpush2.bf16.msra.mxu0 %v4944
    %6201 = vmatprep.subr.bf16.mxu0 0
    %6202 = vmatpush2.bf16.msra.mxu0 %v4937
    %6203 = vmatprep.subr.bf16.mxu0 0
    %6204 = vmatpush2.bf16.msra.mxu0 %v4930
    %6205 = vmatprep.subr.bf16.mxu0 0
    %6206 = vmatpush2.bf16.msra.mxu0 %v4923
    %6207 = vmatprep.subr.bf16.mxu0 0
    %6208 = vmatpush2.bf16.msra.mxu0 %v4916
    %6209 = vmatprep.subr.bf16.mxu0 0
    %6210 = vmatpush2.bf16.msra.mxu0 %v4909
    %6211 = vmatprep.subr.bf16.mxu0 0
    %6212 = vmatpush2.bf16.msra.mxu0 %v4902
    %6213 = vmatprep.mubr.bf16.mxu0 %v2766
    %6214 = vmatmul.mubr.bf16.gmra.mxu0 %v2765
    %v6215 = vpop.f32.mrf.mxu0
    %v6216 = vadd.f32 %v6175, %v6215
    %v6217 = vpop.f32.mrf.mxu0
    %v6218 = vpop.f32.mrf.mxu0
    %v6219 = vadd.f32 %v6178, %v6218
    %v6220 = vpop.f32.mrf.mxu0
    %6221 = vdwg.mxu0
    %6222 = vmatprep.subr.bf16.mxu0 0
    %6223 = vmatpush1.bf16.msra.mxu0 %v5007
    %6224 = vmatprep.subr.bf16.mxu0 0
    %6225 = vmatpush1.bf16.msra.mxu0 %v5000
    %6226 = vmatprep.subr.bf16.mxu0 0
    %6227 = vmatpush1.bf16.msra.mxu0 %v4993
    %6228 = vmatprep.subr.bf16.mxu0 0
    %6229 = vmatpush1.bf16.msra.mxu0 %v4986
    %6230 = vmatprep.subr.bf16.mxu0 0
    %6231 = vmatpush1.bf16.msra.mxu0 %v4979
    %6232 = vmatprep.subr.bf16.mxu0 0
    %6233 = vmatpush1.bf16.msra.mxu0 %v4972
    %6234 = vmatprep.subr.bf16.mxu0 0
    %6235 = vmatpush1.bf16.msra.mxu0 %v4965
    %6236 = vmatprep.subr.bf16.mxu0 0
    %6237 = vmatpush1.bf16.msra.mxu0 %v4958
    %6238 = vmatprep.subr.bf16.mxu0 0
    %6239 = vmatpush2.bf16.msra.mxu0 %v5063
    %6240 = vmatprep.subr.bf16.mxu0 0
    %6241 = vmatpush2.bf16.msra.mxu0 %v5056
    %6242 = vmatprep.subr.bf16.mxu0 0
    %6243 = vmatpush2.bf16.msra.mxu0 %v5049
    %6244 = vmatprep.subr.bf16.mxu0 0
    %6245 = vmatpush2.bf16.msra.mxu0 %v5042
    %6246 = vmatprep.subr.bf16.mxu0 0
    %6247 = vmatpush2.bf16.msra.mxu0 %v5035
    %6248 = vmatprep.subr.bf16.mxu0 0
    %6249 = vmatpush2.bf16.msra.mxu0 %v5028
    %6250 = vmatprep.subr.bf16.mxu0 0
    %6251 = vmatpush2.bf16.msra.mxu0 %v5021
    %6252 = vmatprep.subr.bf16.mxu0 0
    %6253 = vmatpush2.bf16.msra.mxu0 %v5014
    %6254 = vmatprep.mubr.bf16.mxu0 %v2768
    %6255 = vmatmul.mubr.bf16.gmra.mxu0 %v2767
    %v6256 = vpop.f32.mrf.mxu0
    %v6257 = vadd.f32 %v6216, %v6256
    %v6258 = vpop.f32.mrf.mxu0
    %v6259 = vpop.f32.mrf.mxu0
    %v6260 = vadd.f32 %v6219, %v6259
    %v6261 = vpop.f32.mrf.mxu0
    %6262 = vdwg.mxu0
    %6263 = vmatprep.subr.bf16.mxu0 0
    %6264 = vmatpush1.bf16.msra.mxu0 %v5119
    %6265 = vmatprep.subr.bf16.mxu0 0
    %6266 = vmatpush1.bf16.msra.mxu0 %v5112
    %6267 = vmatprep.subr.bf16.mxu0 0
    %6268 = vmatpush1.bf16.msra.mxu0 %v5105
    %6269 = vmatprep.subr.bf16.mxu0 0
    %6270 = vmatpush1.bf16.msra.mxu0 %v5098
    %6271 = vmatprep.subr.bf16.mxu0 0
    %6272 = vmatpush1.bf16.msra.mxu0 %v5091
    %6273 = vmatprep.subr.bf16.mxu0 0
    %6274 = vmatpush1.bf16.msra.mxu0 %v5084
    %6275 = vmatprep.subr.bf16.mxu0 0
    %6276 = vmatpush1.bf16.msra.mxu0 %v5077
    %6277 = vmatprep.subr.bf16.mxu0 0
    %6278 = vmatpush1.bf16.msra.mxu0 %v5070
    %6279 = vmatprep.subr.bf16.mxu0 0
    %6280 = vmatpush2.bf16.msra.mxu0 %v5175
    %6281 = vmatprep.subr.bf16.mxu0 0
    %6282 = vmatpush2.bf16.msra.mxu0 %v5168
    %6283 = vmatprep.subr.bf16.mxu0 0
    %6284 = vmatpush2.bf16.msra.mxu0 %v5161
    %6285 = vmatprep.subr.bf16.mxu0 0
    %6286 = vmatpush2.bf16.msra.mxu0 %v5154
    %6287 = vmatprep.subr.bf16.mxu0 0
    %6288 = vmatpush2.bf16.msra.mxu0 %v5147
    %6289 = vmatprep.subr.bf16.mxu0 0
    %6290 = vmatpush2.bf16.msra.mxu0 %v5140
    %6291 = vmatprep.subr.bf16.mxu0 0
    %6292 = vmatpush2.bf16.msra.mxu0 %v5133
    %6293 = vmatprep.subr.bf16.mxu0 0
    %6294 = vmatpush2.bf16.msra.mxu0 %v5126
    %6295 = vmatprep.mubr.bf16.mxu0 %v2770
    %6296 = vmatmul.mubr.bf16.gmra.mxu0 %v2769
    %v6297 = vpop.f32.mrf.mxu0
    %v6298 = vadd.f32 %v6257, %v6297
    %v6299 = vpop.f32.mrf.mxu0
    %v6300 = vpop.f32.mrf.mxu0
    %v6301 = vadd.f32 %v6260, %v6300
    %v6302 = vpop.f32.mrf.mxu0
    %6303 = vdwg.mxu0
    %v6304 = vtanh.pop %v5788
    %v6305 = vtanh.pop %v5790
    %v6306 = vtanh.pop %v5960
    %v6307 = vtanh.pop %v5962
    %v6308 = vtanh.pop %v6132
    %v6309 = vtanh.pop %v6134
    %v6310 = vtanh.pop %v6298
    %v6311 = vtanh.pop %v5792
    %v6312 = vtanh.pop %v5794
    %v6313 = vtanh.pop %v5964
    %v6314 = vtanh.pop %v5966
    %v6315 = vtanh.pop %v6136
    %v6316 = vtanh.pop %v6138
    %v6317 = vtanh.pop %v6301
    %6318 = vst [vmem:[#allocation18] sm:$0xff] %v6304
    %6319 = vst [vmem:[#allocation18 + $0x8] sm:$0xff] %v6305
    %6320 = vst [vmem:[#allocation18 + $0x10] sm:$0xff] %v6306
    %6321 = vst [vmem:[#allocation18 + $0x18] sm:$0xff] %v6307
    %6322 = vst [vmem:[#allocation18 + $0x20] sm:$0xff] %v6308
    %6323 = vst [vmem:[#allocation18 + $0x28] sm:$0xff] %v6309
    %6324 = vst [vmem:[#allocation18 + $0x30] sm:$0xff] %v6310
    %6325 = vst [vmem:[#allocation18 + $0x38] sm:$0xff] %v6311
    %6326 = vst [vmem:[#allocation18 + $0x40] sm:$0xff] %v6312
    %6327 = vst [vmem:[#allocation18 + $0x48] sm:$0xff] %v6313
    %6328 = vst [vmem:[#allocation18 + $0x50] sm:$0xff] %v6314
    %6329 = vst [vmem:[#allocation18 + $0x58] sm:$0xff] %v6315
    %6330 = vst [vmem:[#allocation18 + $0x60] sm:$0xff] %v6316
    %6331 = vst [vmem:[#allocation18 + $0x68] sm:$0xff] %v6317
    // Predicated region
    $region74: #{tpu_custom_call.1} parent=1 // pred_check
      _
    $region75: #{tpu_custom_call.1} parent=1 // pred_check_branch
      %6333 = sbr.rel (0) target = $region77
    $region76: #{tpu_custom_call.1} parent=1 // pred_region
      %s6335 = ssub.s32 1792, 1792
      %6336 = vsyncadd [#allocation5], %s6335
      %s6337 = sshll.u32 [#allocation18], 4
      %s6338 = int_to_ptr.vmem [resolvable:$true] %s6337
      %6343 = dma.vmem_to_hbm [thread:$0]  %s6338, 1792, %s9, [#allocation5], 896, 896, 56
    $region77: #{tpu_custom_call.1} parent=1 // pred_fallthru
      _
    // Predicated region
    $region78: #{tpu_custom_call.1} parent=1 // pred_check
      _
    $region79: #{tpu_custom_call.1} parent=1 // pred_check_branch
      %6345 = sbr.rel (0) target = $region81
    $region80: #{tpu_custom_call.1} parent=1 // pred_region
      %6346 = dma.done [#allocation5], 1792
    $region81: #{tpu_custom_call.1} parent=1 // pred_fallthru
      _
    %6347 = vsyncpa [#allocation4], 1
    %6348 = vsyncpa [#allocation7], 1
    %6349 = vsyncpa [#allocation10], 1
    %6350 = vsyncpa [#allocation13], 1
    %6351 = vsyncpa [#allocation16], 1
    %6352 = vsyncpa [#allocation5], 1

</llo_original>
